<compile_context>
chip_gen: v6e
topology: v6e:2x2x1
jax: 0.10.0
libtpu: 0.0.40
codegen_flags: <defaults>
</compile_context>

<pallas_src>
import jax
import jax.numpy as jnp
from jax import lax
from jax.experimental import pallas as pl
from jax.experimental.pallas import tpu as pltpu

# ----------------------- synthetic "args" ---------------------------------
FULL_MAX_MOMENT = 3
CLS_MAX_MOMENT = 3
VALUE_MIN = -1.0
VALUE_MAX = 1.0
SCALE = float(VALUE_MAX - VALUE_MIN)
LAMBDA1 = 1.0
LAMBDA2 = 1.0
ADAPT_STEPS_PER_SAMPLE = 2
MAX_GRAD_NORM = 1.0
CLIP_GRAD_OFF = False
LR = 1e-2

CP = 16           # class dim padded only to the sublane granule (NCLS=10 -> 16)
_EPS = 1e-12      # protects the sqrt-norm gradient when diff == 0

_VMEM = pl.BlockSpec(memory_space=pltpu.MemorySpace.VMEM)
_DN_BATCH = (((0,), (0,)), ((), ()))   # contract dim 0 of both operands (batch)


# ================= single fused adapt kernel ===============================
def _fused_adapt_kernel(x_ref, w1_ref, b1_ref, w2_ref, b2_ref, sf_ref, sc_ref,
                        logits_ref, w1_out_ref, b1_out_ref):
    B = x_ref.shape[0]
    HID = w1_ref.shape[1]
    CP_ = w2_ref.shape[1]

    # ---------- step-invariant values, hoisted out of the unrolled loop ----
    x = x_ref[...]                               # (B, D_in) f32
    x_bf = x.astype(jnp.bfloat16)                # bf16 LHS for the big dw1 matmul
    w2 = w2_ref[...]                             # (HID, CP)
    b2 = b2_ref[...]                             # (1, CP)  (padded classes = -1e30)
    inv_B = 1.0 / B
    iota = lax.broadcasted_iota(jnp.int32, (B, CP_), 1)
    ones_b1 = jnp.ones((B, 1), jnp.float32)

    # Adapted params live in the (aliased) output refs across the steps.
    w1_out_ref[...] = w1_ref[...]
    b1_out_ref[...] = b1_ref[...]

    for _ in range(ADAPT_STEPS_PER_SAMPLE):      # unrolled: static, tiny
        # ---------------- model forward (MXU) ----------------
        # Kept f32 (multi-pass MXU): it is an 8-row matmul and keeps the
        # detached argmax decisions identical to the f32 reference.
        h = jnp.dot(x, w1_out_ref[...],
                    preferred_element_type=jnp.float32) + b1_out_ref[...]     # (B, HID)
        logits = jnp.dot(h, w2, preferred_element_type=jnp.float32) + b2      # (B, CP)

        # ------------- detached argmax -> one-hot (first max wins) --------
        maxv = jnp.max(logits, axis=1, keepdims=True)
        amax = jnp.min(jnp.where(logits == maxv, iota, CP_), axis=1, keepdims=True)
        one_hot = (iota == amax).astype(jnp.float32)                          # (B, CP)

        dh = jnp.zeros((B, HID), jnp.float32)

        # --------- d(cmd_optimization)/dh : full-batch central moments -----
        if FULL_MAX_MOMENT:
            mean0 = jnp.sum(h, axis=0, keepdims=True) * inv_B                 # (1, HID)
            c = h - mean0                                                     # (B, HID)
            cpows = [c]
            for _p in range(2, FULL_MAX_MOMENT + 1):
                cpows.append(cpows[-1] * c)                                   # c^p
            cmeans = [jnp.sum(cp_, axis=0, keepdims=True) * inv_B for cp_ in cpows]
            for p in range(1, FULL_MAX_MOMENT + 1):
                m_p = mean0 if p == 1 else cmeans[p - 1]
                diff = m_p - sf_ref[p - 1:p, :]                               # (1, HID)
                u_p = diff * lax.rsqrt(jnp.sum(diff * diff) + _EPS)
                u_p = u_p * (1.0 / SCALE ** p)
                if p == 1:
                    dh = dh + (LAMBDA1 * inv_B) * u_p
                else:
                    dh = dh + (LAMBDA1 * p * inv_B) * u_p * (cpows[p - 2] - cmeans[p - 2])

        # --- d(cmd_optimization_for_cls)/dh : batched class-moment matmuls -
        if CLS_MAX_MOMENT:
            # One MXU call gives per-class mean numerators AND per-class counts
            # (ones column folded into the RHS; no replicated counts matrix).
            stat0 = lax.dot_general(one_hot, jnp.concatenate([h, ones_b1], axis=1),
                                    dimension_numbers=_DN_BATCH,
                                    preferred_element_type=jnp.float32)       # (CP, HID+1)
            counts = stat0[:, HID:HID + 1]                                    # (CP, 1)
            count = jnp.maximum(counts, 1.0)
            inv_count = 1.0 / count                                           # (CP, 1) only
            idx = jnp.minimum(counts, 1.0)                                    # (CP, 1)
            inv_n_idx = 1.0 / jnp.sum(idx)

            mu = stat0[:, :HID] * inv_count                                   # (CP, HID)
            center = h - jnp.dot(one_hot, mu,
                                 preferred_element_type=jnp.float32)          # (B, HID)
            zpows = [center]
            for _p in range(2, CLS_MAX_MOMENT + 1):
                zpows.append(zpows[-1] * center)                              # center^p
            # One MXU call for all class-centered moments p=1..P.
            mraw = lax.dot_general(one_hot, jnp.concatenate(zpows, axis=1),
                                   dimension_numbers=_DN_BATCH,
                                   preferred_element_type=jnp.float32)        # (CP, P*HID)
            mcls = [mraw[:, (p - 1) * HID:p * HID] * inv_count
                    for p in range(1, CLS_MAX_MOMENT + 1)]

            vs = []
            for p in range(1, CLS_MAX_MOMENT + 1):
                m_p = mu if p == 1 else mcls[p - 1]
                diffc = m_p - sc_ref[p - 1]                                   # (CP, HID)
                rn = lax.rsqrt(jnp.sum(diffc * diffc, axis=1, keepdims=True) + _EPS)
                vs.append(diffc * (rn * idx) * (inv_n_idx * (1.0 / SCALE ** p)) * inv_count)
            # One MXU call broadcasts v_p/count and the needed class means to samples.
            bcast = jnp.dot(one_hot,
                            jnp.concatenate(vs + mcls[:CLS_MAX_MOMENT - 1], axis=1),
                            preferred_element_type=jnp.float32)               # (B, (2P-1)*HID)
            for p in range(1, CLS_MAX_MOMENT + 1):
                g_p = bcast[:, (p - 1) * HID:p * HID]                         # (B, HID)
                if p == 1:
                    dh = dh + LAMBDA2 * g_p
                else:
                    bc_m = bcast[:, (CLS_MAX_MOMENT + p - 2) * HID:
                                    (CLS_MAX_MOMENT + p - 1) * HID]
                    dh = dh + (LAMBDA2 * p) * g_p * (zpows[p - 2] - bc_m)

        # ---- backward into trainables (dlogits == 0 -> only w1, b1) -------
        # bf16 operands for the dominant (D_in x HID, K=B) MXU matmul, f32 acc.
        dw1 = lax.dot_general(x_bf, dh.astype(jnp.bfloat16),
                              dimension_numbers=_DN_BATCH,
                              preferred_element_type=jnp.float32)             # (D_in, HID)
        db1 = jnp.sum(dh, axis=0, keepdims=True)                              # (1, HID)

        # ---------------- clip_grad_norm_ + SGD step, fused -----------------
        if CLIP_GRAD_OFF:
            step_sz = jnp.float32(LR)
        else:
            total_norm = jnp.sqrt(jnp.sum(dw1 * dw1) + jnp.sum(db1 * db1))
            step_sz = LR * jnp.minimum(MAX_GRAD_NORM / (total_norm + 1e-6), 1.0)
        w1_out_ref[...] = w1_out_ref[...] - step_sz * dw1
        b1_out_ref[...] = b1_out_ref[...] - step_sz * db1
        logits_ref[...] = logits          # logits from the last pre-update forward


def _fused_adapt_call(x_flat, w1, b1, w2p, b2p, sf, scp):
    B, D_in = x_flat.shape
    hid = w1.shape[1]
    return pl.pallas_call(
        _fused_adapt_kernel,
        out_shape=(
            jax.ShapeDtypeStruct((B, CP), jnp.float32),       # logits (padded classes)
            jax.ShapeDtypeStruct((D_in, hid), jnp.float32),   # adapted w1 (unpadded)
            jax.ShapeDtypeStruct((1, hid), jnp.float32),      # adapted b1 (unpadded)
        ),
        in_specs=[_VMEM] * 7,
        out_specs=(_VMEM, _VMEM, _VMEM),
        input_output_aliases={1: 1, 2: 2},                    # w1 -> w1_new, b1 -> b1_new
    )(x_flat, w1, b1, w2p, b2p, sf, scp)


# ================= adapt_gradient_based_model.forward ======================
def adapt_forward(params, x_flat, stats_full, stats_cls):
    """`steps` x forward_and_adapt (method='cfa').  Returns (logits, adapted params)."""
    hid = params["w1"].shape[1]
    ncls = params["w2"].shape[1]

    # Only the tiny class-dim tensors are padded (NCLS=10 -> CP=16).  Padding is
    # exact: padded logits are biased to -1e30 (never win the argmax) and padded
    # class statistics are zero (idx == 0 -> no loss/grad contribution).
    w2p = jnp.zeros((hid, CP), jnp.float32).at[:, :ncls].set(params["w2"])
    b2p = jnp.full((1, CP), -1e30, jnp.float32).at[:, :ncls].set(params["b2"])
    scp = jnp.zeros((CLS_MAX_MOMENT, CP, hid), jnp.float32).at[:, :ncls, :].set(stats_cls)

    logits_p, w1n, b1n = _fused_adapt_call(
        x_flat, params["w1"], params["b1"], w2p, b2p, stats_full, scp)

    new_params = dict(params)
    new_params["w1"] = w1n
    new_params["b1"] = b1n
    return logits_p[:, :ncls], new_params


# ============ pure-JAX autodiff reference (validation only) ================
def _reference_adapt(params, x_flat, stats_full, stats_cls):
    hi = lax.Precision.HIGHEST

    def model(p):
        h = jnp.dot(x_flat, p["w1"], precision=hi) + p["b1"]
        logits = jnp.dot(h, p["w2"], precision=hi) + p["b2"]
        return h, logits

    def cmd_full(h):
        loss = 0.0
        mean0 = jnp.mean(h, axis=0, keepdims=True)
        for j in range(FULL_MAX_MOMENT):
            m = mean0 if j == 0 else jnp.mean((h - mean0) ** (j + 1), axis=0, keepdims=True)
            d = m - stats_full[j][None, :]
            loss = loss + jnp.sqrt(jnp.sum(d * d)) / SCALE ** (j + 1)
        return loss

    def cmd_cls(logits, h):
        ncls = logits.shape[1]
        oh = lax.stop_gradient(
            jax.nn.one_hot(jnp.argmax(logits, axis=1), ncls, dtype=jnp.float32))
        ac = oh[:, :, None]
        h3 = h[:, None, :]
        num = jnp.maximum(jnp.sum(ac, axis=0), 1.0)
        idx = jnp.clip(jnp.sum(ac, axis=0), 0.0, 1.0)
        loss = 0.0
        m0 = jnp.sum(ac * h3, axis=0, keepdims=True) / num
        for j in range(CLS_MAX_MOMENT):
            m = m0 if j == 0 else jnp.sum((ac * h3 - ac * m0) ** (j + 1), axis=0,
                                          keepdims=True) / num
            d = m - stats_cls[j][None]
            lc = jnp.sqrt(jnp.sum(d * d, axis=-1, keepdims=True)) / SCALE ** (j + 1)
            loss = loss + jnp.sum(lc * idx) / jnp.sum(idx)
        return loss

    logits_out = None
    for _ in range(ADAPT_STEPS_PER_SAMPLE):
        def loss_fn(p):
            h, logits = model(p)
            return LAMBDA1 * cmd_full(h) + LAMBDA2 * cmd_cls(logits, h), logits

        (_, logits), grads = jax.value_and_grad(loss_fn, has_aux=True)(params)
        if not CLIP_GRAD_OFF:
            leaves = jax.tree_util.tree_leaves(grads)
            tn = jnp.sqrt(sum(jnp.sum(g * g) for g in leaves))
            coef = jnp.minimum(MAX_GRAD_NORM / (tn + 1e-6), 1.0)
            grads = jax.tree_util.tree_map(lambda g: g * coef, grads)
        params = jax.tree_util.tree_map(lambda p, g: p - LR * g, params, grads)
        logits_out = logits
    return logits_out, params


if __name__ == "__main__":
    key = jax.random.PRNGKey(0)
    k_x, k_w1, k_w2, k_sf, k_sc = jax.random.split(key, 5)

    B, C_in, H_img, W_img = 8, 4, 16, 16          # NCHW input
    HID, NCLS = 32, 10
    D_in = C_in * H_img * W_img

    x = jax.random.normal(k_x, (B, C_in, H_img, W_img), dtype=jnp.float32)
    x_flat = x.reshape(B, D_in)                   # NCHW flattened row-major

    params = {
        "w1": 0.05 * jax.random.normal(k_w1, (D_in, HID), dtype=jnp.float32),
        "b1": jnp.zeros((1, HID), dtype=jnp.float32),
        "w2": 0.10 * jax.random.normal(k_w2, (HID, NCLS), dtype=jnp.float32),
        "b2": jnp.zeros((1, NCLS), dtype=jnp.float32),
    }
    # statistics['cmd_base_mid'][j] ~ (1, HID)           -> stacked (M, HID)
    # statistics['cmd_base_mid_cls'][j] ~ (1, NCLS, HID) -> stacked (M, NCLS, HID)
    stats_full = 0.1 * jax.random.normal(k_sf, (FULL_MAX_MOMENT, HID), dtype=jnp.float32)
    stats_cls = 0.1 * jax.random.normal(k_sc, (CLS_MAX_MOMENT, NCLS, HID), dtype=jnp.float32)

    logits, new_params = jax.jit(adapt_forward)(params, x_flat, stats_full, stats_cls)
    jax.block_until_ready(logits)
    assert logits.shape == (B, NCLS)

    # Cross-check the fused analytic-gradient kernel against a pure-JAX
    # autodiff port of the PyTorch module.  Tolerances account for the bf16
    # operands of the dw1 matmul (f32 accumulation).
    ref_logits, ref_params = jax.jit(_reference_adapt)(params, x_flat, stats_full, stats_cls)
    jax.block_until_ready(ref_logits)
    assert bool(jnp.allclose(logits, ref_logits, atol=3e-2, rtol=3e-2)), "logits mismatch"
    assert float(jnp.linalg.norm(new_params["w1"] - ref_params["w1"])) < 2e-3, "w1 update mismatch"
    assert float(jnp.linalg.norm(new_params["b1"] - ref_params["b1"])) < 2e-3, "b1 update mismatch"

    print("KERNEL_OK")
</pallas_src>

<mosaic_0001>
module attributes {stable_mosaic.version = 11 : i64} {
  func.func @_fused_adapt_kernel(%arg0: memref<8x1024xf32, #tpu.memory_space<vmem>>, %arg1: memref<1024x32xf32, #tpu.memory_space<vmem>>, %arg2: memref<1x32xf32, #tpu.memory_space<vmem>>, %arg3: memref<32x16xf32, #tpu.memory_space<vmem>>, %arg4: memref<1x16xf32, #tpu.memory_space<vmem>>, %arg5: memref<3x32xf32, #tpu.memory_space<vmem>>, %arg6: memref<3x16x32xf32, #tpu.memory_space<vmem>>, %arg7: memref<8x16xf32, #tpu.memory_space<vmem>>, %arg8: memref<1024x32xf32, #tpu.memory_space<vmem>>, %arg9: memref<1x32xf32, #tpu.memory_space<vmem>>) attributes {dimension_semantics = [], scalar_prefetch = 0 : i64, scratch_operands = 0 : i64, tpu.core_type = #tpu.core_type<tc>} {
    %c0 = arith.constant 0 : index
    %c0_0 = arith.constant 0 : index
    %0 = vector.load %arg0[%c0, %c0_0] : memref<8x1024xf32, #tpu.memory_space<vmem>>, vector<8x1024xf32>
    %1 = arith.truncf %0 : vector<8x1024xf32> to vector<8x1024xbf16>
    %c0_1 = arith.constant 0 : index
    %c0_2 = arith.constant 0 : index
    %2 = vector.load %arg3[%c0_1, %c0_2] : memref<32x16xf32, #tpu.memory_space<vmem>>, vector<32x16xf32>
    %c0_3 = arith.constant 0 : index
    %c0_4 = arith.constant 0 : index
    %3 = vector.load %arg4[%c0_3, %c0_4] : memref<1x16xf32, #tpu.memory_space<vmem>>, vector<1x16xf32>
    %4 = tpu.iota {dimensions = array<i32: 1>} : vector<8x16xi32>
    %cst = arith.constant 1.000000e+00 : f32
    %5 = vector.broadcast %cst : f32 to vector<8x1xf32>
    %c0_5 = arith.constant 0 : index
    %c0_6 = arith.constant 0 : index
    %6 = vector.load %arg1[%c0_5, %c0_6] : memref<1024x32xf32, #tpu.memory_space<vmem>>, vector<1024x32xf32>
    %c0_7 = arith.constant 0 : index
    %c0_8 = arith.constant 0 : index
    %7 = vector.load %arg8[%c0_7, %c0_8] : memref<1024x32xf32, #tpu.memory_space<vmem>>, vector<1024x32xf32>
    tpu.vector_store %arg8[%c0_7, %c0_8], %6 {strides = array<i32>} : memref<1024x32xf32, #tpu.memory_space<vmem>>, vector<1024x32xf32>,
    %c0_9 = arith.constant 0 : index
    %c0_10 = arith.constant 0 : index
    %8 = vector.load %arg2[%c0_9, %c0_10] : memref<1x32xf32, #tpu.memory_space<vmem>>, vector<1x32xf32>
    %c0_11 = arith.constant 0 : index
    %c0_12 = arith.constant 0 : index
    %9 = vector.load %arg9[%c0_11, %c0_12] : memref<1x32xf32, #tpu.memory_space<vmem>>, vector<1x32xf32>
    tpu.vector_store %arg9[%c0_11, %c0_12], %8 {strides = array<i32>} : memref<1x32xf32, #tpu.memory_space<vmem>>, vector<1x32xf32>,
    %c0_13 = arith.constant 0 : index
    %c0_14 = arith.constant 0 : index
    %10 = vector.load %arg8[%c0_13, %c0_14] : memref<1024x32xf32, #tpu.memory_space<vmem>>, vector<1024x32xf32>
    %cst_15 = arith.constant dense<0.000000e+00> : vector<8x32xf32>
    %11 = tpu.matmul %0, %10, %cst_15 {dimension_numbers = #tpu.dot_dimension_numbers<[1], [0], [0], [1], [0, 0, 1, 1], [], []>} : vector<8x1024xf32>, vector<1024x32xf32>, vector<8x32xf32> -> vector<8x32xf32>
    %c0_16 = arith.constant 0 : index
    %c0_17 = arith.constant 0 : index
    %12 = vector.load %arg9[%c0_16, %c0_17] : memref<1x32xf32, #tpu.memory_space<vmem>>, vector<1x32xf32>
    %13 = vector.broadcast %12 : vector<1x32xf32> to vector<8x32xf32>
    %14 = arith.addf %11, %13 : vector<8x32xf32>
    %cst_18 = arith.constant dense<0.000000e+00> : vector<8x16xf32>
    %15 = tpu.matmul %14, %2, %cst_18 {dimension_numbers = #tpu.dot_dimension_numbers<[1], [0], [0], [1], [0, 0, 1, 1], [], []>} : vector<8x32xf32>, vector<32x16xf32>, vector<8x16xf32> -> vector<8x16xf32>
    %16 = vector.broadcast %3 : vector<1x16xf32> to vector<8x16xf32>
    %17 = arith.addf %15, %16 : vector<8x16xf32>
    %cst_19 = arith.constant dense<0xFF800000> : vector<8xf32>
    %18 = vector.multi_reduction <maximumf>, %17, %cst_19 [1] : vector<8x16xf32> to vector<8xf32>
    %19 = vector.shape_cast %18 : vector<8xf32> to vector<8x1xf32>
    %20 = vector.broadcast %19 : vector<8x1xf32> to vector<8x16xf32>
    %21 = arith.cmpf oeq, %17, %20 : vector<8x16xf32>
    %c16_i32 = arith.constant 16 : i32
    %22 = vector.broadcast %c16_i32 : i32 to vector<8x16xi32>
    %23 = arith.select %21, %4, %22 : vector<8x16xi1>, vector<8x16xi32>
    %cst_20 = arith.constant dense<2147483647> : vector<8xi32>
    %24 = vector.multi_reduction <minsi>, %23, %cst_20 [1] : vector<8x16xi32> to vector<8xi32>
    %25 = vector.shape_cast %24 : vector<8xi32> to vector<8x1xi32>
    %26 = vector.broadcast %25 : vector<8x1xi32> to vector<8x16xi32>
    %27 = arith.cmpi eq, %4, %26 : vector<8x16xi32>
    %28 = arith.extui %27 : vector<8x16xi1> to vector<8x16xi32>
    %29 = arith.sitofp %28 : vector<8x16xi32> to vector<8x16xf32>
    %cst_21 = arith.constant 0.000000e+00 : f32
    %30 = vector.broadcast %cst_21 : f32 to vector<8x32xf32>
    %cst_22 = arith.constant dense<0.000000e+00> : vector<32xf32>
    %31 = vector.multi_reduction <add>, %14, %cst_22 [0] : vector<8x32xf32> to vector<32xf32>
    %32 = vector.shape_cast %31 : vector<32xf32> to vector<1x32xf32>
    %cst_23 = arith.constant 1.250000e-01 : f32
    %33 = vector.broadcast %cst_23 : f32 to vector<1x32xf32>
    %34 = arith.mulf %32, %33 : vector<1x32xf32>
    %35 = vector.broadcast %34 : vector<1x32xf32> to vector<8x32xf32>
    %36 = arith.subf %14, %35 : vector<8x32xf32>
    %37 = arith.mulf %36, %36 : vector<8x32xf32>
    %38 = arith.mulf %37, %36 : vector<8x32xf32>
    %cst_24 = arith.constant dense<0.000000e+00> : vector<32xf32>
    %39 = vector.multi_reduction <add>, %36, %cst_24 [0] : vector<8x32xf32> to vector<32xf32>
    %40 = vector.shape_cast %39 : vector<32xf32> to vector<1x32xf32>
    %cst_25 = arith.constant 1.250000e-01 : f32
    %41 = vector.broadcast %cst_25 : f32 to vector<1x32xf32>
    %42 = arith.mulf %40, %41 : vector<1x32xf32>
    %cst_26 = arith.constant dense<0.000000e+00> : vector<32xf32>
    %43 = vector.multi_reduction <add>, %37, %cst_26 [0] : vector<8x32xf32> to vector<32xf32>
    %44 = vector.shape_cast %43 : vector<32xf32> to vector<1x32xf32>
    %cst_27 = arith.constant 1.250000e-01 : f32
    %45 = vector.broadcast %cst_27 : f32 to vector<1x32xf32>
    %46 = arith.mulf %44, %45 : vector<1x32xf32>
    %cst_28 = arith.constant dense<0.000000e+00> : vector<32xf32>
    %47 = vector.multi_reduction <add>, %38, %cst_28 [0] : vector<8x32xf32> to vector<32xf32>
    %48 = vector.shape_cast %47 : vector<32xf32> to vector<1x32xf32>
    %cst_29 = arith.constant 1.250000e-01 : f32
    %49 = vector.broadcast %cst_29 : f32 to vector<1x32xf32>
    %50 = arith.mulf %48, %49 : vector<1x32xf32>
    %c0_30 = arith.constant 0 : index
    %c0_31 = arith.constant 0 : index
    %51 = vector.load %arg5[%c0_30, %c0_31] : memref<3x32xf32, #tpu.memory_space<vmem>>, vector<1x32xf32>
    %52 = arith.subf %34, %51 : vector<1x32xf32>
    %53 = arith.mulf %52, %52 : vector<1x32xf32>
    %54 = vector.shape_cast %53 : vector<1x32xf32> to vector<1x1x32xf32>
    %cst_32 = arith.constant dense<0.000000e+00> : vector<1xf32>
    %55 = vector.multi_reduction <add>, %54, %cst_32 [1, 2] : vector<1x1x32xf32> to vector<1xf32>
    %56 = vector.shape_cast %55 : vector<1xf32> to vector<1x1x1xf32>
    %57 = vector.extract %56[0, 0, 0] : f32 from vector<1x1x1xf32>
    %cst_33 = arith.constant 9.99999996E-13 : f32
    %58 = arith.addf %57, %cst_33 : f32
    %59 = math.rsqrt %58 : f32
    %60 = vector.broadcast %59 : f32 to vector<1x32xf32>
    %61 = arith.mulf %52, %60 : vector<1x32xf32>
    %cst_34 = arith.constant 5.000000e-01 : f32
    %62 = vector.broadcast %cst_34 : f32 to vector<1x32xf32>
    %63 = arith.mulf %61, %62 : vector<1x32xf32>
    %cst_35 = arith.constant 1.250000e-01 : f32
    %64 = vector.broadcast %cst_35 : f32 to vector<1x32xf32>
    %65 = arith.mulf %64, %63 : vector<1x32xf32>
    %66 = vector.broadcast %65 : vector<1x32xf32> to vector<8x32xf32>
    %67 = arith.addf %30, %66 : vector<8x32xf32>
    %c1 = arith.constant 1 : index
    %c0_36 = arith.constant 0 : index
    %68 = vector.load %arg5[%c1, %c0_36] : memref<3x32xf32, #tpu.memory_space<vmem>>, vector<1x32xf32>
    %69 = arith.subf %46, %68 : vector<1x32xf32>
    %70 = arith.mulf %69, %69 : vector<1x32xf32>
    %71 = vector.shape_cast %70 : vector<1x32xf32> to vector<1x1x32xf32>
    %cst_37 = arith.constant dense<0.000000e+00> : vector<1xf32>
    %72 = vector.multi_reduction <add>, %71, %cst_37 [1, 2] : vector<1x1x32xf32> to vector<1xf32>
    %73 = vector.shape_cast %72 : vector<1xf32> to vector<1x1x1xf32>
    %74 = vector.extract %73[0, 0, 0] : f32 from vector<1x1x1xf32>
    %cst_38 = arith.constant 9.99999996E-13 : f32
    %75 = arith.addf %74, %cst_38 : f32
    %76 = math.rsqrt %75 : f32
    %77 = vector.broadcast %76 : f32 to vector<1x32xf32>
    %78 = arith.mulf %69, %77 : vector<1x32xf32>
    %cst_39 = arith.constant 2.500000e-01 : f32
    %79 = vector.broadcast %cst_39 : f32 to vector<1x32xf32>
    %80 = arith.mulf %78, %79 : vector<1x32xf32>
    %cst_40 = arith.constant 2.500000e-01 : f32
    %81 = vector.broadcast %cst_40 : f32 to vector<1x32xf32>
    %82 = arith.mulf %81, %80 : vector<1x32xf32>
    %83 = vector.broadcast %42 : vector<1x32xf32> to vector<8x32xf32>
    %84 = arith.subf %36, %83 : vector<8x32xf32>
    %85 = vector.broadcast %82 : vector<1x32xf32> to vector<8x32xf32>
    %86 = arith.mulf %85, %84 : vector<8x32xf32>
    %87 = arith.addf %67, %86 : vector<8x32xf32>
    %c2 = arith.constant 2 : index
    %c0_41 = arith.constant 0 : index
    %88 = vector.load %arg5[%c2, %c0_41] : memref<3x32xf32, #tpu.memory_space<vmem>>, vector<1x32xf32>
    %89 = arith.subf %50, %88 : vector<1x32xf32>
    %90 = arith.mulf %89, %89 : vector<1x32xf32>
    %91 = vector.shape_cast %90 : vector<1x32xf32> to vector<1x1x32xf32>
    %cst_42 = arith.constant dense<0.000000e+00> : vector<1xf32>
    %92 = vector.multi_reduction <add>, %91, %cst_42 [1, 2] : vector<1x1x32xf32> to vector<1xf32>
    %93 = vector.shape_cast %92 : vector<1xf32> to vector<1x1x1xf32>
    %94 = vector.extract %93[0, 0, 0] : f32 from vector<1x1x1xf32>
    %cst_43 = arith.constant 9.99999996E-13 : f32
    %95 = arith.addf %94, %cst_43 : f32
    %96 = math.rsqrt %95 : f32
    %97 = vector.broadcast %96 : f32 to vector<1x32xf32>
    %98 = arith.mulf %89, %97 : vector<1x32xf32>
    %cst_44 = arith.constant 1.250000e-01 : f32
    %99 = vector.broadcast %cst_44 : f32 to vector<1x32xf32>
    %100 = arith.mulf %98, %99 : vector<1x32xf32>
    %cst_45 = arith.constant 3.750000e-01 : f32
    %101 = vector.broadcast %cst_45 : f32 to vector<1x32xf32>
    %102 = arith.mulf %101, %100 : vector<1x32xf32>
    %103 = vector.broadcast %46 : vector<1x32xf32> to vector<8x32xf32>
    %104 = arith.subf %37, %103 : vector<8x32xf32>
    %105 = vector.broadcast %102 : vector<1x32xf32> to vector<8x32xf32>
    %106 = arith.mulf %105, %104 : vector<8x32xf32>
    %107 = arith.addf %87, %106 : vector<8x32xf32>
    %108 = tpu.concatenate %14, %5 in 1 : vector<8x32xf32>, vector<8x1xf32> -> vector<8x33xf32>
    %cst_46 = arith.constant dense<0.000000e+00> : vector<16x33xf32>
    %109 = tpu.matmul %29, %108, %cst_46 {dimension_numbers = #tpu.dot_dimension_numbers<[0], [0], [1], [1], [0, 1, 1, 1], [], []>} : vector<8x16xf32>, vector<8x33xf32>, vector<16x33xf32> -> vector<16x33xf32>
    %110 = vector.extract_strided_slice %109 {offsets = [0, 32], sizes = [16, 1], strides = [1, 1]} : vector<16x33xf32> to vector<16x1xf32>
    %cst_47 = arith.constant 1.000000e+00 : f32
    %111 = vector.broadcast %cst_47 : f32 to vector<16x1xf32>
    %112 = arith.maximumf %110, %111 : vector<16x1xf32>
    %cst_48 = arith.constant 1.000000e+00 : f32
    %113 = vector.broadcast %cst_48 : f32 to vector<16x1xf32>
    %114 = arith.divf %113, %112 : vector<16x1xf32>
    %cst_49 = arith.constant 1.000000e+00 : f32
    %115 = vector.broadcast %cst_49 : f32 to vector<16x1xf32>
    %116 = arith.minimumf %110, %115 : vector<16x1xf32>
    %117 = vector.shape_cast %116 : vector<16x1xf32> to vector<1x16x1xf32>
    %cst_50 = arith.constant dense<0.000000e+00> : vector<1xf32>
    %118 = vector.multi_reduction <add>, %117, %cst_50 [1, 2] : vector<1x16x1xf32> to vector<1xf32>
    %119 = vector.shape_cast %118 : vector<1xf32> to vector<1x1x1xf32>
    %120 = vector.extract %119[0, 0, 0] : f32 from vector<1x1x1xf32>
    %cst_51 = arith.constant 1.000000e+00 : f32
    %121 = arith.divf %cst_51, %120 : f32
    %122 = vector.extract_strided_slice %109 {offsets = [0, 0], sizes = [16, 32], strides = [1, 1]} : vector<16x33xf32> to vector<16x32xf32>
    %123 = vector.broadcast %114 : vector<16x1xf32> to vector<16x32xf32>
    %124 = arith.mulf %122, %123 : vector<16x32xf32>
    %cst_52 = arith.constant dense<0.000000e+00> : vector<8x32xf32>
    %125 = tpu.matmul %29, %124, %cst_52 {dimension_numbers = #tpu.dot_dimension_numbers<[1], [0], [0], [1], [0, 0, 1, 1], [], []>} : vector<8x16xf32>, vector<16x32xf32>, vector<8x32xf32> -> vector<8x32xf32>
    %126 = arith.subf %14, %125 : vector<8x32xf32>
    %127 = arith.mulf %126, %126 : vector<8x32xf32>
    %128 = arith.mulf %127, %126 : vector<8x32xf32>
    %129 = tpu.concatenate %126, %127, %128 in 1 : vector<8x32xf32>, vector<8x32xf32>, vector<8x32xf32> -> vector<8x96xf32>
    %cst_53 = arith.constant dense<0.000000e+00> : vector<16x96xf32>
    %130 = tpu.matmul %29, %129, %cst_53 {dimension_numbers = #tpu.dot_dimension_numbers<[0], [0], [1], [1], [0, 1, 1, 1], [], []>} : vector<8x16xf32>, vector<8x96xf32>, vector<16x96xf32> -> vector<16x96xf32>
    %131 = vector.extract_strided_slice %130 {offsets = [0, 0], sizes = [16, 32], strides = [1, 1]} : vector<16x96xf32> to vector<16x32xf32>
    %132 = vector.broadcast %114 : vector<16x1xf32> to vector<16x32xf32>
    %133 = arith.mulf %131, %132 : vector<16x32xf32>
    %134 = vector.extract_strided_slice %130 {offsets = [0, 32], sizes = [16, 32], strides = [1, 1]} : vector<16x96xf32> to vector<16x32xf32>
    %135 = vector.broadcast %114 : vector<16x1xf32> to vector<16x32xf32>
    %136 = arith.mulf %134, %135 : vector<16x32xf32>
    %137 = vector.extract_strided_slice %130 {offsets = [0, 64], sizes = [16, 32], strides = [1, 1]} : vector<16x96xf32> to vector<16x32xf32>
    %138 = vector.broadcast %114 : vector<16x1xf32> to vector<16x32xf32>
    %139 = arith.mulf %137, %138 : vector<16x32xf32>
    %c0_54 = arith.constant 0 : index
    %c0_55 = arith.constant 0 : index
    %c0_56 = arith.constant 0 : index
    %140 = vector.load %arg6[%c0_54, %c0_55, %c0_56] : memref<3x16x32xf32, #tpu.memory_space<vmem>>, vector<1x16x32xf32>
    %141 = vector.shape_cast %140 : vector<1x16x32xf32> to vector<16x32xf32>
    %142 = arith.subf %124, %141 : vector<16x32xf32>
    %143 = arith.mulf %142, %142 : vector<16x32xf32>
    %cst_57 = arith.constant dense<0.000000e+00> : vector<16xf32>
    %144 = vector.multi_reduction <add>, %143, %cst_57 [1] : vector<16x32xf32> to vector<16xf32>
    %145 = vector.shape_cast %144 : vector<16xf32> to vector<16x1xf32>
    %cst_58 = arith.constant 9.99999996E-13 : f32
    %146 = vector.broadcast %cst_58 : f32 to vector<16x1xf32>
    %147 = arith.addf %145, %146 : vector<16x1xf32>
    %148 = math.rsqrt %147 : vector<16x1xf32>
    %149 = arith.mulf %148, %116 : vector<16x1xf32>
    %150 = vector.broadcast %149 : vector<16x1xf32> to vector<16x32xf32>
    %151 = arith.mulf %142, %150 : vector<16x32xf32>
    %cst_59 = arith.constant 5.000000e-01 : f32
    %152 = arith.mulf %121, %cst_59 : f32
    %153 = vector.broadcast %152 : f32 to vector<16x32xf32>
    %154 = arith.mulf %151, %153 : vector<16x32xf32>
    %155 = vector.broadcast %114 : vector<16x1xf32> to vector<16x32xf32>
    %156 = arith.mulf %154, %155 : vector<16x32xf32>
    %c1_60 = arith.constant 1 : index
    %c0_61 = arith.constant 0 : index
    %c0_62 = arith.constant 0 : index
    %157 = vector.load %arg6[%c1_60, %c0_61, %c0_62] : memref<3x16x32xf32, #tpu.memory_space<vmem>>, vector<1x16x32xf32>
    %158 = vector.shape_cast %157 : vector<1x16x32xf32> to vector<16x32xf32>
    %159 = arith.subf %136, %158 : vector<16x32xf32>
    %160 = arith.mulf %159, %159 : vector<16x32xf32>
    %cst_63 = arith.constant dense<0.000000e+00> : vector<16xf32>
    %161 = vector.multi_reduction <add>, %160, %cst_63 [1] : vector<16x32xf32> to vector<16xf32>
    %162 = vector.shape_cast %161 : vector<16xf32> to vector<16x1xf32>
    %cst_64 = arith.constant 9.99999996E-13 : f32
    %163 = vector.broadcast %cst_64 : f32 to vector<16x1xf32>
    %164 = arith.addf %162, %163 : vector<16x1xf32>
    %165 = math.rsqrt %164 : vector<16x1xf32>
    %166 = arith.mulf %165, %116 : vector<16x1xf32>
    %167 = vector.broadcast %166 : vector<16x1xf32> to vector<16x32xf32>
    %168 = arith.mulf %159, %167 : vector<16x32xf32>
    %cst_65 = arith.constant 2.500000e-01 : f32
    %169 = arith.mulf %121, %cst_65 : f32
    %170 = vector.broadcast %169 : f32 to vector<16x32xf32>
    %171 = arith.mulf %168, %170 : vector<16x32xf32>
    %172 = vector.broadcast %114 : vector<16x1xf32> to vector<16x32xf32>
    %173 = arith.mulf %171, %172 : vector<16x32xf32>
    %c2_66 = arith.constant 2 : index
    %c0_67 = arith.constant 0 : index
    %c0_68 = arith.constant 0 : index
    %174 = vector.load %arg6[%c2_66, %c0_67, %c0_68] : memref<3x16x32xf32, #tpu.memory_space<vmem>>, vector<1x16x32xf32>
    %175 = vector.shape_cast %174 : vector<1x16x32xf32> to vector<16x32xf32>
    %176 = arith.subf %139, %175 : vector<16x32xf32>
    %177 = arith.mulf %176, %176 : vector<16x32xf32>
    %cst_69 = arith.constant dense<0.000000e+00> : vector<16xf32>
    %178 = vector.multi_reduction <add>, %177, %cst_69 [1] : vector<16x32xf32> to vector<16xf32>
    %179 = vector.shape_cast %178 : vector<16xf32> to vector<16x1xf32>
    %cst_70 = arith.constant 9.99999996E-13 : f32
    %180 = vector.broadcast %cst_70 : f32 to vector<16x1xf32>
    %181 = arith.addf %179, %180 : vector<16x1xf32>
    %182 = math.rsqrt %181 : vector<16x1xf32>
    %183 = arith.mulf %182, %116 : vector<16x1xf32>
    %184 = vector.broadcast %183 : vector<16x1xf32> to vector<16x32xf32>
    %185 = arith.mulf %176, %184 : vector<16x32xf32>
    %cst_71 = arith.constant 1.250000e-01 : f32
    %186 = arith.mulf %121, %cst_71 : f32
    %187 = vector.broadcast %186 : f32 to vector<16x32xf32>
    %188 = arith.mulf %185, %187 : vector<16x32xf32>
    %189 = vector.broadcast %114 : vector<16x1xf32> to vector<16x32xf32>
    %190 = arith.mulf %188, %189 : vector<16x32xf32>
    %191 = tpu.concatenate %156, %173, %190, %133, %136 in 1 : vector<16x32xf32>, vector<16x32xf32>, vector<16x32xf32>, vector<16x32xf32>, vector<16x32xf32> -> vector<16x160xf32>
    %cst_72 = arith.constant dense<0.000000e+00> : vector<8x160xf32>
    %192 = tpu.matmul %29, %191, %cst_72 {dimension_numbers = #tpu.dot_dimension_numbers<[1], [0], [0], [1], [0, 0, 1, 1], [], []>} : vector<8x16xf32>, vector<16x160xf32>, vector<8x160xf32> -> vector<8x160xf32>
    %193 = vector.extract_strided_slice %192 {offsets = [0, 0], sizes = [8, 32], strides = [1, 1]} : vector<8x160xf32> to vector<8x32xf32>
    %cst_73 = arith.constant 1.000000e+00 : f32
    %194 = vector.broadcast %cst_73 : f32 to vector<8x32xf32>
    %195 = arith.mulf %194, %193 : vector<8x32xf32>
    %196 = arith.addf %107, %195 : vector<8x32xf32>
    %197 = vector.extract_strided_slice %192 {offsets = [0, 32], sizes = [8, 32], strides = [1, 1]} : vector<8x160xf32> to vector<8x32xf32>
    %198 = vector.extract_strided_slice %192 {offsets = [0, 96], sizes = [8, 32], strides = [1, 1]} : vector<8x160xf32> to vector<8x32xf32>
    %cst_74 = arith.constant 2.000000e+00 : f32
    %199 = vector.broadcast %cst_74 : f32 to vector<8x32xf32>
    %200 = arith.mulf %199, %197 : vector<8x32xf32>
    %201 = arith.subf %126, %198 : vector<8x32xf32>
    %202 = arith.mulf %200, %201 : vector<8x32xf32>
    %203 = arith.addf %196, %202 : vector<8x32xf32>
    %204 = vector.extract_strided_slice %192 {offsets = [0, 64], sizes = [8, 32], strides = [1, 1]} : vector<8x160xf32> to vector<8x32xf32>
    %205 = vector.extract_strided_slice %192 {offsets = [0, 128], sizes = [8, 32], strides = [1, 1]} : vector<8x160xf32> to vector<8x32xf32>
    %cst_75 = arith.constant 3.000000e+00 : f32
    %206 = vector.broadcast %cst_75 : f32 to vector<8x32xf32>
    %207 = arith.mulf %206, %204 : vector<8x32xf32>
    %208 = arith.subf %127, %205 : vector<8x32xf32>
    %209 = arith.mulf %207, %208 : vector<8x32xf32>
    %210 = arith.addf %203, %209 : vector<8x32xf32>
    %211 = arith.truncf %210 : vector<8x32xf32> to vector<8x32xbf16>
    %cst_76 = arith.constant dense<0.000000e+00> : vector<1024x32xf32>
    %212 = tpu.matmul %1, %211, %cst_76 {dimension_numbers = #tpu.dot_dimension_numbers<[0], [0], [1], [1], [0, 1, 1, 1], [], []>} : vector<8x1024xbf16>, vector<8x32xbf16>, vector<1024x32xf32> -> vector<1024x32xf32>
    %cst_77 = arith.constant dense<0.000000e+00> : vector<32xf32>
    %213 = vector.multi_reduction <add>, %210, %cst_77 [0] : vector<8x32xf32> to vector<32xf32>
    %214 = vector.shape_cast %213 : vector<32xf32> to vector<1x32xf32>
    %215 = arith.mulf %212, %212 : vector<1024x32xf32>
    %216 = vector.shape_cast %215 : vector<1024x32xf32> to vector<1x1024x32xf32>
    %cst_78 = arith.constant dense<0.000000e+00> : vector<1xf32>
    %217 = vector.multi_reduction <add>, %216, %cst_78 [1, 2] : vector<1x1024x32xf32> to vector<1xf32>
    %218 = vector.shape_cast %217 : vector<1xf32> to vector<1x1x1xf32>
    %219 = vector.extract %218[0, 0, 0] : f32 from vector<1x1x1xf32>
    %220 = arith.mulf %214, %214 : vector<1x32xf32>
    %221 = vector.shape_cast %220 : vector<1x32xf32> to vector<1x1x32xf32>
    %cst_79 = arith.constant dense<0.000000e+00> : vector<1xf32>
    %222 = vector.multi_reduction <add>, %221, %cst_79 [1, 2] : vector<1x1x32xf32> to vector<1xf32>
    %223 = vector.shape_cast %222 : vector<1xf32> to vector<1x1x1xf32>
    %224 = vector.extract %223[0, 0, 0] : f32 from vector<1x1x1xf32>
    %225 = arith.addf %219, %224 : f32
    %226 = math.sqrt %225 : f32
    %cst_80 = arith.constant 9.99999997E-7 : f32
    %227 = arith.addf %226, %cst_80 : f32
    %cst_81 = arith.constant 1.000000e+00 : f32
    %228 = arith.divf %cst_81, %227 : f32
    %cst_82 = arith.constant 1.000000e+00 : f32
    %229 = arith.minimumf %228, %cst_82 : f32
    %cst_83 = arith.constant 0.00999999977 : f32
    %230 = arith.mulf %cst_83, %229 : f32
    %c0_84 = arith.constant 0 : index
    %c0_85 = arith.constant 0 : index
    %231 = vector.load %arg8[%c0_84, %c0_85] : memref<1024x32xf32, #tpu.memory_space<vmem>>, vector<1024x32xf32>
    %232 = vector.broadcast %230 : f32 to vector<1024x32xf32>
    %233 = arith.mulf %232, %212 : vector<1024x32xf32>
    %234 = arith.subf %231, %233 : vector<1024x32xf32>
    %c0_86 = arith.constant 0 : index
    %c0_87 = arith.constant 0 : index
    %235 = vector.load %arg8[%c0_86, %c0_87] : memref<1024x32xf32, #tpu.memory_space<vmem>>, vector<1024x32xf32>
    tpu.vector_store %arg8[%c0_86, %c0_87], %234 {strides = array<i32>} : memref<1024x32xf32, #tpu.memory_space<vmem>>, vector<1024x32xf32>,
    %c0_88 = arith.constant 0 : index
    %c0_89 = arith.constant 0 : index
    %236 = vector.load %arg9[%c0_88, %c0_89] : memref<1x32xf32, #tpu.memory_space<vmem>>, vector<1x32xf32>
    %237 = vector.broadcast %230 : f32 to vector<1x32xf32>
    %238 = arith.mulf %237, %214 : vector<1x32xf32>
    %239 = arith.subf %236, %238 : vector<1x32xf32>
    %c0_90 = arith.constant 0 : index
    %c0_91 = arith.constant 0 : index
    %240 = vector.load %arg9[%c0_90, %c0_91] : memref<1x32xf32, #tpu.memory_space<vmem>>, vector<1x32xf32>
    tpu.vector_store %arg9[%c0_90, %c0_91], %239 {strides = array<i32>} : memref<1x32xf32, #tpu.memory_space<vmem>>, vector<1x32xf32>,
    %c0_92 = arith.constant 0 : index
    %c0_93 = arith.constant 0 : index
    %241 = vector.load %arg7[%c0_92, %c0_93] : memref<8x16xf32, #tpu.memory_space<vmem>>, vector<8x16xf32>
    tpu.vector_store %arg7[%c0_92, %c0_93], %17 {strides = array<i32>} : memref<8x16xf32, #tpu.memory_space<vmem>>, vector<8x16xf32>,
    %c0_94 = arith.constant 0 : index
    %c0_95 = arith.constant 0 : index
    %242 = vector.load %arg8[%c0_94, %c0_95] : memref<1024x32xf32, #tpu.memory_space<vmem>>, vector<1024x32xf32>
    %cst_96 = arith.constant dense<0.000000e+00> : vector<8x32xf32>
    %243 = tpu.matmul %0, %242, %cst_96 {dimension_numbers = #tpu.dot_dimension_numbers<[1], [0], [0], [1], [0, 0, 1, 1], [], []>} : vector<8x1024xf32>, vector<1024x32xf32>, vector<8x32xf32> -> vector<8x32xf32>
    %c0_97 = arith.constant 0 : index
    %c0_98 = arith.constant 0 : index
    %244 = vector.load %arg9[%c0_97, %c0_98] : memref<1x32xf32, #tpu.memory_space<vmem>>, vector<1x32xf32>
    %245 = vector.broadcast %244 : vector<1x32xf32> to vector<8x32xf32>
    %246 = arith.addf %243, %245 : vector<8x32xf32>
    %cst_99 = arith.constant dense<0.000000e+00> : vector<8x16xf32>
    %247 = tpu.matmul %246, %2, %cst_99 {dimension_numbers = #tpu.dot_dimension_numbers<[1], [0], [0], [1], [0, 0, 1, 1], [], []>} : vector<8x32xf32>, vector<32x16xf32>, vector<8x16xf32> -> vector<8x16xf32>
    %248 = vector.broadcast %3 : vector<1x16xf32> to vector<8x16xf32>
    %249 = arith.addf %247, %248 : vector<8x16xf32>
    %cst_100 = arith.constant dense<0xFF800000> : vector<8xf32>
    %250 = vector.multi_reduction <maximumf>, %249, %cst_100 [1] : vector<8x16xf32> to vector<8xf32>
    %251 = vector.shape_cast %250 : vector<8xf32> to vector<8x1xf32>
    %252 = vector.broadcast %251 : vector<8x1xf32> to vector<8x16xf32>
    %253 = arith.cmpf oeq, %249, %252 : vector<8x16xf32>
    %c16_i32_101 = arith.constant 16 : i32
    %254 = vector.broadcast %c16_i32_101 : i32 to vector<8x16xi32>
    %255 = arith.select %253, %4, %254 : vector<8x16xi1>, vector<8x16xi32>
    %cst_102 = arith.constant dense<2147483647> : vector<8xi32>
    %256 = vector.multi_reduction <minsi>, %255, %cst_102 [1] : vector<8x16xi32> to vector<8xi32>
    %257 = vector.shape_cast %256 : vector<8xi32> to vector<8x1xi32>
    %258 = vector.broadcast %257 : vector<8x1xi32> to vector<8x16xi32>
    %259 = arith.cmpi eq, %4, %258 : vector<8x16xi32>
    %260 = arith.extui %259 : vector<8x16xi1> to vector<8x16xi32>
    %261 = arith.sitofp %260 : vector<8x16xi32> to vector<8x16xf32>
    %cst_103 = arith.constant 0.000000e+00 : f32
    %262 = vector.broadcast %cst_103 : f32 to vector<8x32xf32>
    %cst_104 = arith.constant dense<0.000000e+00> : vector<32xf32>
    %263 = vector.multi_reduction <add>, %246, %cst_104 [0] : vector<8x32xf32> to vector<32xf32>
    %264 = vector.shape_cast %263 : vector<32xf32> to vector<1x32xf32>
    %cst_105 = arith.constant 1.250000e-01 : f32
    %265 = vector.broadcast %cst_105 : f32 to vector<1x32xf32>
    %266 = arith.mulf %264, %265 : vector<1x32xf32>
    %267 = vector.broadcast %266 : vector<1x32xf32> to vector<8x32xf32>
    %268 = arith.subf %246, %267 : vector<8x32xf32>
    %269 = arith.mulf %268, %268 : vector<8x32xf32>
    %270 = arith.mulf %269, %268 : vector<8x32xf32>
    %cst_106 = arith.constant dense<0.000000e+00> : vector<32xf32>
    %271 = vector.multi_reduction <add>, %268, %cst_106 [0] : vector<8x32xf32> to vector<32xf32>
    %272 = vector.shape_cast %271 : vector<32xf32> to vector<1x32xf32>
    %cst_107 = arith.constant 1.250000e-01 : f32
    %273 = vector.broadcast %cst_107 : f32 to vector<1x32xf32>
    %274 = arith.mulf %272, %273 : vector<1x32xf32>
    %cst_108 = arith.constant dense<0.000000e+00> : vector<32xf32>
    %275 = vector.multi_reduction <add>, %269, %cst_108 [0] : vector<8x32xf32> to vector<32xf32>
    %276 = vector.shape_cast %275 : vector<32xf32> to vector<1x32xf32>
    %cst_109 = arith.constant 1.250000e-01 : f32
    %277 = vector.broadcast %cst_109 : f32 to vector<1x32xf32>
    %278 = arith.mulf %276, %277 : vector<1x32xf32>
    %cst_110 = arith.constant dense<0.000000e+00> : vector<32xf32>
    %279 = vector.multi_reduction <add>, %270, %cst_110 [0] : vector<8x32xf32> to vector<32xf32>
    %280 = vector.shape_cast %279 : vector<32xf32> to vector<1x32xf32>
    %cst_111 = arith.constant 1.250000e-01 : f32
    %281 = vector.broadcast %cst_111 : f32 to vector<1x32xf32>
    %282 = arith.mulf %280, %281 : vector<1x32xf32>
    %c0_112 = arith.constant 0 : index
    %c0_113 = arith.constant 0 : index
    %283 = vector.load %arg5[%c0_112, %c0_113] : memref<3x32xf32, #tpu.memory_space<vmem>>, vector<1x32xf32>
    %284 = arith.subf %266, %283 : vector<1x32xf32>
    %285 = arith.mulf %284, %284 : vector<1x32xf32>
    %286 = vector.shape_cast %285 : vector<1x32xf32> to vector<1x1x32xf32>
    %cst_114 = arith.constant dense<0.000000e+00> : vector<1xf32>
    %287 = vector.multi_reduction <add>, %286, %cst_114 [1, 2] : vector<1x1x32xf32> to vector<1xf32>
    %288 = vector.shape_cast %287 : vector<1xf32> to vector<1x1x1xf32>
    %289 = vector.extract %288[0, 0, 0] : f32 from vector<1x1x1xf32>
    %cst_115 = arith.constant 9.99999996E-13 : f32
    %290 = arith.addf %289, %cst_115 : f32
    %291 = math.rsqrt %290 : f32
    %292 = vector.broadcast %291 : f32 to vector<1x32xf32>
    %293 = arith.mulf %284, %292 : vector<1x32xf32>
    %cst_116 = arith.constant 5.000000e-01 : f32
    %294 = vector.broadcast %cst_116 : f32 to vector<1x32xf32>
    %295 = arith.mulf %293, %294 : vector<1x32xf32>
    %cst_117 = arith.constant 1.250000e-01 : f32
    %296 = vector.broadcast %cst_117 : f32 to vector<1x32xf32>
    %297 = arith.mulf %296, %295 : vector<1x32xf32>
    %298 = vector.broadcast %297 : vector<1x32xf32> to vector<8x32xf32>
    %299 = arith.addf %262, %298 : vector<8x32xf32>
    %c1_118 = arith.constant 1 : index
    %c0_119 = arith.constant 0 : index
    %300 = vector.load %arg5[%c1_118, %c0_119] : memref<3x32xf32, #tpu.memory_space<vmem>>, vector<1x32xf32>
    %301 = arith.subf %278, %300 : vector<1x32xf32>
    %302 = arith.mulf %301, %301 : vector<1x32xf32>
    %303 = vector.shape_cast %302 : vector<1x32xf32> to vector<1x1x32xf32>
    %cst_120 = arith.constant dense<0.000000e+00> : vector<1xf32>
    %304 = vector.multi_reduction <add>, %303, %cst_120 [1, 2] : vector<1x1x32xf32> to vector<1xf32>
    %305 = vector.shape_cast %304 : vector<1xf32> to vector<1x1x1xf32>
    %306 = vector.extract %305[0, 0, 0] : f32 from vector<1x1x1xf32>
    %cst_121 = arith.constant 9.99999996E-13 : f32
    %307 = arith.addf %306, %cst_121 : f32
    %308 = math.rsqrt %307 : f32
    %309 = vector.broadcast %308 : f32 to vector<1x32xf32>
    %310 = arith.mulf %301, %309 : vector<1x32xf32>
    %cst_122 = arith.constant 2.500000e-01 : f32
    %311 = vector.broadcast %cst_122 : f32 to vector<1x32xf32>
    %312 = arith.mulf %310, %311 : vector<1x32xf32>
    %cst_123 = arith.constant 2.500000e-01 : f32
    %313 = vector.broadcast %cst_123 : f32 to vector<1x32xf32>
    %314 = arith.mulf %313, %312 : vector<1x32xf32>
    %315 = vector.broadcast %274 : vector<1x32xf32> to vector<8x32xf32>
    %316 = arith.subf %268, %315 : vector<8x32xf32>
    %317 = vector.broadcast %314 : vector<1x32xf32> to vector<8x32xf32>
    %318 = arith.mulf %317, %316 : vector<8x32xf32>
    %319 = arith.addf %299, %318 : vector<8x32xf32>
    %c2_124 = arith.constant 2 : index
    %c0_125 = arith.constant 0 : index
    %320 = vector.load %arg5[%c2_124, %c0_125] : memref<3x32xf32, #tpu.memory_space<vmem>>, vector<1x32xf32>
    %321 = arith.subf %282, %320 : vector<1x32xf32>
    %322 = arith.mulf %321, %321 : vector<1x32xf32>
    %323 = vector.shape_cast %322 : vector<1x32xf32> to vector<1x1x32xf32>
    %cst_126 = arith.constant dense<0.000000e+00> : vector<1xf32>
    %324 = vector.multi_reduction <add>, %323, %cst_126 [1, 2] : vector<1x1x32xf32> to vector<1xf32>
    %325 = vector.shape_cast %324 : vector<1xf32> to vector<1x1x1xf32>
    %326 = vector.extract %325[0, 0, 0] : f32 from vector<1x1x1xf32>
    %cst_127 = arith.constant 9.99999996E-13 : f32
    %327 = arith.addf %326, %cst_127 : f32
    %328 = math.rsqrt %327 : f32
    %329 = vector.broadcast %328 : f32 to vector<1x32xf32>
    %330 = arith.mulf %321, %329 : vector<1x32xf32>
    %cst_128 = arith.constant 1.250000e-01 : f32
    %331 = vector.broadcast %cst_128 : f32 to vector<1x32xf32>
    %332 = arith.mulf %330, %331 : vector<1x32xf32>
    %cst_129 = arith.constant 3.750000e-01 : f32
    %333 = vector.broadcast %cst_129 : f32 to vector<1x32xf32>
    %334 = arith.mulf %333, %332 : vector<1x32xf32>
    %335 = vector.broadcast %278 : vector<1x32xf32> to vector<8x32xf32>
    %336 = arith.subf %269, %335 : vector<8x32xf32>
    %337 = vector.broadcast %334 : vector<1x32xf32> to vector<8x32xf32>
    %338 = arith.mulf %337, %336 : vector<8x32xf32>
    %339 = arith.addf %319, %338 : vector<8x32xf32>
    %340 = tpu.concatenate %246, %5 in 1 : vector<8x32xf32>, vector<8x1xf32> -> vector<8x33xf32>
    %cst_130 = arith.constant dense<0.000000e+00> : vector<16x33xf32>
    %341 = tpu.matmul %261, %340, %cst_130 {dimension_numbers = #tpu.dot_dimension_numbers<[0], [0], [1], [1], [0, 1, 1, 1], [], []>} : vector<8x16xf32>, vector<8x33xf32>, vector<16x33xf32> -> vector<16x33xf32>
    %342 = vector.extract_strided_slice %341 {offsets = [0, 32], sizes = [16, 1], strides = [1, 1]} : vector<16x33xf32> to vector<16x1xf32>
    %cst_131 = arith.constant 1.000000e+00 : f32
    %343 = vector.broadcast %cst_131 : f32 to vector<16x1xf32>
    %344 = arith.maximumf %342, %343 : vector<16x1xf32>
    %cst_132 = arith.constant 1.000000e+00 : f32
    %345 = vector.broadcast %cst_132 : f32 to vector<16x1xf32>
    %346 = arith.divf %345, %344 : vector<16x1xf32>
    %cst_133 = arith.constant 1.000000e+00 : f32
    %347 = vector.broadcast %cst_133 : f32 to vector<16x1xf32>
    %348 = arith.minimumf %342, %347 : vector<16x1xf32>
    %349 = vector.shape_cast %348 : vector<16x1xf32> to vector<1x16x1xf32>
    %cst_134 = arith.constant dense<0.000000e+00> : vector<1xf32>
    %350 = vector.multi_reduction <add>, %349, %cst_134 [1, 2] : vector<1x16x1xf32> to vector<1xf32>
    %351 = vector.shape_cast %350 : vector<1xf32> to vector<1x1x1xf32>
    %352 = vector.extract %351[0, 0, 0] : f32 from vector<1x1x1xf32>
    %cst_135 = arith.constant 1.000000e+00 : f32
    %353 = arith.divf %cst_135, %352 : f32
    %354 = vector.extract_strided_slice %341 {offsets = [0, 0], sizes = [16, 32], strides = [1, 1]} : vector<16x33xf32> to vector<16x32xf32>
    %355 = vector.broadcast %346 : vector<16x1xf32> to vector<16x32xf32>
    %356 = arith.mulf %354, %355 : vector<16x32xf32>
    %cst_136 = arith.constant dense<0.000000e+00> : vector<8x32xf32>
    %357 = tpu.matmul %261, %356, %cst_136 {dimension_numbers = #tpu.dot_dimension_numbers<[1], [0], [0], [1], [0, 0, 1, 1], [], []>} : vector<8x16xf32>, vector<16x32xf32>, vector<8x32xf32> -> vector<8x32xf32>
    %358 = arith.subf %246, %357 : vector<8x32xf32>
    %359 = arith.mulf %358, %358 : vector<8x32xf32>
    %360 = arith.mulf %359, %358 : vector<8x32xf32>
    %361 = tpu.concatenate %358, %359, %360 in 1 : vector<8x32xf32>, vector<8x32xf32>, vector<8x32xf32> -> vector<8x96xf32>
    %cst_137 = arith.constant dense<0.000000e+00> : vector<16x96xf32>
    %362 = tpu.matmul %261, %361, %cst_137 {dimension_numbers = #tpu.dot_dimension_numbers<[0], [0], [1], [1], [0, 1, 1, 1], [], []>} : vector<8x16xf32>, vector<8x96xf32>, vector<16x96xf32> -> vector<16x96xf32>
    %363 = vector.extract_strided_slice %362 {offsets = [0, 0], sizes = [16, 32], strides = [1, 1]} : vector<16x96xf32> to vector<16x32xf32>
    %364 = vector.broadcast %346 : vector<16x1xf32> to vector<16x32xf32>
    %365 = arith.mulf %363, %364 : vector<16x32xf32>
    %366 = vector.extract_strided_slice %362 {offsets = [0, 32], sizes = [16, 32], strides = [1, 1]} : vector<16x96xf32> to vector<16x32xf32>
    %367 = vector.broadcast %346 : vector<16x1xf32> to vector<16x32xf32>
    %368 = arith.mulf %366, %367 : vector<16x32xf32>
    %369 = vector.extract_strided_slice %362 {offsets = [0, 64], sizes = [16, 32], strides = [1, 1]} : vector<16x96xf32> to vector<16x32xf32>
    %370 = vector.broadcast %346 : vector<16x1xf32> to vector<16x32xf32>
    %371 = arith.mulf %369, %370 : vector<16x32xf32>
    %c0_138 = arith.constant 0 : index
    %c0_139 = arith.constant 0 : index
    %c0_140 = arith.constant 0 : index
    %372 = vector.load %arg6[%c0_138, %c0_139, %c0_140] : memref<3x16x32xf32, #tpu.memory_space<vmem>>, vector<1x16x32xf32>
    %373 = vector.shape_cast %372 : vector<1x16x32xf32> to vector<16x32xf32>
    %374 = arith.subf %356, %373 : vector<16x32xf32>
    %375 = arith.mulf %374, %374 : vector<16x32xf32>
    %cst_141 = arith.constant dense<0.000000e+00> : vector<16xf32>
    %376 = vector.multi_reduction <add>, %375, %cst_141 [1] : vector<16x32xf32> to vector<16xf32>
    %377 = vector.shape_cast %376 : vector<16xf32> to vector<16x1xf32>
    %cst_142 = arith.constant 9.99999996E-13 : f32
    %378 = vector.broadcast %cst_142 : f32 to vector<16x1xf32>
    %379 = arith.addf %377, %378 : vector<16x1xf32>
    %380 = math.rsqrt %379 : vector<16x1xf32>
    %381 = arith.mulf %380, %348 : vector<16x1xf32>
    %382 = vector.broadcast %381 : vector<16x1xf32> to vector<16x32xf32>
    %383 = arith.mulf %374, %382 : vector<16x32xf32>
    %cst_143 = arith.constant 5.000000e-01 : f32
    %384 = arith.mulf %353, %cst_143 : f32
    %385 = vector.broadcast %384 : f32 to vector<16x32xf32>
    %386 = arith.mulf %383, %385 : vector<16x32xf32>
    %387 = vector.broadcast %346 : vector<16x1xf32> to vector<16x32xf32>
    %388 = arith.mulf %386, %387 : vector<16x32xf32>
    %c1_144 = arith.constant 1 : index
    %c0_145 = arith.constant 0 : index
    %c0_146 = arith.constant 0 : index
    %389 = vector.load %arg6[%c1_144, %c0_145, %c0_146] : memref<3x16x32xf32, #tpu.memory_space<vmem>>, vector<1x16x32xf32>
    %390 = vector.shape_cast %389 : vector<1x16x32xf32> to vector<16x32xf32>
    %391 = arith.subf %368, %390 : vector<16x32xf32>
    %392 = arith.mulf %391, %391 : vector<16x32xf32>
    %cst_147 = arith.constant dense<0.000000e+00> : vector<16xf32>
    %393 = vector.multi_reduction <add>, %392, %cst_147 [1] : vector<16x32xf32> to vector<16xf32>
    %394 = vector.shape_cast %393 : vector<16xf32> to vector<16x1xf32>
    %cst_148 = arith.constant 9.99999996E-13 : f32
    %395 = vector.broadcast %cst_148 : f32 to vector<16x1xf32>
    %396 = arith.addf %394, %395 : vector<16x1xf32>
    %397 = math.rsqrt %396 : vector<16x1xf32>
    %398 = arith.mulf %397, %348 : vector<16x1xf32>
    %399 = vector.broadcast %398 : vector<16x1xf32> to vector<16x32xf32>
    %400 = arith.mulf %391, %399 : vector<16x32xf32>
    %cst_149 = arith.constant 2.500000e-01 : f32
    %401 = arith.mulf %353, %cst_149 : f32
    %402 = vector.broadcast %401 : f32 to vector<16x32xf32>
    %403 = arith.mulf %400, %402 : vector<16x32xf32>
    %404 = vector.broadcast %346 : vector<16x1xf32> to vector<16x32xf32>
    %405 = arith.mulf %403, %404 : vector<16x32xf32>
    %c2_150 = arith.constant 2 : index
    %c0_151 = arith.constant 0 : index
    %c0_152 = arith.constant 0 : index
    %406 = vector.load %arg6[%c2_150, %c0_151, %c0_152] : memref<3x16x32xf32, #tpu.memory_space<vmem>>, vector<1x16x32xf32>
    %407 = vector.shape_cast %406 : vector<1x16x32xf32> to vector<16x32xf32>
    %408 = arith.subf %371, %407 : vector<16x32xf32>
    %409 = arith.mulf %408, %408 : vector<16x32xf32>
    %cst_153 = arith.constant dense<0.000000e+00> : vector<16xf32>
    %410 = vector.multi_reduction <add>, %409, %cst_153 [1] : vector<16x32xf32> to vector<16xf32>
    %411 = vector.shape_cast %410 : vector<16xf32> to vector<16x1xf32>
    %cst_154 = arith.constant 9.99999996E-13 : f32
    %412 = vector.broadcast %cst_154 : f32 to vector<16x1xf32>
    %413 = arith.addf %411, %412 : vector<16x1xf32>
    %414 = math.rsqrt %413 : vector<16x1xf32>
    %415 = arith.mulf %414, %348 : vector<16x1xf32>
    %416 = vector.broadcast %415 : vector<16x1xf32> to vector<16x32xf32>
    %417 = arith.mulf %408, %416 : vector<16x32xf32>
    %cst_155 = arith.constant 1.250000e-01 : f32
    %418 = arith.mulf %353, %cst_155 : f32
    %419 = vector.broadcast %418 : f32 to vector<16x32xf32>
    %420 = arith.mulf %417, %419 : vector<16x32xf32>
    %421 = vector.broadcast %346 : vector<16x1xf32> to vector<16x32xf32>
    %422 = arith.mulf %420, %421 : vector<16x32xf32>
    %423 = tpu.concatenate %388, %405, %422, %365, %368 in 1 : vector<16x32xf32>, vector<16x32xf32>, vector<16x32xf32>, vector<16x32xf32>, vector<16x32xf32> -> vector<16x160xf32>
    %cst_156 = arith.constant dense<0.000000e+00> : vector<8x160xf32>
    %424 = tpu.matmul %261, %423, %cst_156 {dimension_numbers = #tpu.dot_dimension_numbers<[1], [0], [0], [1], [0, 0, 1, 1], [], []>} : vector<8x16xf32>, vector<16x160xf32>, vector<8x160xf32> -> vector<8x160xf32>
    %425 = vector.extract_strided_slice %424 {offsets = [0, 0], sizes = [8, 32], strides = [1, 1]} : vector<8x160xf32> to vector<8x32xf32>
    %cst_157 = arith.constant 1.000000e+00 : f32
    %426 = vector.broadcast %cst_157 : f32 to vector<8x32xf32>
    %427 = arith.mulf %426, %425 : vector<8x32xf32>
    %428 = arith.addf %339, %427 : vector<8x32xf32>
    %429 = vector.extract_strided_slice %424 {offsets = [0, 32], sizes = [8, 32], strides = [1, 1]} : vector<8x160xf32> to vector<8x32xf32>
    %430 = vector.extract_strided_slice %424 {offsets = [0, 96], sizes = [8, 32], strides = [1, 1]} : vector<8x160xf32> to vector<8x32xf32>
    %cst_158 = arith.constant 2.000000e+00 : f32
    %431 = vector.broadcast %cst_158 : f32 to vector<8x32xf32>
    %432 = arith.mulf %431, %429 : vector<8x32xf32>
    %433 = arith.subf %358, %430 : vector<8x32xf32>
    %434 = arith.mulf %432, %433 : vector<8x32xf32>
    %435 = arith.addf %428, %434 : vector<8x32xf32>
    %436 = vector.extract_strided_slice %424 {offsets = [0, 64], sizes = [8, 32], strides = [1, 1]} : vector<8x160xf32> to vector<8x32xf32>
    %437 = vector.extract_strided_slice %424 {offsets = [0, 128], sizes = [8, 32], strides = [1, 1]} : vector<8x160xf32> to vector<8x32xf32>
    %cst_159 = arith.constant 3.000000e+00 : f32
    %438 = vector.broadcast %cst_159 : f32 to vector<8x32xf32>
    %439 = arith.mulf %438, %436 : vector<8x32xf32>
    %440 = arith.subf %359, %437 : vector<8x32xf32>
    %441 = arith.mulf %439, %440 : vector<8x32xf32>
    %442 = arith.addf %435, %441 : vector<8x32xf32>
    %443 = arith.truncf %442 : vector<8x32xf32> to vector<8x32xbf16>
    %cst_160 = arith.constant dense<0.000000e+00> : vector<1024x32xf32>
    %444 = tpu.matmul %1, %443, %cst_160 {dimension_numbers = #tpu.dot_dimension_numbers<[0], [0], [1], [1], [0, 1, 1, 1], [], []>} : vector<8x1024xbf16>, vector<8x32xbf16>, vector<1024x32xf32> -> vector<1024x32xf32>
    %cst_161 = arith.constant dense<0.000000e+00> : vector<32xf32>
    %445 = vector.multi_reduction <add>, %442, %cst_161 [0] : vector<8x32xf32> to vector<32xf32>
    %446 = vector.shape_cast %445 : vector<32xf32> to vector<1x32xf32>
    %447 = arith.mulf %444, %444 : vector<1024x32xf32>
    %448 = vector.shape_cast %447 : vector<1024x32xf32> to vector<1x1024x32xf32>
    %cst_162 = arith.constant dense<0.000000e+00> : vector<1xf32>
    %449 = vector.multi_reduction <add>, %448, %cst_162 [1, 2] : vector<1x1024x32xf32> to vector<1xf32>
    %450 = vector.shape_cast %449 : vector<1xf32> to vector<1x1x1xf32>
    %451 = vector.extract %450[0, 0, 0] : f32 from vector<1x1x1xf32>
    %452 = arith.mulf %446, %446 : vector<1x32xf32>
    %453 = vector.shape_cast %452 : vector<1x32xf32> to vector<1x1x32xf32>
    %cst_163 = arith.constant dense<0.000000e+00> : vector<1xf32>
    %454 = vector.multi_reduction <add>, %453, %cst_163 [1, 2] : vector<1x1x32xf32> to vector<1xf32>
    %455 = vector.shape_cast %454 : vector<1xf32> to vector<1x1x1xf32>
    %456 = vector.extract %455[0, 0, 0] : f32 from vector<1x1x1xf32>
    %457 = arith.addf %451, %456 : f32
    %458 = math.sqrt %457 : f32
    %cst_164 = arith.constant 9.99999997E-7 : f32
    %459 = arith.addf %458, %cst_164 : f32
    %cst_165 = arith.constant 1.000000e+00 : f32
    %460 = arith.divf %cst_165, %459 : f32
    %cst_166 = arith.constant 1.000000e+00 : f32
    %461 = arith.minimumf %460, %cst_166 : f32
    %cst_167 = arith.constant 0.00999999977 : f32
    %462 = arith.mulf %cst_167, %461 : f32
    %c0_168 = arith.constant 0 : index
    %c0_169 = arith.constant 0 : index
    %463 = vector.load %arg8[%c0_168, %c0_169] : memref<1024x32xf32, #tpu.memory_space<vmem>>, vector<1024x32xf32>
    %464 = vector.broadcast %462 : f32 to vector<1024x32xf32>
    %465 = arith.mulf %464, %444 : vector<1024x32xf32>
    %466 = arith.subf %463, %465 : vector<1024x32xf32>
    %c0_170 = arith.constant 0 : index
    %c0_171 = arith.constant 0 : index
    %467 = vector.load %arg8[%c0_170, %c0_171] : memref<1024x32xf32, #tpu.memory_space<vmem>>, vector<1024x32xf32>
    tpu.vector_store %arg8[%c0_170, %c0_171], %466 {strides = array<i32>} : memref<1024x32xf32, #tpu.memory_space<vmem>>, vector<1024x32xf32>,
    %c0_172 = arith.constant 0 : index
    %c0_173 = arith.constant 0 : index
    %468 = vector.load %arg9[%c0_172, %c0_173] : memref<1x32xf32, #tpu.memory_space<vmem>>, vector<1x32xf32>
    %469 = vector.broadcast %462 : f32 to vector<1x32xf32>
    %470 = arith.mulf %469, %446 : vector<1x32xf32>
    %471 = arith.subf %468, %470 : vector<1x32xf32>
    %c0_174 = arith.constant 0 : index
    %c0_175 = arith.constant 0 : index
    %472 = vector.load %arg9[%c0_174, %c0_175] : memref<1x32xf32, #tpu.memory_space<vmem>>, vector<1x32xf32>
    tpu.vector_store %arg9[%c0_174, %c0_175], %471 {strides = array<i32>} : memref<1x32xf32, #tpu.memory_space<vmem>>, vector<1x32xf32>,
    %c0_176 = arith.constant 0 : index
    %c0_177 = arith.constant 0 : index
    %473 = vector.load %arg7[%c0_176, %c0_177] : memref<8x16xf32, #tpu.memory_space<vmem>>, vector<8x16xf32>
    tpu.vector_store %arg7[%c0_176, %c0_177], %249 {strides = array<i32>} : memref<8x16xf32, #tpu.memory_space<vmem>>, vector<8x16xf32>,
    return
  }
}

</mosaic_0001>

<llo_original>
// kernel: adapt_forward.1
$region0: #{adapt_forward.1}
  #allocation0 [shape = 'u32[]', space=smem, size = 0x4, offset = 0x4, fixed_abs, tag = 'smem constant byte address 0x4 - core index']
  #allocation1 [shape = 'u32[144,128]{1,0:T(1,128)}', space=vmem, size = 0x12000, scoped, tag = 'internal scratch']
  %s0 = inlined_call_operand.vmem [shape: f32[8,1024], index: 0, kind: input, shape index: {}]
  %s1 = inlined_call_operand.vmem [shape: f32[1024,32], index: 1, kind: input, shape index: {}, may-alias: {1,8}]
  %s2 = inlined_call_operand.vmem [shape: f32[1,32], index: 2, kind: input, shape index: {}, may-alias: {2,9}]
  %s3 = inlined_call_operand.vmem [shape: f32[32,16], index: 3, kind: input, shape index: {}]
  %s4 = inlined_call_operand.vmem [shape: f32[1,16], index: 4, kind: input, shape index: {}]
  %s5 = inlined_call_operand.vmem [shape: f32[3,32], index: 5, kind: input, shape index: {}]
  %s6 = inlined_call_operand.vmem [shape: f32[3,16,32], index: 6, kind: input, shape index: {}]
  %s7 = inlined_call_operand.hbm [shape: f32[8,16], index: 7, kind: output, shape index: {0}]
  %s8 = inlined_call_operand.vmem [shape: f32[1024,32], index: 8, kind: output, shape index: {1}, may-alias: {1,8}]
  %s9 = inlined_call_operand.vmem [shape: f32[1,32], index: 9, kind: output, shape index: {2}, may-alias: {2,9}]
  %10 = xla_tuple %s7, %s8, %s9
  %s11 = sld [smem:[#allocation0]]
  $region54: #{adapt_forward.1} parent=0
    _
  %s13 = ssub.s32 1, %s11
  %s14 = scalar_select 0, %s13, %s11
  $region1: #{adapt_forward.1} parent=0
    #allocation2 [shape = 'u8[4096]{0}', space=vmem, size = 0x1000, scoped, tag = 'output window, operand 0, single buffered']
    #allocation3 [shape = 's32[1]{0}', space=sflag, size = 0x4, scoped, tag = 'scoped memory for adapt_forward.1']
    %15 = vsyncpa [#allocation3], 0
    // Predicated region
    $region2: #{adapt_forward.1} parent=1 // pred_check
      _
    $region3: #{adapt_forward.1} parent=1 // pred_check_branch
      %17 = sbr.rel (0) target = $region5
    $region4: #{adapt_forward.1} parent=1 // pred_region
      _
    $region5: #{adapt_forward.1} parent=1 // pred_fallthru
      _
    // Predicated region
    $region6: #{adapt_forward.1} parent=1 // pred_check
      _
    $region7: #{adapt_forward.1} parent=1 // pred_check_branch
      %19 = sbr.rel (0) target = $region9
    $region8: #{adapt_forward.1} parent=1 // pred_region
      _
    $region9: #{adapt_forward.1} parent=1 // pred_fallthru
      _
    // Predicated region
    $region10: #{adapt_forward.1} parent=1 // pred_check
      _
    $region11: #{adapt_forward.1} parent=1 // pred_check_branch
      %21 = sbr.rel (0) target = $region13
    $region12: #{adapt_forward.1} parent=1 // pred_region
      _
    $region13: #{adapt_forward.1} parent=1 // pred_fallthru
      _
    // Predicated region
    $region14: #{adapt_forward.1} parent=1 // pred_check
      _
    $region15: #{adapt_forward.1} parent=1 // pred_check_branch
      %23 = sbr.rel (0) target = $region17
    $region16: #{adapt_forward.1} parent=1 // pred_region
      _
    $region17: #{adapt_forward.1} parent=1 // pred_fallthru
      _
    // Predicated region
    $region18: #{adapt_forward.1} parent=1 // pred_check
      _
    $region19: #{adapt_forward.1} parent=1 // pred_check_branch
      %25 = sbr.rel (0) target = $region21
    $region20: #{adapt_forward.1} parent=1 // pred_region
      _
    $region21: #{adapt_forward.1} parent=1 // pred_fallthru
      _
    // Predicated region
    $region22: #{adapt_forward.1} parent=1 // pred_check
      _
    $region23: #{adapt_forward.1} parent=1 // pred_check_branch
      %27 = sbr.rel (0) target = $region25
    $region24: #{adapt_forward.1} parent=1 // pred_region
      _
    $region25: #{adapt_forward.1} parent=1 // pred_fallthru
      _
    // Predicated region
    $region26: #{adapt_forward.1} parent=1 // pred_check
      _
    $region27: #{adapt_forward.1} parent=1 // pred_check_branch
      %29 = sbr.rel (0) target = $region29
    $region28: #{adapt_forward.1} parent=1 // pred_region
      _
    $region29: #{adapt_forward.1} parent=1 // pred_fallthru
      _
    %v31 = vld [vmem:[%s0] sm:$0xff]
    %v32 = vld [vmem:[%s0 + $0x8] sm:$0xff]
    %v33 = vld [vmem:[%s0 + $0x10] sm:$0xff]
    %v34 = vld [vmem:[%s0 + $0x18] sm:$0xff]
    %v35 = vld [vmem:[%s0 + $0x20] sm:$0xff]
    %v36 = vld [vmem:[%s0 + $0x28] sm:$0xff]
    %v37 = vld [vmem:[%s0 + $0x30] sm:$0xff]
    %v38 = vld [vmem:[%s0 + $0x38] sm:$0xff]
    %v39 = vpack.c.bf16 %v31, %v31
    %v40 = vpack.c.bf16 %v32, %v32
    %v41 = vpack.c.bf16 %v33, %v33
    %v42 = vpack.c.bf16 %v34, %v34
    %v43 = vpack.c.bf16 %v35, %v35
    %v44 = vpack.c.bf16 %v36, %v36
    %v45 = vpack.c.bf16 %v37, %v37
    %v46 = vpack.c.bf16 %v38, %v38
    %v47 = vld [vmem:[%s3] sm:$0xff]
    %v48 = vld [vmem:[%s3 + $0x8] sm:$0xff]
    %v49 = vld [vmem:[%s3 + $0x10] sm:$0xff]
    %v50 = vld [vmem:[%s3 + $0x18] sm:$0xff]
    %v51 = vld [vmem:[%s4] sm:$0x1]
    %v52 = vlaneseq
    %v53 = vand.u32 %v52, 127
    %v54 = vld [vmem:[%s1] sm:$0xff]
    %v55 = vld [vmem:[%s1 + $0x8] sm:$0xff]
    %v56 = vld [vmem:[%s1 + $0x10] sm:$0xff]
    %v57 = vld [vmem:[%s1 + $0x18] sm:$0xff]
    %v58 = vld [vmem:[%s1 + $0x20] sm:$0xff]
    %v59 = vld [vmem:[%s1 + $0x28] sm:$0xff]
    %v60 = vld [vmem:[%s1 + $0x30] sm:$0xff]
    %v61 = vld [vmem:[%s1 + $0x38] sm:$0xff]
    %v62 = vld [vmem:[%s1 + $0x40] sm:$0xff]
    %v63 = vld [vmem:[%s1 + $0x48] sm:$0xff]
    %v64 = vld [vmem:[%s1 + $0x50] sm:$0xff]
    %v65 = vld [vmem:[%s1 + $0x58] sm:$0xff]
    %v66 = vld [vmem:[%s1 + $0x60] sm:$0xff]
    %v67 = vld [vmem:[%s1 + $0x68] sm:$0xff]
    %v68 = vld [vmem:[%s1 + $0x70] sm:$0xff]
    %v69 = vld [vmem:[%s1 + $0x78] sm:$0xff]
    %v70 = vld [vmem:[%s1 + $0x80] sm:$0xff]
    %v71 = vld [vmem:[%s1 + $0x88] sm:$0xff]
    %v72 = vld [vmem:[%s1 + $0x90] sm:$0xff]
    %v73 = vld [vmem:[%s1 + $0x98] sm:$0xff]
    %v74 = vld [vmem:[%s1 + $0xa0] sm:$0xff]
    %v75 = vld [vmem:[%s1 + $0xa8] sm:$0xff]
    %v76 = vld [vmem:[%s1 + $0xb0] sm:$0xff]
    %v77 = vld [vmem:[%s1 + $0xb8] sm:$0xff]
    %v78 = vld [vmem:[%s1 + $0xc0] sm:$0xff]
    %v79 = vld [vmem:[%s1 + $0xc8] sm:$0xff]
    %v80 = vld [vmem:[%s1 + $0xd0] sm:$0xff]
    %v81 = vld [vmem:[%s1 + $0xd8] sm:$0xff]
    %v82 = vld [vmem:[%s1 + $0xe0] sm:$0xff]
    %v83 = vld [vmem:[%s1 + $0xe8] sm:$0xff]
    %v84 = vld [vmem:[%s1 + $0xf0] sm:$0xff]
    %v85 = vld [vmem:[%s1 + $0xf8] sm:$0xff]
    %v86 = vld [vmem:[%s1 + $0x100] sm:$0xff]
    %v87 = vld [vmem:[%s1 + $0x108] sm:$0xff]
    %v88 = vld [vmem:[%s1 + $0x110] sm:$0xff]
    %v89 = vld [vmem:[%s1 + $0x118] sm:$0xff]
    %v90 = vld [vmem:[%s1 + $0x120] sm:$0xff]
    %v91 = vld [vmem:[%s1 + $0x128] sm:$0xff]
    %v92 = vld [vmem:[%s1 + $0x130] sm:$0xff]
    %v93 = vld [vmem:[%s1 + $0x138] sm:$0xff]
    %v94 = vld [vmem:[%s1 + $0x140] sm:$0xff]
    %v95 = vld [vmem:[%s1 + $0x148] sm:$0xff]
    %v96 = vld [vmem:[%s1 + $0x150] sm:$0xff]
    %v97 = vld [vmem:[%s1 + $0x158] sm:$0xff]
    %v98 = vld [vmem:[%s1 + $0x160] sm:$0xff]
    %v99 = vld [vmem:[%s1 + $0x168] sm:$0xff]
    %v100 = vld [vmem:[%s1 + $0x170] sm:$0xff]
    %v101 = vld [vmem:[%s1 + $0x178] sm:$0xff]
    %v102 = vld [vmem:[%s1 + $0x180] sm:$0xff]
    %v103 = vld [vmem:[%s1 + $0x188] sm:$0xff]
    %v104 = vld [vmem:[%s1 + $0x190] sm:$0xff]
    %v105 = vld [vmem:[%s1 + $0x198] sm:$0xff]
    %v106 = vld [vmem:[%s1 + $0x1a0] sm:$0xff]
    %v107 = vld [vmem:[%s1 + $0x1a8] sm:$0xff]
    %v108 = vld [vmem:[%s1 + $0x1b0] sm:$0xff]
    %v109 = vld [vmem:[%s1 + $0x1b8] sm:$0xff]
    %v110 = vld [vmem:[%s1 + $0x1c0] sm:$0xff]
    %v111 = vld [vmem:[%s1 + $0x1c8] sm:$0xff]
    %v112 = vld [vmem:[%s1 + $0x1d0] sm:$0xff]
    %v113 = vld [vmem:[%s1 + $0x1d8] sm:$0xff]
    %v114 = vld [vmem:[%s1 + $0x1e0] sm:$0xff]
    %v115 = vld [vmem:[%s1 + $0x1e8] sm:$0xff]
    %v116 = vld [vmem:[%s1 + $0x1f0] sm:$0xff]
    %v117 = vld [vmem:[%s1 + $0x1f8] sm:$0xff]
    %v118 = vld [vmem:[%s1 + $0x200] sm:$0xff]
    %v119 = vld [vmem:[%s1 + $0x208] sm:$0xff]
    %v120 = vld [vmem:[%s1 + $0x210] sm:$0xff]
    %v121 = vld [vmem:[%s1 + $0x218] sm:$0xff]
    %v122 = vld [vmem:[%s1 + $0x220] sm:$0xff]
    %v123 = vld [vmem:[%s1 + $0x228] sm:$0xff]
    %v124 = vld [vmem:[%s1 + $0x230] sm:$0xff]
    %v125 = vld [vmem:[%s1 + $0x238] sm:$0xff]
    %v126 = vld [vmem:[%s1 + $0x240] sm:$0xff]
    %v127 = vld [vmem:[%s1 + $0x248] sm:$0xff]
    %v128 = vld [vmem:[%s1 + $0x250] sm:$0xff]
    %v129 = vld [vmem:[%s1 + $0x258] sm:$0xff]
    %v130 = vld [vmem:[%s1 + $0x260] sm:$0xff]
    %v131 = vld [vmem:[%s1 + $0x268] sm:$0xff]
    %v132 = vld [vmem:[%s1 + $0x270] sm:$0xff]
    %v133 = vld [vmem:[%s1 + $0x278] sm:$0xff]
    %v134 = vld [vmem:[%s1 + $0x280] sm:$0xff]
    %v135 = vld [vmem:[%s1 + $0x288] sm:$0xff]
    %v136 = vld [vmem:[%s1 + $0x290] sm:$0xff]
    %v137 = vld [vmem:[%s1 + $0x298] sm:$0xff]
    %v138 = vld [vmem:[%s1 + $0x2a0] sm:$0xff]
    %v139 = vld [vmem:[%s1 + $0x2a8] sm:$0xff]
    %v140 = vld [vmem:[%s1 + $0x2b0] sm:$0xff]
    %v141 = vld [vmem:[%s1 + $0x2b8] sm:$0xff]
    %v142 = vld [vmem:[%s1 + $0x2c0] sm:$0xff]
    %v143 = vld [vmem:[%s1 + $0x2c8] sm:$0xff]
    %v144 = vld [vmem:[%s1 + $0x2d0] sm:$0xff]
    %v145 = vld [vmem:[%s1 + $0x2d8] sm:$0xff]
    %v146 = vld [vmem:[%s1 + $0x2e0] sm:$0xff]
    %v147 = vld [vmem:[%s1 + $0x2e8] sm:$0xff]
    %v148 = vld [vmem:[%s1 + $0x2f0] sm:$0xff]
    %v149 = vld [vmem:[%s1 + $0x2f8] sm:$0xff]
    %v150 = vld [vmem:[%s1 + $0x300] sm:$0xff]
    %v151 = vld [vmem:[%s1 + $0x308] sm:$0xff]
    %v152 = vld [vmem:[%s1 + $0x310] sm:$0xff]
    %v153 = vld [vmem:[%s1 + $0x318] sm:$0xff]
    %v154 = vld [vmem:[%s1 + $0x320] sm:$0xff]
    %v155 = vld [vmem:[%s1 + $0x328] sm:$0xff]
    %v156 = vld [vmem:[%s1 + $0x330] sm:$0xff]
    %v157 = vld [vmem:[%s1 + $0x338] sm:$0xff]
    %v158 = vld [vmem:[%s1 + $0x340] sm:$0xff]
    %v159 = vld [vmem:[%s1 + $0x348] sm:$0xff]
    %v160 = vld [vmem:[%s1 + $0x350] sm:$0xff]
    %v161 = vld [vmem:[%s1 + $0x358] sm:$0xff]
    %v162 = vld [vmem:[%s1 + $0x360] sm:$0xff]
    %v163 = vld [vmem:[%s1 + $0x368] sm:$0xff]
    %v164 = vld [vmem:[%s1 + $0x370] sm:$0xff]
    %v165 = vld [vmem:[%s1 + $0x378] sm:$0xff]
    %v166 = vld [vmem:[%s1 + $0x380] sm:$0xff]
    %v167 = vld [vmem:[%s1 + $0x388] sm:$0xff]
    %v168 = vld [vmem:[%s1 + $0x390] sm:$0xff]
    %v169 = vld [vmem:[%s1 + $0x398] sm:$0xff]
    %v170 = vld [vmem:[%s1 + $0x3a0] sm:$0xff]
    %v171 = vld [vmem:[%s1 + $0x3a8] sm:$0xff]
    %v172 = vld [vmem:[%s1 + $0x3b0] sm:$0xff]
    %v173 = vld [vmem:[%s1 + $0x3b8] sm:$0xff]
    %v174 = vld [vmem:[%s1 + $0x3c0] sm:$0xff]
    %v175 = vld [vmem:[%s1 + $0x3c8] sm:$0xff]
    %v176 = vld [vmem:[%s1 + $0x3d0] sm:$0xff]
    %v177 = vld [vmem:[%s1 + $0x3d8] sm:$0xff]
    %v178 = vld [vmem:[%s1 + $0x3e0] sm:$0xff]
    %v179 = vld [vmem:[%s1 + $0x3e8] sm:$0xff]
    %v180 = vld [vmem:[%s1 + $0x3f0] sm:$0xff]
    %v181 = vld [vmem:[%s1 + $0x3f8] sm:$0xff]
    %vm182 = vcmask 261120
    %183 = vst.msk [vmem:[%s8] sm:$0xff] %vm182, %v54
    %184 = vst.msk [vmem:[%s8 + $0x8] sm:$0xff] %vm182, %v55
    %185 = vst.msk [vmem:[%s8 + $0x10] sm:$0xff] %vm182, %v56
    %186 = vst.msk [vmem:[%s8 + $0x18] sm:$0xff] %vm182, %v57
    %187 = vst.msk [vmem:[%s8 + $0x20] sm:$0xff] %vm182, %v58
    %188 = vst.msk [vmem:[%s8 + $0x28] sm:$0xff] %vm182, %v59
    %189 = vst.msk [vmem:[%s8 + $0x30] sm:$0xff] %vm182, %v60
    %190 = vst.msk [vmem:[%s8 + $0x38] sm:$0xff] %vm182, %v61
    %191 = vst.msk [vmem:[%s8 + $0x40] sm:$0xff] %vm182, %v62
    %192 = vst.msk [vmem:[%s8 + $0x48] sm:$0xff] %vm182, %v63
    %193 = vst.msk [vmem:[%s8 + $0x50] sm:$0xff] %vm182, %v64
    %194 = vst.msk [vmem:[%s8 + $0x58] sm:$0xff] %vm182, %v65
    %195 = vst.msk [vmem:[%s8 + $0x60] sm:$0xff] %vm182, %v66
    %196 = vst.msk [vmem:[%s8 + $0x68] sm:$0xff] %vm182, %v67
    %197 = vst.msk [vmem:[%s8 + $0x70] sm:$0xff] %vm182, %v68
    %198 = vst.msk [vmem:[%s8 + $0x78] sm:$0xff] %vm182, %v69
    %199 = vst.msk [vmem:[%s8 + $0x80] sm:$0xff] %vm182, %v70
    %200 = vst.msk [vmem:[%s8 + $0x88] sm:$0xff] %vm182, %v71
    %201 = vst.msk [vmem:[%s8 + $0x90] sm:$0xff] %vm182, %v72
    %202 = vst.msk [vmem:[%s8 + $0x98] sm:$0xff] %vm182, %v73
    %203 = vst.msk [vmem:[%s8 + $0xa0] sm:$0xff] %vm182, %v74
    %204 = vst.msk [vmem:[%s8 + $0xa8] sm:$0xff] %vm182, %v75
    %205 = vst.msk [vmem:[%s8 + $0xb0] sm:$0xff] %vm182, %v76
    %206 = vst.msk [vmem:[%s8 + $0xb8] sm:$0xff] %vm182, %v77
    %207 = vst.msk [vmem:[%s8 + $0xc0] sm:$0xff] %vm182, %v78
    %208 = vst.msk [vmem:[%s8 + $0xc8] sm:$0xff] %vm182, %v79
    %209 = vst.msk [vmem:[%s8 + $0xd0] sm:$0xff] %vm182, %v80
    %210 = vst.msk [vmem:[%s8 + $0xd8] sm:$0xff] %vm182, %v81
    %211 = vst.msk [vmem:[%s8 + $0xe0] sm:$0xff] %vm182, %v82
    %212 = vst.msk [vmem:[%s8 + $0xe8] sm:$0xff] %vm182, %v83
    %213 = vst.msk [vmem:[%s8 + $0xf0] sm:$0xff] %vm182, %v84
    %214 = vst.msk [vmem:[%s8 + $0xf8] sm:$0xff] %vm182, %v85
    %215 = vst.msk [vmem:[%s8 + $0x100] sm:$0xff] %vm182, %v86
    %216 = vst.msk [vmem:[%s8 + $0x108] sm:$0xff] %vm182, %v87
    %217 = vst.msk [vmem:[%s8 + $0x110] sm:$0xff] %vm182, %v88
    %218 = vst.msk [vmem:[%s8 + $0x118] sm:$0xff] %vm182, %v89
    %219 = vst.msk [vmem:[%s8 + $0x120] sm:$0xff] %vm182, %v90
    %220 = vst.msk [vmem:[%s8 + $0x128] sm:$0xff] %vm182, %v91
    %221 = vst.msk [vmem:[%s8 + $0x130] sm:$0xff] %vm182, %v92
    %222 = vst.msk [vmem:[%s8 + $0x138] sm:$0xff] %vm182, %v93
    %223 = vst.msk [vmem:[%s8 + $0x140] sm:$0xff] %vm182, %v94
    %224 = vst.msk [vmem:[%s8 + $0x148] sm:$0xff] %vm182, %v95
    %225 = vst.msk [vmem:[%s8 + $0x150] sm:$0xff] %vm182, %v96
    %226 = vst.msk [vmem:[%s8 + $0x158] sm:$0xff] %vm182, %v97
    %227 = vst.msk [vmem:[%s8 + $0x160] sm:$0xff] %vm182, %v98
    %228 = vst.msk [vmem:[%s8 + $0x168] sm:$0xff] %vm182, %v99
    %229 = vst.msk [vmem:[%s8 + $0x170] sm:$0xff] %vm182, %v100
    %230 = vst.msk [vmem:[%s8 + $0x178] sm:$0xff] %vm182, %v101
    %231 = vst.msk [vmem:[%s8 + $0x180] sm:$0xff] %vm182, %v102
    %232 = vst.msk [vmem:[%s8 + $0x188] sm:$0xff] %vm182, %v103
    %233 = vst.msk [vmem:[%s8 + $0x190] sm:$0xff] %vm182, %v104
    %234 = vst.msk [vmem:[%s8 + $0x198] sm:$0xff] %vm182, %v105
    %235 = vst.msk [vmem:[%s8 + $0x1a0] sm:$0xff] %vm182, %v106
    %236 = vst.msk [vmem:[%s8 + $0x1a8] sm:$0xff] %vm182, %v107
    %237 = vst.msk [vmem:[%s8 + $0x1b0] sm:$0xff] %vm182, %v108
    %238 = vst.msk [vmem:[%s8 + $0x1b8] sm:$0xff] %vm182, %v109
    %239 = vst.msk [vmem:[%s8 + $0x1c0] sm:$0xff] %vm182, %v110
    %240 = vst.msk [vmem:[%s8 + $0x1c8] sm:$0xff] %vm182, %v111
    %241 = vst.msk [vmem:[%s8 + $0x1d0] sm:$0xff] %vm182, %v112
    %242 = vst.msk [vmem:[%s8 + $0x1d8] sm:$0xff] %vm182, %v113
    %243 = vst.msk [vmem:[%s8 + $0x1e0] sm:$0xff] %vm182, %v114
    %244 = vst.msk [vmem:[%s8 + $0x1e8] sm:$0xff] %vm182, %v115
    %245 = vst.msk [vmem:[%s8 + $0x1f0] sm:$0xff] %vm182, %v116
    %246 = vst.msk [vmem:[%s8 + $0x1f8] sm:$0xff] %vm182, %v117
    %247 = vst.msk [vmem:[%s8 + $0x200] sm:$0xff] %vm182, %v118
    %248 = vst.msk [vmem:[%s8 + $0x208] sm:$0xff] %vm182, %v119
    %249 = vst.msk [vmem:[%s8 + $0x210] sm:$0xff] %vm182, %v120
    %250 = vst.msk [vmem:[%s8 + $0x218] sm:$0xff] %vm182, %v121
    %251 = vst.msk [vmem:[%s8 + $0x220] sm:$0xff] %vm182, %v122
    %252 = vst.msk [vmem:[%s8 + $0x228] sm:$0xff] %vm182, %v123
    %253 = vst.msk [vmem:[%s8 + $0x230] sm:$0xff] %vm182, %v124
    %254 = vst.msk [vmem:[%s8 + $0x238] sm:$0xff] %vm182, %v125
    %255 = vst.msk [vmem:[%s8 + $0x240] sm:$0xff] %vm182, %v126
    %256 = vst.msk [vmem:[%s8 + $0x248] sm:$0xff] %vm182, %v127
    %257 = vst.msk [vmem:[%s8 + $0x250] sm:$0xff] %vm182, %v128
    %258 = vst.msk [vmem:[%s8 + $0x258] sm:$0xff] %vm182, %v129
    %259 = vst.msk [vmem:[%s8 + $0x260] sm:$0xff] %vm182, %v130
    %260 = vst.msk [vmem:[%s8 + $0x268] sm:$0xff] %vm182, %v131
    %261 = vst.msk [vmem:[%s8 + $0x270] sm:$0xff] %vm182, %v132
    %262 = vst.msk [vmem:[%s8 + $0x278] sm:$0xff] %vm182, %v133
    %263 = vst.msk [vmem:[%s8 + $0x280] sm:$0xff] %vm182, %v134
    %264 = vst.msk [vmem:[%s8 + $0x288] sm:$0xff] %vm182, %v135
    %265 = vst.msk [vmem:[%s8 + $0x290] sm:$0xff] %vm182, %v136
    %266 = vst.msk [vmem:[%s8 + $0x298] sm:$0xff] %vm182, %v137
    %267 = vst.msk [vmem:[%s8 + $0x2a0] sm:$0xff] %vm182, %v138
    %268 = vst.msk [vmem:[%s8 + $0x2a8] sm:$0xff] %vm182, %v139
    %269 = vst.msk [vmem:[%s8 + $0x2b0] sm:$0xff] %vm182, %v140
    %270 = vst.msk [vmem:[%s8 + $0x2b8] sm:$0xff] %vm182, %v141
    %271 = vst.msk [vmem:[%s8 + $0x2c0] sm:$0xff] %vm182, %v142
    %272 = vst.msk [vmem:[%s8 + $0x2c8] sm:$0xff] %vm182, %v143
    %273 = vst.msk [vmem:[%s8 + $0x2d0] sm:$0xff] %vm182, %v144
    %274 = vst.msk [vmem:[%s8 + $0x2d8] sm:$0xff] %vm182, %v145
    %275 = vst.msk [vmem:[%s8 + $0x2e0] sm:$0xff] %vm182, %v146
    %276 = vst.msk [vmem:[%s8 + $0x2e8] sm:$0xff] %vm182, %v147
    %277 = vst.msk [vmem:[%s8 + $0x2f0] sm:$0xff] %vm182, %v148
    %278 = vst.msk [vmem:[%s8 + $0x2f8] sm:$0xff] %vm182, %v149
    %279 = vst.msk [vmem:[%s8 + $0x300] sm:$0xff] %vm182, %v150
    %280 = vst.msk [vmem:[%s8 + $0x308] sm:$0xff] %vm182, %v151
    %281 = vst.msk [vmem:[%s8 + $0x310] sm:$0xff] %vm182, %v152
    %282 = vst.msk [vmem:[%s8 + $0x318] sm:$0xff] %vm182, %v153
    %283 = vst.msk [vmem:[%s8 + $0x320] sm:$0xff] %vm182, %v154
    %284 = vst.msk [vmem:[%s8 + $0x328] sm:$0xff] %vm182, %v155
    %285 = vst.msk [vmem:[%s8 + $0x330] sm:$0xff] %vm182, %v156
    %286 = vst.msk [vmem:[%s8 + $0x338] sm:$0xff] %vm182, %v157
    %287 = vst.msk [vmem:[%s8 + $0x340] sm:$0xff] %vm182, %v158
    %288 = vst.msk [vmem:[%s8 + $0x348] sm:$0xff] %vm182, %v159
    %289 = vst.msk [vmem:[%s8 + $0x350] sm:$0xff] %vm182, %v160
    %290 = vst.msk [vmem:[%s8 + $0x358] sm:$0xff] %vm182, %v161
    %291 = vst.msk [vmem:[%s8 + $0x360] sm:$0xff] %vm182, %v162
    %292 = vst.msk [vmem:[%s8 + $0x368] sm:$0xff] %vm182, %v163
    %293 = vst.msk [vmem:[%s8 + $0x370] sm:$0xff] %vm182, %v164
    %294 = vst.msk [vmem:[%s8 + $0x378] sm:$0xff] %vm182, %v165
    %295 = vst.msk [vmem:[%s8 + $0x380] sm:$0xff] %vm182, %v166
    %296 = vst.msk [vmem:[%s8 + $0x388] sm:$0xff] %vm182, %v167
    %297 = vst.msk [vmem:[%s8 + $0x390] sm:$0xff] %vm182, %v168
    %298 = vst.msk [vmem:[%s8 + $0x398] sm:$0xff] %vm182, %v169
    %299 = vst.msk [vmem:[%s8 + $0x3a0] sm:$0xff] %vm182, %v170
    %300 = vst.msk [vmem:[%s8 + $0x3a8] sm:$0xff] %vm182, %v171
    %301 = vst.msk [vmem:[%s8 + $0x3b0] sm:$0xff] %vm182, %v172
    %302 = vst.msk [vmem:[%s8 + $0x3b8] sm:$0xff] %vm182, %v173
    %303 = vst.msk [vmem:[%s8 + $0x3c0] sm:$0xff] %vm182, %v174
    %304 = vst.msk [vmem:[%s8 + $0x3c8] sm:$0xff] %vm182, %v175
    %305 = vst.msk [vmem:[%s8 + $0x3d0] sm:$0xff] %vm182, %v176
    %306 = vst.msk [vmem:[%s8 + $0x3d8] sm:$0xff] %vm182, %v177
    %307 = vst.msk [vmem:[%s8 + $0x3e0] sm:$0xff] %vm182, %v178
    %308 = vst.msk [vmem:[%s8 + $0x3e8] sm:$0xff] %vm182, %v179
    %309 = vst.msk [vmem:[%s8 + $0x3f0] sm:$0xff] %vm182, %v180
    %310 = vst.msk [vmem:[%s8 + $0x3f8] sm:$0xff] %vm182, %v181
    %v311 = vld [vmem:[%s2] sm:$0x1]
    %vm312 = vcmask 253952
    %313 = vst.msk [vmem:[%s9] sm:$0x1] %vm312, %v311
    %v314 = vld [vmem:[%s8] sm:$0xff]
    %v315 = vld [vmem:[%s8 + $0x8] sm:$0xff]
    %v316 = vld [vmem:[%s8 + $0x10] sm:$0xff]
    %v317 = vld [vmem:[%s8 + $0x18] sm:$0xff]
    %v318 = vld [vmem:[%s8 + $0x20] sm:$0xff]
    %v319 = vld [vmem:[%s8 + $0x28] sm:$0xff]
    %v320 = vld [vmem:[%s8 + $0x30] sm:$0xff]
    %v321 = vld [vmem:[%s8 + $0x38] sm:$0xff]
    %v322 = vld [vmem:[%s8 + $0x40] sm:$0xff]
    %v323 = vld [vmem:[%s8 + $0x48] sm:$0xff]
    %v324 = vld [vmem:[%s8 + $0x50] sm:$0xff]
    %v325 = vld [vmem:[%s8 + $0x58] sm:$0xff]
    %v326 = vld [vmem:[%s8 + $0x60] sm:$0xff]
    %v327 = vld [vmem:[%s8 + $0x68] sm:$0xff]
    %v328 = vld [vmem:[%s8 + $0x70] sm:$0xff]
    %v329 = vld [vmem:[%s8 + $0x78] sm:$0xff]
    %v330 = vld [vmem:[%s8 + $0x80] sm:$0xff]
    %v331 = vld [vmem:[%s8 + $0x88] sm:$0xff]
    %v332 = vld [vmem:[%s8 + $0x90] sm:$0xff]
    %v333 = vld [vmem:[%s8 + $0x98] sm:$0xff]
    %v334 = vld [vmem:[%s8 + $0xa0] sm:$0xff]
    %v335 = vld [vmem:[%s8 + $0xa8] sm:$0xff]
    %v336 = vld [vmem:[%s8 + $0xb0] sm:$0xff]
    %v337 = vld [vmem:[%s8 + $0xb8] sm:$0xff]
    %v338 = vld [vmem:[%s8 + $0xc0] sm:$0xff]
    %v339 = vld [vmem:[%s8 + $0xc8] sm:$0xff]
    %v340 = vld [vmem:[%s8 + $0xd0] sm:$0xff]
    %v341 = vld [vmem:[%s8 + $0xd8] sm:$0xff]
    %v342 = vld [vmem:[%s8 + $0xe0] sm:$0xff]
    %v343 = vld [vmem:[%s8 + $0xe8] sm:$0xff]
    %v344 = vld [vmem:[%s8 + $0xf0] sm:$0xff]
    %v345 = vld [vmem:[%s8 + $0xf8] sm:$0xff]
    %v346 = vld [vmem:[%s8 + $0x100] sm:$0xff]
    %v347 = vld [vmem:[%s8 + $0x108] sm:$0xff]
    %v348 = vld [vmem:[%s8 + $0x110] sm:$0xff]
    %v349 = vld [vmem:[%s8 + $0x118] sm:$0xff]
    %v350 = vld [vmem:[%s8 + $0x120] sm:$0xff]
    %v351 = vld [vmem:[%s8 + $0x128] sm:$0xff]
    %v352 = vld [vmem:[%s8 + $0x130] sm:$0xff]
    %v353 = vld [vmem:[%s8 + $0x138] sm:$0xff]
    %v354 = vld [vmem:[%s8 + $0x140] sm:$0xff]
    %v355 = vld [vmem:[%s8 + $0x148] sm:$0xff]
    %v356 = vld [vmem:[%s8 + $0x150] sm:$0xff]
    %v357 = vld [vmem:[%s8 + $0x158] sm:$0xff]
    %v358 = vld [vmem:[%s8 + $0x160] sm:$0xff]
    %v359 = vld [vmem:[%s8 + $0x168] sm:$0xff]
    %v360 = vld [vmem:[%s8 + $0x170] sm:$0xff]
    %v361 = vld [vmem:[%s8 + $0x178] sm:$0xff]
    %v362 = vld [vmem:[%s8 + $0x180] sm:$0xff]
    %v363 = vld [vmem:[%s8 + $0x188] sm:$0xff]
    %v364 = vld [vmem:[%s8 + $0x190] sm:$0xff]
    %v365 = vld [vmem:[%s8 + $0x198] sm:$0xff]
    %v366 = vld [vmem:[%s8 + $0x1a0] sm:$0xff]
    %v367 = vld [vmem:[%s8 + $0x1a8] sm:$0xff]
    %v368 = vld [vmem:[%s8 + $0x1b0] sm:$0xff]
    %v369 = vld [vmem:[%s8 + $0x1b8] sm:$0xff]
    %v370 = vld [vmem:[%s8 + $0x1c0] sm:$0xff]
    %v371 = vld [vmem:[%s8 + $0x1c8] sm:$0xff]
    %v372 = vld [vmem:[%s8 + $0x1d0] sm:$0xff]
    %v373 = vld [vmem:[%s8 + $0x1d8] sm:$0xff]
    %v374 = vld [vmem:[%s8 + $0x1e0] sm:$0xff]
    %v375 = vld [vmem:[%s8 + $0x1e8] sm:$0xff]
    %v376 = vld [vmem:[%s8 + $0x1f0] sm:$0xff]
    %v377 = vld [vmem:[%s8 + $0x1f8] sm:$0xff]
    %v378 = vld [vmem:[%s8 + $0x200] sm:$0xff]
    %v379 = vld [vmem:[%s8 + $0x208] sm:$0xff]
    %v380 = vld [vmem:[%s8 + $0x210] sm:$0xff]
    %v381 = vld [vmem:[%s8 + $0x218] sm:$0xff]
    %v382 = vld [vmem:[%s8 + $0x220] sm:$0xff]
    %v383 = vld [vmem:[%s8 + $0x228] sm:$0xff]
    %v384 = vld [vmem:[%s8 + $0x230] sm:$0xff]
    %v385 = vld [vmem:[%s8 + $0x238] sm:$0xff]
    %v386 = vld [vmem:[%s8 + $0x240] sm:$0xff]
    %v387 = vld [vmem:[%s8 + $0x248] sm:$0xff]
    %v388 = vld [vmem:[%s8 + $0x250] sm:$0xff]
    %v389 = vld [vmem:[%s8 + $0x258] sm:$0xff]
    %v390 = vld [vmem:[%s8 + $0x260] sm:$0xff]
    %v391 = vld [vmem:[%s8 + $0x268] sm:$0xff]
    %v392 = vld [vmem:[%s8 + $0x270] sm:$0xff]
    %v393 = vld [vmem:[%s8 + $0x278] sm:$0xff]
    %v394 = vld [vmem:[%s8 + $0x280] sm:$0xff]
    %v395 = vld [vmem:[%s8 + $0x288] sm:$0xff]
    %v396 = vld [vmem:[%s8 + $0x290] sm:$0xff]
    %v397 = vld [vmem:[%s8 + $0x298] sm:$0xff]
    %v398 = vld [vmem:[%s8 + $0x2a0] sm:$0xff]
    %v399 = vld [vmem:[%s8 + $0x2a8] sm:$0xff]
    %v400 = vld [vmem:[%s8 + $0x2b0] sm:$0xff]
    %v401 = vld [vmem:[%s8 + $0x2b8] sm:$0xff]
    %v402 = vld [vmem:[%s8 + $0x2c0] sm:$0xff]
    %v403 = vld [vmem:[%s8 + $0x2c8] sm:$0xff]
    %v404 = vld [vmem:[%s8 + $0x2d0] sm:$0xff]
    %v405 = vld [vmem:[%s8 + $0x2d8] sm:$0xff]
    %v406 = vld [vmem:[%s8 + $0x2e0] sm:$0xff]
    %v407 = vld [vmem:[%s8 + $0x2e8] sm:$0xff]
    %v408 = vld [vmem:[%s8 + $0x2f0] sm:$0xff]
    %v409 = vld [vmem:[%s8 + $0x2f8] sm:$0xff]
    %v410 = vld [vmem:[%s8 + $0x300] sm:$0xff]
    %v411 = vld [vmem:[%s8 + $0x308] sm:$0xff]
    %v412 = vld [vmem:[%s8 + $0x310] sm:$0xff]
    %v413 = vld [vmem:[%s8 + $0x318] sm:$0xff]
    %v414 = vld [vmem:[%s8 + $0x320] sm:$0xff]
    %v415 = vld [vmem:[%s8 + $0x328] sm:$0xff]
    %v416 = vld [vmem:[%s8 + $0x330] sm:$0xff]
    %v417 = vld [vmem:[%s8 + $0x338] sm:$0xff]
    %v418 = vld [vmem:[%s8 + $0x340] sm:$0xff]
    %v419 = vld [vmem:[%s8 + $0x348] sm:$0xff]
    %v420 = vld [vmem:[%s8 + $0x350] sm:$0xff]
    %v421 = vld [vmem:[%s8 + $0x358] sm:$0xff]
    %v422 = vld [vmem:[%s8 + $0x360] sm:$0xff]
    %v423 = vld [vmem:[%s8 + $0x368] sm:$0xff]
    %v424 = vld [vmem:[%s8 + $0x370] sm:$0xff]
    %v425 = vld [vmem:[%s8 + $0x378] sm:$0xff]
    %v426 = vld [vmem:[%s8 + $0x380] sm:$0xff]
    %v427 = vld [vmem:[%s8 + $0x388] sm:$0xff]
    %v428 = vld [vmem:[%s8 + $0x390] sm:$0xff]
    %v429 = vld [vmem:[%s8 + $0x398] sm:$0xff]
    %v430 = vld [vmem:[%s8 + $0x3a0] sm:$0xff]
    %v431 = vld [vmem:[%s8 + $0x3a8] sm:$0xff]
    %v432 = vld [vmem:[%s8 + $0x3b0] sm:$0xff]
    %v433 = vld [vmem:[%s8 + $0x3b8] sm:$0xff]
    %v434 = vld [vmem:[%s8 + $0x3c0] sm:$0xff]
    %v435 = vld [vmem:[%s8 + $0x3c8] sm:$0xff]
    %v436 = vld [vmem:[%s8 + $0x3d0] sm:$0xff]
    %v437 = vld [vmem:[%s8 + $0x3d8] sm:$0xff]
    %v438 = vld [vmem:[%s8 + $0x3e0] sm:$0xff]
    %v439 = vld [vmem:[%s8 + $0x3e8] sm:$0xff]
    %v440 = vld [vmem:[%s8 + $0x3f0] sm:$0xff]
    %v441 = vld [vmem:[%s8 + $0x3f8] sm:$0xff]
    %v442 = vld [vmem:[%s9] sm:$0x1]
    %v444 = vlaneseq
    %v445 = vshrl.u32 %v444, 7
    %v446 = vsub.s32 0, %v445
    %v447 = vrot.slane %v442, %v446
    %449 = vmatprep.subr.mxu0 0.0
    %450 = vmatpush1.msra.mxu0 %v329
    %451 = vmatprep.subr.mxu0 0.0
    %452 = vmatpush1.msra.mxu0 %v328
    %453 = vmatprep.subr.mxu0 0.0
    %454 = vmatpush1.msra.mxu0 %v327
    %455 = vmatprep.subr.mxu0 0.0
    %456 = vmatpush1.msra.mxu0 %v326
    %457 = vmatprep.subr.mxu0 0.0
    %458 = vmatpush1.msra.mxu0 %v325
    %459 = vmatprep.subr.mxu0 0.0
    %460 = vmatpush1.msra.mxu0 %v324
    %461 = vmatprep.subr.mxu0 0.0
    %462 = vmatpush1.msra.mxu0 %v323
    %463 = vmatprep.subr.mxu0 0.0
    %464 = vmatpush1.msra.mxu0 %v322
    %465 = vmatprep.subr.mxu0 0.0
    %466 = vmatpush1.msra.mxu0 %v321
    %467 = vmatprep.subr.mxu0 0.0
    %468 = vmatpush1.msra.mxu0 %v320
    %469 = vmatprep.subr.mxu0 0.0
    %470 = vmatpush1.msra.mxu0 %v319
    %471 = vmatprep.subr.mxu0 0.0
    %472 = vmatpush1.msra.mxu0 %v318
    %473 = vmatprep.subr.mxu0 0.0
    %474 = vmatpush1.msra.mxu0 %v317
    %475 = vmatprep.subr.mxu0 0.0
    %476 = vmatpush1.msra.mxu0 %v316
    %477 = vmatprep.subr.mxu0 0.0
    %478 = vmatpush1.msra.mxu0 %v315
    %479 = vmatprep.subr.mxu0 0.0
    %480 = vmatpush1.msra.mxu0 %v314
    %481 = vmatprep.subr.mxu0 0.0
    %482 = vmatpush2.msra.mxu0 %v345
    %483 = vmatprep.subr.mxu0 0.0
    %484 = vmatpush2.msra.mxu0 %v344
    %485 = vmatprep.subr.mxu0 0.0
    %486 = vmatpush2.msra.mxu0 %v343
    %487 = vmatprep.subr.mxu0 0.0
    %488 = vmatpush2.msra.mxu0 %v342
    %489 = vmatprep.subr.mxu0 0.0
    %490 = vmatpush2.msra.mxu0 %v341
    %491 = vmatprep.subr.mxu0 0.0
    %492 = vmatpush2.msra.mxu0 %v340
    %493 = vmatprep.subr.mxu0 0.0
    %494 = vmatpush2.msra.mxu0 %v339
    %495 = vmatprep.subr.mxu0 0.0
    %496 = vmatpush2.msra.mxu0 %v338
    %497 = vmatprep.subr.mxu0 0.0
    %498 = vmatpush2.msra.mxu0 %v337
    %499 = vmatprep.subr.mxu0 0.0
    %500 = vmatpush2.msra.mxu0 %v336
    %501 = vmatprep.subr.mxu0 0.0
    %502 = vmatpush2.msra.mxu0 %v335
    %503 = vmatprep.subr.mxu0 0.0
    %504 = vmatpush2.msra.mxu0 %v334
    %505 = vmatprep.subr.mxu0 0.0
    %506 = vmatpush2.msra.mxu0 %v333
    %507 = vmatprep.subr.mxu0 0.0
    %508 = vmatpush2.msra.mxu0 %v332
    %509 = vmatprep.subr.mxu0 0.0
    %510 = vmatpush2.msra.mxu0 %v331
    %511 = vmatprep.subr.mxu0 0.0
    %512 = vmatpush2.msra.mxu0 %v330
    %513 = vmatprep.mubr.f32.mxu0 %v32
    %514 = vmatmul.mubr.f32.gmra.mxu0 %v31
    %v515 = vpop.f32.mrf.mxu0
    %v516 = vadd.f32 %v447, %v515
    %v517 = vpop.f32.mrf.mxu0
    %518 = vdwg.mxu0
    %519 = vmatprep.subr.mxu0 0.0
    %520 = vmatpush1.msra.mxu0 %v361
    %521 = vmatprep.subr.mxu0 0.0
    %522 = vmatpush1.msra.mxu0 %v360
    %523 = vmatprep.subr.mxu0 0.0
    %524 = vmatpush1.msra.mxu0 %v359
    %525 = vmatprep.subr.mxu0 0.0
    %526 = vmatpush1.msra.mxu0 %v358
    %527 = vmatprep.subr.mxu0 0.0
    %528 = vmatpush1.msra.mxu0 %v357
    %529 = vmatprep.subr.mxu0 0.0
    %530 = vmatpush1.msra.mxu0 %v356
    %531 = vmatprep.subr.mxu0 0.0
    %532 = vmatpush1.msra.mxu0 %v355
    %533 = vmatprep.subr.mxu0 0.0
    %534 = vmatpush1.msra.mxu0 %v354
    %535 = vmatprep.subr.mxu0 0.0
    %536 = vmatpush1.msra.mxu0 %v353
    %537 = vmatprep.subr.mxu0 0.0
    %538 = vmatpush1.msra.mxu0 %v352
    %539 = vmatprep.subr.mxu0 0.0
    %540 = vmatpush1.msra.mxu0 %v351
    %541 = vmatprep.subr.mxu0 0.0
    %542 = vmatpush1.msra.mxu0 %v350
    %543 = vmatprep.subr.mxu0 0.0
    %544 = vmatpush1.msra.mxu0 %v349
    %545 = vmatprep.subr.mxu0 0.0
    %546 = vmatpush1.msra.mxu0 %v348
    %547 = vmatprep.subr.mxu0 0.0
    %548 = vmatpush1.msra.mxu0 %v347
    %549 = vmatprep.subr.mxu0 0.0
    %550 = vmatpush1.msra.mxu0 %v346
    %551 = vmatprep.subr.mxu0 0.0
    %552 = vmatpush2.msra.mxu0 %v377
    %553 = vmatprep.subr.mxu0 0.0
    %554 = vmatpush2.msra.mxu0 %v376
    %555 = vmatprep.subr.mxu0 0.0
    %556 = vmatpush2.msra.mxu0 %v375
    %557 = vmatprep.subr.mxu0 0.0
    %558 = vmatpush2.msra.mxu0 %v374
    %559 = vmatprep.subr.mxu0 0.0
    %560 = vmatpush2.msra.mxu0 %v373
    %561 = vmatprep.subr.mxu0 0.0
    %562 = vmatpush2.msra.mxu0 %v372
    %563 = vmatprep.subr.mxu0 0.0
    %564 = vmatpush2.msra.mxu0 %v371
    %565 = vmatprep.subr.mxu0 0.0
    %566 = vmatpush2.msra.mxu0 %v370
    %567 = vmatprep.subr.mxu0 0.0
    %568 = vmatpush2.msra.mxu0 %v369
    %569 = vmatprep.subr.mxu0 0.0
    %570 = vmatpush2.msra.mxu0 %v368
    %571 = vmatprep.subr.mxu0 0.0
    %572 = vmatpush2.msra.mxu0 %v367
    %573 = vmatprep.subr.mxu0 0.0
    %574 = vmatpush2.msra.mxu0 %v366
    %575 = vmatprep.subr.mxu0 0.0
    %576 = vmatpush2.msra.mxu0 %v365
    %577 = vmatprep.subr.mxu0 0.0
    %578 = vmatpush2.msra.mxu0 %v364
    %579 = vmatprep.subr.mxu0 0.0
    %580 = vmatpush2.msra.mxu0 %v363
    %581 = vmatprep.subr.mxu0 0.0
    %582 = vmatpush2.msra.mxu0 %v362
    %583 = vmatprep.mubr.f32.mxu0 %v34
    %584 = vmatmul.mubr.f32.gmra.mxu0 %v33
    %v585 = vpop.f32.mrf.mxu0
    %v586 = vadd.f32 %v516, %v585
    %v587 = vpop.f32.mrf.mxu0
    %588 = vdwg.mxu0
    %589 = vmatprep.subr.mxu0 0.0
    %590 = vmatpush1.msra.mxu0 %v393
    %591 = vmatprep.subr.mxu0 0.0
    %592 = vmatpush1.msra.mxu0 %v392
    %593 = vmatprep.subr.mxu0 0.0
    %594 = vmatpush1.msra.mxu0 %v391
    %595 = vmatprep.subr.mxu0 0.0
    %596 = vmatpush1.msra.mxu0 %v390
    %597 = vmatprep.subr.mxu0 0.0
    %598 = vmatpush1.msra.mxu0 %v389
    %599 = vmatprep.subr.mxu0 0.0
    %600 = vmatpush1.msra.mxu0 %v388
    %601 = vmatprep.subr.mxu0 0.0
    %602 = vmatpush1.msra.mxu0 %v387
    %603 = vmatprep.subr.mxu0 0.0
    %604 = vmatpush1.msra.mxu0 %v386
    %605 = vmatprep.subr.mxu0 0.0
    %606 = vmatpush1.msra.mxu0 %v385
    %607 = vmatprep.subr.mxu0 0.0
    %608 = vmatpush1.msra.mxu0 %v384
    %609 = vmatprep.subr.mxu0 0.0
    %610 = vmatpush1.msra.mxu0 %v383
    %611 = vmatprep.subr.mxu0 0.0
    %612 = vmatpush1.msra.mxu0 %v382
    %613 = vmatprep.subr.mxu0 0.0
    %614 = vmatpush1.msra.mxu0 %v381
    %615 = vmatprep.subr.mxu0 0.0
    %616 = vmatpush1.msra.mxu0 %v380
    %617 = vmatprep.subr.mxu0 0.0
    %618 = vmatpush1.msra.mxu0 %v379
    %619 = vmatprep.subr.mxu0 0.0
    %620 = vmatpush1.msra.mxu0 %v378
    %621 = vmatprep.subr.mxu0 0.0
    %622 = vmatpush2.msra.mxu0 %v409
    %623 = vmatprep.subr.mxu0 0.0
    %624 = vmatpush2.msra.mxu0 %v408
    %625 = vmatprep.subr.mxu0 0.0
    %626 = vmatpush2.msra.mxu0 %v407
    %627 = vmatprep.subr.mxu0 0.0
    %628 = vmatpush2.msra.mxu0 %v406
    %629 = vmatprep.subr.mxu0 0.0
    %630 = vmatpush2.msra.mxu0 %v405
    %631 = vmatprep.subr.mxu0 0.0
    %632 = vmatpush2.msra.mxu0 %v404
    %633 = vmatprep.subr.mxu0 0.0
    %634 = vmatpush2.msra.mxu0 %v403
    %635 = vmatprep.subr.mxu0 0.0
    %636 = vmatpush2.msra.mxu0 %v402
    %637 = vmatprep.subr.mxu0 0.0
    %638 = vmatpush2.msra.mxu0 %v401
    %639 = vmatprep.subr.mxu0 0.0
    %640 = vmatpush2.msra.mxu0 %v400
    %641 = vmatprep.subr.mxu0 0.0
    %642 = vmatpush2.msra.mxu0 %v399
    %643 = vmatprep.subr.mxu0 0.0
    %644 = vmatpush2.msra.mxu0 %v398
    %645 = vmatprep.subr.mxu0 0.0
    %646 = vmatpush2.msra.mxu0 %v397
    %647 = vmatprep.subr.mxu0 0.0
    %648 = vmatpush2.msra.mxu0 %v396
    %649 = vmatprep.subr.mxu0 0.0
    %650 = vmatpush2.msra.mxu0 %v395
    %651 = vmatprep.subr.mxu0 0.0
    %652 = vmatpush2.msra.mxu0 %v394
    %653 = vmatprep.mubr.f32.mxu0 %v36
    %654 = vmatmul.mubr.f32.gmra.mxu0 %v35
    %v655 = vpop.f32.mrf.mxu0
    %v656 = vadd.f32 %v586, %v655
    %v657 = vpop.f32.mrf.mxu0
    %658 = vdwg.mxu0
    %659 = vmatprep.subr.mxu0 0.0
    %660 = vmatpush1.msra.mxu0 %v425
    %661 = vmatprep.subr.mxu0 0.0
    %662 = vmatpush1.msra.mxu0 %v424
    %663 = vmatprep.subr.mxu0 0.0
    %664 = vmatpush1.msra.mxu0 %v423
    %665 = vmatprep.subr.mxu0 0.0
    %666 = vmatpush1.msra.mxu0 %v422
    %667 = vmatprep.subr.mxu0 0.0
    %668 = vmatpush1.msra.mxu0 %v421
    %669 = vmatprep.subr.mxu0 0.0
    %670 = vmatpush1.msra.mxu0 %v420
    %671 = vmatprep.subr.mxu0 0.0
    %672 = vmatpush1.msra.mxu0 %v419
    %673 = vmatprep.subr.mxu0 0.0
    %674 = vmatpush1.msra.mxu0 %v418
    %675 = vmatprep.subr.mxu0 0.0
    %676 = vmatpush1.msra.mxu0 %v417
    %677 = vmatprep.subr.mxu0 0.0
    %678 = vmatpush1.msra.mxu0 %v416
    %679 = vmatprep.subr.mxu0 0.0
    %680 = vmatpush1.msra.mxu0 %v415
    %681 = vmatprep.subr.mxu0 0.0
    %682 = vmatpush1.msra.mxu0 %v414
    %683 = vmatprep.subr.mxu0 0.0
    %684 = vmatpush1.msra.mxu0 %v413
    %685 = vmatprep.subr.mxu0 0.0
    %686 = vmatpush1.msra.mxu0 %v412
    %687 = vmatprep.subr.mxu0 0.0
    %688 = vmatpush1.msra.mxu0 %v411
    %689 = vmatprep.subr.mxu0 0.0
    %690 = vmatpush1.msra.mxu0 %v410
    %691 = vmatprep.subr.mxu0 0.0
    %692 = vmatpush2.msra.mxu0 %v441
    %693 = vmatprep.subr.mxu0 0.0
    %694 = vmatpush2.msra.mxu0 %v440
    %695 = vmatprep.subr.mxu0 0.0
    %696 = vmatpush2.msra.mxu0 %v439
    %697 = vmatprep.subr.mxu0 0.0
    %698 = vmatpush2.msra.mxu0 %v438
    %699 = vmatprep.subr.mxu0 0.0
    %700 = vmatpush2.msra.mxu0 %v437
    %701 = vmatprep.subr.mxu0 0.0
    %702 = vmatpush2.msra.mxu0 %v436
    %703 = vmatprep.subr.mxu0 0.0
    %704 = vmatpush2.msra.mxu0 %v435
    %705 = vmatprep.subr.mxu0 0.0
    %706 = vmatpush2.msra.mxu0 %v434
    %707 = vmatprep.subr.mxu0 0.0
    %708 = vmatpush2.msra.mxu0 %v433
    %709 = vmatprep.subr.mxu0 0.0
    %710 = vmatpush2.msra.mxu0 %v432
    %711 = vmatprep.subr.mxu0 0.0
    %712 = vmatpush2.msra.mxu0 %v431
    %713 = vmatprep.subr.mxu0 0.0
    %714 = vmatpush2.msra.mxu0 %v430
    %715 = vmatprep.subr.mxu0 0.0
    %716 = vmatpush2.msra.mxu0 %v429
    %717 = vmatprep.subr.mxu0 0.0
    %718 = vmatpush2.msra.mxu0 %v428
    %719 = vmatprep.subr.mxu0 0.0
    %720 = vmatpush2.msra.mxu0 %v427
    %721 = vmatprep.subr.mxu0 0.0
    %722 = vmatpush2.msra.mxu0 %v426
    %723 = vmatprep.mubr.f32.mxu0 %v38
    %724 = vmatmul.mubr.f32.gmra.mxu0 %v37
    %v725 = vpop.f32.mrf.mxu0
    %v726 = vadd.f32 %v656, %v725
    %v727 = vpop.f32.mrf.mxu0
    %728 = vdwg.mxu0
    %v730 = vlaneseq
    %v731 = vshrl.u32 %v730, 7
    %v732 = vsub.s32 0, %v731
    %v733 = vrot.slane %v51, %v732
    %v736 = vsel %vm182, %v726, 0
    %738 = vmatprep.subr.mxu0 0.0
    %739 = vmatpush1.msra.mxu0 0.0
    %740 = vmatprep.subr.mxu0 0.0
    %741 = vmatpush1.msra.mxu0 0.0
    %742 = vmatprep.subr.mxu0 0.0
    %743 = vmatpush1.msra.mxu0 0.0
    %744 = vmatprep.subr.mxu0 0.0
    %745 = vmatpush1.msra.mxu0 0.0
    %746 = vmatprep.subr.mxu0 0.0
    %747 = vmatpush1.msra.mxu0 0.0
    %748 = vmatprep.subr.mxu0 0.0
    %749 = vmatpush1.msra.mxu0 0.0
    %750 = vmatprep.subr.mxu0 0.0
    %751 = vmatpush1.msra.mxu0 0.0
    %752 = vmatprep.subr.mxu0 0.0
    %753 = vmatpush1.msra.mxu0 0.0
    %754 = vmatprep.subr.mxu0 0.0
    %755 = vmatpush1.msra.mxu0 0.0
    %756 = vmatprep.subr.mxu0 0.0
    %757 = vmatpush1.msra.mxu0 0.0
    %758 = vmatprep.subr.mxu0 0.0
    %759 = vmatpush1.msra.mxu0 0.0
    %760 = vmatprep.subr.mxu0 0.0
    %761 = vmatpush1.msra.mxu0 0.0
    %762 = vmatprep.subr.mxu0 0.0
    %763 = vmatpush1.msra.mxu0 %v50
    %764 = vmatprep.subr.mxu0 0.0
    %765 = vmatpush1.msra.mxu0 %v49
    %766 = vmatprep.subr.mxu0 0.0
    %767 = vmatpush1.msra.mxu0 %v48
    %768 = vmatprep.subr.mxu0 0.0
    %769 = vmatpush1.msra.mxu0 %v47
    %770 = vmatprep.subr.mxu0 0.0
    %771 = vmatpush2.msra.mxu0 0.0
    %772 = vmatprep.subr.mxu0 0.0
    %773 = vmatpush2.msra.mxu0 0.0
    %774 = vmatprep.subr.mxu0 0.0
    %775 = vmatpush2.msra.mxu0 0.0
    %776 = vmatprep.subr.mxu0 0.0
    %777 = vmatpush2.msra.mxu0 0.0
    %778 = vmatprep.subr.mxu0 0.0
    %779 = vmatpush2.msra.mxu0 0.0
    %780 = vmatprep.subr.mxu0 0.0
    %781 = vmatpush2.msra.mxu0 0.0
    %782 = vmatprep.subr.mxu0 0.0
    %783 = vmatpush2.msra.mxu0 0.0
    %784 = vmatprep.subr.mxu0 0.0
    %785 = vmatpush2.msra.mxu0 0.0
    %786 = vmatprep.subr.mxu0 0.0
    %787 = vmatpush2.msra.mxu0 0.0
    %788 = vmatprep.subr.mxu0 0.0
    %789 = vmatpush2.msra.mxu0 0.0
    %790 = vmatprep.subr.mxu0 0.0
    %791 = vmatpush2.msra.mxu0 0.0
    %792 = vmatprep.subr.mxu0 0.0
    %793 = vmatpush2.msra.mxu0 0.0
    %794 = vmatprep.subr.mxu0 0.0
    %795 = vmatpush2.msra.mxu0 0.0
    %796 = vmatprep.subr.mxu0 0.0
    %797 = vmatpush2.msra.mxu0 0.0
    %798 = vmatprep.subr.mxu0 0.0
    %799 = vmatpush2.msra.mxu0 0.0
    %800 = vmatprep.subr.mxu0 0.0
    %801 = vmatpush2.msra.mxu0 0.0
    %802 = vmatprep.mubr.f32.mxu0 0.0
    %803 = vmatmul.mubr.f32.gmra.mxu0 %v736
    %v804 = vpop.f32.mrf.mxu0
    %v805 = vadd.f32 %v733, %v804
    %v806 = vpop.f32.mrf.mxu0
    %807 = vdwg.mxu0
    %vm808 = vcmask 130048
    %v809 = vsel %vm808, %v805, -inf
    %810 = vmax.xlane.f32.xlu0 %v809
    %v811 = vpop.xlane.xlu0 %810
    %vm812 = vcmp.eq.f32.partialorder %v805, %v811
    %v813 = vsel %vm812, %v53, 16
    %v814 = vsel %vm808, %v813, 2147483647
    %v815 = vand.u32 %v814, 65535
    %v816 = vshra.s32 %v814, 16
    %v817 = vcvt.s32.f32 %v815
    %v818 = vcvt.s32.f32 %v816
    %819 = vmin.xlane.f32.xlu0 %v818
    %v820 = vpop.xlane.xlu0 %819
    %vm821 = vcmp.eq.f32.partialorder %v818, %v820
    %v822 = vsel %vm821, %v817, inf
    %823 = vmin.xlane.f32.xlu0 %v822
    %v824 = vpop.xlane.xlu0 %823
    %v825 = vcvt.f32.s32 %v824
    %v826 = vcvt.f32.s32 %v820
    %v827 = vshll.u32 %v826, 16
    %v828 = vadd.s32 %v827, %v825
    %vm829 = vcmp.eq.s32.totalorder %v53, %v828
    %v830 = vsel %vm829, 1, 0
    %v831 = vcvt.s32.f32 %v830
    %v832 = vsel %vm182, %v726, 0.0
    %v833 = vrot.slane %v832, 4
    %v834 = vadd.f32 %v832, %v833
    %v835 = vrot.slane %v834, 2
    %v836 = vadd.f32 %v834, %v835
    %v837 = vrot.slane %v836, 1
    %v838 = vadd.f32 %v836, %v837
    %v839 = vmul.f32 %v838, 0.125
    %v840 = vsub.f32 %v726, %v839
    %v841 = vmul.f32 %v840, %v840
    %v842 = vmul.f32 %v841, %v840
    %v843 = vsel %vm182, %v840, 0.0
    %v844 = vrot.slane %v843, 4
    %v845 = vadd.f32 %v843, %v844
    %v846 = vrot.slane %v845, 2
    %v847 = vadd.f32 %v845, %v846
    %v848 = vrot.slane %v847, 1
    %v849 = vadd.f32 %v847, %v848
    %v850 = vmul.f32 %v849, 0.125
    %v851 = vsel %vm182, %v841, 0.0
    %v852 = vrot.slane %v851, 4
    %v853 = vadd.f32 %v851, %v852
    %v854 = vrot.slane %v853, 2
    %v855 = vadd.f32 %v853, %v854
    %v856 = vrot.slane %v855, 1
    %v857 = vadd.f32 %v855, %v856
    %v858 = vmul.f32 %v857, 0.125
    %v859 = vsel %vm182, %v842, 0.0
    %v860 = vrot.slane %v859, 4
    %v861 = vadd.f32 %v859, %v860
    %v862 = vrot.slane %v861, 2
    %v863 = vadd.f32 %v861, %v862
    %v864 = vrot.slane %v863, 1
    %v865 = vadd.f32 %v863, %v864
    %v866 = vmul.f32 %v865, 0.125
    %v867 = vld [vmem:[%s5] sm:$0x1]
    %v868 = vsub.f32 %v839, %v867
    %v869 = vmul.f32 %v868, %v868
    %v870 = vsel %vm312, %v869, 0.0
    %871 = vadd.xlane.f32.xlu0 %v870
    %v872 = vpop.xlane.xlu0 %871
    %v873 = vrot.slane %v872, 4
    %v874 = vadd.f32 %v872, %v873
    %v875 = vrot.slane %v874, 2
    %v876 = vadd.f32 %v874, %v875
    %v877 = vrot.slane %v876, 1
    %v878 = vadd.f32 %v876, %v877
    %s879 = vtos %v878
    %s880 = sadd.f32 %s879, 1e-12
    %v881 = vstv %s880
    %v882 = vrsqrt.pop %v881
    %s883 = vtos %v882
    %v884 = vstv %s883
    %v885 = vmul.f32 %v868, %v884
    %v886 = vmul.f32 %v885, 0.5
    %v887 = vmul.f32 %v886, 0.125
    %v888 = vlaneseq
    %v889 = vshrl.u32 %v888, 7
    %v890 = vsub.s32 0, %v889
    %v891 = vrot.slane %v887, %v890
    %v892 = vadd.f32 %v891, 0.0
    %v893 = vld [vmem:[%s5 + $0x1] sm:$0x1]
    %v894 = vsub.f32 %v858, %v893
    %v895 = vmul.f32 %v894, %v894
    %v896 = vsel %vm312, %v895, 0.0
    %897 = vadd.xlane.f32.xlu0 %v896
    %v898 = vpop.xlane.xlu0 %897
    %v899 = vrot.slane %v898, 4
    %v900 = vadd.f32 %v898, %v899
    %v901 = vrot.slane %v900, 2
    %v902 = vadd.f32 %v900, %v901
    %v903 = vrot.slane %v902, 1
    %v904 = vadd.f32 %v902, %v903
    %s905 = vtos %v904
    %s906 = sadd.f32 %s905, 1e-12
    %v907 = vstv %s906
    %v908 = vrsqrt.pop %v907
    %s909 = vtos %v908
    %v910 = vstv %s909
    %v911 = vmul.f32 %v894, %v910
    %v912 = vmul.f32 %v911, 0.25
    %v913 = vmul.f32 %v912, 0.25
    %v914 = vsub.f32 %v840, %v850
    %v915 = vlaneseq
    %v916 = vshrl.u32 %v915, 7
    %v917 = vsub.s32 0, %v916
    %v918 = vrot.slane %v913, %v917
    %v919 = vmul.f32 %v918, %v914
    %v920 = vadd.f32 %v892, %v919
    %v921 = vld [vmem:[%s5 + $0x2] sm:$0x1]
    %v922 = vsub.f32 %v866, %v921
    %v923 = vmul.f32 %v922, %v922
    %v924 = vsel %vm312, %v923, 0.0
    %925 = vadd.xlane.f32.xlu0 %v924
    %v926 = vpop.xlane.xlu0 %925
    %v927 = vrot.slane %v926, 4
    %v928 = vadd.f32 %v926, %v927
    %v929 = vrot.slane %v928, 2
    %v930 = vadd.f32 %v928, %v929
    %v931 = vrot.slane %v930, 1
    %v932 = vadd.f32 %v930, %v931
    %s933 = vtos %v932
    %s934 = sadd.f32 %s933, 1e-12
    %v935 = vstv %s934
    %v936 = vrsqrt.pop %v935
    %s937 = vtos %v936
    %v938 = vstv %s937
    %v939 = vmul.f32 %v922, %v938
    %v940 = vmul.f32 %v939, 0.125
    %v941 = vmul.f32 %v940, 0.375
    %v942 = vsub.f32 %v841, %v858
    %v943 = vlaneseq
    %v944 = vshrl.u32 %v943, 7
    %v945 = vsub.s32 0, %v944
    %v946 = vrot.slane %v941, %v945
    %v947 = vmul.f32 %v946, %v942
    %v948 = vadd.f32 %v920, %v947
    %v949 = vsel %vm182, %v726, 1.0
    %950 = vxpose.xlu0.b32.start [1/16] %v831, 128
    %951 = vxpose.xlu0.b32.cont [2/16] 0.0, 128
    %952 = vxpose.xlu0.b32.cont [3/16] 0.0, 128
    %953 = vxpose.xlu0.b32.cont [4/16] 0.0, 128
    %954 = vxpose.xlu0.b32.cont [5/16] 0.0, 128
    %955 = vxpose.xlu0.b32.cont [6/16] 0.0, 128
    %956 = vxpose.xlu0.b32.cont [7/16] 0.0, 128
    %957 = vxpose.xlu0.b32.cont [8/16] 0.0, 128
    %958 = vxpose.xlu0.b32.cont [9/16] 0.0, 128
    %959 = vxpose.xlu0.b32.cont [10/16] 0.0, 128
    %960 = vxpose.xlu0.b32.cont [11/16] 0.0, 128
    %961 = vxpose.xlu0.b32.cont [12/16] 0.0, 128
    %962 = vxpose.xlu0.b32.cont [13/16] 0.0, 128
    %963 = vxpose.xlu0.b32.cont [14/16] 0.0, 128
    %964 = vxpose.xlu0.b32.cont [15/16] 0.0, 128
    %965 = vxpose.xlu0.b32.end [16/16] 0.0, 128
    %v966 = vpop.trf.xlu0
    %v967 = vpop.trf.xlu0
    %v968 = vpop.trf.xlu0
    %v969 = vpop.trf.xlu0
    %v970 = vpop.trf.xlu0
    %v971 = vpop.trf.xlu0
    %v972 = vpop.trf.xlu0
    %v973 = vpop.trf.xlu0
    %v974 = vpop.trf.xlu0
    %v975 = vpop.trf.xlu0
    %v976 = vpop.trf.xlu0
    %v977 = vpop.trf.xlu0
    %v978 = vpop.trf.xlu0
    %v979 = vpop.trf.xlu0
    %v980 = vpop.trf.xlu0
    %v981 = vpop.trf.xlu0
    %vm982 = vcmask 64512
    %v984 = vsel %vm982, %v966, 0
    %v987 = vsel %vm982, %v967, 0
    %989 = vmatprep.subr.mxu0 0.0
    %990 = vmatpush1.msra.mxu0 0.0
    %991 = vmatprep.subr.mxu0 0.0
    %992 = vmatpush1.msra.mxu0 0.0
    %993 = vmatprep.subr.mxu0 0.0
    %994 = vmatpush1.msra.mxu0 0.0
    %995 = vmatprep.subr.mxu0 0.0
    %996 = vmatpush1.msra.mxu0 0.0
    %997 = vmatprep.subr.mxu0 0.0
    %998 = vmatpush1.msra.mxu0 0.0
    %999 = vmatprep.subr.mxu0 0.0
    %1000 = vmatpush1.msra.mxu0 0.0
    %1001 = vmatprep.subr.mxu0 0.0
    %1002 = vmatpush1.msra.mxu0 0.0
    %1003 = vmatprep.subr.mxu0 0.0
    %1004 = vmatpush1.msra.mxu0 0.0
    %1005 = vmatprep.subr.mxu0 0.0
    %1006 = vmatpush1.msra.mxu0 0.0
    %1007 = vmatprep.subr.mxu0 0.0
    %1008 = vmatpush1.msra.mxu0 0.0
    %1009 = vmatprep.subr.mxu0 0.0
    %1010 = vmatpush1.msra.mxu0 0.0
    %1011 = vmatprep.subr.mxu0 0.0
    %1012 = vmatpush1.msra.mxu0 0.0
    %1013 = vmatprep.subr.mxu0 0.0
    %1014 = vmatpush1.msra.mxu0 0.0
    %1015 = vmatprep.subr.mxu0 0.0
    %1016 = vmatpush1.msra.mxu0 0.0
    %1017 = vmatprep.subr.mxu0 0.0
    %1018 = vmatpush1.msra.mxu0 0.0
    %1019 = vmatprep.subr.mxu0 0.0
    %1020 = vmatpush1.msra.mxu0 %v949
    %1021 = vmatprep.subr.mxu0 0.0
    %1022 = vmatpush2.msra.mxu0 0.0
    %1023 = vmatprep.subr.mxu0 0.0
    %1024 = vmatpush2.msra.mxu0 0.0
    %1025 = vmatprep.subr.mxu0 0.0
    %1026 = vmatpush2.msra.mxu0 0.0
    %1027 = vmatprep.subr.mxu0 0.0
    %1028 = vmatpush2.msra.mxu0 0.0
    %1029 = vmatprep.subr.mxu0 0.0
    %1030 = vmatpush2.msra.mxu0 0.0
    %1031 = vmatprep.subr.mxu0 0.0
    %1032 = vmatpush2.msra.mxu0 0.0
    %1033 = vmatprep.subr.mxu0 0.0
    %1034 = vmatpush2.msra.mxu0 0.0
    %1035 = vmatprep.subr.mxu0 0.0
    %1036 = vmatpush2.msra.mxu0 0.0
    %1037 = vmatprep.subr.mxu0 0.0
    %1038 = vmatpush2.msra.mxu0 0.0
    %1039 = vmatprep.subr.mxu0 0.0
    %1040 = vmatpush2.msra.mxu0 0.0
    %1041 = vmatprep.subr.mxu0 0.0
    %1042 = vmatpush2.msra.mxu0 0.0
    %1043 = vmatprep.subr.mxu0 0.0
    %1044 = vmatpush2.msra.mxu0 0.0
    %1045 = vmatprep.subr.mxu0 0.0
    %1046 = vmatpush2.msra.mxu0 0.0
    %1047 = vmatprep.subr.mxu0 0.0
    %1048 = vmatpush2.msra.mxu0 0.0
    %1049 = vmatprep.subr.mxu0 0.0
    %1050 = vmatpush2.msra.mxu0 0.0
    %1051 = vmatprep.subr.mxu0 0.0
    %1052 = vmatpush2.msra.mxu0 0.0
    %1053 = vmatprep.mubr.f32.mxu0 0.0
    %1054 = vmatmul.mubr.f32.gmra.mxu0 %v984
    %v1055 = vpop.f32.mrf.mxu0
    %v1056 = vadd.f32 0.0, %v1055
    %v1057 = vpop.f32.mrf.mxu0
    %1058 = vmatprep.mubr.f32.mxu0 0.0
    %1059 = vmatmul.mubr.f32.gmra.mxu0 %v987
    %v1060 = vpop.f32.mrf.mxu0
    %v1061 = vadd.f32 0.0, %v1060
    %v1062 = vpop.f32.mrf.mxu0
    %1063 = vdwg.mxu0
    %v1064 = vmax.f32 %v1056, 1.0
    %v1065 = vmax.f32 %v1061, 1.0
    %v1066 = vrcp.pop %v1064
    %v1067 = vmul.f32 1.0, %v1066
    %v1068 = vrcp.pop %v1065
    %v1069 = vmul.f32 1.0, %v1068
    %v1070 = vmin.f32 %v1056, 1.0
    %v1071 = vmin.f32 %v1061, 1.0
    %1074 = vrot.lane.b32.xlu0 %v1070, 96
    %v1075 = vpop.permute.xlu0 %1074
    %1076 = vrot.lane.b32.xlu0 %v1071, 96
    %v1077 = vpop.permute.xlu0 %1076
    %vm1080 = vcmask 7168
    %v1081 = vsel %vm1080, %v1075, 0.0
    %v1082 = vsel %vm1080, %v1077, 0.0
    %v1083 = vadd.f32 %v1081, %v1082
    %1084 = vadd.xlane.f32.xlu0 %v1083
    %v1085 = vpop.xlane.xlu0 %1084
    %v1086 = vrot.slane %v1085, 4
    %v1087 = vadd.f32 %v1085, %v1086
    %v1088 = vrot.slane %v1087, 2
    %v1089 = vadd.f32 %v1087, %v1088
    %v1090 = vrot.slane %v1089, 1
    %v1091 = vadd.f32 %v1089, %v1090
    %s1092 = vtos %v1091
    %v1093 = vstv %s1092
    %v1094 = vrcp.pop %v1093
    %s1095 = vtos %v1094
    %1097 = vset.pattern.permute.xlu0 32
    %1098 = vperm.xlu0 %1097, %v1067
    %v1099 = vpop.permute.xlu0 %1098
    %1102 = vset.pattern.permute.xlu0 32
    %1103 = vperm.xlu0 %1102, %v1069
    %v1104 = vpop.permute.xlu0 %1103
    %v1106 = vmul.f32 %v1056, %v1099
    %v1107 = vmul.f32 %v1061, %v1104
    %v1109 = vsel %vm808, %v831, 0
    %1111 = vmatprep.subr.mxu0 0.0
    %1112 = vmatpush1.msra.mxu0 0.0
    %1113 = vmatprep.subr.mxu0 0.0
    %1114 = vmatpush1.msra.mxu0 0.0
    %1115 = vmatprep.subr.mxu0 0.0
    %1116 = vmatpush1.msra.mxu0 0.0
    %1117 = vmatprep.subr.mxu0 0.0
    %1118 = vmatpush1.msra.mxu0 0.0
    %1119 = vmatprep.subr.mxu0 0.0
    %1120 = vmatpush1.msra.mxu0 0.0
    %1121 = vmatprep.subr.mxu0 0.0
    %1122 = vmatpush1.msra.mxu0 0.0
    %1123 = vmatprep.subr.mxu0 0.0
    %1124 = vmatpush1.msra.mxu0 0.0
    %1125 = vmatprep.subr.mxu0 0.0
    %1126 = vmatpush1.msra.mxu0 0.0
    %1127 = vmatprep.subr.mxu0 0.0
    %1128 = vmatpush1.msra.mxu0 0.0
    %1129 = vmatprep.subr.mxu0 0.0
    %1130 = vmatpush1.msra.mxu0 0.0
    %1131 = vmatprep.subr.mxu0 0.0
    %1132 = vmatpush1.msra.mxu0 0.0
    %1133 = vmatprep.subr.mxu0 0.0
    %1134 = vmatpush1.msra.mxu0 0.0
    %1135 = vmatprep.subr.mxu0 0.0
    %1136 = vmatpush1.msra.mxu0 0.0
    %1137 = vmatprep.subr.mxu0 0.0
    %1138 = vmatpush1.msra.mxu0 0.0
    %1139 = vmatprep.subr.mxu0 0.0
    %1140 = vmatpush1.msra.mxu0 %v1107
    %1141 = vmatprep.subr.mxu0 0.0
    %1142 = vmatpush1.msra.mxu0 %v1106
    %1143 = vmatprep.subr.mxu0 0.0
    %1144 = vmatpush2.msra.mxu0 0.0
    %1145 = vmatprep.subr.mxu0 0.0
    %1146 = vmatpush2.msra.mxu0 0.0
    %1147 = vmatprep.subr.mxu0 0.0
    %1148 = vmatpush2.msra.mxu0 0.0
    %1149 = vmatprep.subr.mxu0 0.0
    %1150 = vmatpush2.msra.mxu0 0.0
    %1151 = vmatprep.subr.mxu0 0.0
    %1152 = vmatpush2.msra.mxu0 0.0
    %1153 = vmatprep.subr.mxu0 0.0
    %1154 = vmatpush2.msra.mxu0 0.0
    %1155 = vmatprep.subr.mxu0 0.0
    %1156 = vmatpush2.msra.mxu0 0.0
    %1157 = vmatprep.subr.mxu0 0.0
    %1158 = vmatpush2.msra.mxu0 0.0
    %1159 = vmatprep.subr.mxu0 0.0
    %1160 = vmatpush2.msra.mxu0 0.0
    %1161 = vmatprep.subr.mxu0 0.0
    %1162 = vmatpush2.msra.mxu0 0.0
    %1163 = vmatprep.subr.mxu0 0.0
    %1164 = vmatpush2.msra.mxu0 0.0
    %1165 = vmatprep.subr.mxu0 0.0
    %1166 = vmatpush2.msra.mxu0 0.0
    %1167 = vmatprep.subr.mxu0 0.0
    %1168 = vmatpush2.msra.mxu0 0.0
    %1169 = vmatprep.subr.mxu0 0.0
    %1170 = vmatpush2.msra.mxu0 0.0
    %1171 = vmatprep.subr.mxu0 0.0
    %1172 = vmatpush2.msra.mxu0 0.0
    %1173 = vmatprep.subr.mxu0 0.0
    %1174 = vmatpush2.msra.mxu0 0.0
    %1175 = vmatprep.mubr.f32.mxu0 0.0
    %1176 = vmatmul.mubr.f32.gmra.mxu0 %v1109
    %v1177 = vpop.f32.mrf.mxu0
    %v1178 = vadd.f32 0.0, %v1177
    %v1179 = vpop.f32.mrf.mxu0
    %1180 = vdwg.mxu0
    %v1181 = vsub.f32 %v726, %v1178
    %v1182 = vmul.f32 %v1181, %v1181
    %v1183 = vmul.f32 %v1182, %v1181
    %1185 = vrot.lane.b32.xlu0 %v1182, 32
    %v1186 = vpop.permute.xlu0 %1185
    %1189 = vrot.lane.b32.xlu0 %v1183, 64
    %v1190 = vpop.permute.xlu0 %1189
    %v1192 = vsel %vm182, %v1181, %v1186
    %vm1193 = vcmask 523264
    %v1194 = vsel %vm1193, %v1192, %v1190
    %1195 = vmatprep.subr.mxu0 0.0
    %1196 = vmatpush1.msra.mxu0 0.0
    %1197 = vmatprep.subr.mxu0 0.0
    %1198 = vmatpush1.msra.mxu0 0.0
    %1199 = vmatprep.subr.mxu0 0.0
    %1200 = vmatpush1.msra.mxu0 0.0
    %1201 = vmatprep.subr.mxu0 0.0
    %1202 = vmatpush1.msra.mxu0 0.0
    %1203 = vmatprep.subr.mxu0 0.0
    %1204 = vmatpush1.msra.mxu0 0.0
    %1205 = vmatprep.subr.mxu0 0.0
    %1206 = vmatpush1.msra.mxu0 0.0
    %1207 = vmatprep.subr.mxu0 0.0
    %1208 = vmatpush1.msra.mxu0 0.0
    %1209 = vmatprep.subr.mxu0 0.0
    %1210 = vmatpush1.msra.mxu0 0.0
    %1211 = vmatprep.subr.mxu0 0.0
    %1212 = vmatpush1.msra.mxu0 0.0
    %1213 = vmatprep.subr.mxu0 0.0
    %1214 = vmatpush1.msra.mxu0 0.0
    %1215 = vmatprep.subr.mxu0 0.0
    %1216 = vmatpush1.msra.mxu0 0.0
    %1217 = vmatprep.subr.mxu0 0.0
    %1218 = vmatpush1.msra.mxu0 0.0
    %1219 = vmatprep.subr.mxu0 0.0
    %1220 = vmatpush1.msra.mxu0 0.0
    %1221 = vmatprep.subr.mxu0 0.0
    %1222 = vmatpush1.msra.mxu0 0.0
    %1223 = vmatprep.subr.mxu0 0.0
    %1224 = vmatpush1.msra.mxu0 0.0
    %1225 = vmatprep.subr.mxu0 0.0
    %1226 = vmatpush1.msra.mxu0 %v1194
    %1227 = vmatprep.subr.mxu0 0.0
    %1228 = vmatpush2.msra.mxu0 0.0
    %1229 = vmatprep.subr.mxu0 0.0
    %1230 = vmatpush2.msra.mxu0 0.0
    %1231 = vmatprep.subr.mxu0 0.0
    %1232 = vmatpush2.msra.mxu0 0.0
    %1233 = vmatprep.subr.mxu0 0.0
    %1234 = vmatpush2.msra.mxu0 0.0
    %1235 = vmatprep.subr.mxu0 0.0
    %1236 = vmatpush2.msra.mxu0 0.0
    %1237 = vmatprep.subr.mxu0 0.0
    %1238 = vmatpush2.msra.mxu0 0.0
    %1239 = vmatprep.subr.mxu0 0.0
    %1240 = vmatpush2.msra.mxu0 0.0
    %1241 = vmatprep.subr.mxu0 0.0
    %1242 = vmatpush2.msra.mxu0 0.0
    %1243 = vmatprep.subr.mxu0 0.0
    %1244 = vmatpush2.msra.mxu0 0.0
    %1245 = vmatprep.subr.mxu0 0.0
    %1246 = vmatpush2.msra.mxu0 0.0
    %1247 = vmatprep.subr.mxu0 0.0
    %1248 = vmatpush2.msra.mxu0 0.0
    %1249 = vmatprep.subr.mxu0 0.0
    %1250 = vmatpush2.msra.mxu0 0.0
    %1251 = vmatprep.subr.mxu0 0.0
    %1252 = vmatpush2.msra.mxu0 0.0
    %1253 = vmatprep.subr.mxu0 0.0
    %1254 = vmatpush2.msra.mxu0 0.0
    %1255 = vmatprep.subr.mxu0 0.0
    %1256 = vmatpush2.msra.mxu0 0.0
    %1257 = vmatprep.subr.mxu0 0.0
    %1258 = vmatpush2.msra.mxu0 0.0
    %1259 = vmatprep.mubr.f32.mxu0 0.0
    %1260 = vmatmul.mubr.f32.gmra.mxu0 %v984
    %v1261 = vpop.f32.mrf.mxu0
    %v1262 = vadd.f32 0.0, %v1261
    %v1263 = vpop.f32.mrf.mxu0
    %1264 = vmatprep.mubr.f32.mxu0 0.0
    %1265 = vmatmul.mubr.f32.gmra.mxu0 %v987
    %v1266 = vpop.f32.mrf.mxu0
    %v1267 = vadd.f32 0.0, %v1266
    %v1268 = vpop.f32.mrf.mxu0
    %1269 = vdwg.mxu0
    %v1270 = vmul.f32 %v1262, %v1099
    %v1271 = vmul.f32 %v1267, %v1104
    %v1272 = vld [vmem:[%s6] sm:$0xff]
    %v1273 = vld [vmem:[%s6 + $0x8] sm:$0xff]
    %v1274 = vsub.f32 %v1106, %v1272
    %v1275 = vsub.f32 %v1107, %v1273
    %v1276 = vmul.f32 %v1274, %v1274
    %v1277 = vmul.f32 %v1275, %v1275
    %v1278 = vsel %vm182, %v1276, 0.0
    %1279 = vadd.xlane.f32.xlu0 %v1278
    %v1280 = vpop.xlane.xlu0 %1279
    %v1281 = vsel %vm182, %v1277, 0.0
    %1282 = vadd.xlane.f32.xlu0 %v1281
    %v1283 = vpop.xlane.xlu0 %1282
    %v1284 = vadd.f32 %v1280, 1e-12
    %v1285 = vadd.f32 %v1283, 1e-12
    %v1286 = vrsqrt.pop %v1284
    %v1287 = vrsqrt.pop %v1285
    %v1288 = vmul.f32 %v1286, %v1070
    %v1289 = vmul.f32 %v1287, %v1071
    %1291 = vset.pattern.permute.xlu0 32
    %1292 = vperm.xlu0 %1291, %v1288
    %v1293 = vpop.permute.xlu0 %1292
    %1296 = vset.pattern.permute.xlu0 32
    %1297 = vperm.xlu0 %1296, %v1289
    %v1298 = vpop.permute.xlu0 %1297
    %v1300 = vmul.f32 %v1274, %v1293
    %v1301 = vmul.f32 %v1275, %v1298
    %s1302 = smul.f32 %s1095, 0.5
    %v1303 = vstv %s1302
    %v1304 = vmul.f32 %v1300, %v1303
    %v1305 = vmul.f32 %v1301, %v1303
    %v1306 = vmul.f32 %v1304, %v1099
    %v1307 = vmul.f32 %v1305, %v1104
    %s1308 = scalar_lea.vmem %s6, 16
    %v1309 = vld [vmem:[%s1308] sm:$0xff]
    %v1310 = vld [vmem:[%s1308 + $0x8] sm:$0xff]
    %1313 = vrot.lane.b32.xlu0 %v1309, 32
    %v1314 = vpop.permute.xlu0 %1313
    %1315 = vrot.lane.b32.xlu0 %v1310, 32
    %v1316 = vpop.permute.xlu0 %1315
    %v1319 = vsub.f32 %v1270, %v1314
    %v1320 = vsub.f32 %v1271, %v1316
    %v1321 = vmul.f32 %v1319, %v1319
    %v1322 = vmul.f32 %v1320, %v1320
    %1325 = vrot.lane.b32.xlu0 %v1321, 96
    %v1326 = vpop.permute.xlu0 %1325
    %1327 = vrot.lane.b32.xlu0 %v1322, 96
    %v1328 = vpop.permute.xlu0 %1327
    %v1331 = vsel %vm182, %v1326, 0.0
    %1332 = vadd.xlane.f32.xlu0 %v1331
    %v1333 = vpop.xlane.xlu0 %1332
    %v1334 = vsel %vm182, %v1328, 0.0
    %1335 = vadd.xlane.f32.xlu0 %v1334
    %v1336 = vpop.xlane.xlu0 %1335
    %v1337 = vadd.f32 %v1333, 1e-12
    %v1338 = vadd.f32 %v1336, 1e-12
    %v1339 = vrsqrt.pop %v1337
    %v1340 = vrsqrt.pop %v1338
    %v1341 = vmul.f32 %v1339, %v1070
    %v1342 = vmul.f32 %v1340, %v1071
    %1344 = vset.pattern.permute.xlu0 32
    %1345 = vperm.xlu0 %1344, %v1341
    %v1346 = vpop.permute.xlu0 %1345
    %1349 = vset.pattern.permute.xlu0 32
    %1350 = vperm.xlu0 %1349, %v1342
    %v1351 = vpop.permute.xlu0 %1350
    %v1353 = vmul.f32 %v1319, %v1346
    %v1354 = vmul.f32 %v1320, %v1351
    %s1355 = smul.f32 %s1095, 0.25
    %v1356 = vstv %s1355
    %v1357 = vmul.f32 %v1353, %v1356
    %v1358 = vmul.f32 %v1354, %v1356
    %v1359 = vmul.f32 %v1357, %v1099
    %v1360 = vmul.f32 %v1358, %v1104
    %s1361 = scalar_lea.vmem %s6, 32
    %v1362 = vld [vmem:[%s1361] sm:$0xff]
    %v1363 = vld [vmem:[%s1361 + $0x8] sm:$0xff]
    %1366 = vrot.lane.b32.xlu0 %v1362, 64
    %v1367 = vpop.permute.xlu0 %1366
    %1368 = vrot.lane.b32.xlu0 %v1363, 64
    %v1369 = vpop.permute.xlu0 %1368
    %v1372 = vsub.f32 %v1270, %v1367
    %v1373 = vsub.f32 %v1271, %v1369
    %v1374 = vmul.f32 %v1372, %v1372
    %v1375 = vmul.f32 %v1373, %v1373
    %1378 = vrot.lane.b32.xlu0 %v1374, 64
    %v1379 = vpop.permute.xlu0 %1378
    %1380 = vrot.lane.b32.xlu0 %v1375, 64
    %v1381 = vpop.permute.xlu0 %1380
    %v1384 = vsel %vm182, %v1379, 0.0
    %1385 = vadd.xlane.f32.xlu0 %v1384
    %v1386 = vpop.xlane.xlu0 %1385
    %v1387 = vsel %vm182, %v1381, 0.0
    %1388 = vadd.xlane.f32.xlu0 %v1387
    %v1389 = vpop.xlane.xlu0 %1388
    %v1390 = vadd.f32 %v1386, 1e-12
    %v1391 = vadd.f32 %v1389, 1e-12
    %v1392 = vrsqrt.pop %v1390
    %v1393 = vrsqrt.pop %v1391
    %v1394 = vmul.f32 %v1392, %v1070
    %v1395 = vmul.f32 %v1393, %v1071
    %1397 = vset.pattern.permute.xlu0 32
    %1398 = vperm.xlu0 %1397, %v1394
    %v1399 = vpop.permute.xlu0 %1398
    %1402 = vset.pattern.permute.xlu0 32
    %1403 = vperm.xlu0 %1402, %v1395
    %v1404 = vpop.permute.xlu0 %1403
    %v1406 = vmul.f32 %v1372, %v1399
    %v1407 = vmul.f32 %v1373, %v1404
    %s1408 = smul.f32 %s1095, 0.125
    %v1409 = vstv %s1408
    %v1410 = vmul.f32 %v1406, %v1409
    %v1411 = vmul.f32 %v1407, %v1409
    %v1412 = vmul.f32 %v1410, %v1099
    %v1413 = vmul.f32 %v1411, %v1104
    %1416 = vrot.lane.b32.xlu0 %v1270, 96
    %v1417 = vpop.permute.xlu0 %1416
    %1418 = vrot.lane.b32.xlu0 %v1271, 96
    %v1419 = vpop.permute.xlu0 %1418
    %v1422 = vsel %vm182, %v1306, %v1359
    %v1423 = vsel %vm182, %v1307, %v1360
    %v1424 = vsel %vm1193, %v1422, %v1412
    %v1425 = vsel %vm1193, %v1423, %v1413
    %vm1426 = vcmask 785408
    %v1427 = vsel %vm1426, %v1424, %v1417
    %v1428 = vsel %vm1426, %v1425, %v1419
    %1429 = vmatprep.subr.mxu0 0.0
    %1430 = vmatpush1.msra.mxu0 0.0
    %1431 = vmatprep.subr.mxu0 0.0
    %1432 = vmatpush1.msra.mxu0 0.0
    %1433 = vmatprep.subr.mxu0 0.0
    %1434 = vmatpush1.msra.mxu0 0.0
    %1435 = vmatprep.subr.mxu0 0.0
    %1436 = vmatpush1.msra.mxu0 0.0
    %1437 = vmatprep.subr.mxu0 0.0
    %1438 = vmatpush1.msra.mxu0 0.0
    %1439 = vmatprep.subr.mxu0 0.0
    %1440 = vmatpush1.msra.mxu0 0.0
    %1441 = vmatprep.subr.mxu0 0.0
    %1442 = vmatpush1.msra.mxu0 0.0
    %1443 = vmatprep.subr.mxu0 0.0
    %1444 = vmatpush1.msra.mxu0 0.0
    %1445 = vmatprep.subr.mxu0 0.0
    %1446 = vmatpush1.msra.mxu0 0.0
    %1447 = vmatprep.subr.mxu0 0.0
    %1448 = vmatpush1.msra.mxu0 0.0
    %1449 = vmatprep.subr.mxu0 0.0
    %1450 = vmatpush1.msra.mxu0 0.0
    %1451 = vmatprep.subr.mxu0 0.0
    %1452 = vmatpush1.msra.mxu0 0.0
    %1453 = vmatprep.subr.mxu0 0.0
    %1454 = vmatpush1.msra.mxu0 0.0
    %1455 = vmatprep.subr.mxu0 0.0
    %1456 = vmatpush1.msra.mxu0 0.0
    %1457 = vmatprep.subr.mxu0 %v1419
    %1458 = vmatpush1.msra.mxu0 %v1428
    %1459 = vmatprep.subr.mxu0 %v1417
    %1460 = vmatpush1.msra.mxu0 %v1427
    %1461 = vmatprep.subr.mxu0 0.0
    %1462 = vmatpush2.msra.mxu0 0.0
    %1463 = vmatprep.subr.mxu0 0.0
    %1464 = vmatpush2.msra.mxu0 0.0
    %1465 = vmatprep.subr.mxu0 0.0
    %1466 = vmatpush2.msra.mxu0 0.0
    %1467 = vmatprep.subr.mxu0 0.0
    %1468 = vmatpush2.msra.mxu0 0.0
    %1469 = vmatprep.subr.mxu0 0.0
    %1470 = vmatpush2.msra.mxu0 0.0
    %1471 = vmatprep.subr.mxu0 0.0
    %1472 = vmatpush2.msra.mxu0 0.0
    %1473 = vmatprep.subr.mxu0 0.0
    %1474 = vmatpush2.msra.mxu0 0.0
    %1475 = vmatprep.subr.mxu0 0.0
    %1476 = vmatpush2.msra.mxu0 0.0
    %1477 = vmatprep.subr.mxu0 0.0
    %1478 = vmatpush2.msra.mxu0 0.0
    %1479 = vmatprep.subr.mxu0 0.0
    %1480 = vmatpush2.msra.mxu0 0.0
    %1481 = vmatprep.subr.mxu0 0.0
    %1482 = vmatpush2.msra.mxu0 0.0
    %1483 = vmatprep.subr.mxu0 0.0
    %1484 = vmatpush2.msra.mxu0 0.0
    %1485 = vmatprep.subr.mxu0 0.0
    %1486 = vmatpush2.msra.mxu0 0.0
    %1487 = vmatprep.subr.mxu0 0.0
    %1488 = vmatpush2.msra.mxu0 0.0
    %1489 = vmatprep.subr.mxu0 0.0
    %1490 = vmatpush2.msra.mxu0 0.0
    %1491 = vmatprep.subr.mxu0 0.0
    %1492 = vmatpush2.msra.mxu0 0.0
    %1493 = vmatprep.mubr.f32.mxu0 0.0
    %1494 = vmatmul.mubr.f32.gmra.mxu0 %v1109
    %v1495 = vpop.f32.mrf.mxu0
    %v1496 = vadd.f32 0.0, %v1495
    %v1497 = vpop.f32.mrf.mxu0
    %v1498 = vadd.f32 0.0, %v1497
    %1499 = vdwg.mxu0
    %v1500 = vadd.f32 %v948, %v1496
    %v1501 = vmul.f32 %v1496, 2.0
    %1503 = vrot.lane.b32.xlu0 %v1496, 32
    %v1504 = vpop.permute.xlu0 %1503
    %v1506 = vsub.f32 %v1181, %v1504
    %1508 = vrot.lane.b32.xlu0 %v1506, 32
    %v1509 = vpop.permute.xlu0 %1508
    %v1511 = vmul.f32 %v1501, %v1509
    %1513 = vrot.lane.b32.xlu0 %v1511, 96
    %v1514 = vpop.permute.xlu0 %1513
    %v1516 = vadd.f32 %v1500, %v1514
    %v1517 = vmul.f32 %v1496, 3.0
    %v1518 = vsub.f32 %v1182, %v1498
    %1520 = vrot.lane.b32.xlu0 %v1518, 64
    %v1521 = vpop.permute.xlu0 %1520
    %v1523 = vmul.f32 %v1517, %v1521
    %1525 = vrot.lane.b32.xlu0 %v1523, 64
    %v1526 = vpop.permute.xlu0 %1525
    %v1528 = vadd.f32 %v1516, %v1526
    %v1529 = vpack.c.bf16 %v1528, %v1528
    %1530 = vxpose.xlu0.c.b16.start [1/8] %v39, 128
    %1531 = vxpose.xlu0.c.b16.cont [2/8] 0, 128
    %1532 = vxpose.xlu0.c.b16.cont [3/8] 0, 128
    %1533 = vxpose.xlu0.c.b16.cont [4/8] 0, 128
    %1534 = vxpose.xlu0.c.b16.cont [5/8] 0, 128
    %1535 = vxpose.xlu0.c.b16.cont [6/8] 0, 128
    %1536 = vxpose.xlu0.c.b16.cont [7/8] 0, 128
    %1537 = vxpose.xlu0.c.b16.end [8/8] 0, 128
    %v1538 = vpop.trf.xlu0
    %v1539 = vpop.trf.xlu0
    %v1540 = vpop.trf.xlu0
    %v1541 = vpop.trf.xlu0
    %v1542 = vpop.trf.xlu0
    %v1543 = vpop.trf.xlu0
    %v1544 = vpop.trf.xlu0
    %v1545 = vpop.trf.xlu0
    %1546 = vxpose.xlu0.c.b16.start [1/8] %v40, 128
    %1547 = vxpose.xlu0.c.b16.cont [2/8] 0, 128
    %1548 = vxpose.xlu0.c.b16.cont [3/8] 0, 128
    %1549 = vxpose.xlu0.c.b16.cont [4/8] 0, 128
    %1550 = vxpose.xlu0.c.b16.cont [5/8] 0, 128
    %1551 = vxpose.xlu0.c.b16.cont [6/8] 0, 128
    %1552 = vxpose.xlu0.c.b16.cont [7/8] 0, 128
    %1553 = vxpose.xlu0.c.b16.end [8/8] 0, 128
    %v1554 = vpop.trf.xlu0
    %v1555 = vpop.trf.xlu0
    %v1556 = vpop.trf.xlu0
    %v1557 = vpop.trf.xlu0
    %v1558 = vpop.trf.xlu0
    %v1559 = vpop.trf.xlu0
    %v1560 = vpop.trf.xlu0
    %v1561 = vpop.trf.xlu0
    %1562 = vxpose.xlu0.c.b16.start [1/8] %v41, 128
    %1563 = vxpose.xlu0.c.b16.cont [2/8] 0, 128
    %1564 = vxpose.xlu0.c.b16.cont [3/8] 0, 128
    %1565 = vxpose.xlu0.c.b16.cont [4/8] 0, 128
    %1566 = vxpose.xlu0.c.b16.cont [5/8] 0, 128
    %1567 = vxpose.xlu0.c.b16.cont [6/8] 0, 128
    %1568 = vxpose.xlu0.c.b16.cont [7/8] 0, 128
    %1569 = vxpose.xlu0.c.b16.end [8/8] 0, 128
    %v1570 = vpop.trf.xlu0
    %v1571 = vpop.trf.xlu0
    %v1572 = vpop.trf.xlu0
    %v1573 = vpop.trf.xlu0
    %v1574 = vpop.trf.xlu0
    %v1575 = vpop.trf.xlu0
    %v1576 = vpop.trf.xlu0
    %v1577 = vpop.trf.xlu0
    %1578 = vxpose.xlu0.c.b16.start [1/8] %v42, 128
    %1579 = vxpose.xlu0.c.b16.cont [2/8] 0, 128
    %1580 = vxpose.xlu0.c.b16.cont [3/8] 0, 128
    %1581 = vxpose.xlu0.c.b16.cont [4/8] 0, 128
    %1582 = vxpose.xlu0.c.b16.cont [5/8] 0, 128
    %1583 = vxpose.xlu0.c.b16.cont [6/8] 0, 128
    %1584 = vxpose.xlu0.c.b16.cont [7/8] 0, 128
    %1585 = vxpose.xlu0.c.b16.end [8/8] 0, 128
    %v1586 = vpop.trf.xlu0
    %v1587 = vpop.trf.xlu0
    %v1588 = vpop.trf.xlu0
    %v1589 = vpop.trf.xlu0
    %v1590 = vpop.trf.xlu0
    %v1591 = vpop.trf.xlu0
    %v1592 = vpop.trf.xlu0
    %v1593 = vpop.trf.xlu0
    %1594 = vxpose.xlu0.c.b16.start [1/8] %v43, 128
    %1595 = vxpose.xlu0.c.b16.cont [2/8] 0, 128
    %1596 = vxpose.xlu0.c.b16.cont [3/8] 0, 128
    %1597 = vxpose.xlu0.c.b16.cont [4/8] 0, 128
    %1598 = vxpose.xlu0.c.b16.cont [5/8] 0, 128
    %1599 = vxpose.xlu0.c.b16.cont [6/8] 0, 128
    %1600 = vxpose.xlu0.c.b16.cont [7/8] 0, 128
    %1601 = vxpose.xlu0.c.b16.end [8/8] 0, 128
    %v1602 = vpop.trf.xlu0
    %v1603 = vpop.trf.xlu0
    %v1604 = vpop.trf.xlu0
    %v1605 = vpop.trf.xlu0
    %v1606 = vpop.trf.xlu0
    %v1607 = vpop.trf.xlu0
    %v1608 = vpop.trf.xlu0
    %v1609 = vpop.trf.xlu0
    %1610 = vxpose.xlu0.c.b16.start [1/8] %v44, 128
    %1611 = vxpose.xlu0.c.b16.cont [2/8] 0, 128
    %1612 = vxpose.xlu0.c.b16.cont [3/8] 0, 128
    %1613 = vxpose.xlu0.c.b16.cont [4/8] 0, 128
    %1614 = vxpose.xlu0.c.b16.cont [5/8] 0, 128
    %1615 = vxpose.xlu0.c.b16.cont [6/8] 0, 128
    %1616 = vxpose.xlu0.c.b16.cont [7/8] 0, 128
    %1617 = vxpose.xlu0.c.b16.end [8/8] 0, 128
    %v1618 = vpop.trf.xlu0
    %v1619 = vpop.trf.xlu0
    %v1620 = vpop.trf.xlu0
    %v1621 = vpop.trf.xlu0
    %v1622 = vpop.trf.xlu0
    %v1623 = vpop.trf.xlu0
    %v1624 = vpop.trf.xlu0
    %v1625 = vpop.trf.xlu0
    %1626 = vxpose.xlu0.c.b16.start [1/8] %v45, 128
    %1627 = vxpose.xlu0.c.b16.cont [2/8] 0, 128
    %1628 = vxpose.xlu0.c.b16.cont [3/8] 0, 128
    %1629 = vxpose.xlu0.c.b16.cont [4/8] 0, 128
    %1630 = vxpose.xlu0.c.b16.cont [5/8] 0, 128
    %1631 = vxpose.xlu0.c.b16.cont [6/8] 0, 128
    %1632 = vxpose.xlu0.c.b16.cont [7/8] 0, 128
    %1633 = vxpose.xlu0.c.b16.end [8/8] 0, 128
    %v1634 = vpop.trf.xlu0
    %v1635 = vpop.trf.xlu0
    %v1636 = vpop.trf.xlu0
    %v1637 = vpop.trf.xlu0
    %v1638 = vpop.trf.xlu0
    %v1639 = vpop.trf.xlu0
    %v1640 = vpop.trf.xlu0
    %v1641 = vpop.trf.xlu0
    %1642 = vxpose.xlu0.c.b16.start [1/8] %v46, 128
    %1643 = vxpose.xlu0.c.b16.cont [2/8] 0, 128
    %1644 = vxpose.xlu0.c.b16.cont [3/8] 0, 128
    %1645 = vxpose.xlu0.c.b16.cont [4/8] 0, 128
    %1646 = vxpose.xlu0.c.b16.cont [5/8] 0, 128
    %1647 = vxpose.xlu0.c.b16.cont [6/8] 0, 128
    %1648 = vxpose.xlu0.c.b16.cont [7/8] 0, 128
    %1649 = vxpose.xlu0.c.b16.end [8/8] 0, 128
    %v1650 = vpop.trf.xlu0
    %v1651 = vpop.trf.xlu0
    %v1652 = vpop.trf.xlu0
    %v1653 = vpop.trf.xlu0
    %v1654 = vpop.trf.xlu0
    %v1655 = vpop.trf.xlu0
    %v1656 = vpop.trf.xlu0
    %v1657 = vpop.trf.xlu0
    %v1659 = vsel %vm982, %v1538, 0
    %v1662 = vsel %vm982, %v1539, 0
    %v1665 = vsel %vm982, %v1540, 0
    %v1668 = vsel %vm982, %v1541, 0
    %v1671 = vsel %vm982, %v1542, 0
    %v1674 = vsel %vm982, %v1543, 0
    %v1677 = vsel %vm982, %v1544, 0
    %v1680 = vsel %vm982, %v1545, 0
    %v1683 = vsel %vm982, %v1554, 0
    %v1686 = vsel %vm982, %v1555, 0
    %v1689 = vsel %vm982, %v1556, 0
    %v1692 = vsel %vm982, %v1557, 0
    %v1695 = vsel %vm982, %v1558, 0
    %v1698 = vsel %vm982, %v1559, 0
    %v1701 = vsel %vm982, %v1560, 0
    %v1704 = vsel %vm982, %v1561, 0
    %v1707 = vsel %vm982, %v1570, 0
    %v1710 = vsel %vm982, %v1571, 0
    %v1713 = vsel %vm982, %v1572, 0
    %v1716 = vsel %vm982, %v1573, 0
    %v1719 = vsel %vm982, %v1574, 0
    %v1722 = vsel %vm982, %v1575, 0
    %v1725 = vsel %vm982, %v1576, 0
    %v1728 = vsel %vm982, %v1577, 0
    %v1731 = vsel %vm982, %v1586, 0
    %v1734 = vsel %vm982, %v1587, 0
    %v1737 = vsel %vm982, %v1588, 0
    %v1740 = vsel %vm982, %v1589, 0
    %v1743 = vsel %vm982, %v1590, 0
    %v1746 = vsel %vm982, %v1591, 0
    %v1749 = vsel %vm982, %v1592, 0
    %v1752 = vsel %vm982, %v1593, 0
    %v1755 = vsel %vm982, %v1602, 0
    %v1758 = vsel %vm982, %v1603, 0
    %v1761 = vsel %vm982, %v1604, 0
    %v1764 = vsel %vm982, %v1605, 0
    %v1767 = vsel %vm982, %v1606, 0
    %v1770 = vsel %vm982, %v1607, 0
    %v1773 = vsel %vm982, %v1608, 0
    %v1776 = vsel %vm982, %v1609, 0
    %v1779 = vsel %vm982, %v1618, 0
    %v1782 = vsel %vm982, %v1619, 0
    %v1785 = vsel %vm982, %v1620, 0
    %v1788 = vsel %vm982, %v1621, 0
    %v1791 = vsel %vm982, %v1622, 0
    %v1794 = vsel %vm982, %v1623, 0
    %v1797 = vsel %vm982, %v1624, 0
    %v1800 = vsel %vm982, %v1625, 0
    %v1803 = vsel %vm982, %v1634, 0
    %v1806 = vsel %vm982, %v1635, 0
    %v1809 = vsel %vm982, %v1636, 0
    %v1812 = vsel %vm982, %v1637, 0
    %v1815 = vsel %vm982, %v1638, 0
    %v1818 = vsel %vm982, %v1639, 0
    %v1821 = vsel %vm982, %v1640, 0
    %v1824 = vsel %vm982, %v1641, 0
    %v1827 = vsel %vm982, %v1650, 0
    %v1830 = vsel %vm982, %v1651, 0
    %v1833 = vsel %vm982, %v1652, 0
    %v1836 = vsel %vm982, %v1653, 0
    %v1839 = vsel %vm982, %v1654, 0
    %v1842 = vsel %vm982, %v1655, 0
    %v1845 = vsel %vm982, %v1656, 0
    %v1848 = vsel %vm982, %v1657, 0
    %vm1850 = vcmask 1043456
    %v1852 = vsel %vm1850, %v1529, 0
    %1854 = vmatprep.subr.bf16.mxu0 0
    %1855 = vmatpush1.bf16.msra.mxu0 0
    %1856 = vmatprep.subr.bf16.mxu0 0
    %1857 = vmatpush1.bf16.msra.mxu0 0
    %1858 = vmatprep.subr.bf16.mxu0 0
    %1859 = vmatpush1.bf16.msra.mxu0 0
    %1860 = vmatprep.subr.bf16.mxu0 0
    %1861 = vmatpush1.bf16.msra.mxu0 0
    %1862 = vmatprep.subr.bf16.mxu0 0
    %1863 = vmatpush1.bf16.msra.mxu0 0
    %1864 = vmatprep.subr.bf16.mxu0 0
    %1865 = vmatpush1.bf16.msra.mxu0 0
    %1866 = vmatprep.subr.bf16.mxu0 0
    %1867 = vmatpush1.bf16.msra.mxu0 0
    %1868 = vmatprep.subr.bf16.mxu0 0
    %1869 = vmatpush1.bf16.msra.mxu0 %v1852
    %1870 = vmatprep.subr.bf16.mxu0 0
    %1871 = vmatpush2.bf16.msra.mxu0 0
    %1872 = vmatprep.subr.bf16.mxu0 0
    %1873 = vmatpush2.bf16.msra.mxu0 0
    %1874 = vmatprep.subr.bf16.mxu0 0
    %1875 = vmatpush2.bf16.msra.mxu0 0
    %1876 = vmatprep.subr.bf16.mxu0 0
    %1877 = vmatpush2.bf16.msra.mxu0 0
    %1878 = vmatprep.subr.bf16.mxu0 0
    %1879 = vmatpush2.bf16.msra.mxu0 0
    %1880 = vmatprep.subr.bf16.mxu0 0
    %1881 = vmatpush2.bf16.msra.mxu0 0
    %1882 = vmatprep.subr.bf16.mxu0 0
    %1883 = vmatpush2.bf16.msra.mxu0 0
    %1884 = vmatprep.subr.bf16.mxu0 0
    %1885 = vmatpush2.bf16.msra.mxu0 0
    %1886 = vmatprep.mubr.bf16.mxu0 0
    %1887 = vmatmul.mubr.bf16.gmra.mxu0 %v1659
    %v1888 = vpop.f32.mrf.mxu0
    %v1889 = vadd.f32 0.0, %v1888
    %v1890 = vpop.f32.mrf.mxu0
    %v1891 = vpop.f32.mrf.mxu0
    %v1892 = vadd.f32 0.0, %v1891
    %v1893 = vpop.f32.mrf.mxu0
    %1894 = vmatprep.mubr.bf16.mxu0 0
    %1895 = vmatmul.mubr.bf16.gmra.mxu0 %v1662
    %v1896 = vpop.f32.mrf.mxu0
    %v1897 = vadd.f32 0.0, %v1896
    %v1898 = vpop.f32.mrf.mxu0
    %v1899 = vpop.f32.mrf.mxu0
    %v1900 = vadd.f32 0.0, %v1899
    %v1901 = vpop.f32.mrf.mxu0
    %1902 = vmatprep.mubr.bf16.mxu0 0
    %1903 = vmatmul.mubr.bf16.gmra.mxu0 %v1665
    %v1904 = vpop.f32.mrf.mxu0
    %v1905 = vadd.f32 0.0, %v1904
    %v1906 = vpop.f32.mrf.mxu0
    %v1907 = vpop.f32.mrf.mxu0
    %v1908 = vadd.f32 0.0, %v1907
    %v1909 = vpop.f32.mrf.mxu0
    %1910 = vmatprep.mubr.bf16.mxu0 0
    %1911 = vmatmul.mubr.bf16.gmra.mxu0 %v1668
    %v1912 = vpop.f32.mrf.mxu0
    %v1913 = vadd.f32 0.0, %v1912
    %v1914 = vpop.f32.mrf.mxu0
    %v1915 = vpop.f32.mrf.mxu0
    %v1916 = vadd.f32 0.0, %v1915
    %v1917 = vpop.f32.mrf.mxu0
    %1918 = vmatprep.mubr.bf16.mxu0 0
    %1919 = vmatmul.mubr.bf16.gmra.mxu0 %v1671
    %v1920 = vpop.f32.mrf.mxu0
    %v1921 = vadd.f32 0.0, %v1920
    %v1922 = vpop.f32.mrf.mxu0
    %v1923 = vpop.f32.mrf.mxu0
    %v1924 = vadd.f32 0.0, %v1923
    %v1925 = vpop.f32.mrf.mxu0
    %1926 = vmatprep.mubr.bf16.mxu0 0
    %1927 = vmatmul.mubr.bf16.gmra.mxu0 %v1674
    %v1928 = vpop.f32.mrf.mxu0
    %v1929 = vadd.f32 0.0, %v1928
    %v1930 = vpop.f32.mrf.mxu0
    %v1931 = vpop.f32.mrf.mxu0
    %v1932 = vadd.f32 0.0, %v1931
    %v1933 = vpop.f32.mrf.mxu0
    %1934 = vmatprep.mubr.bf16.mxu0 0
    %1935 = vmatmul.mubr.bf16.gmra.mxu0 %v1677
    %v1936 = vpop.f32.mrf.mxu0
    %v1937 = vadd.f32 0.0, %v1936
    %v1938 = vpop.f32.mrf.mxu0
    %v1939 = vpop.f32.mrf.mxu0
    %v1940 = vadd.f32 0.0, %v1939
    %v1941 = vpop.f32.mrf.mxu0
    %1942 = vmatprep.mubr.bf16.mxu0 0
    %1943 = vmatmul.mubr.bf16.gmra.mxu0 %v1680
    %v1944 = vpop.f32.mrf.mxu0
    %v1945 = vadd.f32 0.0, %v1944
    %v1946 = vpop.f32.mrf.mxu0
    %v1947 = vpop.f32.mrf.mxu0
    %v1948 = vadd.f32 0.0, %v1947
    %v1949 = vpop.f32.mrf.mxu0
    %1950 = vmatprep.mubr.bf16.mxu0 0
    %1951 = vmatmul.mubr.bf16.gmra.mxu0 %v1683
    %v1952 = vpop.f32.mrf.mxu0
    %v1953 = vadd.f32 0.0, %v1952
    %v1954 = vpop.f32.mrf.mxu0
    %v1955 = vpop.f32.mrf.mxu0
    %v1956 = vadd.f32 0.0, %v1955
    %v1957 = vpop.f32.mrf.mxu0
    %1958 = vmatprep.mubr.bf16.mxu0 0
    %1959 = vmatmul.mubr.bf16.gmra.mxu0 %v1686
    %v1960 = vpop.f32.mrf.mxu0
    %v1961 = vadd.f32 0.0, %v1960
    %v1962 = vpop.f32.mrf.mxu0
    %v1963 = vpop.f32.mrf.mxu0
    %v1964 = vadd.f32 0.0, %v1963
    %v1965 = vpop.f32.mrf.mxu0
    %1966 = vmatprep.mubr.bf16.mxu0 0
    %1967 = vmatmul.mubr.bf16.gmra.mxu0 %v1689
    %v1968 = vpop.f32.mrf.mxu0
    %v1969 = vadd.f32 0.0, %v1968
    %v1970 = vpop.f32.mrf.mxu0
    %v1971 = vpop.f32.mrf.mxu0
    %v1972 = vadd.f32 0.0, %v1971
    %v1973 = vpop.f32.mrf.mxu0
    %1974 = vmatprep.mubr.bf16.mxu0 0
    %1975 = vmatmul.mubr.bf16.gmra.mxu0 %v1692
    %v1976 = vpop.f32.mrf.mxu0
    %v1977 = vadd.f32 0.0, %v1976
    %v1978 = vpop.f32.mrf.mxu0
    %v1979 = vpop.f32.mrf.mxu0
    %v1980 = vadd.f32 0.0, %v1979
    %v1981 = vpop.f32.mrf.mxu0
    %1982 = vmatprep.mubr.bf16.mxu0 0
    %1983 = vmatmul.mubr.bf16.gmra.mxu0 %v1695
    %v1984 = vpop.f32.mrf.mxu0
    %v1985 = vadd.f32 0.0, %v1984
    %v1986 = vpop.f32.mrf.mxu0
    %v1987 = vpop.f32.mrf.mxu0
    %v1988 = vadd.f32 0.0, %v1987
    %v1989 = vpop.f32.mrf.mxu0
    %1990 = vmatprep.mubr.bf16.mxu0 0
    %1991 = vmatmul.mubr.bf16.gmra.mxu0 %v1698
    %v1992 = vpop.f32.mrf.mxu0
    %v1993 = vadd.f32 0.0, %v1992
    %v1994 = vpop.f32.mrf.mxu0
    %v1995 = vpop.f32.mrf.mxu0
    %v1996 = vadd.f32 0.0, %v1995
    %v1997 = vpop.f32.mrf.mxu0
    %1998 = vmatprep.mubr.bf16.mxu0 0
    %1999 = vmatmul.mubr.bf16.gmra.mxu0 %v1701
    %v2000 = vpop.f32.mrf.mxu0
    %v2001 = vadd.f32 0.0, %v2000
    %v2002 = vpop.f32.mrf.mxu0
    %v2003 = vpop.f32.mrf.mxu0
    %v2004 = vadd.f32 0.0, %v2003
    %v2005 = vpop.f32.mrf.mxu0
    %2006 = vmatprep.mubr.bf16.mxu0 0
    %2007 = vmatmul.mubr.bf16.gmra.mxu0 %v1704
    %v2008 = vpop.f32.mrf.mxu0
    %v2009 = vadd.f32 0.0, %v2008
    %v2010 = vpop.f32.mrf.mxu0
    %v2011 = vpop.f32.mrf.mxu0
    %v2012 = vadd.f32 0.0, %v2011
    %v2013 = vpop.f32.mrf.mxu0
    %2014 = vmatprep.mubr.bf16.mxu0 0
    %2015 = vmatmul.mubr.bf16.gmra.mxu0 %v1707
    %v2016 = vpop.f32.mrf.mxu0
    %v2017 = vadd.f32 0.0, %v2016
    %v2018 = vpop.f32.mrf.mxu0
    %v2019 = vpop.f32.mrf.mxu0
    %v2020 = vadd.f32 0.0, %v2019
    %v2021 = vpop.f32.mrf.mxu0
    %2022 = vmatprep.mubr.bf16.mxu0 0
    %2023 = vmatmul.mubr.bf16.gmra.mxu0 %v1710
    %v2024 = vpop.f32.mrf.mxu0
    %v2025 = vadd.f32 0.0, %v2024
    %v2026 = vpop.f32.mrf.mxu0
    %v2027 = vpop.f32.mrf.mxu0
    %v2028 = vadd.f32 0.0, %v2027
    %v2029 = vpop.f32.mrf.mxu0
    %2030 = vmatprep.mubr.bf16.mxu0 0
    %2031 = vmatmul.mubr.bf16.gmra.mxu0 %v1713
    %v2032 = vpop.f32.mrf.mxu0
    %v2033 = vadd.f32 0.0, %v2032
    %v2034 = vpop.f32.mrf.mxu0
    %v2035 = vpop.f32.mrf.mxu0
    %v2036 = vadd.f32 0.0, %v2035
    %v2037 = vpop.f32.mrf.mxu0
    %2038 = vmatprep.mubr.bf16.mxu0 0
    %2039 = vmatmul.mubr.bf16.gmra.mxu0 %v1716
    %v2040 = vpop.f32.mrf.mxu0
    %v2041 = vadd.f32 0.0, %v2040
    %v2042 = vpop.f32.mrf.mxu0
    %v2043 = vpop.f32.mrf.mxu0
    %v2044 = vadd.f32 0.0, %v2043
    %v2045 = vpop.f32.mrf.mxu0
    %2046 = vmatprep.mubr.bf16.mxu0 0
    %2047 = vmatmul.mubr.bf16.gmra.mxu0 %v1719
    %v2048 = vpop.f32.mrf.mxu0
    %v2049 = vadd.f32 0.0, %v2048
    %v2050 = vpop.f32.mrf.mxu0
    %v2051 = vpop.f32.mrf.mxu0
    %v2052 = vadd.f32 0.0, %v2051
    %v2053 = vpop.f32.mrf.mxu0
    %2054 = vmatprep.mubr.bf16.mxu0 0
    %2055 = vmatmul.mubr.bf16.gmra.mxu0 %v1722
    %v2056 = vpop.f32.mrf.mxu0
    %v2057 = vadd.f32 0.0, %v2056
    %v2058 = vpop.f32.mrf.mxu0
    %v2059 = vpop.f32.mrf.mxu0
    %v2060 = vadd.f32 0.0, %v2059
    %v2061 = vpop.f32.mrf.mxu0
    %2062 = vmatprep.mubr.bf16.mxu0 0
    %2063 = vmatmul.mubr.bf16.gmra.mxu0 %v1725
    %v2064 = vpop.f32.mrf.mxu0
    %v2065 = vadd.f32 0.0, %v2064
    %v2066 = vpop.f32.mrf.mxu0
    %v2067 = vpop.f32.mrf.mxu0
    %v2068 = vadd.f32 0.0, %v2067
    %v2069 = vpop.f32.mrf.mxu0
    %2070 = vmatprep.mubr.bf16.mxu0 0
    %2071 = vmatmul.mubr.bf16.gmra.mxu0 %v1728
    %v2072 = vpop.f32.mrf.mxu0
    %v2073 = vadd.f32 0.0, %v2072
    %v2074 = vpop.f32.mrf.mxu0
    %v2075 = vpop.f32.mrf.mxu0
    %v2076 = vadd.f32 0.0, %v2075
    %v2077 = vpop.f32.mrf.mxu0
    %2078 = vmatprep.mubr.bf16.mxu0 0
    %2079 = vmatmul.mubr.bf16.gmra.mxu0 %v1731
    %v2080 = vpop.f32.mrf.mxu0
    %v2081 = vadd.f32 0.0, %v2080
    %v2082 = vpop.f32.mrf.mxu0
    %v2083 = vpop.f32.mrf.mxu0
    %v2084 = vadd.f32 0.0, %v2083
    %v2085 = vpop.f32.mrf.mxu0
    %2086 = vmatprep.mubr.bf16.mxu0 0
    %2087 = vmatmul.mubr.bf16.gmra.mxu0 %v1734
    %v2088 = vpop.f32.mrf.mxu0
    %v2089 = vadd.f32 0.0, %v2088
    %v2090 = vpop.f32.mrf.mxu0
    %v2091 = vpop.f32.mrf.mxu0
    %v2092 = vadd.f32 0.0, %v2091
    %v2093 = vpop.f32.mrf.mxu0
    %2094 = vmatprep.mubr.bf16.mxu0 0
    %2095 = vmatmul.mubr.bf16.gmra.mxu0 %v1737
    %v2096 = vpop.f32.mrf.mxu0
    %v2097 = vadd.f32 0.0, %v2096
    %v2098 = vpop.f32.mrf.mxu0
    %v2099 = vpop.f32.mrf.mxu0
    %v2100 = vadd.f32 0.0, %v2099
    %v2101 = vpop.f32.mrf.mxu0
    %2102 = vmatprep.mubr.bf16.mxu0 0
    %2103 = vmatmul.mubr.bf16.gmra.mxu0 %v1740
    %v2104 = vpop.f32.mrf.mxu0
    %v2105 = vadd.f32 0.0, %v2104
    %v2106 = vpop.f32.mrf.mxu0
    %v2107 = vpop.f32.mrf.mxu0
    %v2108 = vadd.f32 0.0, %v2107
    %v2109 = vpop.f32.mrf.mxu0
    %2110 = vmatprep.mubr.bf16.mxu0 0
    %2111 = vmatmul.mubr.bf16.gmra.mxu0 %v1743
    %v2112 = vpop.f32.mrf.mxu0
    %v2113 = vadd.f32 0.0, %v2112
    %v2114 = vpop.f32.mrf.mxu0
    %v2115 = vpop.f32.mrf.mxu0
    %v2116 = vadd.f32 0.0, %v2115
    %v2117 = vpop.f32.mrf.mxu0
    %2118 = vmatprep.mubr.bf16.mxu0 0
    %2119 = vmatmul.mubr.bf16.gmra.mxu0 %v1746
    %v2120 = vpop.f32.mrf.mxu0
    %v2121 = vadd.f32 0.0, %v2120
    %v2122 = vpop.f32.mrf.mxu0
    %v2123 = vpop.f32.mrf.mxu0
    %v2124 = vadd.f32 0.0, %v2123
    %v2125 = vpop.f32.mrf.mxu0
    %2126 = vmatprep.mubr.bf16.mxu0 0
    %2127 = vmatmul.mubr.bf16.gmra.mxu0 %v1749
    %v2128 = vpop.f32.mrf.mxu0
    %v2129 = vadd.f32 0.0, %v2128
    %v2130 = vpop.f32.mrf.mxu0
    %v2131 = vpop.f32.mrf.mxu0
    %v2132 = vadd.f32 0.0, %v2131
    %v2133 = vpop.f32.mrf.mxu0
    %2134 = vmatprep.mubr.bf16.mxu0 0
    %2135 = vmatmul.mubr.bf16.gmra.mxu0 %v1752
    %v2136 = vpop.f32.mrf.mxu0
    %v2137 = vadd.f32 0.0, %v2136
    %v2138 = vpop.f32.mrf.mxu0
    %v2139 = vpop.f32.mrf.mxu0
    %v2140 = vadd.f32 0.0, %v2139
    %v2141 = vpop.f32.mrf.mxu0
    %2142 = vmatprep.mubr.bf16.mxu0 0
    %2143 = vmatmul.mubr.bf16.gmra.mxu0 %v1755
    %v2144 = vpop.f32.mrf.mxu0
    %v2145 = vadd.f32 0.0, %v2144
    %v2146 = vpop.f32.mrf.mxu0
    %v2147 = vpop.f32.mrf.mxu0
    %v2148 = vadd.f32 0.0, %v2147
    %v2149 = vpop.f32.mrf.mxu0
    %2150 = vmatprep.mubr.bf16.mxu0 0
    %2151 = vmatmul.mubr.bf16.gmra.mxu0 %v1758
    %v2152 = vpop.f32.mrf.mxu0
    %v2153 = vadd.f32 0.0, %v2152
    %v2154 = vpop.f32.mrf.mxu0
    %v2155 = vpop.f32.mrf.mxu0
    %v2156 = vadd.f32 0.0, %v2155
    %v2157 = vpop.f32.mrf.mxu0
    %2158 = vmatprep.mubr.bf16.mxu0 0
    %2159 = vmatmul.mubr.bf16.gmra.mxu0 %v1761
    %v2160 = vpop.f32.mrf.mxu0
    %v2161 = vadd.f32 0.0, %v2160
    %v2162 = vpop.f32.mrf.mxu0
    %v2163 = vpop.f32.mrf.mxu0
    %v2164 = vadd.f32 0.0, %v2163
    %v2165 = vpop.f32.mrf.mxu0
    %2166 = vmatprep.mubr.bf16.mxu0 0
    %2167 = vmatmul.mubr.bf16.gmra.mxu0 %v1764
    %v2168 = vpop.f32.mrf.mxu0
    %v2169 = vadd.f32 0.0, %v2168
    %v2170 = vpop.f32.mrf.mxu0
    %v2171 = vpop.f32.mrf.mxu0
    %v2172 = vadd.f32 0.0, %v2171
    %v2173 = vpop.f32.mrf.mxu0
    %2174 = vmatprep.mubr.bf16.mxu0 0
    %2175 = vmatmul.mubr.bf16.gmra.mxu0 %v1767
    %v2176 = vpop.f32.mrf.mxu0
    %v2177 = vadd.f32 0.0, %v2176
    %v2178 = vpop.f32.mrf.mxu0
    %v2179 = vpop.f32.mrf.mxu0
    %v2180 = vadd.f32 0.0, %v2179
    %v2181 = vpop.f32.mrf.mxu0
    %2182 = vmatprep.mubr.bf16.mxu0 0
    %2183 = vmatmul.mubr.bf16.gmra.mxu0 %v1770
    %v2184 = vpop.f32.mrf.mxu0
    %v2185 = vadd.f32 0.0, %v2184
    %v2186 = vpop.f32.mrf.mxu0
    %v2187 = vpop.f32.mrf.mxu0
    %v2188 = vadd.f32 0.0, %v2187
    %v2189 = vpop.f32.mrf.mxu0
    %2190 = vmatprep.mubr.bf16.mxu0 0
    %2191 = vmatmul.mubr.bf16.gmra.mxu0 %v1773
    %v2192 = vpop.f32.mrf.mxu0
    %v2193 = vadd.f32 0.0, %v2192
    %v2194 = vpop.f32.mrf.mxu0
    %v2195 = vpop.f32.mrf.mxu0
    %v2196 = vadd.f32 0.0, %v2195
    %v2197 = vpop.f32.mrf.mxu0
    %2198 = vmatprep.mubr.bf16.mxu0 0
    %2199 = vmatmul.mubr.bf16.gmra.mxu0 %v1776
    %v2200 = vpop.f32.mrf.mxu0
    %v2201 = vadd.f32 0.0, %v2200
    %v2202 = vpop.f32.mrf.mxu0
    %v2203 = vpop.f32.mrf.mxu0
    %v2204 = vadd.f32 0.0, %v2203
    %v2205 = vpop.f32.mrf.mxu0
    %2206 = vmatprep.mubr.bf16.mxu0 0
    %2207 = vmatmul.mubr.bf16.gmra.mxu0 %v1779
    %v2208 = vpop.f32.mrf.mxu0
    %v2209 = vadd.f32 0.0, %v2208
    %v2210 = vpop.f32.mrf.mxu0
    %v2211 = vpop.f32.mrf.mxu0
    %v2212 = vadd.f32 0.0, %v2211
    %v2213 = vpop.f32.mrf.mxu0
    %2214 = vmatprep.mubr.bf16.mxu0 0
    %2215 = vmatmul.mubr.bf16.gmra.mxu0 %v1782
    %v2216 = vpop.f32.mrf.mxu0
    %v2217 = vadd.f32 0.0, %v2216
    %v2218 = vpop.f32.mrf.mxu0
    %v2219 = vpop.f32.mrf.mxu0
    %v2220 = vadd.f32 0.0, %v2219
    %v2221 = vpop.f32.mrf.mxu0
    %2222 = vmatprep.mubr.bf16.mxu0 0
    %2223 = vmatmul.mubr.bf16.gmra.mxu0 %v1785
    %v2224 = vpop.f32.mrf.mxu0
    %v2225 = vadd.f32 0.0, %v2224
    %v2226 = vpop.f32.mrf.mxu0
    %v2227 = vpop.f32.mrf.mxu0
    %v2228 = vadd.f32 0.0, %v2227
    %v2229 = vpop.f32.mrf.mxu0
    %2230 = vmatprep.mubr.bf16.mxu0 0
    %2231 = vmatmul.mubr.bf16.gmra.mxu0 %v1788
    %v2232 = vpop.f32.mrf.mxu0
    %v2233 = vadd.f32 0.0, %v2232
    %v2234 = vpop.f32.mrf.mxu0
    %v2235 = vpop.f32.mrf.mxu0
    %v2236 = vadd.f32 0.0, %v2235
    %v2237 = vpop.f32.mrf.mxu0
    %2238 = vmatprep.mubr.bf16.mxu0 0
    %2239 = vmatmul.mubr.bf16.gmra.mxu0 %v1791
    %v2240 = vpop.f32.mrf.mxu0
    %v2241 = vadd.f32 0.0, %v2240
    %v2242 = vpop.f32.mrf.mxu0
    %v2243 = vpop.f32.mrf.mxu0
    %v2244 = vadd.f32 0.0, %v2243
    %v2245 = vpop.f32.mrf.mxu0
    %2246 = vmatprep.mubr.bf16.mxu0 0
    %2247 = vmatmul.mubr.bf16.gmra.mxu0 %v1794
    %v2248 = vpop.f32.mrf.mxu0
    %v2249 = vadd.f32 0.0, %v2248
    %v2250 = vpop.f32.mrf.mxu0
    %v2251 = vpop.f32.mrf.mxu0
    %v2252 = vadd.f32 0.0, %v2251
    %v2253 = vpop.f32.mrf.mxu0
    %2254 = vmatprep.mubr.bf16.mxu0 0
    %2255 = vmatmul.mubr.bf16.gmra.mxu0 %v1797
    %v2256 = vpop.f32.mrf.mxu0
    %v2257 = vadd.f32 0.0, %v2256
    %v2258 = vpop.f32.mrf.mxu0
    %v2259 = vpop.f32.mrf.mxu0
    %v2260 = vadd.f32 0.0, %v2259
    %v2261 = vpop.f32.mrf.mxu0
    %2262 = vmatprep.mubr.bf16.mxu0 0
    %2263 = vmatmul.mubr.bf16.gmra.mxu0 %v1800
    %v2264 = vpop.f32.mrf.mxu0
    %v2265 = vadd.f32 0.0, %v2264
    %v2266 = vpop.f32.mrf.mxu0
    %v2267 = vpop.f32.mrf.mxu0
    %v2268 = vadd.f32 0.0, %v2267
    %v2269 = vpop.f32.mrf.mxu0
    %2270 = vmatprep.mubr.bf16.mxu0 0
    %2271 = vmatmul.mubr.bf16.gmra.mxu0 %v1803
    %v2272 = vpop.f32.mrf.mxu0
    %v2273 = vadd.f32 0.0, %v2272
    %v2274 = vpop.f32.mrf.mxu0
    %v2275 = vpop.f32.mrf.mxu0
    %v2276 = vadd.f32 0.0, %v2275
    %v2277 = vpop.f32.mrf.mxu0
    %2278 = vmatprep.mubr.bf16.mxu0 0
    %2279 = vmatmul.mubr.bf16.gmra.mxu0 %v1806
    %v2280 = vpop.f32.mrf.mxu0
    %v2281 = vadd.f32 0.0, %v2280
    %v2282 = vpop.f32.mrf.mxu0
    %v2283 = vpop.f32.mrf.mxu0
    %v2284 = vadd.f32 0.0, %v2283
    %v2285 = vpop.f32.mrf.mxu0
    %2286 = vmatprep.mubr.bf16.mxu0 0
    %2287 = vmatmul.mubr.bf16.gmra.mxu0 %v1809
    %v2288 = vpop.f32.mrf.mxu0
    %v2289 = vadd.f32 0.0, %v2288
    %v2290 = vpop.f32.mrf.mxu0
    %v2291 = vpop.f32.mrf.mxu0
    %v2292 = vadd.f32 0.0, %v2291
    %v2293 = vpop.f32.mrf.mxu0
    %2294 = vmatprep.mubr.bf16.mxu0 0
    %2295 = vmatmul.mubr.bf16.gmra.mxu0 %v1812
    %v2296 = vpop.f32.mrf.mxu0
    %v2297 = vadd.f32 0.0, %v2296
    %v2298 = vpop.f32.mrf.mxu0
    %v2299 = vpop.f32.mrf.mxu0
    %v2300 = vadd.f32 0.0, %v2299
    %v2301 = vpop.f32.mrf.mxu0
    %2302 = vmatprep.mubr.bf16.mxu0 0
    %2303 = vmatmul.mubr.bf16.gmra.mxu0 %v1815
    %v2304 = vpop.f32.mrf.mxu0
    %v2305 = vadd.f32 0.0, %v2304
    %v2306 = vpop.f32.mrf.mxu0
    %v2307 = vpop.f32.mrf.mxu0
    %v2308 = vadd.f32 0.0, %v2307
    %v2309 = vpop.f32.mrf.mxu0
    %2310 = vmatprep.mubr.bf16.mxu0 0
    %2311 = vmatmul.mubr.bf16.gmra.mxu0 %v1818
    %v2312 = vpop.f32.mrf.mxu0
    %v2313 = vadd.f32 0.0, %v2312
    %v2314 = vpop.f32.mrf.mxu0
    %v2315 = vpop.f32.mrf.mxu0
    %v2316 = vadd.f32 0.0, %v2315
    %v2317 = vpop.f32.mrf.mxu0
    %2318 = vmatprep.mubr.bf16.mxu0 0
    %2319 = vmatmul.mubr.bf16.gmra.mxu0 %v1821
    %v2320 = vpop.f32.mrf.mxu0
    %v2321 = vadd.f32 0.0, %v2320
    %v2322 = vpop.f32.mrf.mxu0
    %v2323 = vpop.f32.mrf.mxu0
    %v2324 = vadd.f32 0.0, %v2323
    %v2325 = vpop.f32.mrf.mxu0
    %2326 = vmatprep.mubr.bf16.mxu0 0
    %2327 = vmatmul.mubr.bf16.gmra.mxu0 %v1824
    %v2328 = vpop.f32.mrf.mxu0
    %v2329 = vadd.f32 0.0, %v2328
    %v2330 = vpop.f32.mrf.mxu0
    %v2331 = vpop.f32.mrf.mxu0
    %v2332 = vadd.f32 0.0, %v2331
    %v2333 = vpop.f32.mrf.mxu0
    %2334 = vmatprep.mubr.bf16.mxu0 0
    %2335 = vmatmul.mubr.bf16.gmra.mxu0 %v1827
    %v2336 = vpop.f32.mrf.mxu0
    %v2337 = vadd.f32 0.0, %v2336
    %v2338 = vpop.f32.mrf.mxu0
    %v2339 = vpop.f32.mrf.mxu0
    %v2340 = vadd.f32 0.0, %v2339
    %v2341 = vpop.f32.mrf.mxu0
    %2342 = vmatprep.mubr.bf16.mxu0 0
    %2343 = vmatmul.mubr.bf16.gmra.mxu0 %v1830
    %v2344 = vpop.f32.mrf.mxu0
    %v2345 = vadd.f32 0.0, %v2344
    %v2346 = vpop.f32.mrf.mxu0
    %v2347 = vpop.f32.mrf.mxu0
    %v2348 = vadd.f32 0.0, %v2347
    %v2349 = vpop.f32.mrf.mxu0
    %2350 = vmatprep.mubr.bf16.mxu0 0
    %2351 = vmatmul.mubr.bf16.gmra.mxu0 %v1833
    %v2352 = vpop.f32.mrf.mxu0
    %v2353 = vadd.f32 0.0, %v2352
    %v2354 = vpop.f32.mrf.mxu0
    %v2355 = vpop.f32.mrf.mxu0
    %v2356 = vadd.f32 0.0, %v2355
    %v2357 = vpop.f32.mrf.mxu0
    %2358 = vmatprep.mubr.bf16.mxu0 0
    %2359 = vmatmul.mubr.bf16.gmra.mxu0 %v1836
    %v2360 = vpop.f32.mrf.mxu0
    %v2361 = vadd.f32 0.0, %v2360
    %v2362 = vpop.f32.mrf.mxu0
    %v2363 = vpop.f32.mrf.mxu0
    %v2364 = vadd.f32 0.0, %v2363
    %v2365 = vpop.f32.mrf.mxu0
    %2366 = vmatprep.mubr.bf16.mxu0 0
    %2367 = vmatmul.mubr.bf16.gmra.mxu0 %v1839
    %v2368 = vpop.f32.mrf.mxu0
    %v2369 = vadd.f32 0.0, %v2368
    %v2370 = vpop.f32.mrf.mxu0
    %v2371 = vpop.f32.mrf.mxu0
    %v2372 = vadd.f32 0.0, %v2371
    %v2373 = vpop.f32.mrf.mxu0
    %2374 = vmatprep.mubr.bf16.mxu0 0
    %2375 = vmatmul.mubr.bf16.gmra.mxu0 %v1842
    %v2376 = vpop.f32.mrf.mxu0
    %v2377 = vadd.f32 0.0, %v2376
    %v2378 = vpop.f32.mrf.mxu0
    %v2379 = vpop.f32.mrf.mxu0
    %v2380 = vadd.f32 0.0, %v2379
    %v2381 = vpop.f32.mrf.mxu0
    %2382 = vmatprep.mubr.bf16.mxu0 0
    %2383 = vmatmul.mubr.bf16.gmra.mxu0 %v1845
    %v2384 = vpop.f32.mrf.mxu0
    %v2385 = vadd.f32 0.0, %v2384
    %v2386 = vpop.f32.mrf.mxu0
    %v2387 = vpop.f32.mrf.mxu0
    %v2388 = vadd.f32 0.0, %v2387
    %v2389 = vpop.f32.mrf.mxu0
    %2390 = vmatprep.mubr.bf16.mxu0 0
    %2391 = vmatmul.mubr.bf16.gmra.mxu0 %v1848
    %v2392 = vpop.f32.mrf.mxu0
    %v2393 = vadd.f32 0.0, %v2392
    %v2394 = vpop.f32.mrf.mxu0
    %v2395 = vpop.f32.mrf.mxu0
    %v2396 = vadd.f32 0.0, %v2395
    %v2397 = vpop.f32.mrf.mxu0
    %2398 = vdwg.mxu0
    %v2399 = vsel %vm182, %v1528, 0.0
    %v2400 = vrot.slane %v2399, 4
    %v2401 = vadd.f32 %v2399, %v2400
    %v2402 = vrot.slane %v2401, 2
    %v2403 = vadd.f32 %v2401, %v2402
    %v2404 = vrot.slane %v2403, 1
    %v2405 = vadd.f32 %v2403, %v2404
    %v2406 = vmul.f32 %v1889, %v1889
    %v2407 = vmul.f32 %v1892, %v1892
    %v2408 = vmul.f32 %v1897, %v1897
    %v2409 = vmul.f32 %v1900, %v1900
    %v2410 = vmul.f32 %v1905, %v1905
    %v2411 = vmul.f32 %v1908, %v1908
    %v2412 = vmul.f32 %v1913, %v1913
    %v2413 = vmul.f32 %v1916, %v1916
    %v2414 = vmul.f32 %v1921, %v1921
    %v2415 = vmul.f32 %v1924, %v1924
    %v2416 = vmul.f32 %v1929, %v1929
    %v2417 = vmul.f32 %v1932, %v1932
    %v2418 = vmul.f32 %v1937, %v1937
    %v2419 = vmul.f32 %v1940, %v1940
    %v2420 = vmul.f32 %v1945, %v1945
    %v2421 = vmul.f32 %v1948, %v1948
    %v2422 = vmul.f32 %v1953, %v1953
    %v2423 = vmul.f32 %v1956, %v1956
    %v2424 = vmul.f32 %v1961, %v1961
    %v2425 = vmul.f32 %v1964, %v1964
    %v2426 = vmul.f32 %v1969, %v1969
    %v2427 = vmul.f32 %v1972, %v1972
    %v2428 = vmul.f32 %v1977, %v1977
    %v2429 = vmul.f32 %v1980, %v1980
    %v2430 = vmul.f32 %v1985, %v1985
    %v2431 = vmul.f32 %v1988, %v1988
    %v2432 = vmul.f32 %v1993, %v1993
    %v2433 = vmul.f32 %v1996, %v1996
    %v2434 = vmul.f32 %v2001, %v2001
    %v2435 = vmul.f32 %v2004, %v2004
    %v2436 = vmul.f32 %v2009, %v2009
    %v2437 = vmul.f32 %v2012, %v2012
    %v2438 = vmul.f32 %v2017, %v2017
    %v2439 = vmul.f32 %v2020, %v2020
    %v2440 = vmul.f32 %v2025, %v2025
    %v2441 = vmul.f32 %v2028, %v2028
    %v2442 = vmul.f32 %v2033, %v2033
    %v2443 = vmul.f32 %v2036, %v2036
    %v2444 = vmul.f32 %v2041, %v2041
    %v2445 = vmul.f32 %v2044, %v2044
    %v2446 = vmul.f32 %v2049, %v2049
    %v2447 = vmul.f32 %v2052, %v2052
    %v2448 = vmul.f32 %v2057, %v2057
    %v2449 = vmul.f32 %v2060, %v2060
    %v2450 = vmul.f32 %v2065, %v2065
    %v2451 = vmul.f32 %v2068, %v2068
    %v2452 = vmul.f32 %v2073, %v2073
    %v2453 = vmul.f32 %v2076, %v2076
    %v2454 = vmul.f32 %v2081, %v2081
    %v2455 = vmul.f32 %v2084, %v2084
    %v2456 = vmul.f32 %v2089, %v2089
    %v2457 = vmul.f32 %v2092, %v2092
    %v2458 = vmul.f32 %v2097, %v2097
    %v2459 = vmul.f32 %v2100, %v2100
    %v2460 = vmul.f32 %v2105, %v2105
    %v2461 = vmul.f32 %v2108, %v2108
    %v2462 = vmul.f32 %v2113, %v2113
    %v2463 = vmul.f32 %v2116, %v2116
    %v2464 = vmul.f32 %v2121, %v2121
    %v2465 = vmul.f32 %v2124, %v2124
    %v2466 = vmul.f32 %v2129, %v2129
    %v2467 = vmul.f32 %v2132, %v2132
    %v2468 = vmul.f32 %v2137, %v2137
    %v2469 = vmul.f32 %v2140, %v2140
    %v2470 = vmul.f32 %v2145, %v2145
    %v2471 = vmul.f32 %v2148, %v2148
    %v2472 = vmul.f32 %v2153, %v2153
    %v2473 = vmul.f32 %v2156, %v2156
    %v2474 = vmul.f32 %v2161, %v2161
    %v2475 = vmul.f32 %v2164, %v2164
    %v2476 = vmul.f32 %v2169, %v2169
    %v2477 = vmul.f32 %v2172, %v2172
    %v2478 = vmul.f32 %v2177, %v2177
    %v2479 = vmul.f32 %v2180, %v2180
    %v2480 = vmul.f32 %v2185, %v2185
    %v2481 = vmul.f32 %v2188, %v2188
    %v2482 = vmul.f32 %v2193, %v2193
    %v2483 = vmul.f32 %v2196, %v2196
    %v2484 = vmul.f32 %v2201, %v2201
    %v2485 = vmul.f32 %v2204, %v2204
    %v2486 = vmul.f32 %v2209, %v2209
    %v2487 = vmul.f32 %v2212, %v2212
    %v2488 = vmul.f32 %v2217, %v2217
    %v2489 = vmul.f32 %v2220, %v2220
    %v2490 = vmul.f32 %v2225, %v2225
    %v2491 = vmul.f32 %v2228, %v2228
    %v2492 = vmul.f32 %v2233, %v2233
    %v2493 = vmul.f32 %v2236, %v2236
    %v2494 = vmul.f32 %v2241, %v2241
    %v2495 = vmul.f32 %v2244, %v2244
    %v2496 = vmul.f32 %v2249, %v2249
    %v2497 = vmul.f32 %v2252, %v2252
    %v2498 = vmul.f32 %v2257, %v2257
    %v2499 = vmul.f32 %v2260, %v2260
    %v2500 = vmul.f32 %v2265, %v2265
    %v2501 = vmul.f32 %v2268, %v2268
    %v2502 = vmul.f32 %v2273, %v2273
    %v2503 = vmul.f32 %v2276, %v2276
    %v2504 = vmul.f32 %v2281, %v2281
    %v2505 = vmul.f32 %v2284, %v2284
    %v2506 = vmul.f32 %v2289, %v2289
    %v2507 = vmul.f32 %v2292, %v2292
    %v2508 = vmul.f32 %v2297, %v2297
    %v2509 = vmul.f32 %v2300, %v2300
    %v2510 = vmul.f32 %v2305, %v2305
    %v2511 = vmul.f32 %v2308, %v2308
    %v2512 = vmul.f32 %v2313, %v2313
    %v2513 = vmul.f32 %v2316, %v2316
    %v2514 = vmul.f32 %v2321, %v2321
    %v2515 = vmul.f32 %v2324, %v2324
    %v2516 = vmul.f32 %v2329, %v2329
    %v2517 = vmul.f32 %v2332, %v2332
    %v2518 = vmul.f32 %v2337, %v2337
    %v2519 = vmul.f32 %v2340, %v2340
    %v2520 = vmul.f32 %v2345, %v2345
    %v2521 = vmul.f32 %v2348, %v2348
    %v2522 = vmul.f32 %v2353, %v2353
    %v2523 = vmul.f32 %v2356, %v2356
    %v2524 = vmul.f32 %v2361, %v2361
    %v2525 = vmul.f32 %v2364, %v2364
    %v2526 = vmul.f32 %v2369, %v2369
    %v2527 = vmul.f32 %v2372, %v2372
    %v2528 = vmul.f32 %v2377, %v2377
    %v2529 = vmul.f32 %v2380, %v2380
    %v2530 = vmul.f32 %v2385, %v2385
    %v2531 = vmul.f32 %v2388, %v2388
    %v2532 = vmul.f32 %v2393, %v2393
    %v2533 = vmul.f32 %v2396, %v2396
    %v2534 = vsel %vm182, %v2406, 0.0
    %v2535 = vsel %vm182, %v2407, 0.0
    %v2536 = vadd.f32 %v2534, %v2535
    %v2537 = vsel %vm182, %v2408, 0.0
    %v2538 = vadd.f32 %v2536, %v2537
    %v2539 = vsel %vm182, %v2409, 0.0
    %v2540 = vadd.f32 %v2538, %v2539
    %v2541 = vsel %vm182, %v2410, 0.0
    %v2542 = vadd.f32 %v2540, %v2541
    %v2543 = vsel %vm182, %v2411, 0.0
    %v2544 = vadd.f32 %v2542, %v2543
    %v2545 = vsel %vm182, %v2412, 0.0
    %v2546 = vadd.f32 %v2544, %v2545
    %v2547 = vsel %vm182, %v2413, 0.0
    %v2548 = vadd.f32 %v2546, %v2547
    %v2549 = vsel %vm182, %v2414, 0.0
    %v2550 = vadd.f32 %v2548, %v2549
    %v2551 = vsel %vm182, %v2415, 0.0
    %v2552 = vadd.f32 %v2550, %v2551
    %v2553 = vsel %vm182, %v2416, 0.0
    %v2554 = vadd.f32 %v2552, %v2553
    %v2555 = vsel %vm182, %v2417, 0.0
    %v2556 = vadd.f32 %v2554, %v2555
    %v2557 = vsel %vm182, %v2418, 0.0
    %v2558 = vadd.f32 %v2556, %v2557
    %v2559 = vsel %vm182, %v2419, 0.0
    %v2560 = vadd.f32 %v2558, %v2559
    %v2561 = vsel %vm182, %v2420, 0.0
    %v2562 = vadd.f32 %v2560, %v2561
    %v2563 = vsel %vm182, %v2421, 0.0
    %v2564 = vadd.f32 %v2562, %v2563
    %v2565 = vsel %vm182, %v2422, 0.0
    %v2566 = vadd.f32 %v2564, %v2565
    %v2567 = vsel %vm182, %v2423, 0.0
    %v2568 = vadd.f32 %v2566, %v2567
    %v2569 = vsel %vm182, %v2424, 0.0
    %v2570 = vadd.f32 %v2568, %v2569
    %v2571 = vsel %vm182, %v2425, 0.0
    %v2572 = vadd.f32 %v2570, %v2571
    %v2573 = vsel %vm182, %v2426, 0.0
    %v2574 = vadd.f32 %v2572, %v2573
    %v2575 = vsel %vm182, %v2427, 0.0
    %v2576 = vadd.f32 %v2574, %v2575
    %v2577 = vsel %vm182, %v2428, 0.0
    %v2578 = vadd.f32 %v2576, %v2577
    %v2579 = vsel %vm182, %v2429, 0.0
    %v2580 = vadd.f32 %v2578, %v2579
    %v2581 = vsel %vm182, %v2430, 0.0
    %v2582 = vadd.f32 %v2580, %v2581
    %v2583 = vsel %vm182, %v2431, 0.0
    %v2584 = vadd.f32 %v2582, %v2583
    %v2585 = vsel %vm182, %v2432, 0.0
    %v2586 = vadd.f32 %v2584, %v2585
    %v2587 = vsel %vm182, %v2433, 0.0
    %v2588 = vadd.f32 %v2586, %v2587
    %v2589 = vsel %vm182, %v2434, 0.0
    %v2590 = vadd.f32 %v2588, %v2589
    %v2591 = vsel %vm182, %v2435, 0.0
    %v2592 = vadd.f32 %v2590, %v2591
    %v2593 = vsel %vm182, %v2436, 0.0
    %v2594 = vadd.f32 %v2592, %v2593
    %v2595 = vsel %vm182, %v2437, 0.0
    %v2596 = vadd.f32 %v2594, %v2595
    %v2597 = vsel %vm182, %v2438, 0.0
    %v2598 = vadd.f32 %v2596, %v2597
    %v2599 = vsel %vm182, %v2439, 0.0
    %v2600 = vadd.f32 %v2598, %v2599
    %v2601 = vsel %vm182, %v2440, 0.0
    %v2602 = vadd.f32 %v2600, %v2601
    %v2603 = vsel %vm182, %v2441, 0.0
    %v2604 = vadd.f32 %v2602, %v2603
    %v2605 = vsel %vm182, %v2442, 0.0
    %v2606 = vadd.f32 %v2604, %v2605
    %v2607 = vsel %vm182, %v2443, 0.0
    %v2608 = vadd.f32 %v2606, %v2607
    %v2609 = vsel %vm182, %v2444, 0.0
    %v2610 = vadd.f32 %v2608, %v2609
    %v2611 = vsel %vm182, %v2445, 0.0
    %v2612 = vadd.f32 %v2610, %v2611
    %v2613 = vsel %vm182, %v2446, 0.0
    %v2614 = vadd.f32 %v2612, %v2613
    %v2615 = vsel %vm182, %v2447, 0.0
    %v2616 = vadd.f32 %v2614, %v2615
    %v2617 = vsel %vm182, %v2448, 0.0
    %v2618 = vadd.f32 %v2616, %v2617
    %v2619 = vsel %vm182, %v2449, 0.0
    %v2620 = vadd.f32 %v2618, %v2619
    %v2621 = vsel %vm182, %v2450, 0.0
    %v2622 = vadd.f32 %v2620, %v2621
    %v2623 = vsel %vm182, %v2451, 0.0
    %v2624 = vadd.f32 %v2622, %v2623
    %v2625 = vsel %vm182, %v2452, 0.0
    %v2626 = vadd.f32 %v2624, %v2625
    %v2627 = vsel %vm182, %v2453, 0.0
    %v2628 = vadd.f32 %v2626, %v2627
    %v2629 = vsel %vm182, %v2454, 0.0
    %v2630 = vadd.f32 %v2628, %v2629
    %v2631 = vsel %vm182, %v2455, 0.0
    %v2632 = vadd.f32 %v2630, %v2631
    %v2633 = vsel %vm182, %v2456, 0.0
    %v2634 = vadd.f32 %v2632, %v2633
    %v2635 = vsel %vm182, %v2457, 0.0
    %v2636 = vadd.f32 %v2634, %v2635
    %v2637 = vsel %vm182, %v2458, 0.0
    %v2638 = vadd.f32 %v2636, %v2637
    %v2639 = vsel %vm182, %v2459, 0.0
    %v2640 = vadd.f32 %v2638, %v2639
    %v2641 = vsel %vm182, %v2460, 0.0
    %v2642 = vadd.f32 %v2640, %v2641
    %v2643 = vsel %vm182, %v2461, 0.0
    %v2644 = vadd.f32 %v2642, %v2643
    %v2645 = vsel %vm182, %v2462, 0.0
    %v2646 = vadd.f32 %v2644, %v2645
    %v2647 = vsel %vm182, %v2463, 0.0
    %v2648 = vadd.f32 %v2646, %v2647
    %v2649 = vsel %vm182, %v2464, 0.0
    %v2650 = vadd.f32 %v2648, %v2649
    %v2651 = vsel %vm182, %v2465, 0.0
    %v2652 = vadd.f32 %v2650, %v2651
    %v2653 = vsel %vm182, %v2466, 0.0
    %v2654 = vadd.f32 %v2652, %v2653
    %v2655 = vsel %vm182, %v2467, 0.0
    %v2656 = vadd.f32 %v2654, %v2655
    %v2657 = vsel %vm182, %v2468, 0.0
    %v2658 = vadd.f32 %v2656, %v2657
    %v2659 = vsel %vm182, %v2469, 0.0
    %v2660 = vadd.f32 %v2658, %v2659
    %v2661 = vsel %vm182, %v2470, 0.0
    %v2662 = vadd.f32 %v2660, %v2661
    %v2663 = vsel %vm182, %v2471, 0.0
    %v2664 = vadd.f32 %v2662, %v2663
    %v2665 = vsel %vm182, %v2472, 0.0
    %v2666 = vadd.f32 %v2664, %v2665
    %v2667 = vsel %vm182, %v2473, 0.0
    %v2668 = vadd.f32 %v2666, %v2667
    %v2669 = vsel %vm182, %v2474, 0.0
    %v2670 = vadd.f32 %v2668, %v2669
    %v2671 = vsel %vm182, %v2475, 0.0
    %v2672 = vadd.f32 %v2670, %v2671
    %v2673 = vsel %vm182, %v2476, 0.0
    %v2674 = vadd.f32 %v2672, %v2673
    %v2675 = vsel %vm182, %v2477, 0.0
    %v2676 = vadd.f32 %v2674, %v2675
    %v2677 = vsel %vm182, %v2478, 0.0
    %v2678 = vadd.f32 %v2676, %v2677
    %v2679 = vsel %vm182, %v2479, 0.0
    %v2680 = vadd.f32 %v2678, %v2679
    %v2681 = vsel %vm182, %v2480, 0.0
    %v2682 = vadd.f32 %v2680, %v2681
    %v2683 = vsel %vm182, %v2481, 0.0
    %v2684 = vadd.f32 %v2682, %v2683
    %v2685 = vsel %vm182, %v2482, 0.0
    %v2686 = vadd.f32 %v2684, %v2685
    %v2687 = vsel %vm182, %v2483, 0.0
    %v2688 = vadd.f32 %v2686, %v2687
    %v2689 = vsel %vm182, %v2484, 0.0
    %v2690 = vadd.f32 %v2688, %v2689
    %v2691 = vsel %vm182, %v2485, 0.0
    %v2692 = vadd.f32 %v2690, %v2691
    %v2693 = vsel %vm182, %v2486, 0.0
    %v2694 = vadd.f32 %v2692, %v2693
    %v2695 = vsel %vm182, %v2487, 0.0
    %v2696 = vadd.f32 %v2694, %v2695
    %v2697 = vsel %vm182, %v2488, 0.0
    %v2698 = vadd.f32 %v2696, %v2697
    %v2699 = vsel %vm182, %v2489, 0.0
    %v2700 = vadd.f32 %v2698, %v2699
    %v2701 = vsel %vm182, %v2490, 0.0
    %v2702 = vadd.f32 %v2700, %v2701
    %v2703 = vsel %vm182, %v2491, 0.0
    %v2704 = vadd.f32 %v2702, %v2703
    %v2705 = vsel %vm182, %v2492, 0.0
    %v2706 = vadd.f32 %v2704, %v2705
    %v2707 = vsel %vm182, %v2493, 0.0
    %v2708 = vadd.f32 %v2706, %v2707
    %v2709 = vsel %vm182, %v2494, 0.0
    %v2710 = vadd.f32 %v2708, %v2709
    %v2711 = vsel %vm182, %v2495, 0.0
    %v2712 = vadd.f32 %v2710, %v2711
    %v2713 = vsel %vm182, %v2496, 0.0
    %v2714 = vadd.f32 %v2712, %v2713
    %v2715 = vsel %vm182, %v2497, 0.0
    %v2716 = vadd.f32 %v2714, %v2715
    %v2717 = vsel %vm182, %v2498, 0.0
    %v2718 = vadd.f32 %v2716, %v2717
    %v2719 = vsel %vm182, %v2499, 0.0
    %v2720 = vadd.f32 %v2718, %v2719
    %v2721 = vsel %vm182, %v2500, 0.0
    %v2722 = vadd.f32 %v2720, %v2721
    %v2723 = vsel %vm182, %v2501, 0.0
    %v2724 = vadd.f32 %v2722, %v2723
    %v2725 = vsel %vm182, %v2502, 0.0
    %v2726 = vadd.f32 %v2724, %v2725
    %v2727 = vsel %vm182, %v2503, 0.0
    %v2728 = vadd.f32 %v2726, %v2727
    %v2729 = vsel %vm182, %v2504, 0.0
    %v2730 = vadd.f32 %v2728, %v2729
    %v2731 = vsel %vm182, %v2505, 0.0
    %v2732 = vadd.f32 %v2730, %v2731
    %v2733 = vsel %vm182, %v2506, 0.0
    %v2734 = vadd.f32 %v2732, %v2733
    %v2735 = vsel %vm182, %v2507, 0.0
    %v2736 = vadd.f32 %v2734, %v2735
    %v2737 = vsel %vm182, %v2508, 0.0
    %v2738 = vadd.f32 %v2736, %v2737
    %v2739 = vsel %vm182, %v2509, 0.0
    %v2740 = vadd.f32 %v2738, %v2739
    %v2741 = vsel %vm182, %v2510, 0.0
    %v2742 = vadd.f32 %v2740, %v2741
    %v2743 = vsel %vm182, %v2511, 0.0
    %v2744 = vadd.f32 %v2742, %v2743
    %v2745 = vsel %vm182, %v2512, 0.0
    %v2746 = vadd.f32 %v2744, %v2745
    %v2747 = vsel %vm182, %v2513, 0.0
    %v2748 = vadd.f32 %v2746, %v2747
    %v2749 = vsel %vm182, %v2514, 0.0
    %v2750 = vadd.f32 %v2748, %v2749
    %v2751 = vsel %vm182, %v2515, 0.0
    %v2752 = vadd.f32 %v2750, %v2751
    %v2753 = vsel %vm182, %v2516, 0.0
    %v2754 = vadd.f32 %v2752, %v2753
    %v2755 = vsel %vm182, %v2517, 0.0
    %v2756 = vadd.f32 %v2754, %v2755
    %v2757 = vsel %vm182, %v2518, 0.0
    %v2758 = vadd.f32 %v2756, %v2757
    %v2759 = vsel %vm182, %v2519, 0.0
    %v2760 = vadd.f32 %v2758, %v2759
    %v2761 = vsel %vm182, %v2520, 0.0
    %v2762 = vadd.f32 %v2760, %v2761
    %v2763 = vsel %vm182, %v2521, 0.0
    %v2764 = vadd.f32 %v2762, %v2763
    %v2765 = vsel %vm182, %v2522, 0.0
    %v2766 = vadd.f32 %v2764, %v2765
    %v2767 = vsel %vm182, %v2523, 0.0
    %v2768 = vadd.f32 %v2766, %v2767
    %v2769 = vsel %vm182, %v2524, 0.0
    %v2770 = vadd.f32 %v2768, %v2769
    %v2771 = vsel %vm182, %v2525, 0.0
    %v2772 = vadd.f32 %v2770, %v2771
    %v2773 = vsel %vm182, %v2526, 0.0
    %v2774 = vadd.f32 %v2772, %v2773
    %v2775 = vsel %vm182, %v2527, 0.0
    %v2776 = vadd.f32 %v2774, %v2775
    %v2777 = vsel %vm182, %v2528, 0.0
    %v2778 = vadd.f32 %v2776, %v2777
    %v2779 = vsel %vm182, %v2529, 0.0
    %v2780 = vadd.f32 %v2778, %v2779
    %v2781 = vsel %vm182, %v2530, 0.0
    %v2782 = vadd.f32 %v2780, %v2781
    %v2783 = vsel %vm182, %v2531, 0.0
    %v2784 = vadd.f32 %v2782, %v2783
    %v2785 = vsel %vm182, %v2532, 0.0
    %v2786 = vadd.f32 %v2784, %v2785
    %v2787 = vsel %vm182, %v2533, 0.0
    %v2788 = vadd.f32 %v2786, %v2787
    %2789 = vadd.xlane.f32.xlu0 %v2788
    %v2790 = vpop.xlane.xlu0 %2789
    %v2791 = vrot.slane %v2790, 4
    %v2792 = vadd.f32 %v2790, %v2791
    %v2793 = vrot.slane %v2792, 2
    %v2794 = vadd.f32 %v2792, %v2793
    %v2795 = vrot.slane %v2794, 1
    %v2796 = vadd.f32 %v2794, %v2795
    %s2797 = vtos %v2796
    %v2798 = vmul.f32 %v2405, %v2405
    %v2799 = vsel %vm312, %v2798, 0.0
    %2800 = vadd.xlane.f32.xlu0 %v2799
    %v2801 = vpop.xlane.xlu0 %2800
    %v2802 = vrot.slane %v2801, 4
    %v2803 = vadd.f32 %v2801, %v2802
    %v2804 = vrot.slane %v2803, 2
    %v2805 = vadd.f32 %v2803, %v2804
    %v2806 = vrot.slane %v2805, 1
    %v2807 = vadd.f32 %v2805, %v2806
    %s2808 = vtos %v2807
    %s2809 = sadd.f32 %s2797, %s2808
    %v2810 = vstv %s2809
    %v2811 = vrsqrt.pop %v2810
    %v2812 = vmul.f32 %v2810, %v2811
    %vm2813 = vcmp.eq.f32.partialorder %v2810, inf
    %v2814 = vsel %vm2813, %v2810, %v2812
    %vm2815 = vcmp.eq.f32.partialorder %v2810, 0.0
    %v2816 = vand.u32 %v2810, 2147483648
    %v2817 = vsel %vm2815, %v2816, %v2814
    %s2818 = vtos %v2817
    %s2819 = sadd.f32 %s2818, 1e-06
    %v2820 = vstv %s2819
    %v2821 = vrcp.pop %v2820
    %s2822 = vtos %v2821
    %s2823 = smin.f32 %s2822, 1.0
    %s2824 = smul.f32 %s2823, 0.01
    %v2825 = vstv %s2824
    %v2826 = vmul.f32 %v2825, %v1889
    %v2827 = vmul.f32 %v2825, %v1892
    %v2828 = vmul.f32 %v2825, %v1897
    %v2829 = vmul.f32 %v2825, %v1900
    %v2830 = vmul.f32 %v2825, %v1905
    %v2831 = vmul.f32 %v2825, %v1908
    %v2832 = vmul.f32 %v2825, %v1913
    %v2833 = vmul.f32 %v2825, %v1916
    %v2834 = vmul.f32 %v2825, %v1921
    %v2835 = vmul.f32 %v2825, %v1924
    %v2836 = vmul.f32 %v2825, %v1929
    %v2837 = vmul.f32 %v2825, %v1932
    %v2838 = vmul.f32 %v2825, %v1937
    %v2839 = vmul.f32 %v2825, %v1940
    %v2840 = vmul.f32 %v2825, %v1945
    %v2841 = vmul.f32 %v2825, %v1948
    %v2842 = vmul.f32 %v2825, %v1953
    %v2843 = vmul.f32 %v2825, %v1956
    %v2844 = vmul.f32 %v2825, %v1961
    %v2845 = vmul.f32 %v2825, %v1964
    %v2846 = vmul.f32 %v2825, %v1969
    %v2847 = vmul.f32 %v2825, %v1972
    %v2848 = vmul.f32 %v2825, %v1977
    %v2849 = vmul.f32 %v2825, %v1980
    %v2850 = vmul.f32 %v2825, %v1985
    %v2851 = vmul.f32 %v2825, %v1988
    %v2852 = vmul.f32 %v2825, %v1993
    %v2853 = vmul.f32 %v2825, %v1996
    %v2854 = vmul.f32 %v2825, %v2001
    %v2855 = vmul.f32 %v2825, %v2004
    %v2856 = vmul.f32 %v2825, %v2009
    %v2857 = vmul.f32 %v2825, %v2012
    %v2858 = vmul.f32 %v2825, %v2017
    %v2859 = vmul.f32 %v2825, %v2020
    %v2860 = vmul.f32 %v2825, %v2025
    %v2861 = vmul.f32 %v2825, %v2028
    %v2862 = vmul.f32 %v2825, %v2033
    %v2863 = vmul.f32 %v2825, %v2036
    %v2864 = vmul.f32 %v2825, %v2041
    %v2865 = vmul.f32 %v2825, %v2044
    %v2866 = vmul.f32 %v2825, %v2049
    %v2867 = vmul.f32 %v2825, %v2052
    %v2868 = vmul.f32 %v2825, %v2057
    %v2869 = vmul.f32 %v2825, %v2060
    %v2870 = vmul.f32 %v2825, %v2065
    %v2871 = vmul.f32 %v2825, %v2068
    %v2872 = vmul.f32 %v2825, %v2073
    %v2873 = vmul.f32 %v2825, %v2076
    %v2874 = vmul.f32 %v2825, %v2081
    %v2875 = vmul.f32 %v2825, %v2084
    %v2876 = vmul.f32 %v2825, %v2089
    %v2877 = vmul.f32 %v2825, %v2092
    %v2878 = vmul.f32 %v2825, %v2097
    %v2879 = vmul.f32 %v2825, %v2100
    %v2880 = vmul.f32 %v2825, %v2105
    %v2881 = vmul.f32 %v2825, %v2108
    %v2882 = vmul.f32 %v2825, %v2113
    %v2883 = vmul.f32 %v2825, %v2116
    %v2884 = vmul.f32 %v2825, %v2121
    %v2885 = vmul.f32 %v2825, %v2124
    %v2886 = vmul.f32 %v2825, %v2129
    %v2887 = vmul.f32 %v2825, %v2132
    %v2888 = vmul.f32 %v2825, %v2137
    %v2889 = vmul.f32 %v2825, %v2140
    %v2890 = vmul.f32 %v2825, %v2145
    %v2891 = vmul.f32 %v2825, %v2148
    %v2892 = vmul.f32 %v2825, %v2153
    %v2893 = vmul.f32 %v2825, %v2156
    %v2894 = vmul.f32 %v2825, %v2161
    %v2895 = vmul.f32 %v2825, %v2164
    %v2896 = vmul.f32 %v2825, %v2169
    %v2897 = vmul.f32 %v2825, %v2172
    %v2898 = vmul.f32 %v2825, %v2177
    %v2899 = vmul.f32 %v2825, %v2180
    %v2900 = vmul.f32 %v2825, %v2185
    %v2901 = vmul.f32 %v2825, %v2188
    %v2902 = vmul.f32 %v2825, %v2193
    %v2903 = vmul.f32 %v2825, %v2196
    %v2904 = vmul.f32 %v2825, %v2201
    %v2905 = vmul.f32 %v2825, %v2204
    %v2906 = vmul.f32 %v2825, %v2209
    %v2907 = vmul.f32 %v2825, %v2212
    %v2908 = vmul.f32 %v2825, %v2217
    %v2909 = vmul.f32 %v2825, %v2220
    %v2910 = vmul.f32 %v2825, %v2225
    %v2911 = vmul.f32 %v2825, %v2228
    %v2912 = vmul.f32 %v2825, %v2233
    %v2913 = vmul.f32 %v2825, %v2236
    %v2914 = vmul.f32 %v2825, %v2241
    %v2915 = vmul.f32 %v2825, %v2244
    %v2916 = vmul.f32 %v2825, %v2249
    %v2917 = vmul.f32 %v2825, %v2252
    %v2918 = vmul.f32 %v2825, %v2257
    %v2919 = vmul.f32 %v2825, %v2260
    %v2920 = vmul.f32 %v2825, %v2265
    %v2921 = vmul.f32 %v2825, %v2268
    %v2922 = vmul.f32 %v2825, %v2273
    %v2923 = vmul.f32 %v2825, %v2276
    %v2924 = vmul.f32 %v2825, %v2281
    %v2925 = vmul.f32 %v2825, %v2284
    %v2926 = vmul.f32 %v2825, %v2289
    %v2927 = vmul.f32 %v2825, %v2292
    %v2928 = vmul.f32 %v2825, %v2297
    %v2929 = vmul.f32 %v2825, %v2300
    %v2930 = vmul.f32 %v2825, %v2305
    %v2931 = vmul.f32 %v2825, %v2308
    %v2932 = vmul.f32 %v2825, %v2313
    %v2933 = vmul.f32 %v2825, %v2316
    %v2934 = vmul.f32 %v2825, %v2321
    %v2935 = vmul.f32 %v2825, %v2324
    %v2936 = vmul.f32 %v2825, %v2329
    %v2937 = vmul.f32 %v2825, %v2332
    %v2938 = vmul.f32 %v2825, %v2337
    %v2939 = vmul.f32 %v2825, %v2340
    %v2940 = vmul.f32 %v2825, %v2345
    %v2941 = vmul.f32 %v2825, %v2348
    %v2942 = vmul.f32 %v2825, %v2353
    %v2943 = vmul.f32 %v2825, %v2356
    %v2944 = vmul.f32 %v2825, %v2361
    %v2945 = vmul.f32 %v2825, %v2364
    %v2946 = vmul.f32 %v2825, %v2369
    %v2947 = vmul.f32 %v2825, %v2372
    %v2948 = vmul.f32 %v2825, %v2377
    %v2949 = vmul.f32 %v2825, %v2380
    %v2950 = vmul.f32 %v2825, %v2385
    %v2951 = vmul.f32 %v2825, %v2388
    %v2952 = vmul.f32 %v2825, %v2393
    %v2953 = vmul.f32 %v2825, %v2396
    %v2954 = vsub.f32 %v314, %v2826
    %v2955 = vsub.f32 %v315, %v2827
    %v2956 = vsub.f32 %v316, %v2828
    %v2957 = vsub.f32 %v317, %v2829
    %v2958 = vsub.f32 %v318, %v2830
    %v2959 = vsub.f32 %v319, %v2831
    %v2960 = vsub.f32 %v320, %v2832
    %v2961 = vsub.f32 %v321, %v2833
    %v2962 = vsub.f32 %v322, %v2834
    %v2963 = vsub.f32 %v323, %v2835
    %v2964 = vsub.f32 %v324, %v2836
    %v2965 = vsub.f32 %v325, %v2837
    %v2966 = vsub.f32 %v326, %v2838
    %v2967 = vsub.f32 %v327, %v2839
    %v2968 = vsub.f32 %v328, %v2840
    %v2969 = vsub.f32 %v329, %v2841
    %v2970 = vsub.f32 %v330, %v2842
    %v2971 = vsub.f32 %v331, %v2843
    %v2972 = vsub.f32 %v332, %v2844
    %v2973 = vsub.f32 %v333, %v2845
    %v2974 = vsub.f32 %v334, %v2846
    %v2975 = vsub.f32 %v335, %v2847
    %v2976 = vsub.f32 %v336, %v2848
    %v2977 = vsub.f32 %v337, %v2849
    %v2978 = vsub.f32 %v338, %v2850
    %v2979 = vsub.f32 %v339, %v2851
    %v2980 = vsub.f32 %v340, %v2852
    %v2981 = vsub.f32 %v341, %v2853
    %v2982 = vsub.f32 %v342, %v2854
    %v2983 = vsub.f32 %v343, %v2855
    %v2984 = vsub.f32 %v344, %v2856
    %v2985 = vsub.f32 %v345, %v2857
    %v2986 = vsub.f32 %v346, %v2858
    %v2987 = vsub.f32 %v347, %v2859
    %v2988 = vsub.f32 %v348, %v2860
    %v2989 = vsub.f32 %v349, %v2861
    %v2990 = vsub.f32 %v350, %v2862
    %v2991 = vsub.f32 %v351, %v2863
    %v2992 = vsub.f32 %v352, %v2864
    %v2993 = vsub.f32 %v353, %v2865
    %v2994 = vsub.f32 %v354, %v2866
    %v2995 = vsub.f32 %v355, %v2867
    %v2996 = vsub.f32 %v356, %v2868
    %v2997 = vsub.f32 %v357, %v2869
    %v2998 = vsub.f32 %v358, %v2870
    %v2999 = vsub.f32 %v359, %v2871
    %v3000 = vsub.f32 %v360, %v2872
    %v3001 = vsub.f32 %v361, %v2873
    %v3002 = vsub.f32 %v362, %v2874
    %v3003 = vsub.f32 %v363, %v2875
    %v3004 = vsub.f32 %v364, %v2876
    %v3005 = vsub.f32 %v365, %v2877
    %v3006 = vsub.f32 %v366, %v2878
    %v3007 = vsub.f32 %v367, %v2879
    %v3008 = vsub.f32 %v368, %v2880
    %v3009 = vsub.f32 %v369, %v2881
    %v3010 = vsub.f32 %v370, %v2882
    %v3011 = vsub.f32 %v371, %v2883
    %v3012 = vsub.f32 %v372, %v2884
    %v3013 = vsub.f32 %v373, %v2885
    %v3014 = vsub.f32 %v374, %v2886
    %v3015 = vsub.f32 %v375, %v2887
    %v3016 = vsub.f32 %v376, %v2888
    %v3017 = vsub.f32 %v377, %v2889
    %v3018 = vsub.f32 %v378, %v2890
    %v3019 = vsub.f32 %v379, %v2891
    %v3020 = vsub.f32 %v380, %v2892
    %v3021 = vsub.f32 %v381, %v2893
    %v3022 = vsub.f32 %v382, %v2894
    %v3023 = vsub.f32 %v383, %v2895
    %v3024 = vsub.f32 %v384, %v2896
    %v3025 = vsub.f32 %v385, %v2897
    %v3026 = vsub.f32 %v386, %v2898
    %v3027 = vsub.f32 %v387, %v2899
    %v3028 = vsub.f32 %v388, %v2900
    %v3029 = vsub.f32 %v389, %v2901
    %v3030 = vsub.f32 %v390, %v2902
    %v3031 = vsub.f32 %v391, %v2903
    %v3032 = vsub.f32 %v392, %v2904
    %v3033 = vsub.f32 %v393, %v2905
    %v3034 = vsub.f32 %v394, %v2906
    %v3035 = vsub.f32 %v395, %v2907
    %v3036 = vsub.f32 %v396, %v2908
    %v3037 = vsub.f32 %v397, %v2909
    %v3038 = vsub.f32 %v398, %v2910
    %v3039 = vsub.f32 %v399, %v2911
    %v3040 = vsub.f32 %v400, %v2912
    %v3041 = vsub.f32 %v401, %v2913
    %v3042 = vsub.f32 %v402, %v2914
    %v3043 = vsub.f32 %v403, %v2915
    %v3044 = vsub.f32 %v404, %v2916
    %v3045 = vsub.f32 %v405, %v2917
    %v3046 = vsub.f32 %v406, %v2918
    %v3047 = vsub.f32 %v407, %v2919
    %v3048 = vsub.f32 %v408, %v2920
    %v3049 = vsub.f32 %v409, %v2921
    %v3050 = vsub.f32 %v410, %v2922
    %v3051 = vsub.f32 %v411, %v2923
    %v3052 = vsub.f32 %v412, %v2924
    %v3053 = vsub.f32 %v413, %v2925
    %v3054 = vsub.f32 %v414, %v2926
    %v3055 = vsub.f32 %v415, %v2927
    %v3056 = vsub.f32 %v416, %v2928
    %v3057 = vsub.f32 %v417, %v2929
    %v3058 = vsub.f32 %v418, %v2930
    %v3059 = vsub.f32 %v419, %v2931
    %v3060 = vsub.f32 %v420, %v2932
    %v3061 = vsub.f32 %v421, %v2933
    %v3062 = vsub.f32 %v422, %v2934
    %v3063 = vsub.f32 %v423, %v2935
    %v3064 = vsub.f32 %v424, %v2936
    %v3065 = vsub.f32 %v425, %v2937
    %v3066 = vsub.f32 %v426, %v2938
    %v3067 = vsub.f32 %v427, %v2939
    %v3068 = vsub.f32 %v428, %v2940
    %v3069 = vsub.f32 %v429, %v2941
    %v3070 = vsub.f32 %v430, %v2942
    %v3071 = vsub.f32 %v431, %v2943
    %v3072 = vsub.f32 %v432, %v2944
    %v3073 = vsub.f32 %v433, %v2945
    %v3074 = vsub.f32 %v434, %v2946
    %v3075 = vsub.f32 %v435, %v2947
    %v3076 = vsub.f32 %v436, %v2948
    %v3077 = vsub.f32 %v437, %v2949
    %v3078 = vsub.f32 %v438, %v2950
    %v3079 = vsub.f32 %v439, %v2951
    %v3080 = vsub.f32 %v440, %v2952
    %v3081 = vsub.f32 %v441, %v2953
    %3082 = vst.msk [vmem:[%s8] sm:$0xff] %vm182, %v2954
    %3083 = vst.msk [vmem:[%s8 + $0x8] sm:$0xff] %vm182, %v2955
    %3084 = vst.msk [vmem:[%s8 + $0x10] sm:$0xff] %vm182, %v2956
    %3085 = vst.msk [vmem:[%s8 + $0x18] sm:$0xff] %vm182, %v2957
    %3086 = vst.msk [vmem:[%s8 + $0x20] sm:$0xff] %vm182, %v2958
    %3087 = vst.msk [vmem:[%s8 + $0x28] sm:$0xff] %vm182, %v2959
    %3088 = vst.msk [vmem:[%s8 + $0x30] sm:$0xff] %vm182, %v2960
    %3089 = vst.msk [vmem:[%s8 + $0x38] sm:$0xff] %vm182, %v2961
    %3090 = vst.msk [vmem:[%s8 + $0x40] sm:$0xff] %vm182, %v2962
    %3091 = vst.msk [vmem:[%s8 + $0x48] sm:$0xff] %vm182, %v2963
    %3092 = vst.msk [vmem:[%s8 + $0x50] sm:$0xff] %vm182, %v2964
    %3093 = vst.msk [vmem:[%s8 + $0x58] sm:$0xff] %vm182, %v2965
    %3094 = vst.msk [vmem:[%s8 + $0x60] sm:$0xff] %vm182, %v2966
    %3095 = vst.msk [vmem:[%s8 + $0x68] sm:$0xff] %vm182, %v2967
    %3096 = vst.msk [vmem:[%s8 + $0x70] sm:$0xff] %vm182, %v2968
    %3097 = vst.msk [vmem:[%s8 + $0x78] sm:$0xff] %vm182, %v2969
    %3098 = vst.msk [vmem:[%s8 + $0x80] sm:$0xff] %vm182, %v2970
    %3099 = vst.msk [vmem:[%s8 + $0x88] sm:$0xff] %vm182, %v2971
    %3100 = vst.msk [vmem:[%s8 + $0x90] sm:$0xff] %vm182, %v2972
    %3101 = vst.msk [vmem:[%s8 + $0x98] sm:$0xff] %vm182, %v2973
    %3102 = vst.msk [vmem:[%s8 + $0xa0] sm:$0xff] %vm182, %v2974
    %3103 = vst.msk [vmem:[%s8 + $0xa8] sm:$0xff] %vm182, %v2975
    %3104 = vst.msk [vmem:[%s8 + $0xb0] sm:$0xff] %vm182, %v2976
    %3105 = vst.msk [vmem:[%s8 + $0xb8] sm:$0xff] %vm182, %v2977
    %3106 = vst.msk [vmem:[%s8 + $0xc0] sm:$0xff] %vm182, %v2978
    %3107 = vst.msk [vmem:[%s8 + $0xc8] sm:$0xff] %vm182, %v2979
    %3108 = vst.msk [vmem:[%s8 + $0xd0] sm:$0xff] %vm182, %v2980
    %3109 = vst.msk [vmem:[%s8 + $0xd8] sm:$0xff] %vm182, %v2981
    %3110 = vst.msk [vmem:[%s8 + $0xe0] sm:$0xff] %vm182, %v2982
    %3111 = vst.msk [vmem:[%s8 + $0xe8] sm:$0xff] %vm182, %v2983
    %3112 = vst.msk [vmem:[%s8 + $0xf0] sm:$0xff] %vm182, %v2984
    %3113 = vst.msk [vmem:[%s8 + $0xf8] sm:$0xff] %vm182, %v2985
    %3114 = vst.msk [vmem:[%s8 + $0x100] sm:$0xff] %vm182, %v2986
    %3115 = vst.msk [vmem:[%s8 + $0x108] sm:$0xff] %vm182, %v2987
    %3116 = vst.msk [vmem:[%s8 + $0x110] sm:$0xff] %vm182, %v2988
    %3117 = vst.msk [vmem:[%s8 + $0x118] sm:$0xff] %vm182, %v2989
    %3118 = vst.msk [vmem:[%s8 + $0x120] sm:$0xff] %vm182, %v2990
    %3119 = vst.msk [vmem:[%s8 + $0x128] sm:$0xff] %vm182, %v2991
    %3120 = vst.msk [vmem:[%s8 + $0x130] sm:$0xff] %vm182, %v2992
    %3121 = vst.msk [vmem:[%s8 + $0x138] sm:$0xff] %vm182, %v2993
    %3122 = vst.msk [vmem:[%s8 + $0x140] sm:$0xff] %vm182, %v2994
    %3123 = vst.msk [vmem:[%s8 + $0x148] sm:$0xff] %vm182, %v2995
    %3124 = vst.msk [vmem:[%s8 + $0x150] sm:$0xff] %vm182, %v2996
    %3125 = vst.msk [vmem:[%s8 + $0x158] sm:$0xff] %vm182, %v2997
    %3126 = vst.msk [vmem:[%s8 + $0x160] sm:$0xff] %vm182, %v2998
    %3127 = vst.msk [vmem:[%s8 + $0x168] sm:$0xff] %vm182, %v2999
    %3128 = vst.msk [vmem:[%s8 + $0x170] sm:$0xff] %vm182, %v3000
    %3129 = vst.msk [vmem:[%s8 + $0x178] sm:$0xff] %vm182, %v3001
    %3130 = vst.msk [vmem:[%s8 + $0x180] sm:$0xff] %vm182, %v3002
    %3131 = vst.msk [vmem:[%s8 + $0x188] sm:$0xff] %vm182, %v3003
    %3132 = vst.msk [vmem:[%s8 + $0x190] sm:$0xff] %vm182, %v3004
    %3133 = vst.msk [vmem:[%s8 + $0x198] sm:$0xff] %vm182, %v3005
    %3134 = vst.msk [vmem:[%s8 + $0x1a0] sm:$0xff] %vm182, %v3006
    %3135 = vst.msk [vmem:[%s8 + $0x1a8] sm:$0xff] %vm182, %v3007
    %3136 = vst.msk [vmem:[%s8 + $0x1b0] sm:$0xff] %vm182, %v3008
    %3137 = vst.msk [vmem:[%s8 + $0x1b8] sm:$0xff] %vm182, %v3009
    %3138 = vst.msk [vmem:[%s8 + $0x1c0] sm:$0xff] %vm182, %v3010
    %3139 = vst.msk [vmem:[%s8 + $0x1c8] sm:$0xff] %vm182, %v3011
    %3140 = vst.msk [vmem:[%s8 + $0x1d0] sm:$0xff] %vm182, %v3012
    %3141 = vst.msk [vmem:[%s8 + $0x1d8] sm:$0xff] %vm182, %v3013
    %3142 = vst.msk [vmem:[%s8 + $0x1e0] sm:$0xff] %vm182, %v3014
    %3143 = vst.msk [vmem:[%s8 + $0x1e8] sm:$0xff] %vm182, %v3015
    %3144 = vst.msk [vmem:[%s8 + $0x1f0] sm:$0xff] %vm182, %v3016
    %3145 = vst.msk [vmem:[%s8 + $0x1f8] sm:$0xff] %vm182, %v3017
    %3146 = vst.msk [vmem:[%s8 + $0x200] sm:$0xff] %vm182, %v3018
    %3147 = vst.msk [vmem:[%s8 + $0x208] sm:$0xff] %vm182, %v3019
    %3148 = vst.msk [vmem:[%s8 + $0x210] sm:$0xff] %vm182, %v3020
    %3149 = vst.msk [vmem:[%s8 + $0x218] sm:$0xff] %vm182, %v3021
    %3150 = vst.msk [vmem:[%s8 + $0x220] sm:$0xff] %vm182, %v3022
    %3151 = vst.msk [vmem:[%s8 + $0x228] sm:$0xff] %vm182, %v3023
    %3152 = vst.msk [vmem:[%s8 + $0x230] sm:$0xff] %vm182, %v3024
    %3153 = vst.msk [vmem:[%s8 + $0x238] sm:$0xff] %vm182, %v3025
    %3154 = vst.msk [vmem:[%s8 + $0x240] sm:$0xff] %vm182, %v3026
    %3155 = vst.msk [vmem:[%s8 + $0x248] sm:$0xff] %vm182, %v3027
    %3156 = vst.msk [vmem:[%s8 + $0x250] sm:$0xff] %vm182, %v3028
    %3157 = vst.msk [vmem:[%s8 + $0x258] sm:$0xff] %vm182, %v3029
    %3158 = vst.msk [vmem:[%s8 + $0x260] sm:$0xff] %vm182, %v3030
    %3159 = vst.msk [vmem:[%s8 + $0x268] sm:$0xff] %vm182, %v3031
    %3160 = vst.msk [vmem:[%s8 + $0x270] sm:$0xff] %vm182, %v3032
    %3161 = vst.msk [vmem:[%s8 + $0x278] sm:$0xff] %vm182, %v3033
    %3162 = vst.msk [vmem:[%s8 + $0x280] sm:$0xff] %vm182, %v3034
    %3163 = vst.msk [vmem:[%s8 + $0x288] sm:$0xff] %vm182, %v3035
    %3164 = vst.msk [vmem:[%s8 + $0x290] sm:$0xff] %vm182, %v3036
    %3165 = vst.msk [vmem:[%s8 + $0x298] sm:$0xff] %vm182, %v3037
    %3166 = vst.msk [vmem:[%s8 + $0x2a0] sm:$0xff] %vm182, %v3038
    %3167 = vst.msk [vmem:[%s8 + $0x2a8] sm:$0xff] %vm182, %v3039
    %3168 = vst.msk [vmem:[%s8 + $0x2b0] sm:$0xff] %vm182, %v3040
    %3169 = vst.msk [vmem:[%s8 + $0x2b8] sm:$0xff] %vm182, %v3041
    %3170 = vst.msk [vmem:[%s8 + $0x2c0] sm:$0xff] %vm182, %v3042
    %3171 = vst.msk [vmem:[%s8 + $0x2c8] sm:$0xff] %vm182, %v3043
    %3172 = vst.msk [vmem:[%s8 + $0x2d0] sm:$0xff] %vm182, %v3044
    %3173 = vst.msk [vmem:[%s8 + $0x2d8] sm:$0xff] %vm182, %v3045
    %3174 = vst.msk [vmem:[%s8 + $0x2e0] sm:$0xff] %vm182, %v3046
    %3175 = vst.msk [vmem:[%s8 + $0x2e8] sm:$0xff] %vm182, %v3047
    %3176 = vst.msk [vmem:[%s8 + $0x2f0] sm:$0xff] %vm182, %v3048
    %3177 = vst.msk [vmem:[%s8 + $0x2f8] sm:$0xff] %vm182, %v3049
    %3178 = vst.msk [vmem:[%s8 + $0x300] sm:$0xff] %vm182, %v3050
    %3179 = vst.msk [vmem:[%s8 + $0x308] sm:$0xff] %vm182, %v3051
    %3180 = vst.msk [vmem:[%s8 + $0x310] sm:$0xff] %vm182, %v3052
    %3181 = vst.msk [vmem:[%s8 + $0x318] sm:$0xff] %vm182, %v3053
    %3182 = vst.msk [vmem:[%s8 + $0x320] sm:$0xff] %vm182, %v3054
    %3183 = vst.msk [vmem:[%s8 + $0x328] sm:$0xff] %vm182, %v3055
    %3184 = vst.msk [vmem:[%s8 + $0x330] sm:$0xff] %vm182, %v3056
    %3185 = vst.msk [vmem:[%s8 + $0x338] sm:$0xff] %vm182, %v3057
    %3186 = vst.msk [vmem:[%s8 + $0x340] sm:$0xff] %vm182, %v3058
    %3187 = vst.msk [vmem:[%s8 + $0x348] sm:$0xff] %vm182, %v3059
    %3188 = vst.msk [vmem:[%s8 + $0x350] sm:$0xff] %vm182, %v3060
    %3189 = vst.msk [vmem:[%s8 + $0x358] sm:$0xff] %vm182, %v3061
    %3190 = vst.msk [vmem:[%s8 + $0x360] sm:$0xff] %vm182, %v3062
    %3191 = vst.msk [vmem:[%s8 + $0x368] sm:$0xff] %vm182, %v3063
    %3192 = vst.msk [vmem:[%s8 + $0x370] sm:$0xff] %vm182, %v3064
    %3193 = vst.msk [vmem:[%s8 + $0x378] sm:$0xff] %vm182, %v3065
    %3194 = vst.msk [vmem:[%s8 + $0x380] sm:$0xff] %vm182, %v3066
    %3195 = vst.msk [vmem:[%s8 + $0x388] sm:$0xff] %vm182, %v3067
    %3196 = vst.msk [vmem:[%s8 + $0x390] sm:$0xff] %vm182, %v3068
    %3197 = vst.msk [vmem:[%s8 + $0x398] sm:$0xff] %vm182, %v3069
    %3198 = vst.msk [vmem:[%s8 + $0x3a0] sm:$0xff] %vm182, %v3070
    %3199 = vst.msk [vmem:[%s8 + $0x3a8] sm:$0xff] %vm182, %v3071
    %3200 = vst.msk [vmem:[%s8 + $0x3b0] sm:$0xff] %vm182, %v3072
    %3201 = vst.msk [vmem:[%s8 + $0x3b8] sm:$0xff] %vm182, %v3073
    %3202 = vst.msk [vmem:[%s8 + $0x3c0] sm:$0xff] %vm182, %v3074
    %3203 = vst.msk [vmem:[%s8 + $0x3c8] sm:$0xff] %vm182, %v3075
    %3204 = vst.msk [vmem:[%s8 + $0x3d0] sm:$0xff] %vm182, %v3076
    %3205 = vst.msk [vmem:[%s8 + $0x3d8] sm:$0xff] %vm182, %v3077
    %3206 = vst.msk [vmem:[%s8 + $0x3e0] sm:$0xff] %vm182, %v3078
    %3207 = vst.msk [vmem:[%s8 + $0x3e8] sm:$0xff] %vm182, %v3079
    %3208 = vst.msk [vmem:[%s8 + $0x3f0] sm:$0xff] %vm182, %v3080
    %3209 = vst.msk [vmem:[%s8 + $0x3f8] sm:$0xff] %vm182, %v3081
    %v3210 = vld [vmem:[%s9] sm:$0x1]
    %v3211 = vmul.f32 %v2825, %v2405
    %v3212 = vsub.f32 %v3210, %v3211
    %3213 = vst.msk [vmem:[%s9] sm:$0x1] %vm312, %v3212
    %3214 = vst.msk [vmem:[#allocation2] sm:$0xff] %vm808, %v805
    %v3215 = vld [vmem:[%s8] sm:$0xff]
    %v3216 = vld [vmem:[%s8 + $0x8] sm:$0xff]
    %v3217 = vld [vmem:[%s8 + $0x10] sm:$0xff]
    %v3218 = vld [vmem:[%s8 + $0x18] sm:$0xff]
    %v3219 = vld [vmem:[%s8 + $0x20] sm:$0xff]
    %v3220 = vld [vmem:[%s8 + $0x28] sm:$0xff]
    %v3221 = vld [vmem:[%s8 + $0x30] sm:$0xff]
    %v3222 = vld [vmem:[%s8 + $0x38] sm:$0xff]
    %v3223 = vld [vmem:[%s8 + $0x40] sm:$0xff]
    %v3224 = vld [vmem:[%s8 + $0x48] sm:$0xff]
    %v3225 = vld [vmem:[%s8 + $0x50] sm:$0xff]
    %v3226 = vld [vmem:[%s8 + $0x58] sm:$0xff]
    %v3227 = vld [vmem:[%s8 + $0x60] sm:$0xff]
    %v3228 = vld [vmem:[%s8 + $0x68] sm:$0xff]
    %v3229 = vld [vmem:[%s8 + $0x70] sm:$0xff]
    %v3230 = vld [vmem:[%s8 + $0x78] sm:$0xff]
    %v3231 = vld [vmem:[%s8 + $0x80] sm:$0xff]
    %v3232 = vld [vmem:[%s8 + $0x88] sm:$0xff]
    %v3233 = vld [vmem:[%s8 + $0x90] sm:$0xff]
    %v3234 = vld [vmem:[%s8 + $0x98] sm:$0xff]
    %v3235 = vld [vmem:[%s8 + $0xa0] sm:$0xff]
    %v3236 = vld [vmem:[%s8 + $0xa8] sm:$0xff]
    %v3237 = vld [vmem:[%s8 + $0xb0] sm:$0xff]
    %v3238 = vld [vmem:[%s8 + $0xb8] sm:$0xff]
    %v3239 = vld [vmem:[%s8 + $0xc0] sm:$0xff]
    %v3240 = vld [vmem:[%s8 + $0xc8] sm:$0xff]
    %v3241 = vld [vmem:[%s8 + $0xd0] sm:$0xff]
    %v3242 = vld [vmem:[%s8 + $0xd8] sm:$0xff]
    %v3243 = vld [vmem:[%s8 + $0xe0] sm:$0xff]
    %v3244 = vld [vmem:[%s8 + $0xe8] sm:$0xff]
    %v3245 = vld [vmem:[%s8 + $0xf0] sm:$0xff]
    %v3246 = vld [vmem:[%s8 + $0xf8] sm:$0xff]
    %v3247 = vld [vmem:[%s8 + $0x100] sm:$0xff]
    %v3248 = vld [vmem:[%s8 + $0x108] sm:$0xff]
    %v3249 = vld [vmem:[%s8 + $0x110] sm:$0xff]
    %v3250 = vld [vmem:[%s8 + $0x118] sm:$0xff]
    %v3251 = vld [vmem:[%s8 + $0x120] sm:$0xff]
    %v3252 = vld [vmem:[%s8 + $0x128] sm:$0xff]
    %v3253 = vld [vmem:[%s8 + $0x130] sm:$0xff]
    %v3254 = vld [vmem:[%s8 + $0x138] sm:$0xff]
    %v3255 = vld [vmem:[%s8 + $0x140] sm:$0xff]
    %v3256 = vld [vmem:[%s8 + $0x148] sm:$0xff]
    %v3257 = vld [vmem:[%s8 + $0x150] sm:$0xff]
    %v3258 = vld [vmem:[%s8 + $0x158] sm:$0xff]
    %v3259 = vld [vmem:[%s8 + $0x160] sm:$0xff]
    %v3260 = vld [vmem:[%s8 + $0x168] sm:$0xff]
    %v3261 = vld [vmem:[%s8 + $0x170] sm:$0xff]
    %v3262 = vld [vmem:[%s8 + $0x178] sm:$0xff]
    %v3263 = vld [vmem:[%s8 + $0x180] sm:$0xff]
    %v3264 = vld [vmem:[%s8 + $0x188] sm:$0xff]
    %v3265 = vld [vmem:[%s8 + $0x190] sm:$0xff]
    %v3266 = vld [vmem:[%s8 + $0x198] sm:$0xff]
    %v3267 = vld [vmem:[%s8 + $0x1a0] sm:$0xff]
    %v3268 = vld [vmem:[%s8 + $0x1a8] sm:$0xff]
    %v3269 = vld [vmem:[%s8 + $0x1b0] sm:$0xff]
    %v3270 = vld [vmem:[%s8 + $0x1b8] sm:$0xff]
    %v3271 = vld [vmem:[%s8 + $0x1c0] sm:$0xff]
    %v3272 = vld [vmem:[%s8 + $0x1c8] sm:$0xff]
    %v3273 = vld [vmem:[%s8 + $0x1d0] sm:$0xff]
    %v3274 = vld [vmem:[%s8 + $0x1d8] sm:$0xff]
    %v3275 = vld [vmem:[%s8 + $0x1e0] sm:$0xff]
    %v3276 = vld [vmem:[%s8 + $0x1e8] sm:$0xff]
    %v3277 = vld [vmem:[%s8 + $0x1f0] sm:$0xff]
    %v3278 = vld [vmem:[%s8 + $0x1f8] sm:$0xff]
    %v3279 = vld [vmem:[%s8 + $0x200] sm:$0xff]
    %v3280 = vld [vmem:[%s8 + $0x208] sm:$0xff]
    %v3281 = vld [vmem:[%s8 + $0x210] sm:$0xff]
    %v3282 = vld [vmem:[%s8 + $0x218] sm:$0xff]
    %v3283 = vld [vmem:[%s8 + $0x220] sm:$0xff]
    %v3284 = vld [vmem:[%s8 + $0x228] sm:$0xff]
    %v3285 = vld [vmem:[%s8 + $0x230] sm:$0xff]
    %v3286 = vld [vmem:[%s8 + $0x238] sm:$0xff]
    %v3287 = vld [vmem:[%s8 + $0x240] sm:$0xff]
    %v3288 = vld [vmem:[%s8 + $0x248] sm:$0xff]
    %v3289 = vld [vmem:[%s8 + $0x250] sm:$0xff]
    %v3290 = vld [vmem:[%s8 + $0x258] sm:$0xff]
    %v3291 = vld [vmem:[%s8 + $0x260] sm:$0xff]
    %v3292 = vld [vmem:[%s8 + $0x268] sm:$0xff]
    %v3293 = vld [vmem:[%s8 + $0x270] sm:$0xff]
    %v3294 = vld [vmem:[%s8 + $0x278] sm:$0xff]
    %v3295 = vld [vmem:[%s8 + $0x280] sm:$0xff]
    %v3296 = vld [vmem:[%s8 + $0x288] sm:$0xff]
    %v3297 = vld [vmem:[%s8 + $0x290] sm:$0xff]
    %v3298 = vld [vmem:[%s8 + $0x298] sm:$0xff]
    %v3299 = vld [vmem:[%s8 + $0x2a0] sm:$0xff]
    %v3300 = vld [vmem:[%s8 + $0x2a8] sm:$0xff]
    %v3301 = vld [vmem:[%s8 + $0x2b0] sm:$0xff]
    %v3302 = vld [vmem:[%s8 + $0x2b8] sm:$0xff]
    %v3303 = vld [vmem:[%s8 + $0x2c0] sm:$0xff]
    %v3304 = vld [vmem:[%s8 + $0x2c8] sm:$0xff]
    %v3305 = vld [vmem:[%s8 + $0x2d0] sm:$0xff]
    %v3306 = vld [vmem:[%s8 + $0x2d8] sm:$0xff]
    %v3307 = vld [vmem:[%s8 + $0x2e0] sm:$0xff]
    %v3308 = vld [vmem:[%s8 + $0x2e8] sm:$0xff]
    %v3309 = vld [vmem:[%s8 + $0x2f0] sm:$0xff]
    %v3310 = vld [vmem:[%s8 + $0x2f8] sm:$0xff]
    %v3311 = vld [vmem:[%s8 + $0x300] sm:$0xff]
    %v3312 = vld [vmem:[%s8 + $0x308] sm:$0xff]
    %v3313 = vld [vmem:[%s8 + $0x310] sm:$0xff]
    %v3314 = vld [vmem:[%s8 + $0x318] sm:$0xff]
    %v3315 = vld [vmem:[%s8 + $0x320] sm:$0xff]
    %v3316 = vld [vmem:[%s8 + $0x328] sm:$0xff]
    %v3317 = vld [vmem:[%s8 + $0x330] sm:$0xff]
    %v3318 = vld [vmem:[%s8 + $0x338] sm:$0xff]
    %v3319 = vld [vmem:[%s8 + $0x340] sm:$0xff]
    %v3320 = vld [vmem:[%s8 + $0x348] sm:$0xff]
    %v3321 = vld [vmem:[%s8 + $0x350] sm:$0xff]
    %v3322 = vld [vmem:[%s8 + $0x358] sm:$0xff]
    %v3323 = vld [vmem:[%s8 + $0x360] sm:$0xff]
    %v3324 = vld [vmem:[%s8 + $0x368] sm:$0xff]
    %v3325 = vld [vmem:[%s8 + $0x370] sm:$0xff]
    %v3326 = vld [vmem:[%s8 + $0x378] sm:$0xff]
    %v3327 = vld [vmem:[%s8 + $0x380] sm:$0xff]
    %v3328 = vld [vmem:[%s8 + $0x388] sm:$0xff]
    %v3329 = vld [vmem:[%s8 + $0x390] sm:$0xff]
    %v3330 = vld [vmem:[%s8 + $0x398] sm:$0xff]
    %v3331 = vld [vmem:[%s8 + $0x3a0] sm:$0xff]
    %v3332 = vld [vmem:[%s8 + $0x3a8] sm:$0xff]
    %v3333 = vld [vmem:[%s8 + $0x3b0] sm:$0xff]
    %v3334 = vld [vmem:[%s8 + $0x3b8] sm:$0xff]
    %v3335 = vld [vmem:[%s8 + $0x3c0] sm:$0xff]
    %v3336 = vld [vmem:[%s8 + $0x3c8] sm:$0xff]
    %v3337 = vld [vmem:[%s8 + $0x3d0] sm:$0xff]
    %v3338 = vld [vmem:[%s8 + $0x3d8] sm:$0xff]
    %v3339 = vld [vmem:[%s8 + $0x3e0] sm:$0xff]
    %v3340 = vld [vmem:[%s8 + $0x3e8] sm:$0xff]
    %v3341 = vld [vmem:[%s8 + $0x3f0] sm:$0xff]
    %v3342 = vld [vmem:[%s8 + $0x3f8] sm:$0xff]
    %v3343 = vld [vmem:[%s9] sm:$0x1]
    %v3345 = vlaneseq
    %v3346 = vshrl.u32 %v3345, 7
    %v3347 = vsub.s32 0, %v3346
    %v3348 = vrot.slane %v3343, %v3347
    %3350 = vmatprep.subr.mxu0 0.0
    %3351 = vmatpush1.msra.mxu0 %v3230
    %3352 = vmatprep.subr.mxu0 0.0
    %3353 = vmatpush1.msra.mxu0 %v3229
    %3354 = vmatprep.subr.mxu0 0.0
    %3355 = vmatpush1.msra.mxu0 %v3228
    %3356 = vmatprep.subr.mxu0 0.0
    %3357 = vmatpush1.msra.mxu0 %v3227
    %3358 = vmatprep.subr.mxu0 0.0
    %3359 = vmatpush1.msra.mxu0 %v3226
    %3360 = vmatprep.subr.mxu0 0.0
    %3361 = vmatpush1.msra.mxu0 %v3225
    %3362 = vmatprep.subr.mxu0 0.0
    %3363 = vmatpush1.msra.mxu0 %v3224
    %3364 = vmatprep.subr.mxu0 0.0
    %3365 = vmatpush1.msra.mxu0 %v3223
    %3366 = vmatprep.subr.mxu0 0.0
    %3367 = vmatpush1.msra.mxu0 %v3222
    %3368 = vmatprep.subr.mxu0 0.0
    %3369 = vmatpush1.msra.mxu0 %v3221
    %3370 = vmatprep.subr.mxu0 0.0
    %3371 = vmatpush1.msra.mxu0 %v3220
    %3372 = vmatprep.subr.mxu0 0.0
    %3373 = vmatpush1.msra.mxu0 %v3219
    %3374 = vmatprep.subr.mxu0 0.0
    %3375 = vmatpush1.msra.mxu0 %v3218
    %3376 = vmatprep.subr.mxu0 0.0
    %3377 = vmatpush1.msra.mxu0 %v3217
    %3378 = vmatprep.subr.mxu0 0.0
    %3379 = vmatpush1.msra.mxu0 %v3216
    %3380 = vmatprep.subr.mxu0 0.0
    %3381 = vmatpush1.msra.mxu0 %v3215
    %3382 = vmatprep.subr.mxu0 0.0
    %3383 = vmatpush2.msra.mxu0 %v3246
    %3384 = vmatprep.subr.mxu0 0.0
    %3385 = vmatpush2.msra.mxu0 %v3245
    %3386 = vmatprep.subr.mxu0 0.0
    %3387 = vmatpush2.msra.mxu0 %v3244
    %3388 = vmatprep.subr.mxu0 0.0
    %3389 = vmatpush2.msra.mxu0 %v3243
    %3390 = vmatprep.subr.mxu0 0.0
    %3391 = vmatpush2.msra.mxu0 %v3242
    %3392 = vmatprep.subr.mxu0 0.0
    %3393 = vmatpush2.msra.mxu0 %v3241
    %3394 = vmatprep.subr.mxu0 0.0
    %3395 = vmatpush2.msra.mxu0 %v3240
    %3396 = vmatprep.subr.mxu0 0.0
    %3397 = vmatpush2.msra.mxu0 %v3239
    %3398 = vmatprep.subr.mxu0 0.0
    %3399 = vmatpush2.msra.mxu0 %v3238
    %3400 = vmatprep.subr.mxu0 0.0
    %3401 = vmatpush2.msra.mxu0 %v3237
    %3402 = vmatprep.subr.mxu0 0.0
    %3403 = vmatpush2.msra.mxu0 %v3236
    %3404 = vmatprep.subr.mxu0 0.0
    %3405 = vmatpush2.msra.mxu0 %v3235
    %3406 = vmatprep.subr.mxu0 0.0
    %3407 = vmatpush2.msra.mxu0 %v3234
    %3408 = vmatprep.subr.mxu0 0.0
    %3409 = vmatpush2.msra.mxu0 %v3233
    %3410 = vmatprep.subr.mxu0 0.0
    %3411 = vmatpush2.msra.mxu0 %v3232
    %3412 = vmatprep.subr.mxu0 0.0
    %3413 = vmatpush2.msra.mxu0 %v3231
    %3414 = vmatprep.mubr.f32.mxu0 %v32
    %3415 = vmatmul.mubr.f32.gmra.mxu0 %v31
    %v3416 = vpop.f32.mrf.mxu0
    %v3417 = vadd.f32 %v3348, %v3416
    %v3418 = vpop.f32.mrf.mxu0
    %3419 = vdwg.mxu0
    %3420 = vmatprep.subr.mxu0 0.0
    %3421 = vmatpush1.msra.mxu0 %v3262
    %3422 = vmatprep.subr.mxu0 0.0
    %3423 = vmatpush1.msra.mxu0 %v3261
    %3424 = vmatprep.subr.mxu0 0.0
    %3425 = vmatpush1.msra.mxu0 %v3260
    %3426 = vmatprep.subr.mxu0 0.0
    %3427 = vmatpush1.msra.mxu0 %v3259
    %3428 = vmatprep.subr.mxu0 0.0
    %3429 = vmatpush1.msra.mxu0 %v3258
    %3430 = vmatprep.subr.mxu0 0.0
    %3431 = vmatpush1.msra.mxu0 %v3257
    %3432 = vmatprep.subr.mxu0 0.0
    %3433 = vmatpush1.msra.mxu0 %v3256
    %3434 = vmatprep.subr.mxu0 0.0
    %3435 = vmatpush1.msra.mxu0 %v3255
    %3436 = vmatprep.subr.mxu0 0.0
    %3437 = vmatpush1.msra.mxu0 %v3254
    %3438 = vmatprep.subr.mxu0 0.0
    %3439 = vmatpush1.msra.mxu0 %v3253
    %3440 = vmatprep.subr.mxu0 0.0
    %3441 = vmatpush1.msra.mxu0 %v3252
    %3442 = vmatprep.subr.mxu0 0.0
    %3443 = vmatpush1.msra.mxu0 %v3251
    %3444 = vmatprep.subr.mxu0 0.0
    %3445 = vmatpush1.msra.mxu0 %v3250
    %3446 = vmatprep.subr.mxu0 0.0
    %3447 = vmatpush1.msra.mxu0 %v3249
    %3448 = vmatprep.subr.mxu0 0.0
    %3449 = vmatpush1.msra.mxu0 %v3248
    %3450 = vmatprep.subr.mxu0 0.0
    %3451 = vmatpush1.msra.mxu0 %v3247
    %3452 = vmatprep.subr.mxu0 0.0
    %3453 = vmatpush2.msra.mxu0 %v3278
    %3454 = vmatprep.subr.mxu0 0.0
    %3455 = vmatpush2.msra.mxu0 %v3277
    %3456 = vmatprep.subr.mxu0 0.0
    %3457 = vmatpush2.msra.mxu0 %v3276
    %3458 = vmatprep.subr.mxu0 0.0
    %3459 = vmatpush2.msra.mxu0 %v3275
    %3460 = vmatprep.subr.mxu0 0.0
    %3461 = vmatpush2.msra.mxu0 %v3274
    %3462 = vmatprep.subr.mxu0 0.0
    %3463 = vmatpush2.msra.mxu0 %v3273
    %3464 = vmatprep.subr.mxu0 0.0
    %3465 = vmatpush2.msra.mxu0 %v3272
    %3466 = vmatprep.subr.mxu0 0.0
    %3467 = vmatpush2.msra.mxu0 %v3271
    %3468 = vmatprep.subr.mxu0 0.0
    %3469 = vmatpush2.msra.mxu0 %v3270
    %3470 = vmatprep.subr.mxu0 0.0
    %3471 = vmatpush2.msra.mxu0 %v3269
    %3472 = vmatprep.subr.mxu0 0.0
    %3473 = vmatpush2.msra.mxu0 %v3268
    %3474 = vmatprep.subr.mxu0 0.0
    %3475 = vmatpush2.msra.mxu0 %v3267
    %3476 = vmatprep.subr.mxu0 0.0
    %3477 = vmatpush2.msra.mxu0 %v3266
    %3478 = vmatprep.subr.mxu0 0.0
    %3479 = vmatpush2.msra.mxu0 %v3265
    %3480 = vmatprep.subr.mxu0 0.0
    %3481 = vmatpush2.msra.mxu0 %v3264
    %3482 = vmatprep.subr.mxu0 0.0
    %3483 = vmatpush2.msra.mxu0 %v3263
    %3484 = vmatprep.mubr.f32.mxu0 %v34
    %3485 = vmatmul.mubr.f32.gmra.mxu0 %v33
    %v3486 = vpop.f32.mrf.mxu0
    %v3487 = vadd.f32 %v3417, %v3486
    %v3488 = vpop.f32.mrf.mxu0
    %3489 = vdwg.mxu0
    %3490 = vmatprep.subr.mxu0 0.0
    %3491 = vmatpush1.msra.mxu0 %v3294
    %3492 = vmatprep.subr.mxu0 0.0
    %3493 = vmatpush1.msra.mxu0 %v3293
    %3494 = vmatprep.subr.mxu0 0.0
    %3495 = vmatpush1.msra.mxu0 %v3292
    %3496 = vmatprep.subr.mxu0 0.0
    %3497 = vmatpush1.msra.mxu0 %v3291
    %3498 = vmatprep.subr.mxu0 0.0
    %3499 = vmatpush1.msra.mxu0 %v3290
    %3500 = vmatprep.subr.mxu0 0.0
    %3501 = vmatpush1.msra.mxu0 %v3289
    %3502 = vmatprep.subr.mxu0 0.0
    %3503 = vmatpush1.msra.mxu0 %v3288
    %3504 = vmatprep.subr.mxu0 0.0
    %3505 = vmatpush1.msra.mxu0 %v3287
    %3506 = vmatprep.subr.mxu0 0.0
    %3507 = vmatpush1.msra.mxu0 %v3286
    %3508 = vmatprep.subr.mxu0 0.0
    %3509 = vmatpush1.msra.mxu0 %v3285
    %3510 = vmatprep.subr.mxu0 0.0
    %3511 = vmatpush1.msra.mxu0 %v3284
    %3512 = vmatprep.subr.mxu0 0.0
    %3513 = vmatpush1.msra.mxu0 %v3283
    %3514 = vmatprep.subr.mxu0 0.0
    %3515 = vmatpush1.msra.mxu0 %v3282
    %3516 = vmatprep.subr.mxu0 0.0
    %3517 = vmatpush1.msra.mxu0 %v3281
    %3518 = vmatprep.subr.mxu0 0.0
    %3519 = vmatpush1.msra.mxu0 %v3280
    %3520 = vmatprep.subr.mxu0 0.0
    %3521 = vmatpush1.msra.mxu0 %v3279
    %3522 = vmatprep.subr.mxu0 0.0
    %3523 = vmatpush2.msra.mxu0 %v3310
    %3524 = vmatprep.subr.mxu0 0.0
    %3525 = vmatpush2.msra.mxu0 %v3309
    %3526 = vmatprep.subr.mxu0 0.0
    %3527 = vmatpush2.msra.mxu0 %v3308
    %3528 = vmatprep.subr.mxu0 0.0
    %3529 = vmatpush2.msra.mxu0 %v3307
    %3530 = vmatprep.subr.mxu0 0.0
    %3531 = vmatpush2.msra.mxu0 %v3306
    %3532 = vmatprep.subr.mxu0 0.0
    %3533 = vmatpush2.msra.mxu0 %v3305
    %3534 = vmatprep.subr.mxu0 0.0
    %3535 = vmatpush2.msra.mxu0 %v3304
    %3536 = vmatprep.subr.mxu0 0.0
    %3537 = vmatpush2.msra.mxu0 %v3303
    %3538 = vmatprep.subr.mxu0 0.0
    %3539 = vmatpush2.msra.mxu0 %v3302
    %3540 = vmatprep.subr.mxu0 0.0
    %3541 = vmatpush2.msra.mxu0 %v3301
    %3542 = vmatprep.subr.mxu0 0.0
    %3543 = vmatpush2.msra.mxu0 %v3300
    %3544 = vmatprep.subr.mxu0 0.0
    %3545 = vmatpush2.msra.mxu0 %v3299
    %3546 = vmatprep.subr.mxu0 0.0
    %3547 = vmatpush2.msra.mxu0 %v3298
    %3548 = vmatprep.subr.mxu0 0.0
    %3549 = vmatpush2.msra.mxu0 %v3297
    %3550 = vmatprep.subr.mxu0 0.0
    %3551 = vmatpush2.msra.mxu0 %v3296
    %3552 = vmatprep.subr.mxu0 0.0
    %3553 = vmatpush2.msra.mxu0 %v3295
    %3554 = vmatprep.mubr.f32.mxu0 %v36
    %3555 = vmatmul.mubr.f32.gmra.mxu0 %v35
    %v3556 = vpop.f32.mrf.mxu0
    %v3557 = vadd.f32 %v3487, %v3556
    %v3558 = vpop.f32.mrf.mxu0
    %3559 = vdwg.mxu0
    %3560 = vmatprep.subr.mxu0 0.0
    %3561 = vmatpush1.msra.mxu0 %v3326
    %3562 = vmatprep.subr.mxu0 0.0
    %3563 = vmatpush1.msra.mxu0 %v3325
    %3564 = vmatprep.subr.mxu0 0.0
    %3565 = vmatpush1.msra.mxu0 %v3324
    %3566 = vmatprep.subr.mxu0 0.0
    %3567 = vmatpush1.msra.mxu0 %v3323
    %3568 = vmatprep.subr.mxu0 0.0
    %3569 = vmatpush1.msra.mxu0 %v3322
    %3570 = vmatprep.subr.mxu0 0.0
    %3571 = vmatpush1.msra.mxu0 %v3321
    %3572 = vmatprep.subr.mxu0 0.0
    %3573 = vmatpush1.msra.mxu0 %v3320
    %3574 = vmatprep.subr.mxu0 0.0
    %3575 = vmatpush1.msra.mxu0 %v3319
    %3576 = vmatprep.subr.mxu0 0.0
    %3577 = vmatpush1.msra.mxu0 %v3318
    %3578 = vmatprep.subr.mxu0 0.0
    %3579 = vmatpush1.msra.mxu0 %v3317
    %3580 = vmatprep.subr.mxu0 0.0
    %3581 = vmatpush1.msra.mxu0 %v3316
    %3582 = vmatprep.subr.mxu0 0.0
    %3583 = vmatpush1.msra.mxu0 %v3315
    %3584 = vmatprep.subr.mxu0 0.0
    %3585 = vmatpush1.msra.mxu0 %v3314
    %3586 = vmatprep.subr.mxu0 0.0
    %3587 = vmatpush1.msra.mxu0 %v3313
    %3588 = vmatprep.subr.mxu0 0.0
    %3589 = vmatpush1.msra.mxu0 %v3312
    %3590 = vmatprep.subr.mxu0 0.0
    %3591 = vmatpush1.msra.mxu0 %v3311
    %3592 = vmatprep.subr.mxu0 0.0
    %3593 = vmatpush2.msra.mxu0 %v3342
    %3594 = vmatprep.subr.mxu0 0.0
    %3595 = vmatpush2.msra.mxu0 %v3341
    %3596 = vmatprep.subr.mxu0 0.0
    %3597 = vmatpush2.msra.mxu0 %v3340
    %3598 = vmatprep.subr.mxu0 0.0
    %3599 = vmatpush2.msra.mxu0 %v3339
    %3600 = vmatprep.subr.mxu0 0.0
    %3601 = vmatpush2.msra.mxu0 %v3338
    %3602 = vmatprep.subr.mxu0 0.0
    %3603 = vmatpush2.msra.mxu0 %v3337
    %3604 = vmatprep.subr.mxu0 0.0
    %3605 = vmatpush2.msra.mxu0 %v3336
    %3606 = vmatprep.subr.mxu0 0.0
    %3607 = vmatpush2.msra.mxu0 %v3335
    %3608 = vmatprep.subr.mxu0 0.0
    %3609 = vmatpush2.msra.mxu0 %v3334
    %3610 = vmatprep.subr.mxu0 0.0
    %3611 = vmatpush2.msra.mxu0 %v3333
    %3612 = vmatprep.subr.mxu0 0.0
    %3613 = vmatpush2.msra.mxu0 %v3332
    %3614 = vmatprep.subr.mxu0 0.0
    %3615 = vmatpush2.msra.mxu0 %v3331
    %3616 = vmatprep.subr.mxu0 0.0
    %3617 = vmatpush2.msra.mxu0 %v3330
    %3618 = vmatprep.subr.mxu0 0.0
    %3619 = vmatpush2.msra.mxu0 %v3329
    %3620 = vmatprep.subr.mxu0 0.0
    %3621 = vmatpush2.msra.mxu0 %v3328
    %3622 = vmatprep.subr.mxu0 0.0
    %3623 = vmatpush2.msra.mxu0 %v3327
    %3624 = vmatprep.mubr.f32.mxu0 %v38
    %3625 = vmatmul.mubr.f32.gmra.mxu0 %v37
    %v3626 = vpop.f32.mrf.mxu0
    %v3627 = vadd.f32 %v3557, %v3626
    %v3628 = vpop.f32.mrf.mxu0
    %3629 = vdwg.mxu0
    %v3631 = vsel %vm182, %v3627, 0
    %3633 = vmatprep.subr.mxu0 0.0
    %3634 = vmatpush1.msra.mxu0 0.0
    %3635 = vmatprep.subr.mxu0 0.0
    %3636 = vmatpush1.msra.mxu0 0.0
    %3637 = vmatprep.subr.mxu0 0.0
    %3638 = vmatpush1.msra.mxu0 0.0
    %3639 = vmatprep.subr.mxu0 0.0
    %3640 = vmatpush1.msra.mxu0 0.0
    %3641 = vmatprep.subr.mxu0 0.0
    %3642 = vmatpush1.msra.mxu0 0.0
    %3643 = vmatprep.subr.mxu0 0.0
    %3644 = vmatpush1.msra.mxu0 0.0
    %3645 = vmatprep.subr.mxu0 0.0
    %3646 = vmatpush1.msra.mxu0 0.0
    %3647 = vmatprep.subr.mxu0 0.0
    %3648 = vmatpush1.msra.mxu0 0.0
    %3649 = vmatprep.subr.mxu0 0.0
    %3650 = vmatpush1.msra.mxu0 0.0
    %3651 = vmatprep.subr.mxu0 0.0
    %3652 = vmatpush1.msra.mxu0 0.0
    %3653 = vmatprep.subr.mxu0 0.0
    %3654 = vmatpush1.msra.mxu0 0.0
    %3655 = vmatprep.subr.mxu0 0.0
    %3656 = vmatpush1.msra.mxu0 0.0
    %3657 = vmatprep.subr.mxu0 0.0
    %3658 = vmatpush1.msra.mxu0 %v50
    %3659 = vmatprep.subr.mxu0 0.0
    %3660 = vmatpush1.msra.mxu0 %v49
    %3661 = vmatprep.subr.mxu0 0.0
    %3662 = vmatpush1.msra.mxu0 %v48
    %3663 = vmatprep.subr.mxu0 0.0
    %3664 = vmatpush1.msra.mxu0 %v47
    %3665 = vmatprep.subr.mxu0 0.0
    %3666 = vmatpush2.msra.mxu0 0.0
    %3667 = vmatprep.subr.mxu0 0.0
    %3668 = vmatpush2.msra.mxu0 0.0
    %3669 = vmatprep.subr.mxu0 0.0
    %3670 = vmatpush2.msra.mxu0 0.0
    %3671 = vmatprep.subr.mxu0 0.0
    %3672 = vmatpush2.msra.mxu0 0.0
    %3673 = vmatprep.subr.mxu0 0.0
    %3674 = vmatpush2.msra.mxu0 0.0
    %3675 = vmatprep.subr.mxu0 0.0
    %3676 = vmatpush2.msra.mxu0 0.0
    %3677 = vmatprep.subr.mxu0 0.0
    %3678 = vmatpush2.msra.mxu0 0.0
    %3679 = vmatprep.subr.mxu0 0.0
    %3680 = vmatpush2.msra.mxu0 0.0
    %3681 = vmatprep.subr.mxu0 0.0
    %3682 = vmatpush2.msra.mxu0 0.0
    %3683 = vmatprep.subr.mxu0 0.0
    %3684 = vmatpush2.msra.mxu0 0.0
    %3685 = vmatprep.subr.mxu0 0.0
    %3686 = vmatpush2.msra.mxu0 0.0
    %3687 = vmatprep.subr.mxu0 0.0
    %3688 = vmatpush2.msra.mxu0 0.0
    %3689 = vmatprep.subr.mxu0 0.0
    %3690 = vmatpush2.msra.mxu0 0.0
    %3691 = vmatprep.subr.mxu0 0.0
    %3692 = vmatpush2.msra.mxu0 0.0
    %3693 = vmatprep.subr.mxu0 0.0
    %3694 = vmatpush2.msra.mxu0 0.0
    %3695 = vmatprep.subr.mxu0 0.0
    %3696 = vmatpush2.msra.mxu0 0.0
    %3697 = vmatprep.mubr.f32.mxu0 0.0
    %3698 = vmatmul.mubr.f32.gmra.mxu0 %v3631
    %v3699 = vpop.f32.mrf.mxu0
    %v3700 = vadd.f32 %v733, %v3699
    %v3701 = vpop.f32.mrf.mxu0
    %3702 = vdwg.mxu0
    %v3703 = vsel %vm808, %v3700, -inf
    %3704 = vmax.xlane.f32.xlu0 %v3703
    %v3705 = vpop.xlane.xlu0 %3704
    %vm3706 = vcmp.eq.f32.partialorder %v3700, %v3705
    %v3707 = vsel %vm3706, %v53, 16
    %v3708 = vsel %vm808, %v3707, 2147483647
    %v3709 = vand.u32 %v3708, 65535
    %v3710 = vshra.s32 %v3708, 16
    %v3711 = vcvt.s32.f32 %v3709
    %v3712 = vcvt.s32.f32 %v3710
    %3713 = vmin.xlane.f32.xlu0 %v3712
    %v3714 = vpop.xlane.xlu0 %3713
    %vm3715 = vcmp.eq.f32.partialorder %v3712, %v3714
    %v3716 = vsel %vm3715, %v3711, inf
    %3717 = vmin.xlane.f32.xlu0 %v3716
    %v3718 = vpop.xlane.xlu0 %3717
    %v3719 = vcvt.f32.s32 %v3718
    %v3720 = vcvt.f32.s32 %v3714
    %v3721 = vshll.u32 %v3720, 16
    %v3722 = vadd.s32 %v3721, %v3719
    %vm3723 = vcmp.eq.s32.totalorder %v53, %v3722
    %v3724 = vsel %vm3723, 1, 0
    %v3725 = vcvt.s32.f32 %v3724
    %v3726 = vsel %vm182, %v3627, 0.0
    %v3727 = vrot.slane %v3726, 4
    %v3728 = vadd.f32 %v3726, %v3727
    %v3729 = vrot.slane %v3728, 2
    %v3730 = vadd.f32 %v3728, %v3729
    %v3731 = vrot.slane %v3730, 1
    %v3732 = vadd.f32 %v3730, %v3731
    %v3733 = vmul.f32 %v3732, 0.125
    %v3734 = vsub.f32 %v3627, %v3733
    %v3735 = vmul.f32 %v3734, %v3734
    %v3736 = vmul.f32 %v3735, %v3734
    %v3737 = vsel %vm182, %v3734, 0.0
    %v3738 = vrot.slane %v3737, 4
    %v3739 = vadd.f32 %v3737, %v3738
    %v3740 = vrot.slane %v3739, 2
    %v3741 = vadd.f32 %v3739, %v3740
    %v3742 = vrot.slane %v3741, 1
    %v3743 = vadd.f32 %v3741, %v3742
    %v3744 = vmul.f32 %v3743, 0.125
    %v3745 = vsel %vm182, %v3735, 0.0
    %v3746 = vrot.slane %v3745, 4
    %v3747 = vadd.f32 %v3745, %v3746
    %v3748 = vrot.slane %v3747, 2
    %v3749 = vadd.f32 %v3747, %v3748
    %v3750 = vrot.slane %v3749, 1
    %v3751 = vadd.f32 %v3749, %v3750
    %v3752 = vmul.f32 %v3751, 0.125
    %v3753 = vsel %vm182, %v3736, 0.0
    %v3754 = vrot.slane %v3753, 4
    %v3755 = vadd.f32 %v3753, %v3754
    %v3756 = vrot.slane %v3755, 2
    %v3757 = vadd.f32 %v3755, %v3756
    %v3758 = vrot.slane %v3757, 1
    %v3759 = vadd.f32 %v3757, %v3758
    %v3760 = vmul.f32 %v3759, 0.125
    %v3761 = vld [vmem:[%s5] sm:$0x1]
    %v3762 = vsub.f32 %v3733, %v3761
    %v3763 = vmul.f32 %v3762, %v3762
    %v3764 = vsel %vm312, %v3763, 0.0
    %3765 = vadd.xlane.f32.xlu0 %v3764
    %v3766 = vpop.xlane.xlu0 %3765
    %v3767 = vrot.slane %v3766, 4
    %v3768 = vadd.f32 %v3766, %v3767
    %v3769 = vrot.slane %v3768, 2
    %v3770 = vadd.f32 %v3768, %v3769
    %v3771 = vrot.slane %v3770, 1
    %v3772 = vadd.f32 %v3770, %v3771
    %s3773 = vtos %v3772
    %s3774 = sadd.f32 %s3773, 1e-12
    %v3775 = vstv %s3774
    %v3776 = vrsqrt.pop %v3775
    %s3777 = vtos %v3776
    %v3778 = vstv %s3777
    %v3779 = vmul.f32 %v3762, %v3778
    %v3780 = vmul.f32 %v3779, 0.5
    %v3781 = vmul.f32 %v3780, 0.125
    %v3782 = vlaneseq
    %v3783 = vshrl.u32 %v3782, 7
    %v3784 = vsub.s32 0, %v3783
    %v3785 = vrot.slane %v3781, %v3784
    %v3786 = vadd.f32 %v3785, 0.0
    %v3787 = vld [vmem:[%s5 + $0x1] sm:$0x1]
    %v3788 = vsub.f32 %v3752, %v3787
    %v3789 = vmul.f32 %v3788, %v3788
    %v3790 = vsel %vm312, %v3789, 0.0
    %3791 = vadd.xlane.f32.xlu0 %v3790
    %v3792 = vpop.xlane.xlu0 %3791
    %v3793 = vrot.slane %v3792, 4
    %v3794 = vadd.f32 %v3792, %v3793
    %v3795 = vrot.slane %v3794, 2
    %v3796 = vadd.f32 %v3794, %v3795
    %v3797 = vrot.slane %v3796, 1
    %v3798 = vadd.f32 %v3796, %v3797
    %s3799 = vtos %v3798
    %s3800 = sadd.f32 %s3799, 1e-12
    %v3801 = vstv %s3800
    %v3802 = vrsqrt.pop %v3801
    %s3803 = vtos %v3802
    %v3804 = vstv %s3803
    %v3805 = vmul.f32 %v3788, %v3804
    %v3806 = vmul.f32 %v3805, 0.25
    %v3807 = vmul.f32 %v3806, 0.25
    %v3808 = vsub.f32 %v3734, %v3744
    %v3809 = vlaneseq
    %v3810 = vshrl.u32 %v3809, 7
    %v3811 = vsub.s32 0, %v3810
    %v3812 = vrot.slane %v3807, %v3811
    %v3813 = vmul.f32 %v3812, %v3808
    %v3814 = vadd.f32 %v3786, %v3813
    %v3815 = vld [vmem:[%s5 + $0x2] sm:$0x1]
    %v3816 = vsub.f32 %v3760, %v3815
    %v3817 = vmul.f32 %v3816, %v3816
    %v3818 = vsel %vm312, %v3817, 0.0
    %3819 = vadd.xlane.f32.xlu0 %v3818
    %v3820 = vpop.xlane.xlu0 %3819
    %v3821 = vrot.slane %v3820, 4
    %v3822 = vadd.f32 %v3820, %v3821
    %v3823 = vrot.slane %v3822, 2
    %v3824 = vadd.f32 %v3822, %v3823
    %v3825 = vrot.slane %v3824, 1
    %v3826 = vadd.f32 %v3824, %v3825
    %s3827 = vtos %v3826
    %s3828 = sadd.f32 %s3827, 1e-12
    %v3829 = vstv %s3828
    %v3830 = vrsqrt.pop %v3829
    %s3831 = vtos %v3830
    %v3832 = vstv %s3831
    %v3833 = vmul.f32 %v3816, %v3832
    %v3834 = vmul.f32 %v3833, 0.125
    %v3835 = vmul.f32 %v3834, 0.375
    %v3836 = vsub.f32 %v3735, %v3752
    %v3837 = vlaneseq
    %v3838 = vshrl.u32 %v3837, 7
    %v3839 = vsub.s32 0, %v3838
    %v3840 = vrot.slane %v3835, %v3839
    %v3841 = vmul.f32 %v3840, %v3836
    %v3842 = vadd.f32 %v3814, %v3841
    %v3843 = vsel %vm182, %v3627, 1.0
    %3844 = vxpose.xlu0.b32.start [1/16] %v3725, 128
    %3845 = vxpose.xlu0.b32.cont [2/16] 0.0, 128
    %3846 = vxpose.xlu0.b32.cont [3/16] 0.0, 128
    %3847 = vxpose.xlu0.b32.cont [4/16] 0.0, 128
    %3848 = vxpose.xlu0.b32.cont [5/16] 0.0, 128
    %3849 = vxpose.xlu0.b32.cont [6/16] 0.0, 128
    %3850 = vxpose.xlu0.b32.cont [7/16] 0.0, 128
    %3851 = vxpose.xlu0.b32.cont [8/16] 0.0, 128
    %3852 = vxpose.xlu0.b32.cont [9/16] 0.0, 128
    %3853 = vxpose.xlu0.b32.cont [10/16] 0.0, 128
    %3854 = vxpose.xlu0.b32.cont [11/16] 0.0, 128
    %3855 = vxpose.xlu0.b32.cont [12/16] 0.0, 128
    %3856 = vxpose.xlu0.b32.cont [13/16] 0.0, 128
    %3857 = vxpose.xlu0.b32.cont [14/16] 0.0, 128
    %3858 = vxpose.xlu0.b32.cont [15/16] 0.0, 128
    %3859 = vxpose.xlu0.b32.end [16/16] 0.0, 128
    %v3860 = vpop.trf.xlu0
    %v3861 = vpop.trf.xlu0
    %v3862 = vpop.trf.xlu0
    %v3863 = vpop.trf.xlu0
    %v3864 = vpop.trf.xlu0
    %v3865 = vpop.trf.xlu0
    %v3866 = vpop.trf.xlu0
    %v3867 = vpop.trf.xlu0
    %v3868 = vpop.trf.xlu0
    %v3869 = vpop.trf.xlu0
    %v3870 = vpop.trf.xlu0
    %v3871 = vpop.trf.xlu0
    %v3872 = vpop.trf.xlu0
    %v3873 = vpop.trf.xlu0
    %v3874 = vpop.trf.xlu0
    %v3875 = vpop.trf.xlu0
    %v3877 = vsel %vm982, %v3860, 0
    %v3880 = vsel %vm982, %v3861, 0
    %3882 = vmatprep.subr.mxu0 0.0
    %3883 = vmatpush1.msra.mxu0 0.0
    %3884 = vmatprep.subr.mxu0 0.0
    %3885 = vmatpush1.msra.mxu0 0.0
    %3886 = vmatprep.subr.mxu0 0.0
    %3887 = vmatpush1.msra.mxu0 0.0
    %3888 = vmatprep.subr.mxu0 0.0
    %3889 = vmatpush1.msra.mxu0 0.0
    %3890 = vmatprep.subr.mxu0 0.0
    %3891 = vmatpush1.msra.mxu0 0.0
    %3892 = vmatprep.subr.mxu0 0.0
    %3893 = vmatpush1.msra.mxu0 0.0
    %3894 = vmatprep.subr.mxu0 0.0
    %3895 = vmatpush1.msra.mxu0 0.0
    %3896 = vmatprep.subr.mxu0 0.0
    %3897 = vmatpush1.msra.mxu0 0.0
    %3898 = vmatprep.subr.mxu0 0.0
    %3899 = vmatpush1.msra.mxu0 0.0
    %3900 = vmatprep.subr.mxu0 0.0
    %3901 = vmatpush1.msra.mxu0 0.0
    %3902 = vmatprep.subr.mxu0 0.0
    %3903 = vmatpush1.msra.mxu0 0.0
    %3904 = vmatprep.subr.mxu0 0.0
    %3905 = vmatpush1.msra.mxu0 0.0
    %3906 = vmatprep.subr.mxu0 0.0
    %3907 = vmatpush1.msra.mxu0 0.0
    %3908 = vmatprep.subr.mxu0 0.0
    %3909 = vmatpush1.msra.mxu0 0.0
    %3910 = vmatprep.subr.mxu0 0.0
    %3911 = vmatpush1.msra.mxu0 0.0
    %3912 = vmatprep.subr.mxu0 0.0
    %3913 = vmatpush1.msra.mxu0 %v3843
    %3914 = vmatprep.subr.mxu0 0.0
    %3915 = vmatpush2.msra.mxu0 0.0
    %3916 = vmatprep.subr.mxu0 0.0
    %3917 = vmatpush2.msra.mxu0 0.0
    %3918 = vmatprep.subr.mxu0 0.0
    %3919 = vmatpush2.msra.mxu0 0.0
    %3920 = vmatprep.subr.mxu0 0.0
    %3921 = vmatpush2.msra.mxu0 0.0
    %3922 = vmatprep.subr.mxu0 0.0
    %3923 = vmatpush2.msra.mxu0 0.0
    %3924 = vmatprep.subr.mxu0 0.0
    %3925 = vmatpush2.msra.mxu0 0.0
    %3926 = vmatprep.subr.mxu0 0.0
    %3927 = vmatpush2.msra.mxu0 0.0
    %3928 = vmatprep.subr.mxu0 0.0
    %3929 = vmatpush2.msra.mxu0 0.0
    %3930 = vmatprep.subr.mxu0 0.0
    %3931 = vmatpush2.msra.mxu0 0.0
    %3932 = vmatprep.subr.mxu0 0.0
    %3933 = vmatpush2.msra.mxu0 0.0
    %3934 = vmatprep.subr.mxu0 0.0
    %3935 = vmatpush2.msra.mxu0 0.0
    %3936 = vmatprep.subr.mxu0 0.0
    %3937 = vmatpush2.msra.mxu0 0.0
    %3938 = vmatprep.subr.mxu0 0.0
    %3939 = vmatpush2.msra.mxu0 0.0
    %3940 = vmatprep.subr.mxu0 0.0
    %3941 = vmatpush2.msra.mxu0 0.0
    %3942 = vmatprep.subr.mxu0 0.0
    %3943 = vmatpush2.msra.mxu0 0.0
    %3944 = vmatprep.subr.mxu0 0.0
    %3945 = vmatpush2.msra.mxu0 0.0
    %3946 = vmatprep.mubr.f32.mxu0 0.0
    %3947 = vmatmul.mubr.f32.gmra.mxu0 %v3877
    %v3948 = vpop.f32.mrf.mxu0
    %v3949 = vadd.f32 0.0, %v3948
    %v3950 = vpop.f32.mrf.mxu0
    %3951 = vmatprep.mubr.f32.mxu0 0.0
    %3952 = vmatmul.mubr.f32.gmra.mxu0 %v3880
    %v3953 = vpop.f32.mrf.mxu0
    %v3954 = vadd.f32 0.0, %v3953
    %v3955 = vpop.f32.mrf.mxu0
    %3956 = vdwg.mxu0
    %v3957 = vmax.f32 %v3949, 1.0
    %v3958 = vmax.f32 %v3954, 1.0
    %v3959 = vrcp.pop %v3957
    %v3960 = vmul.f32 1.0, %v3959
    %v3961 = vrcp.pop %v3958
    %v3962 = vmul.f32 1.0, %v3961
    %v3963 = vmin.f32 %v3949, 1.0
    %v3964 = vmin.f32 %v3954, 1.0
    %3967 = vrot.lane.b32.xlu0 %v3963, 96
    %v3968 = vpop.permute.xlu0 %3967
    %3969 = vrot.lane.b32.xlu0 %v3964, 96
    %v3970 = vpop.permute.xlu0 %3969
    %v3973 = vsel %vm1080, %v3968, 0.0
    %v3974 = vsel %vm1080, %v3970, 0.0
    %v3975 = vadd.f32 %v3973, %v3974
    %3976 = vadd.xlane.f32.xlu0 %v3975
    %v3977 = vpop.xlane.xlu0 %3976
    %v3978 = vrot.slane %v3977, 4
    %v3979 = vadd.f32 %v3977, %v3978
    %v3980 = vrot.slane %v3979, 2
    %v3981 = vadd.f32 %v3979, %v3980
    %v3982 = vrot.slane %v3981, 1
    %v3983 = vadd.f32 %v3981, %v3982
    %s3984 = vtos %v3983
    %v3985 = vstv %s3984
    %v3986 = vrcp.pop %v3985
    %s3987 = vtos %v3986
    %3989 = vset.pattern.permute.xlu0 32
    %3990 = vperm.xlu0 %3989, %v3960
    %v3991 = vpop.permute.xlu0 %3990
    %3994 = vset.pattern.permute.xlu0 32
    %3995 = vperm.xlu0 %3994, %v3962
    %v3996 = vpop.permute.xlu0 %3995
    %v3998 = vmul.f32 %v3949, %v3991
    %v3999 = vmul.f32 %v3954, %v3996
    %v4001 = vsel %vm808, %v3725, 0
    %4003 = vmatprep.subr.mxu0 0.0
    %4004 = vmatpush1.msra.mxu0 0.0
    %4005 = vmatprep.subr.mxu0 0.0
    %4006 = vmatpush1.msra.mxu0 0.0
    %4007 = vmatprep.subr.mxu0 0.0
    %4008 = vmatpush1.msra.mxu0 0.0
    %4009 = vmatprep.subr.mxu0 0.0
    %4010 = vmatpush1.msra.mxu0 0.0
    %4011 = vmatprep.subr.mxu0 0.0
    %4012 = vmatpush1.msra.mxu0 0.0
    %4013 = vmatprep.subr.mxu0 0.0
    %4014 = vmatpush1.msra.mxu0 0.0
    %4015 = vmatprep.subr.mxu0 0.0
    %4016 = vmatpush1.msra.mxu0 0.0
    %4017 = vmatprep.subr.mxu0 0.0
    %4018 = vmatpush1.msra.mxu0 0.0
    %4019 = vmatprep.subr.mxu0 0.0
    %4020 = vmatpush1.msra.mxu0 0.0
    %4021 = vmatprep.subr.mxu0 0.0
    %4022 = vmatpush1.msra.mxu0 0.0
    %4023 = vmatprep.subr.mxu0 0.0
    %4024 = vmatpush1.msra.mxu0 0.0
    %4025 = vmatprep.subr.mxu0 0.0
    %4026 = vmatpush1.msra.mxu0 0.0
    %4027 = vmatprep.subr.mxu0 0.0
    %4028 = vmatpush1.msra.mxu0 0.0
    %4029 = vmatprep.subr.mxu0 0.0
    %4030 = vmatpush1.msra.mxu0 0.0
    %4031 = vmatprep.subr.mxu0 0.0
    %4032 = vmatpush1.msra.mxu0 %v3999
    %4033 = vmatprep.subr.mxu0 0.0
    %4034 = vmatpush1.msra.mxu0 %v3998
    %4035 = vmatprep.subr.mxu0 0.0
    %4036 = vmatpush2.msra.mxu0 0.0
    %4037 = vmatprep.subr.mxu0 0.0
    %4038 = vmatpush2.msra.mxu0 0.0
    %4039 = vmatprep.subr.mxu0 0.0
    %4040 = vmatpush2.msra.mxu0 0.0
    %4041 = vmatprep.subr.mxu0 0.0
    %4042 = vmatpush2.msra.mxu0 0.0
    %4043 = vmatprep.subr.mxu0 0.0
    %4044 = vmatpush2.msra.mxu0 0.0
    %4045 = vmatprep.subr.mxu0 0.0
    %4046 = vmatpush2.msra.mxu0 0.0
    %4047 = vmatprep.subr.mxu0 0.0
    %4048 = vmatpush2.msra.mxu0 0.0
    %4049 = vmatprep.subr.mxu0 0.0
    %4050 = vmatpush2.msra.mxu0 0.0
    %4051 = vmatprep.subr.mxu0 0.0
    %4052 = vmatpush2.msra.mxu0 0.0
    %4053 = vmatprep.subr.mxu0 0.0
    %4054 = vmatpush2.msra.mxu0 0.0
    %4055 = vmatprep.subr.mxu0 0.0
    %4056 = vmatpush2.msra.mxu0 0.0
    %4057 = vmatprep.subr.mxu0 0.0
    %4058 = vmatpush2.msra.mxu0 0.0
    %4059 = vmatprep.subr.mxu0 0.0
    %4060 = vmatpush2.msra.mxu0 0.0
    %4061 = vmatprep.subr.mxu0 0.0
    %4062 = vmatpush2.msra.mxu0 0.0
    %4063 = vmatprep.subr.mxu0 0.0
    %4064 = vmatpush2.msra.mxu0 0.0
    %4065 = vmatprep.subr.mxu0 0.0
    %4066 = vmatpush2.msra.mxu0 0.0
    %4067 = vmatprep.mubr.f32.mxu0 0.0
    %4068 = vmatmul.mubr.f32.gmra.mxu0 %v4001
    %v4069 = vpop.f32.mrf.mxu0
    %v4070 = vadd.f32 0.0, %v4069
    %v4071 = vpop.f32.mrf.mxu0
    %4072 = vdwg.mxu0
    %v4073 = vsub.f32 %v3627, %v4070
    %v4074 = vmul.f32 %v4073, %v4073
    %v4075 = vmul.f32 %v4074, %v4073
    %4077 = vrot.lane.b32.xlu0 %v4074, 32
    %v4078 = vpop.permute.xlu0 %4077
    %4081 = vrot.lane.b32.xlu0 %v4075, 64
    %v4082 = vpop.permute.xlu0 %4081
    %v4084 = vsel %vm182, %v4073, %v4078
    %v4085 = vsel %vm1193, %v4084, %v4082
    %4086 = vmatprep.subr.mxu0 0.0
    %4087 = vmatpush1.msra.mxu0 0.0
    %4088 = vmatprep.subr.mxu0 0.0
    %4089 = vmatpush1.msra.mxu0 0.0
    %4090 = vmatprep.subr.mxu0 0.0
    %4091 = vmatpush1.msra.mxu0 0.0
    %4092 = vmatprep.subr.mxu0 0.0
    %4093 = vmatpush1.msra.mxu0 0.0
    %4094 = vmatprep.subr.mxu0 0.0
    %4095 = vmatpush1.msra.mxu0 0.0
    %4096 = vmatprep.subr.mxu0 0.0
    %4097 = vmatpush1.msra.mxu0 0.0
    %4098 = vmatprep.subr.mxu0 0.0
    %4099 = vmatpush1.msra.mxu0 0.0
    %4100 = vmatprep.subr.mxu0 0.0
    %4101 = vmatpush1.msra.mxu0 0.0
    %4102 = vmatprep.subr.mxu0 0.0
    %4103 = vmatpush1.msra.mxu0 0.0
    %4104 = vmatprep.subr.mxu0 0.0
    %4105 = vmatpush1.msra.mxu0 0.0
    %4106 = vmatprep.subr.mxu0 0.0
    %4107 = vmatpush1.msra.mxu0 0.0
    %4108 = vmatprep.subr.mxu0 0.0
    %4109 = vmatpush1.msra.mxu0 0.0
    %4110 = vmatprep.subr.mxu0 0.0
    %4111 = vmatpush1.msra.mxu0 0.0
    %4112 = vmatprep.subr.mxu0 0.0
    %4113 = vmatpush1.msra.mxu0 0.0
    %4114 = vmatprep.subr.mxu0 0.0
    %4115 = vmatpush1.msra.mxu0 0.0
    %4116 = vmatprep.subr.mxu0 0.0
    %4117 = vmatpush1.msra.mxu0 %v4085
    %4118 = vmatprep.subr.mxu0 0.0
    %4119 = vmatpush2.msra.mxu0 0.0
    %4120 = vmatprep.subr.mxu0 0.0
    %4121 = vmatpush2.msra.mxu0 0.0
    %4122 = vmatprep.subr.mxu0 0.0
    %4123 = vmatpush2.msra.mxu0 0.0
    %4124 = vmatprep.subr.mxu0 0.0
    %4125 = vmatpush2.msra.mxu0 0.0
    %4126 = vmatprep.subr.mxu0 0.0
    %4127 = vmatpush2.msra.mxu0 0.0
    %4128 = vmatprep.subr.mxu0 0.0
    %4129 = vmatpush2.msra.mxu0 0.0
    %4130 = vmatprep.subr.mxu0 0.0
    %4131 = vmatpush2.msra.mxu0 0.0
    %4132 = vmatprep.subr.mxu0 0.0
    %4133 = vmatpush2.msra.mxu0 0.0
    %4134 = vmatprep.subr.mxu0 0.0
    %4135 = vmatpush2.msra.mxu0 0.0
    %4136 = vmatprep.subr.mxu0 0.0
    %4137 = vmatpush2.msra.mxu0 0.0
    %4138 = vmatprep.subr.mxu0 0.0
    %4139 = vmatpush2.msra.mxu0 0.0
    %4140 = vmatprep.subr.mxu0 0.0
    %4141 = vmatpush2.msra.mxu0 0.0
    %4142 = vmatprep.subr.mxu0 0.0
    %4143 = vmatpush2.msra.mxu0 0.0
    %4144 = vmatprep.subr.mxu0 0.0
    %4145 = vmatpush2.msra.mxu0 0.0
    %4146 = vmatprep.subr.mxu0 0.0
    %4147 = vmatpush2.msra.mxu0 0.0
    %4148 = vmatprep.subr.mxu0 0.0
    %4149 = vmatpush2.msra.mxu0 0.0
    %4150 = vmatprep.mubr.f32.mxu0 0.0
    %4151 = vmatmul.mubr.f32.gmra.mxu0 %v3877
    %v4152 = vpop.f32.mrf.mxu0
    %v4153 = vadd.f32 0.0, %v4152
    %v4154 = vpop.f32.mrf.mxu0
    %4155 = vmatprep.mubr.f32.mxu0 0.0
    %4156 = vmatmul.mubr.f32.gmra.mxu0 %v3880
    %v4157 = vpop.f32.mrf.mxu0
    %v4158 = vadd.f32 0.0, %v4157
    %v4159 = vpop.f32.mrf.mxu0
    %4160 = vdwg.mxu0
    %v4161 = vmul.f32 %v4153, %v3991
    %v4162 = vmul.f32 %v4158, %v3996
    %v4163 = vld [vmem:[%s6] sm:$0xff]
    %v4164 = vld [vmem:[%s6 + $0x8] sm:$0xff]
    %v4165 = vsub.f32 %v3998, %v4163
    %v4166 = vsub.f32 %v3999, %v4164
    %v4167 = vmul.f32 %v4165, %v4165
    %v4168 = vmul.f32 %v4166, %v4166
    %v4169 = vsel %vm182, %v4167, 0.0
    %4170 = vadd.xlane.f32.xlu0 %v4169
    %v4171 = vpop.xlane.xlu0 %4170
    %v4172 = vsel %vm182, %v4168, 0.0
    %4173 = vadd.xlane.f32.xlu0 %v4172
    %v4174 = vpop.xlane.xlu0 %4173
    %v4175 = vadd.f32 %v4171, 1e-12
    %v4176 = vadd.f32 %v4174, 1e-12
    %v4177 = vrsqrt.pop %v4175
    %v4178 = vrsqrt.pop %v4176
    %v4179 = vmul.f32 %v4177, %v3963
    %v4180 = vmul.f32 %v4178, %v3964
    %4182 = vset.pattern.permute.xlu0 32
    %4183 = vperm.xlu0 %4182, %v4179
    %v4184 = vpop.permute.xlu0 %4183
    %4187 = vset.pattern.permute.xlu0 32
    %4188 = vperm.xlu0 %4187, %v4180
    %v4189 = vpop.permute.xlu0 %4188
    %v4191 = vmul.f32 %v4165, %v4184
    %v4192 = vmul.f32 %v4166, %v4189
    %s4193 = smul.f32 %s3987, 0.5
    %v4194 = vstv %s4193
    %v4195 = vmul.f32 %v4191, %v4194
    %v4196 = vmul.f32 %v4192, %v4194
    %v4197 = vmul.f32 %v4195, %v3991
    %v4198 = vmul.f32 %v4196, %v3996
    %v4199 = vld [vmem:[%s1308] sm:$0xff]
    %v4200 = vld [vmem:[%s1308 + $0x8] sm:$0xff]
    %4203 = vrot.lane.b32.xlu0 %v4199, 32
    %v4204 = vpop.permute.xlu0 %4203
    %4205 = vrot.lane.b32.xlu0 %v4200, 32
    %v4206 = vpop.permute.xlu0 %4205
    %v4209 = vsub.f32 %v4161, %v4204
    %v4210 = vsub.f32 %v4162, %v4206
    %v4211 = vmul.f32 %v4209, %v4209
    %v4212 = vmul.f32 %v4210, %v4210
    %4215 = vrot.lane.b32.xlu0 %v4211, 96
    %v4216 = vpop.permute.xlu0 %4215
    %4217 = vrot.lane.b32.xlu0 %v4212, 96
    %v4218 = vpop.permute.xlu0 %4217
    %v4221 = vsel %vm182, %v4216, 0.0
    %4222 = vadd.xlane.f32.xlu0 %v4221
    %v4223 = vpop.xlane.xlu0 %4222
    %v4224 = vsel %vm182, %v4218, 0.0
    %4225 = vadd.xlane.f32.xlu0 %v4224
    %v4226 = vpop.xlane.xlu0 %4225
    %v4227 = vadd.f32 %v4223, 1e-12
    %v4228 = vadd.f32 %v4226, 1e-12
    %v4229 = vrsqrt.pop %v4227
    %v4230 = vrsqrt.pop %v4228
    %v4231 = vmul.f32 %v4229, %v3963
    %v4232 = vmul.f32 %v4230, %v3964
    %4234 = vset.pattern.permute.xlu0 32
    %4235 = vperm.xlu0 %4234, %v4231
    %v4236 = vpop.permute.xlu0 %4235
    %4239 = vset.pattern.permute.xlu0 32
    %4240 = vperm.xlu0 %4239, %v4232
    %v4241 = vpop.permute.xlu0 %4240
    %v4243 = vmul.f32 %v4209, %v4236
    %v4244 = vmul.f32 %v4210, %v4241
    %s4245 = smul.f32 %s3987, 0.25
    %v4246 = vstv %s4245
    %v4247 = vmul.f32 %v4243, %v4246
    %v4248 = vmul.f32 %v4244, %v4246
    %v4249 = vmul.f32 %v4247, %v3991
    %v4250 = vmul.f32 %v4248, %v3996
    %v4251 = vld [vmem:[%s1361] sm:$0xff]
    %v4252 = vld [vmem:[%s1361 + $0x8] sm:$0xff]
    %4255 = vrot.lane.b32.xlu0 %v4251, 64
    %v4256 = vpop.permute.xlu0 %4255
    %4257 = vrot.lane.b32.xlu0 %v4252, 64
    %v4258 = vpop.permute.xlu0 %4257
    %v4261 = vsub.f32 %v4161, %v4256
    %v4262 = vsub.f32 %v4162, %v4258
    %v4263 = vmul.f32 %v4261, %v4261
    %v4264 = vmul.f32 %v4262, %v4262
    %4267 = vrot.lane.b32.xlu0 %v4263, 64
    %v4268 = vpop.permute.xlu0 %4267
    %4269 = vrot.lane.b32.xlu0 %v4264, 64
    %v4270 = vpop.permute.xlu0 %4269
    %v4273 = vsel %vm182, %v4268, 0.0
    %4274 = vadd.xlane.f32.xlu0 %v4273
    %v4275 = vpop.xlane.xlu0 %4274
    %v4276 = vsel %vm182, %v4270, 0.0
    %4277 = vadd.xlane.f32.xlu0 %v4276
    %v4278 = vpop.xlane.xlu0 %4277
    %v4279 = vadd.f32 %v4275, 1e-12
    %v4280 = vadd.f32 %v4278, 1e-12
    %v4281 = vrsqrt.pop %v4279
    %v4282 = vrsqrt.pop %v4280
    %v4283 = vmul.f32 %v4281, %v3963
    %v4284 = vmul.f32 %v4282, %v3964
    %4286 = vset.pattern.permute.xlu0 32
    %4287 = vperm.xlu0 %4286, %v4283
    %v4288 = vpop.permute.xlu0 %4287
    %4291 = vset.pattern.permute.xlu0 32
    %4292 = vperm.xlu0 %4291, %v4284
    %v4293 = vpop.permute.xlu0 %4292
    %v4295 = vmul.f32 %v4261, %v4288
    %v4296 = vmul.f32 %v4262, %v4293
    %s4297 = smul.f32 %s3987, 0.125
    %v4298 = vstv %s4297
    %v4299 = vmul.f32 %v4295, %v4298
    %v4300 = vmul.f32 %v4296, %v4298
    %v4301 = vmul.f32 %v4299, %v3991
    %v4302 = vmul.f32 %v4300, %v3996
    %4305 = vrot.lane.b32.xlu0 %v4161, 96
    %v4306 = vpop.permute.xlu0 %4305
    %4307 = vrot.lane.b32.xlu0 %v4162, 96
    %v4308 = vpop.permute.xlu0 %4307
    %v4311 = vsel %vm182, %v4197, %v4249
    %v4312 = vsel %vm182, %v4198, %v4250
    %v4313 = vsel %vm1193, %v4311, %v4301
    %v4314 = vsel %vm1193, %v4312, %v4302
    %v4315 = vsel %vm1426, %v4313, %v4306
    %v4316 = vsel %vm1426, %v4314, %v4308
    %4317 = vmatprep.subr.mxu0 0.0
    %4318 = vmatpush1.msra.mxu0 0.0
    %4319 = vmatprep.subr.mxu0 0.0
    %4320 = vmatpush1.msra.mxu0 0.0
    %4321 = vmatprep.subr.mxu0 0.0
    %4322 = vmatpush1.msra.mxu0 0.0
    %4323 = vmatprep.subr.mxu0 0.0
    %4324 = vmatpush1.msra.mxu0 0.0
    %4325 = vmatprep.subr.mxu0 0.0
    %4326 = vmatpush1.msra.mxu0 0.0
    %4327 = vmatprep.subr.mxu0 0.0
    %4328 = vmatpush1.msra.mxu0 0.0
    %4329 = vmatprep.subr.mxu0 0.0
    %4330 = vmatpush1.msra.mxu0 0.0
    %4331 = vmatprep.subr.mxu0 0.0
    %4332 = vmatpush1.msra.mxu0 0.0
    %4333 = vmatprep.subr.mxu0 0.0
    %4334 = vmatpush1.msra.mxu0 0.0
    %4335 = vmatprep.subr.mxu0 0.0
    %4336 = vmatpush1.msra.mxu0 0.0
    %4337 = vmatprep.subr.mxu0 0.0
    %4338 = vmatpush1.msra.mxu0 0.0
    %4339 = vmatprep.subr.mxu0 0.0
    %4340 = vmatpush1.msra.mxu0 0.0
    %4341 = vmatprep.subr.mxu0 0.0
    %4342 = vmatpush1.msra.mxu0 0.0
    %4343 = vmatprep.subr.mxu0 0.0
    %4344 = vmatpush1.msra.mxu0 0.0
    %4345 = vmatprep.subr.mxu0 %v4308
    %4346 = vmatpush1.msra.mxu0 %v4316
    %4347 = vmatprep.subr.mxu0 %v4306
    %4348 = vmatpush1.msra.mxu0 %v4315
    %4349 = vmatprep.subr.mxu0 0.0
    %4350 = vmatpush2.msra.mxu0 0.0
    %4351 = vmatprep.subr.mxu0 0.0
    %4352 = vmatpush2.msra.mxu0 0.0
    %4353 = vmatprep.subr.mxu0 0.0
    %4354 = vmatpush2.msra.mxu0 0.0
    %4355 = vmatprep.subr.mxu0 0.0
    %4356 = vmatpush2.msra.mxu0 0.0
    %4357 = vmatprep.subr.mxu0 0.0
    %4358 = vmatpush2.msra.mxu0 0.0
    %4359 = vmatprep.subr.mxu0 0.0
    %4360 = vmatpush2.msra.mxu0 0.0
    %4361 = vmatprep.subr.mxu0 0.0
    %4362 = vmatpush2.msra.mxu0 0.0
    %4363 = vmatprep.subr.mxu0 0.0
    %4364 = vmatpush2.msra.mxu0 0.0
    %4365 = vmatprep.subr.mxu0 0.0
    %4366 = vmatpush2.msra.mxu0 0.0
    %4367 = vmatprep.subr.mxu0 0.0
    %4368 = vmatpush2.msra.mxu0 0.0
    %4369 = vmatprep.subr.mxu0 0.0
    %4370 = vmatpush2.msra.mxu0 0.0
    %4371 = vmatprep.subr.mxu0 0.0
    %4372 = vmatpush2.msra.mxu0 0.0
    %4373 = vmatprep.subr.mxu0 0.0
    %4374 = vmatpush2.msra.mxu0 0.0
    %4375 = vmatprep.subr.mxu0 0.0
    %4376 = vmatpush2.msra.mxu0 0.0
    %4377 = vmatprep.subr.mxu0 0.0
    %4378 = vmatpush2.msra.mxu0 0.0
    %4379 = vmatprep.subr.mxu0 0.0
    %4380 = vmatpush2.msra.mxu0 0.0
    %4381 = vmatprep.mubr.f32.mxu0 0.0
    %4382 = vmatmul.mubr.f32.gmra.mxu0 %v4001
    %v4383 = vpop.f32.mrf.mxu0
    %v4384 = vadd.f32 0.0, %v4383
    %v4385 = vpop.f32.mrf.mxu0
    %v4386 = vadd.f32 0.0, %v4385
    %4387 = vdwg.mxu0
    %v4388 = vadd.f32 %v3842, %v4384
    %v4389 = vmul.f32 %v4384, 2.0
    %4391 = vrot.lane.b32.xlu0 %v4384, 32
    %v4392 = vpop.permute.xlu0 %4391
    %v4394 = vsub.f32 %v4073, %v4392
    %4396 = vrot.lane.b32.xlu0 %v4394, 32
    %v4397 = vpop.permute.xlu0 %4396
    %v4399 = vmul.f32 %v4389, %v4397
    %4401 = vrot.lane.b32.xlu0 %v4399, 96
    %v4402 = vpop.permute.xlu0 %4401
    %v4404 = vadd.f32 %v4388, %v4402
    %v4405 = vmul.f32 %v4384, 3.0
    %v4406 = vsub.f32 %v4074, %v4386
    %4408 = vrot.lane.b32.xlu0 %v4406, 64
    %v4409 = vpop.permute.xlu0 %4408
    %v4411 = vmul.f32 %v4405, %v4409
    %4413 = vrot.lane.b32.xlu0 %v4411, 64
    %v4414 = vpop.permute.xlu0 %4413
    %v4416 = vadd.f32 %v4404, %v4414
    %v4417 = vpack.c.bf16 %v4416, %v4416
    %v4419 = vsel %vm1850, %v4417, 0
    %4421 = vmatprep.subr.bf16.mxu0 0
    %4422 = vmatpush1.bf16.msra.mxu0 0
    %4423 = vmatprep.subr.bf16.mxu0 0
    %4424 = vmatpush1.bf16.msra.mxu0 0
    %4425 = vmatprep.subr.bf16.mxu0 0
    %4426 = vmatpush1.bf16.msra.mxu0 0
    %4427 = vmatprep.subr.bf16.mxu0 0
    %4428 = vmatpush1.bf16.msra.mxu0 0
    %4429 = vmatprep.subr.bf16.mxu0 0
    %4430 = vmatpush1.bf16.msra.mxu0 0
    %4431 = vmatprep.subr.bf16.mxu0 0
    %4432 = vmatpush1.bf16.msra.mxu0 0
    %4433 = vmatprep.subr.bf16.mxu0 0
    %4434 = vmatpush1.bf16.msra.mxu0 0
    %4435 = vmatprep.subr.bf16.mxu0 0
    %4436 = vmatpush1.bf16.msra.mxu0 %v4419
    %4437 = vmatprep.subr.bf16.mxu0 0
    %4438 = vmatpush2.bf16.msra.mxu0 0
    %4439 = vmatprep.subr.bf16.mxu0 0
    %4440 = vmatpush2.bf16.msra.mxu0 0
    %4441 = vmatprep.subr.bf16.mxu0 0
    %4442 = vmatpush2.bf16.msra.mxu0 0
    %4443 = vmatprep.subr.bf16.mxu0 0
    %4444 = vmatpush2.bf16.msra.mxu0 0
    %4445 = vmatprep.subr.bf16.mxu0 0
    %4446 = vmatpush2.bf16.msra.mxu0 0
    %4447 = vmatprep.subr.bf16.mxu0 0
    %4448 = vmatpush2.bf16.msra.mxu0 0
    %4449 = vmatprep.subr.bf16.mxu0 0
    %4450 = vmatpush2.bf16.msra.mxu0 0
    %4451 = vmatprep.subr.bf16.mxu0 0
    %4452 = vmatpush2.bf16.msra.mxu0 0
    %4453 = vmatprep.mubr.bf16.mxu0 0
    %4454 = vmatmul.mubr.bf16.gmra.mxu0 %v1659
    %v4455 = vpop.f32.mrf.mxu0
    %v4456 = vadd.f32 0.0, %v4455
    %v4457 = vpop.f32.mrf.mxu0
    %v4458 = vpop.f32.mrf.mxu0
    %v4459 = vadd.f32 0.0, %v4458
    %v4460 = vpop.f32.mrf.mxu0
    %4461 = vmatprep.mubr.bf16.mxu0 0
    %4462 = vmatmul.mubr.bf16.gmra.mxu0 %v1662
    %v4463 = vpop.f32.mrf.mxu0
    %v4464 = vadd.f32 0.0, %v4463
    %v4465 = vpop.f32.mrf.mxu0
    %v4466 = vpop.f32.mrf.mxu0
    %v4467 = vadd.f32 0.0, %v4466
    %v4468 = vpop.f32.mrf.mxu0
    %4469 = vmatprep.mubr.bf16.mxu0 0
    %4470 = vmatmul.mubr.bf16.gmra.mxu0 %v1665
    %v4471 = vpop.f32.mrf.mxu0
    %v4472 = vadd.f32 0.0, %v4471
    %v4473 = vpop.f32.mrf.mxu0
    %v4474 = vpop.f32.mrf.mxu0
    %v4475 = vadd.f32 0.0, %v4474
    %v4476 = vpop.f32.mrf.mxu0
    %4477 = vmatprep.mubr.bf16.mxu0 0
    %4478 = vmatmul.mubr.bf16.gmra.mxu0 %v1668
    %v4479 = vpop.f32.mrf.mxu0
    %v4480 = vadd.f32 0.0, %v4479
    %v4481 = vpop.f32.mrf.mxu0
    %v4482 = vpop.f32.mrf.mxu0
    %v4483 = vadd.f32 0.0, %v4482
    %v4484 = vpop.f32.mrf.mxu0
    %4485 = vmatprep.mubr.bf16.mxu0 0
    %4486 = vmatmul.mubr.bf16.gmra.mxu0 %v1671
    %v4487 = vpop.f32.mrf.mxu0
    %v4488 = vadd.f32 0.0, %v4487
    %v4489 = vpop.f32.mrf.mxu0
    %v4490 = vpop.f32.mrf.mxu0
    %v4491 = vadd.f32 0.0, %v4490
    %v4492 = vpop.f32.mrf.mxu0
    %4493 = vmatprep.mubr.bf16.mxu0 0
    %4494 = vmatmul.mubr.bf16.gmra.mxu0 %v1674
    %v4495 = vpop.f32.mrf.mxu0
    %v4496 = vadd.f32 0.0, %v4495
    %v4497 = vpop.f32.mrf.mxu0
    %v4498 = vpop.f32.mrf.mxu0
    %v4499 = vadd.f32 0.0, %v4498
    %v4500 = vpop.f32.mrf.mxu0
    %4501 = vmatprep.mubr.bf16.mxu0 0
    %4502 = vmatmul.mubr.bf16.gmra.mxu0 %v1677
    %v4503 = vpop.f32.mrf.mxu0
    %v4504 = vadd.f32 0.0, %v4503
    %v4505 = vpop.f32.mrf.mxu0
    %v4506 = vpop.f32.mrf.mxu0
    %v4507 = vadd.f32 0.0, %v4506
    %v4508 = vpop.f32.mrf.mxu0
    %4509 = vmatprep.mubr.bf16.mxu0 0
    %4510 = vmatmul.mubr.bf16.gmra.mxu0 %v1680
    %v4511 = vpop.f32.mrf.mxu0
    %v4512 = vadd.f32 0.0, %v4511
    %v4513 = vpop.f32.mrf.mxu0
    %v4514 = vpop.f32.mrf.mxu0
    %v4515 = vadd.f32 0.0, %v4514
    %v4516 = vpop.f32.mrf.mxu0
    %4517 = vmatprep.mubr.bf16.mxu0 0
    %4518 = vmatmul.mubr.bf16.gmra.mxu0 %v1683
    %v4519 = vpop.f32.mrf.mxu0
    %v4520 = vadd.f32 0.0, %v4519
    %v4521 = vpop.f32.mrf.mxu0
    %v4522 = vpop.f32.mrf.mxu0
    %v4523 = vadd.f32 0.0, %v4522
    %v4524 = vpop.f32.mrf.mxu0
    %4525 = vmatprep.mubr.bf16.mxu0 0
    %4526 = vmatmul.mubr.bf16.gmra.mxu0 %v1686
    %v4527 = vpop.f32.mrf.mxu0
    %v4528 = vadd.f32 0.0, %v4527
    %v4529 = vpop.f32.mrf.mxu0
    %v4530 = vpop.f32.mrf.mxu0
    %v4531 = vadd.f32 0.0, %v4530
    %v4532 = vpop.f32.mrf.mxu0
    %4533 = vmatprep.mubr.bf16.mxu0 0
    %4534 = vmatmul.mubr.bf16.gmra.mxu0 %v1689
    %v4535 = vpop.f32.mrf.mxu0
    %v4536 = vadd.f32 0.0, %v4535
    %v4537 = vpop.f32.mrf.mxu0
    %v4538 = vpop.f32.mrf.mxu0
    %v4539 = vadd.f32 0.0, %v4538
    %v4540 = vpop.f32.mrf.mxu0
    %4541 = vmatprep.mubr.bf16.mxu0 0
    %4542 = vmatmul.mubr.bf16.gmra.mxu0 %v1692
    %v4543 = vpop.f32.mrf.mxu0
    %v4544 = vadd.f32 0.0, %v4543
    %v4545 = vpop.f32.mrf.mxu0
    %v4546 = vpop.f32.mrf.mxu0
    %v4547 = vadd.f32 0.0, %v4546
    %v4548 = vpop.f32.mrf.mxu0
    %4549 = vmatprep.mubr.bf16.mxu0 0
    %4550 = vmatmul.mubr.bf16.gmra.mxu0 %v1695
    %v4551 = vpop.f32.mrf.mxu0
    %v4552 = vadd.f32 0.0, %v4551
    %v4553 = vpop.f32.mrf.mxu0
    %v4554 = vpop.f32.mrf.mxu0
    %v4555 = vadd.f32 0.0, %v4554
    %v4556 = vpop.f32.mrf.mxu0
    %4557 = vmatprep.mubr.bf16.mxu0 0
    %4558 = vmatmul.mubr.bf16.gmra.mxu0 %v1698
    %v4559 = vpop.f32.mrf.mxu0
    %v4560 = vadd.f32 0.0, %v4559
    %v4561 = vpop.f32.mrf.mxu0
    %v4562 = vpop.f32.mrf.mxu0
    %v4563 = vadd.f32 0.0, %v4562
    %v4564 = vpop.f32.mrf.mxu0
    %4565 = vmatprep.mubr.bf16.mxu0 0
    %4566 = vmatmul.mubr.bf16.gmra.mxu0 %v1701
    %v4567 = vpop.f32.mrf.mxu0
    %v4568 = vadd.f32 0.0, %v4567
    %v4569 = vpop.f32.mrf.mxu0
    %v4570 = vpop.f32.mrf.mxu0
    %v4571 = vadd.f32 0.0, %v4570
    %v4572 = vpop.f32.mrf.mxu0
    %4573 = vmatprep.mubr.bf16.mxu0 0
    %4574 = vmatmul.mubr.bf16.gmra.mxu0 %v1704
    %v4575 = vpop.f32.mrf.mxu0
    %v4576 = vadd.f32 0.0, %v4575
    %v4577 = vpop.f32.mrf.mxu0
    %v4578 = vpop.f32.mrf.mxu0
    %v4579 = vadd.f32 0.0, %v4578
    %v4580 = vpop.f32.mrf.mxu0
    %4581 = vmatprep.mubr.bf16.mxu0 0
    %4582 = vmatmul.mubr.bf16.gmra.mxu0 %v1707
    %v4583 = vpop.f32.mrf.mxu0
    %v4584 = vadd.f32 0.0, %v4583
    %v4585 = vpop.f32.mrf.mxu0
    %v4586 = vpop.f32.mrf.mxu0
    %v4587 = vadd.f32 0.0, %v4586
    %v4588 = vpop.f32.mrf.mxu0
    %4589 = vmatprep.mubr.bf16.mxu0 0
    %4590 = vmatmul.mubr.bf16.gmra.mxu0 %v1710
    %v4591 = vpop.f32.mrf.mxu0
    %v4592 = vadd.f32 0.0, %v4591
    %v4593 = vpop.f32.mrf.mxu0
    %v4594 = vpop.f32.mrf.mxu0
    %v4595 = vadd.f32 0.0, %v4594
    %v4596 = vpop.f32.mrf.mxu0
    %4597 = vmatprep.mubr.bf16.mxu0 0
    %4598 = vmatmul.mubr.bf16.gmra.mxu0 %v1713
    %v4599 = vpop.f32.mrf.mxu0
    %v4600 = vadd.f32 0.0, %v4599
    %v4601 = vpop.f32.mrf.mxu0
    %v4602 = vpop.f32.mrf.mxu0
    %v4603 = vadd.f32 0.0, %v4602
    %v4604 = vpop.f32.mrf.mxu0
    %4605 = vmatprep.mubr.bf16.mxu0 0
    %4606 = vmatmul.mubr.bf16.gmra.mxu0 %v1716
    %v4607 = vpop.f32.mrf.mxu0
    %v4608 = vadd.f32 0.0, %v4607
    %v4609 = vpop.f32.mrf.mxu0
    %v4610 = vpop.f32.mrf.mxu0
    %v4611 = vadd.f32 0.0, %v4610
    %v4612 = vpop.f32.mrf.mxu0
    %4613 = vmatprep.mubr.bf16.mxu0 0
    %4614 = vmatmul.mubr.bf16.gmra.mxu0 %v1719
    %v4615 = vpop.f32.mrf.mxu0
    %v4616 = vadd.f32 0.0, %v4615
    %v4617 = vpop.f32.mrf.mxu0
    %v4618 = vpop.f32.mrf.mxu0
    %v4619 = vadd.f32 0.0, %v4618
    %v4620 = vpop.f32.mrf.mxu0
    %4621 = vmatprep.mubr.bf16.mxu0 0
    %4622 = vmatmul.mubr.bf16.gmra.mxu0 %v1722
    %v4623 = vpop.f32.mrf.mxu0
    %v4624 = vadd.f32 0.0, %v4623
    %v4625 = vpop.f32.mrf.mxu0
    %v4626 = vpop.f32.mrf.mxu0
    %v4627 = vadd.f32 0.0, %v4626
    %v4628 = vpop.f32.mrf.mxu0
    %4629 = vmatprep.mubr.bf16.mxu0 0
    %4630 = vmatmul.mubr.bf16.gmra.mxu0 %v1725
    %v4631 = vpop.f32.mrf.mxu0
    %v4632 = vadd.f32 0.0, %v4631
    %v4633 = vpop.f32.mrf.mxu0
    %v4634 = vpop.f32.mrf.mxu0
    %v4635 = vadd.f32 0.0, %v4634
    %v4636 = vpop.f32.mrf.mxu0
    %4637 = vmatprep.mubr.bf16.mxu0 0
    %4638 = vmatmul.mubr.bf16.gmra.mxu0 %v1728
    %v4639 = vpop.f32.mrf.mxu0
    %v4640 = vadd.f32 0.0, %v4639
    %v4641 = vpop.f32.mrf.mxu0
    %v4642 = vpop.f32.mrf.mxu0
    %v4643 = vadd.f32 0.0, %v4642
    %v4644 = vpop.f32.mrf.mxu0
    %4645 = vmatprep.mubr.bf16.mxu0 0
    %4646 = vmatmul.mubr.bf16.gmra.mxu0 %v1731
    %v4647 = vpop.f32.mrf.mxu0
    %v4648 = vadd.f32 0.0, %v4647
    %v4649 = vpop.f32.mrf.mxu0
    %v4650 = vpop.f32.mrf.mxu0
    %v4651 = vadd.f32 0.0, %v4650
    %v4652 = vpop.f32.mrf.mxu0
    %4653 = vmatprep.mubr.bf16.mxu0 0
    %4654 = vmatmul.mubr.bf16.gmra.mxu0 %v1734
    %v4655 = vpop.f32.mrf.mxu0
    %v4656 = vadd.f32 0.0, %v4655
    %v4657 = vpop.f32.mrf.mxu0
    %v4658 = vpop.f32.mrf.mxu0
    %v4659 = vadd.f32 0.0, %v4658
    %v4660 = vpop.f32.mrf.mxu0
    %4661 = vmatprep.mubr.bf16.mxu0 0
    %4662 = vmatmul.mubr.bf16.gmra.mxu0 %v1737
    %v4663 = vpop.f32.mrf.mxu0
    %v4664 = vadd.f32 0.0, %v4663
    %v4665 = vpop.f32.mrf.mxu0
    %v4666 = vpop.f32.mrf.mxu0
    %v4667 = vadd.f32 0.0, %v4666
    %v4668 = vpop.f32.mrf.mxu0
    %4669 = vmatprep.mubr.bf16.mxu0 0
    %4670 = vmatmul.mubr.bf16.gmra.mxu0 %v1740
    %v4671 = vpop.f32.mrf.mxu0
    %v4672 = vadd.f32 0.0, %v4671
    %v4673 = vpop.f32.mrf.mxu0
    %v4674 = vpop.f32.mrf.mxu0
    %v4675 = vadd.f32 0.0, %v4674
    %v4676 = vpop.f32.mrf.mxu0
    %4677 = vmatprep.mubr.bf16.mxu0 0
    %4678 = vmatmul.mubr.bf16.gmra.mxu0 %v1743
    %v4679 = vpop.f32.mrf.mxu0
    %v4680 = vadd.f32 0.0, %v4679
    %v4681 = vpop.f32.mrf.mxu0
    %v4682 = vpop.f32.mrf.mxu0
    %v4683 = vadd.f32 0.0, %v4682
    %v4684 = vpop.f32.mrf.mxu0
    %4685 = vmatprep.mubr.bf16.mxu0 0
    %4686 = vmatmul.mubr.bf16.gmra.mxu0 %v1746
    %v4687 = vpop.f32.mrf.mxu0
    %v4688 = vadd.f32 0.0, %v4687
    %v4689 = vpop.f32.mrf.mxu0
    %v4690 = vpop.f32.mrf.mxu0
    %v4691 = vadd.f32 0.0, %v4690
    %v4692 = vpop.f32.mrf.mxu0
    %4693 = vmatprep.mubr.bf16.mxu0 0
    %4694 = vmatmul.mubr.bf16.gmra.mxu0 %v1749
    %v4695 = vpop.f32.mrf.mxu0
    %v4696 = vadd.f32 0.0, %v4695
    %v4697 = vpop.f32.mrf.mxu0
    %v4698 = vpop.f32.mrf.mxu0
    %v4699 = vadd.f32 0.0, %v4698
    %v4700 = vpop.f32.mrf.mxu0
    %4701 = vmatprep.mubr.bf16.mxu0 0
    %4702 = vmatmul.mubr.bf16.gmra.mxu0 %v1752
    %v4703 = vpop.f32.mrf.mxu0
    %v4704 = vadd.f32 0.0, %v4703
    %v4705 = vpop.f32.mrf.mxu0
    %v4706 = vpop.f32.mrf.mxu0
    %v4707 = vadd.f32 0.0, %v4706
    %v4708 = vpop.f32.mrf.mxu0
    %4709 = vmatprep.mubr.bf16.mxu0 0
    %4710 = vmatmul.mubr.bf16.gmra.mxu0 %v1755
    %v4711 = vpop.f32.mrf.mxu0
    %v4712 = vadd.f32 0.0, %v4711
    %v4713 = vpop.f32.mrf.mxu0
    %v4714 = vpop.f32.mrf.mxu0
    %v4715 = vadd.f32 0.0, %v4714
    %v4716 = vpop.f32.mrf.mxu0
    %4717 = vmatprep.mubr.bf16.mxu0 0
    %4718 = vmatmul.mubr.bf16.gmra.mxu0 %v1758
    %v4719 = vpop.f32.mrf.mxu0
    %v4720 = vadd.f32 0.0, %v4719
    %v4721 = vpop.f32.mrf.mxu0
    %v4722 = vpop.f32.mrf.mxu0
    %v4723 = vadd.f32 0.0, %v4722
    %v4724 = vpop.f32.mrf.mxu0
    %4725 = vmatprep.mubr.bf16.mxu0 0
    %4726 = vmatmul.mubr.bf16.gmra.mxu0 %v1761
    %v4727 = vpop.f32.mrf.mxu0
    %v4728 = vadd.f32 0.0, %v4727
    %v4729 = vpop.f32.mrf.mxu0
    %v4730 = vpop.f32.mrf.mxu0
    %v4731 = vadd.f32 0.0, %v4730
    %v4732 = vpop.f32.mrf.mxu0
    %4733 = vmatprep.mubr.bf16.mxu0 0
    %4734 = vmatmul.mubr.bf16.gmra.mxu0 %v1764
    %v4735 = vpop.f32.mrf.mxu0
    %v4736 = vadd.f32 0.0, %v4735
    %v4737 = vpop.f32.mrf.mxu0
    %v4738 = vpop.f32.mrf.mxu0
    %v4739 = vadd.f32 0.0, %v4738
    %v4740 = vpop.f32.mrf.mxu0
    %4741 = vmatprep.mubr.bf16.mxu0 0
    %4742 = vmatmul.mubr.bf16.gmra.mxu0 %v1767
    %v4743 = vpop.f32.mrf.mxu0
    %v4744 = vadd.f32 0.0, %v4743
    %v4745 = vpop.f32.mrf.mxu0
    %v4746 = vpop.f32.mrf.mxu0
    %v4747 = vadd.f32 0.0, %v4746
    %v4748 = vpop.f32.mrf.mxu0
    %4749 = vmatprep.mubr.bf16.mxu0 0
    %4750 = vmatmul.mubr.bf16.gmra.mxu0 %v1770
    %v4751 = vpop.f32.mrf.mxu0
    %v4752 = vadd.f32 0.0, %v4751
    %v4753 = vpop.f32.mrf.mxu0
    %v4754 = vpop.f32.mrf.mxu0
    %v4755 = vadd.f32 0.0, %v4754
    %v4756 = vpop.f32.mrf.mxu0
    %4757 = vmatprep.mubr.bf16.mxu0 0
    %4758 = vmatmul.mubr.bf16.gmra.mxu0 %v1773
    %v4759 = vpop.f32.mrf.mxu0
    %v4760 = vadd.f32 0.0, %v4759
    %v4761 = vpop.f32.mrf.mxu0
    %v4762 = vpop.f32.mrf.mxu0
    %v4763 = vadd.f32 0.0, %v4762
    %v4764 = vpop.f32.mrf.mxu0
    %4765 = vmatprep.mubr.bf16.mxu0 0
    %4766 = vmatmul.mubr.bf16.gmra.mxu0 %v1776
    %v4767 = vpop.f32.mrf.mxu0
    %v4768 = vadd.f32 0.0, %v4767
    %v4769 = vpop.f32.mrf.mxu0
    %v4770 = vpop.f32.mrf.mxu0
    %v4771 = vadd.f32 0.0, %v4770
    %v4772 = vpop.f32.mrf.mxu0
    %4773 = vmatprep.mubr.bf16.mxu0 0
    %4774 = vmatmul.mubr.bf16.gmra.mxu0 %v1779
    %v4775 = vpop.f32.mrf.mxu0
    %v4776 = vadd.f32 0.0, %v4775
    %v4777 = vpop.f32.mrf.mxu0
    %v4778 = vpop.f32.mrf.mxu0
    %v4779 = vadd.f32 0.0, %v4778
    %v4780 = vpop.f32.mrf.mxu0
    %4781 = vmatprep.mubr.bf16.mxu0 0
    %4782 = vmatmul.mubr.bf16.gmra.mxu0 %v1782
    %v4783 = vpop.f32.mrf.mxu0
    %v4784 = vadd.f32 0.0, %v4783
    %v4785 = vpop.f32.mrf.mxu0
    %v4786 = vpop.f32.mrf.mxu0
    %v4787 = vadd.f32 0.0, %v4786
    %v4788 = vpop.f32.mrf.mxu0
    %4789 = vmatprep.mubr.bf16.mxu0 0
    %4790 = vmatmul.mubr.bf16.gmra.mxu0 %v1785
    %v4791 = vpop.f32.mrf.mxu0
    %v4792 = vadd.f32 0.0, %v4791
    %v4793 = vpop.f32.mrf.mxu0
    %v4794 = vpop.f32.mrf.mxu0
    %v4795 = vadd.f32 0.0, %v4794
    %v4796 = vpop.f32.mrf.mxu0
    %4797 = vmatprep.mubr.bf16.mxu0 0
    %4798 = vmatmul.mubr.bf16.gmra.mxu0 %v1788
    %v4799 = vpop.f32.mrf.mxu0
    %v4800 = vadd.f32 0.0, %v4799
    %v4801 = vpop.f32.mrf.mxu0
    %v4802 = vpop.f32.mrf.mxu0
    %v4803 = vadd.f32 0.0, %v4802
    %v4804 = vpop.f32.mrf.mxu0
    %4805 = vmatprep.mubr.bf16.mxu0 0
    %4806 = vmatmul.mubr.bf16.gmra.mxu0 %v1791
    %v4807 = vpop.f32.mrf.mxu0
    %v4808 = vadd.f32 0.0, %v4807
    %v4809 = vpop.f32.mrf.mxu0
    %v4810 = vpop.f32.mrf.mxu0
    %v4811 = vadd.f32 0.0, %v4810
    %v4812 = vpop.f32.mrf.mxu0
    %4813 = vmatprep.mubr.bf16.mxu0 0
    %4814 = vmatmul.mubr.bf16.gmra.mxu0 %v1794
    %v4815 = vpop.f32.mrf.mxu0
    %v4816 = vadd.f32 0.0, %v4815
    %v4817 = vpop.f32.mrf.mxu0
    %v4818 = vpop.f32.mrf.mxu0
    %v4819 = vadd.f32 0.0, %v4818
    %v4820 = vpop.f32.mrf.mxu0
    %4821 = vmatprep.mubr.bf16.mxu0 0
    %4822 = vmatmul.mubr.bf16.gmra.mxu0 %v1797
    %v4823 = vpop.f32.mrf.mxu0
    %v4824 = vadd.f32 0.0, %v4823
    %v4825 = vpop.f32.mrf.mxu0
    %v4826 = vpop.f32.mrf.mxu0
    %v4827 = vadd.f32 0.0, %v4826
    %v4828 = vpop.f32.mrf.mxu0
    %4829 = vmatprep.mubr.bf16.mxu0 0
    %4830 = vmatmul.mubr.bf16.gmra.mxu0 %v1800
    %v4831 = vpop.f32.mrf.mxu0
    %v4832 = vadd.f32 0.0, %v4831
    %v4833 = vpop.f32.mrf.mxu0
    %v4834 = vpop.f32.mrf.mxu0
    %v4835 = vadd.f32 0.0, %v4834
    %v4836 = vpop.f32.mrf.mxu0
    %4837 = vmatprep.mubr.bf16.mxu0 0
    %4838 = vmatmul.mubr.bf16.gmra.mxu0 %v1803
    %v4839 = vpop.f32.mrf.mxu0
    %v4840 = vadd.f32 0.0, %v4839
    %v4841 = vpop.f32.mrf.mxu0
    %v4842 = vpop.f32.mrf.mxu0
    %v4843 = vadd.f32 0.0, %v4842
    %v4844 = vpop.f32.mrf.mxu0
    %4845 = vmatprep.mubr.bf16.mxu0 0
    %4846 = vmatmul.mubr.bf16.gmra.mxu0 %v1806
    %v4847 = vpop.f32.mrf.mxu0
    %v4848 = vadd.f32 0.0, %v4847
    %v4849 = vpop.f32.mrf.mxu0
    %v4850 = vpop.f32.mrf.mxu0
    %v4851 = vadd.f32 0.0, %v4850
    %v4852 = vpop.f32.mrf.mxu0
    %4853 = vmatprep.mubr.bf16.mxu0 0
    %4854 = vmatmul.mubr.bf16.gmra.mxu0 %v1809
    %v4855 = vpop.f32.mrf.mxu0
    %v4856 = vadd.f32 0.0, %v4855
    %v4857 = vpop.f32.mrf.mxu0
    %v4858 = vpop.f32.mrf.mxu0
    %v4859 = vadd.f32 0.0, %v4858
    %v4860 = vpop.f32.mrf.mxu0
    %4861 = vmatprep.mubr.bf16.mxu0 0
    %4862 = vmatmul.mubr.bf16.gmra.mxu0 %v1812
    %v4863 = vpop.f32.mrf.mxu0
    %v4864 = vadd.f32 0.0, %v4863
    %v4865 = vpop.f32.mrf.mxu0
    %v4866 = vpop.f32.mrf.mxu0
    %v4867 = vadd.f32 0.0, %v4866
    %v4868 = vpop.f32.mrf.mxu0
    %4869 = vmatprep.mubr.bf16.mxu0 0
    %4870 = vmatmul.mubr.bf16.gmra.mxu0 %v1815
    %v4871 = vpop.f32.mrf.mxu0
    %v4872 = vadd.f32 0.0, %v4871
    %v4873 = vpop.f32.mrf.mxu0
    %v4874 = vpop.f32.mrf.mxu0
    %v4875 = vadd.f32 0.0, %v4874
    %v4876 = vpop.f32.mrf.mxu0
    %4877 = vmatprep.mubr.bf16.mxu0 0
    %4878 = vmatmul.mubr.bf16.gmra.mxu0 %v1818
    %v4879 = vpop.f32.mrf.mxu0
    %v4880 = vadd.f32 0.0, %v4879
    %v4881 = vpop.f32.mrf.mxu0
    %v4882 = vpop.f32.mrf.mxu0
    %v4883 = vadd.f32 0.0, %v4882
    %v4884 = vpop.f32.mrf.mxu0
    %4885 = vmatprep.mubr.bf16.mxu0 0
    %4886 = vmatmul.mubr.bf16.gmra.mxu0 %v1821
    %v4887 = vpop.f32.mrf.mxu0
    %v4888 = vadd.f32 0.0, %v4887
    %v4889 = vpop.f32.mrf.mxu0
    %v4890 = vpop.f32.mrf.mxu0
    %v4891 = vadd.f32 0.0, %v4890
    %v4892 = vpop.f32.mrf.mxu0
    %4893 = vmatprep.mubr.bf16.mxu0 0
    %4894 = vmatmul.mubr.bf16.gmra.mxu0 %v1824
    %v4895 = vpop.f32.mrf.mxu0
    %v4896 = vadd.f32 0.0, %v4895
    %v4897 = vpop.f32.mrf.mxu0
    %v4898 = vpop.f32.mrf.mxu0
    %v4899 = vadd.f32 0.0, %v4898
    %v4900 = vpop.f32.mrf.mxu0
    %4901 = vmatprep.mubr.bf16.mxu0 0
    %4902 = vmatmul.mubr.bf16.gmra.mxu0 %v1827
    %v4903 = vpop.f32.mrf.mxu0
    %v4904 = vadd.f32 0.0, %v4903
    %v4905 = vpop.f32.mrf.mxu0
    %v4906 = vpop.f32.mrf.mxu0
    %v4907 = vadd.f32 0.0, %v4906
    %v4908 = vpop.f32.mrf.mxu0
    %4909 = vmatprep.mubr.bf16.mxu0 0
    %4910 = vmatmul.mubr.bf16.gmra.mxu0 %v1830
    %v4911 = vpop.f32.mrf.mxu0
    %v4912 = vadd.f32 0.0, %v4911
    %v4913 = vpop.f32.mrf.mxu0
    %v4914 = vpop.f32.mrf.mxu0
    %v4915 = vadd.f32 0.0, %v4914
    %v4916 = vpop.f32.mrf.mxu0
    %4917 = vmatprep.mubr.bf16.mxu0 0
    %4918 = vmatmul.mubr.bf16.gmra.mxu0 %v1833
    %v4919 = vpop.f32.mrf.mxu0
    %v4920 = vadd.f32 0.0, %v4919
    %v4921 = vpop.f32.mrf.mxu0
    %v4922 = vpop.f32.mrf.mxu0
    %v4923 = vadd.f32 0.0, %v4922
    %v4924 = vpop.f32.mrf.mxu0
    %4925 = vmatprep.mubr.bf16.mxu0 0
    %4926 = vmatmul.mubr.bf16.gmra.mxu0 %v1836
    %v4927 = vpop.f32.mrf.mxu0
    %v4928 = vadd.f32 0.0, %v4927
    %v4929 = vpop.f32.mrf.mxu0
    %v4930 = vpop.f32.mrf.mxu0
    %v4931 = vadd.f32 0.0, %v4930
    %v4932 = vpop.f32.mrf.mxu0
    %4933 = vmatprep.mubr.bf16.mxu0 0
    %4934 = vmatmul.mubr.bf16.gmra.mxu0 %v1839
    %v4935 = vpop.f32.mrf.mxu0
    %v4936 = vadd.f32 0.0, %v4935
    %v4937 = vpop.f32.mrf.mxu0
    %v4938 = vpop.f32.mrf.mxu0
    %v4939 = vadd.f32 0.0, %v4938
    %v4940 = vpop.f32.mrf.mxu0
    %4941 = vmatprep.mubr.bf16.mxu0 0
    %4942 = vmatmul.mubr.bf16.gmra.mxu0 %v1842
    %v4943 = vpop.f32.mrf.mxu0
    %v4944 = vadd.f32 0.0, %v4943
    %v4945 = vpop.f32.mrf.mxu0
    %v4946 = vpop.f32.mrf.mxu0
    %v4947 = vadd.f32 0.0, %v4946
    %v4948 = vpop.f32.mrf.mxu0
    %4949 = vmatprep.mubr.bf16.mxu0 0
    %4950 = vmatmul.mubr.bf16.gmra.mxu0 %v1845
    %v4951 = vpop.f32.mrf.mxu0
    %v4952 = vadd.f32 0.0, %v4951
    %v4953 = vpop.f32.mrf.mxu0
    %v4954 = vpop.f32.mrf.mxu0
    %v4955 = vadd.f32 0.0, %v4954
    %v4956 = vpop.f32.mrf.mxu0
    %4957 = vmatprep.mubr.bf16.mxu0 0
    %4958 = vmatmul.mubr.bf16.gmra.mxu0 %v1848
    %v4959 = vpop.f32.mrf.mxu0
    %v4960 = vadd.f32 0.0, %v4959
    %v4961 = vpop.f32.mrf.mxu0
    %v4962 = vpop.f32.mrf.mxu0
    %v4963 = vadd.f32 0.0, %v4962
    %v4964 = vpop.f32.mrf.mxu0
    %4965 = vdwg.mxu0
    %v4966 = vsel %vm182, %v4416, 0.0
    %v4967 = vrot.slane %v4966, 4
    %v4968 = vadd.f32 %v4966, %v4967
    %v4969 = vrot.slane %v4968, 2
    %v4970 = vadd.f32 %v4968, %v4969
    %v4971 = vrot.slane %v4970, 1
    %v4972 = vadd.f32 %v4970, %v4971
    %v4973 = vmul.f32 %v4456, %v4456
    %v4974 = vmul.f32 %v4459, %v4459
    %v4975 = vmul.f32 %v4464, %v4464
    %v4976 = vmul.f32 %v4467, %v4467
    %v4977 = vmul.f32 %v4472, %v4472
    %v4978 = vmul.f32 %v4475, %v4475
    %v4979 = vmul.f32 %v4480, %v4480
    %v4980 = vmul.f32 %v4483, %v4483
    %v4981 = vmul.f32 %v4488, %v4488
    %v4982 = vmul.f32 %v4491, %v4491
    %v4983 = vmul.f32 %v4496, %v4496
    %v4984 = vmul.f32 %v4499, %v4499
    %v4985 = vmul.f32 %v4504, %v4504
    %v4986 = vmul.f32 %v4507, %v4507
    %v4987 = vmul.f32 %v4512, %v4512
    %v4988 = vmul.f32 %v4515, %v4515
    %v4989 = vmul.f32 %v4520, %v4520
    %v4990 = vmul.f32 %v4523, %v4523
    %v4991 = vmul.f32 %v4528, %v4528
    %v4992 = vmul.f32 %v4531, %v4531
    %v4993 = vmul.f32 %v4536, %v4536
    %v4994 = vmul.f32 %v4539, %v4539
    %v4995 = vmul.f32 %v4544, %v4544
    %v4996 = vmul.f32 %v4547, %v4547
    %v4997 = vmul.f32 %v4552, %v4552
    %v4998 = vmul.f32 %v4555, %v4555
    %v4999 = vmul.f32 %v4560, %v4560
    %v5000 = vmul.f32 %v4563, %v4563
    %v5001 = vmul.f32 %v4568, %v4568
    %v5002 = vmul.f32 %v4571, %v4571
    %v5003 = vmul.f32 %v4576, %v4576
    %v5004 = vmul.f32 %v4579, %v4579
    %v5005 = vmul.f32 %v4584, %v4584
    %v5006 = vmul.f32 %v4587, %v4587
    %v5007 = vmul.f32 %v4592, %v4592
    %v5008 = vmul.f32 %v4595, %v4595
    %v5009 = vmul.f32 %v4600, %v4600
    %v5010 = vmul.f32 %v4603, %v4603
    %v5011 = vmul.f32 %v4608, %v4608
    %v5012 = vmul.f32 %v4611, %v4611
    %v5013 = vmul.f32 %v4616, %v4616
    %v5014 = vmul.f32 %v4619, %v4619
    %v5015 = vmul.f32 %v4624, %v4624
    %v5016 = vmul.f32 %v4627, %v4627
    %v5017 = vmul.f32 %v4632, %v4632
    %v5018 = vmul.f32 %v4635, %v4635
    %v5019 = vmul.f32 %v4640, %v4640
    %v5020 = vmul.f32 %v4643, %v4643
    %v5021 = vmul.f32 %v4648, %v4648
    %v5022 = vmul.f32 %v4651, %v4651
    %v5023 = vmul.f32 %v4656, %v4656
    %v5024 = vmul.f32 %v4659, %v4659
    %v5025 = vmul.f32 %v4664, %v4664
    %v5026 = vmul.f32 %v4667, %v4667
    %v5027 = vmul.f32 %v4672, %v4672
    %v5028 = vmul.f32 %v4675, %v4675
    %v5029 = vmul.f32 %v4680, %v4680
    %v5030 = vmul.f32 %v4683, %v4683
    %v5031 = vmul.f32 %v4688, %v4688
    %v5032 = vmul.f32 %v4691, %v4691
    %v5033 = vmul.f32 %v4696, %v4696
    %v5034 = vmul.f32 %v4699, %v4699
    %v5035 = vmul.f32 %v4704, %v4704
    %v5036 = vmul.f32 %v4707, %v4707
    %v5037 = vmul.f32 %v4712, %v4712
    %v5038 = vmul.f32 %v4715, %v4715
    %v5039 = vmul.f32 %v4720, %v4720
    %v5040 = vmul.f32 %v4723, %v4723
    %v5041 = vmul.f32 %v4728, %v4728
    %v5042 = vmul.f32 %v4731, %v4731
    %v5043 = vmul.f32 %v4736, %v4736
    %v5044 = vmul.f32 %v4739, %v4739
    %v5045 = vmul.f32 %v4744, %v4744
    %v5046 = vmul.f32 %v4747, %v4747
    %v5047 = vmul.f32 %v4752, %v4752
    %v5048 = vmul.f32 %v4755, %v4755
    %v5049 = vmul.f32 %v4760, %v4760
    %v5050 = vmul.f32 %v4763, %v4763
    %v5051 = vmul.f32 %v4768, %v4768
    %v5052 = vmul.f32 %v4771, %v4771
    %v5053 = vmul.f32 %v4776, %v4776
    %v5054 = vmul.f32 %v4779, %v4779
    %v5055 = vmul.f32 %v4784, %v4784
    %v5056 = vmul.f32 %v4787, %v4787
    %v5057 = vmul.f32 %v4792, %v4792
    %v5058 = vmul.f32 %v4795, %v4795
    %v5059 = vmul.f32 %v4800, %v4800
    %v5060 = vmul.f32 %v4803, %v4803
    %v5061 = vmul.f32 %v4808, %v4808
    %v5062 = vmul.f32 %v4811, %v4811
    %v5063 = vmul.f32 %v4816, %v4816
    %v5064 = vmul.f32 %v4819, %v4819
    %v5065 = vmul.f32 %v4824, %v4824
    %v5066 = vmul.f32 %v4827, %v4827
    %v5067 = vmul.f32 %v4832, %v4832
    %v5068 = vmul.f32 %v4835, %v4835
    %v5069 = vmul.f32 %v4840, %v4840
    %v5070 = vmul.f32 %v4843, %v4843
    %v5071 = vmul.f32 %v4848, %v4848
    %v5072 = vmul.f32 %v4851, %v4851
    %v5073 = vmul.f32 %v4856, %v4856
    %v5074 = vmul.f32 %v4859, %v4859
    %v5075 = vmul.f32 %v4864, %v4864
    %v5076 = vmul.f32 %v4867, %v4867
    %v5077 = vmul.f32 %v4872, %v4872
    %v5078 = vmul.f32 %v4875, %v4875
    %v5079 = vmul.f32 %v4880, %v4880
    %v5080 = vmul.f32 %v4883, %v4883
    %v5081 = vmul.f32 %v4888, %v4888
    %v5082 = vmul.f32 %v4891, %v4891
    %v5083 = vmul.f32 %v4896, %v4896
    %v5084 = vmul.f32 %v4899, %v4899
    %v5085 = vmul.f32 %v4904, %v4904
    %v5086 = vmul.f32 %v4907, %v4907
    %v5087 = vmul.f32 %v4912, %v4912
    %v5088 = vmul.f32 %v4915, %v4915
    %v5089 = vmul.f32 %v4920, %v4920
    %v5090 = vmul.f32 %v4923, %v4923
    %v5091 = vmul.f32 %v4928, %v4928
    %v5092 = vmul.f32 %v4931, %v4931
    %v5093 = vmul.f32 %v4936, %v4936
    %v5094 = vmul.f32 %v4939, %v4939
    %v5095 = vmul.f32 %v4944, %v4944
    %v5096 = vmul.f32 %v4947, %v4947
    %v5097 = vmul.f32 %v4952, %v4952
    %v5098 = vmul.f32 %v4955, %v4955
    %v5099 = vmul.f32 %v4960, %v4960
    %v5100 = vmul.f32 %v4963, %v4963
    %v5101 = vsel %vm182, %v4973, 0.0
    %v5102 = vsel %vm182, %v4974, 0.0
    %v5103 = vadd.f32 %v5101, %v5102
    %v5104 = vsel %vm182, %v4975, 0.0
    %v5105 = vadd.f32 %v5103, %v5104
    %v5106 = vsel %vm182, %v4976, 0.0
    %v5107 = vadd.f32 %v5105, %v5106
    %v5108 = vsel %vm182, %v4977, 0.0
    %v5109 = vadd.f32 %v5107, %v5108
    %v5110 = vsel %vm182, %v4978, 0.0
    %v5111 = vadd.f32 %v5109, %v5110
    %v5112 = vsel %vm182, %v4979, 0.0
    %v5113 = vadd.f32 %v5111, %v5112
    %v5114 = vsel %vm182, %v4980, 0.0
    %v5115 = vadd.f32 %v5113, %v5114
    %v5116 = vsel %vm182, %v4981, 0.0
    %v5117 = vadd.f32 %v5115, %v5116
    %v5118 = vsel %vm182, %v4982, 0.0
    %v5119 = vadd.f32 %v5117, %v5118
    %v5120 = vsel %vm182, %v4983, 0.0
    %v5121 = vadd.f32 %v5119, %v5120
    %v5122 = vsel %vm182, %v4984, 0.0
    %v5123 = vadd.f32 %v5121, %v5122
    %v5124 = vsel %vm182, %v4985, 0.0
    %v5125 = vadd.f32 %v5123, %v5124
    %v5126 = vsel %vm182, %v4986, 0.0
    %v5127 = vadd.f32 %v5125, %v5126
    %v5128 = vsel %vm182, %v4987, 0.0
    %v5129 = vadd.f32 %v5127, %v5128
    %v5130 = vsel %vm182, %v4988, 0.0
    %v5131 = vadd.f32 %v5129, %v5130
    %v5132 = vsel %vm182, %v4989, 0.0
    %v5133 = vadd.f32 %v5131, %v5132
    %v5134 = vsel %vm182, %v4990, 0.0
    %v5135 = vadd.f32 %v5133, %v5134
    %v5136 = vsel %vm182, %v4991, 0.0
    %v5137 = vadd.f32 %v5135, %v5136
    %v5138 = vsel %vm182, %v4992, 0.0
    %v5139 = vadd.f32 %v5137, %v5138
    %v5140 = vsel %vm182, %v4993, 0.0
    %v5141 = vadd.f32 %v5139, %v5140
    %v5142 = vsel %vm182, %v4994, 0.0
    %v5143 = vadd.f32 %v5141, %v5142
    %v5144 = vsel %vm182, %v4995, 0.0
    %v5145 = vadd.f32 %v5143, %v5144
    %v5146 = vsel %vm182, %v4996, 0.0
    %v5147 = vadd.f32 %v5145, %v5146
    %v5148 = vsel %vm182, %v4997, 0.0
    %v5149 = vadd.f32 %v5147, %v5148
    %v5150 = vsel %vm182, %v4998, 0.0
    %v5151 = vadd.f32 %v5149, %v5150
    %v5152 = vsel %vm182, %v4999, 0.0
    %v5153 = vadd.f32 %v5151, %v5152
    %v5154 = vsel %vm182, %v5000, 0.0
    %v5155 = vadd.f32 %v5153, %v5154
    %v5156 = vsel %vm182, %v5001, 0.0
    %v5157 = vadd.f32 %v5155, %v5156
    %v5158 = vsel %vm182, %v5002, 0.0
    %v5159 = vadd.f32 %v5157, %v5158
    %v5160 = vsel %vm182, %v5003, 0.0
    %v5161 = vadd.f32 %v5159, %v5160
    %v5162 = vsel %vm182, %v5004, 0.0
    %v5163 = vadd.f32 %v5161, %v5162
    %v5164 = vsel %vm182, %v5005, 0.0
    %v5165 = vadd.f32 %v5163, %v5164
    %v5166 = vsel %vm182, %v5006, 0.0
    %v5167 = vadd.f32 %v5165, %v5166
    %v5168 = vsel %vm182, %v5007, 0.0
    %v5169 = vadd.f32 %v5167, %v5168
    %v5170 = vsel %vm182, %v5008, 0.0
    %v5171 = vadd.f32 %v5169, %v5170
    %v5172 = vsel %vm182, %v5009, 0.0
    %v5173 = vadd.f32 %v5171, %v5172
    %v5174 = vsel %vm182, %v5010, 0.0
    %v5175 = vadd.f32 %v5173, %v5174
    %v5176 = vsel %vm182, %v5011, 0.0
    %v5177 = vadd.f32 %v5175, %v5176
    %v5178 = vsel %vm182, %v5012, 0.0
    %v5179 = vadd.f32 %v5177, %v5178
    %v5180 = vsel %vm182, %v5013, 0.0
    %v5181 = vadd.f32 %v5179, %v5180
    %v5182 = vsel %vm182, %v5014, 0.0
    %v5183 = vadd.f32 %v5181, %v5182
    %v5184 = vsel %vm182, %v5015, 0.0
    %v5185 = vadd.f32 %v5183, %v5184
    %v5186 = vsel %vm182, %v5016, 0.0
    %v5187 = vadd.f32 %v5185, %v5186
    %v5188 = vsel %vm182, %v5017, 0.0
    %v5189 = vadd.f32 %v5187, %v5188
    %v5190 = vsel %vm182, %v5018, 0.0
    %v5191 = vadd.f32 %v5189, %v5190
    %v5192 = vsel %vm182, %v5019, 0.0
    %v5193 = vadd.f32 %v5191, %v5192
    %v5194 = vsel %vm182, %v5020, 0.0
    %v5195 = vadd.f32 %v5193, %v5194
    %v5196 = vsel %vm182, %v5021, 0.0
    %v5197 = vadd.f32 %v5195, %v5196
    %v5198 = vsel %vm182, %v5022, 0.0
    %v5199 = vadd.f32 %v5197, %v5198
    %v5200 = vsel %vm182, %v5023, 0.0
    %v5201 = vadd.f32 %v5199, %v5200
    %v5202 = vsel %vm182, %v5024, 0.0
    %v5203 = vadd.f32 %v5201, %v5202
    %v5204 = vsel %vm182, %v5025, 0.0
    %v5205 = vadd.f32 %v5203, %v5204
    %v5206 = vsel %vm182, %v5026, 0.0
    %v5207 = vadd.f32 %v5205, %v5206
    %v5208 = vsel %vm182, %v5027, 0.0
    %v5209 = vadd.f32 %v5207, %v5208
    %v5210 = vsel %vm182, %v5028, 0.0
    %v5211 = vadd.f32 %v5209, %v5210
    %v5212 = vsel %vm182, %v5029, 0.0
    %v5213 = vadd.f32 %v5211, %v5212
    %v5214 = vsel %vm182, %v5030, 0.0
    %v5215 = vadd.f32 %v5213, %v5214
    %v5216 = vsel %vm182, %v5031, 0.0
    %v5217 = vadd.f32 %v5215, %v5216
    %v5218 = vsel %vm182, %v5032, 0.0
    %v5219 = vadd.f32 %v5217, %v5218
    %v5220 = vsel %vm182, %v5033, 0.0
    %v5221 = vadd.f32 %v5219, %v5220
    %v5222 = vsel %vm182, %v5034, 0.0
    %v5223 = vadd.f32 %v5221, %v5222
    %v5224 = vsel %vm182, %v5035, 0.0
    %v5225 = vadd.f32 %v5223, %v5224
    %v5226 = vsel %vm182, %v5036, 0.0
    %v5227 = vadd.f32 %v5225, %v5226
    %v5228 = vsel %vm182, %v5037, 0.0
    %v5229 = vadd.f32 %v5227, %v5228
    %v5230 = vsel %vm182, %v5038, 0.0
    %v5231 = vadd.f32 %v5229, %v5230
    %v5232 = vsel %vm182, %v5039, 0.0
    %v5233 = vadd.f32 %v5231, %v5232
    %v5234 = vsel %vm182, %v5040, 0.0
    %v5235 = vadd.f32 %v5233, %v5234
    %v5236 = vsel %vm182, %v5041, 0.0
    %v5237 = vadd.f32 %v5235, %v5236
    %v5238 = vsel %vm182, %v5042, 0.0
    %v5239 = vadd.f32 %v5237, %v5238
    %v5240 = vsel %vm182, %v5043, 0.0
    %v5241 = vadd.f32 %v5239, %v5240
    %v5242 = vsel %vm182, %v5044, 0.0
    %v5243 = vadd.f32 %v5241, %v5242
    %v5244 = vsel %vm182, %v5045, 0.0
    %v5245 = vadd.f32 %v5243, %v5244
    %v5246 = vsel %vm182, %v5046, 0.0
    %v5247 = vadd.f32 %v5245, %v5246
    %v5248 = vsel %vm182, %v5047, 0.0
    %v5249 = vadd.f32 %v5247, %v5248
    %v5250 = vsel %vm182, %v5048, 0.0
    %v5251 = vadd.f32 %v5249, %v5250
    %v5252 = vsel %vm182, %v5049, 0.0
    %v5253 = vadd.f32 %v5251, %v5252
    %v5254 = vsel %vm182, %v5050, 0.0
    %v5255 = vadd.f32 %v5253, %v5254
    %v5256 = vsel %vm182, %v5051, 0.0
    %v5257 = vadd.f32 %v5255, %v5256
    %v5258 = vsel %vm182, %v5052, 0.0
    %v5259 = vadd.f32 %v5257, %v5258
    %v5260 = vsel %vm182, %v5053, 0.0
    %v5261 = vadd.f32 %v5259, %v5260
    %v5262 = vsel %vm182, %v5054, 0.0
    %v5263 = vadd.f32 %v5261, %v5262
    %v5264 = vsel %vm182, %v5055, 0.0
    %v5265 = vadd.f32 %v5263, %v5264
    %v5266 = vsel %vm182, %v5056, 0.0
    %v5267 = vadd.f32 %v5265, %v5266
    %v5268 = vsel %vm182, %v5057, 0.0
    %v5269 = vadd.f32 %v5267, %v5268
    %v5270 = vsel %vm182, %v5058, 0.0
    %v5271 = vadd.f32 %v5269, %v5270
    %v5272 = vsel %vm182, %v5059, 0.0
    %v5273 = vadd.f32 %v5271, %v5272
    %v5274 = vsel %vm182, %v5060, 0.0
    %v5275 = vadd.f32 %v5273, %v5274
    %v5276 = vsel %vm182, %v5061, 0.0
    %v5277 = vadd.f32 %v5275, %v5276
    %v5278 = vsel %vm182, %v5062, 0.0
    %v5279 = vadd.f32 %v5277, %v5278
    %v5280 = vsel %vm182, %v5063, 0.0
    %v5281 = vadd.f32 %v5279, %v5280
    %v5282 = vsel %vm182, %v5064, 0.0
    %v5283 = vadd.f32 %v5281, %v5282
    %v5284 = vsel %vm182, %v5065, 0.0
    %v5285 = vadd.f32 %v5283, %v5284
    %v5286 = vsel %vm182, %v5066, 0.0
    %v5287 = vadd.f32 %v5285, %v5286
    %v5288 = vsel %vm182, %v5067, 0.0
    %v5289 = vadd.f32 %v5287, %v5288
    %v5290 = vsel %vm182, %v5068, 0.0
    %v5291 = vadd.f32 %v5289, %v5290
    %v5292 = vsel %vm182, %v5069, 0.0
    %v5293 = vadd.f32 %v5291, %v5292
    %v5294 = vsel %vm182, %v5070, 0.0
    %v5295 = vadd.f32 %v5293, %v5294
    %v5296 = vsel %vm182, %v5071, 0.0
    %v5297 = vadd.f32 %v5295, %v5296
    %v5298 = vsel %vm182, %v5072, 0.0
    %v5299 = vadd.f32 %v5297, %v5298
    %v5300 = vsel %vm182, %v5073, 0.0
    %v5301 = vadd.f32 %v5299, %v5300
    %v5302 = vsel %vm182, %v5074, 0.0
    %v5303 = vadd.f32 %v5301, %v5302
    %v5304 = vsel %vm182, %v5075, 0.0
    %v5305 = vadd.f32 %v5303, %v5304
    %v5306 = vsel %vm182, %v5076, 0.0
    %v5307 = vadd.f32 %v5305, %v5306
    %v5308 = vsel %vm182, %v5077, 0.0
    %v5309 = vadd.f32 %v5307, %v5308
    %v5310 = vsel %vm182, %v5078, 0.0
    %v5311 = vadd.f32 %v5309, %v5310
    %v5312 = vsel %vm182, %v5079, 0.0
    %v5313 = vadd.f32 %v5311, %v5312
    %v5314 = vsel %vm182, %v5080, 0.0
    %v5315 = vadd.f32 %v5313, %v5314
    %v5316 = vsel %vm182, %v5081, 0.0
    %v5317 = vadd.f32 %v5315, %v5316
    %v5318 = vsel %vm182, %v5082, 0.0
    %v5319 = vadd.f32 %v5317, %v5318
    %v5320 = vsel %vm182, %v5083, 0.0
    %v5321 = vadd.f32 %v5319, %v5320
    %v5322 = vsel %vm182, %v5084, 0.0
    %v5323 = vadd.f32 %v5321, %v5322
    %v5324 = vsel %vm182, %v5085, 0.0
    %v5325 = vadd.f32 %v5323, %v5324
    %v5326 = vsel %vm182, %v5086, 0.0
    %v5327 = vadd.f32 %v5325, %v5326
    %v5328 = vsel %vm182, %v5087, 0.0
    %v5329 = vadd.f32 %v5327, %v5328
    %v5330 = vsel %vm182, %v5088, 0.0
    %v5331 = vadd.f32 %v5329, %v5330
    %v5332 = vsel %vm182, %v5089, 0.0
    %v5333 = vadd.f32 %v5331, %v5332
    %v5334 = vsel %vm182, %v5090, 0.0
    %v5335 = vadd.f32 %v5333, %v5334
    %v5336 = vsel %vm182, %v5091, 0.0
    %v5337 = vadd.f32 %v5335, %v5336
    %v5338 = vsel %vm182, %v5092, 0.0
    %v5339 = vadd.f32 %v5337, %v5338
    %v5340 = vsel %vm182, %v5093, 0.0
    %v5341 = vadd.f32 %v5339, %v5340
    %v5342 = vsel %vm182, %v5094, 0.0
    %v5343 = vadd.f32 %v5341, %v5342
    %v5344 = vsel %vm182, %v5095, 0.0
    %v5345 = vadd.f32 %v5343, %v5344
    %v5346 = vsel %vm182, %v5096, 0.0
    %v5347 = vadd.f32 %v5345, %v5346
    %v5348 = vsel %vm182, %v5097, 0.0
    %v5349 = vadd.f32 %v5347, %v5348
    %v5350 = vsel %vm182, %v5098, 0.0
    %v5351 = vadd.f32 %v5349, %v5350
    %v5352 = vsel %vm182, %v5099, 0.0
    %v5353 = vadd.f32 %v5351, %v5352
    %v5354 = vsel %vm182, %v5100, 0.0
    %v5355 = vadd.f32 %v5353, %v5354
    %5356 = vadd.xlane.f32.xlu0 %v5355
    %v5357 = vpop.xlane.xlu0 %5356
    %v5358 = vrot.slane %v5357, 4
    %v5359 = vadd.f32 %v5357, %v5358
    %v5360 = vrot.slane %v5359, 2
    %v5361 = vadd.f32 %v5359, %v5360
    %v5362 = vrot.slane %v5361, 1
    %v5363 = vadd.f32 %v5361, %v5362
    %s5364 = vtos %v5363
    %v5365 = vmul.f32 %v4972, %v4972
    %v5366 = vsel %vm312, %v5365, 0.0
    %5367 = vadd.xlane.f32.xlu0 %v5366
    %v5368 = vpop.xlane.xlu0 %5367
    %v5369 = vrot.slane %v5368, 4
    %v5370 = vadd.f32 %v5368, %v5369
    %v5371 = vrot.slane %v5370, 2
    %v5372 = vadd.f32 %v5370, %v5371
    %v5373 = vrot.slane %v5372, 1
    %v5374 = vadd.f32 %v5372, %v5373
    %s5375 = vtos %v5374
    %s5376 = sadd.f32 %s5364, %s5375
    %v5377 = vstv %s5376
    %v5378 = vrsqrt.pop %v5377
    %v5379 = vmul.f32 %v5377, %v5378
    %vm5380 = vcmp.eq.f32.partialorder %v5377, inf
    %v5381 = vsel %vm5380, %v5377, %v5379
    %vm5382 = vcmp.eq.f32.partialorder %v5377, 0.0
    %v5383 = vand.u32 %v5377, 2147483648
    %v5384 = vsel %vm5382, %v5383, %v5381
    %s5385 = vtos %v5384
    %s5386 = sadd.f32 %s5385, 1e-06
    %v5387 = vstv %s5386
    %v5388 = vrcp.pop %v5387
    %s5389 = vtos %v5388
    %s5390 = smin.f32 %s5389, 1.0
    %s5391 = smul.f32 %s5390, 0.01
    %v5392 = vstv %s5391
    %v5393 = vmul.f32 %v5392, %v4456
    %v5394 = vmul.f32 %v5392, %v4459
    %v5395 = vmul.f32 %v5392, %v4464
    %v5396 = vmul.f32 %v5392, %v4467
    %v5397 = vmul.f32 %v5392, %v4472
    %v5398 = vmul.f32 %v5392, %v4475
    %v5399 = vmul.f32 %v5392, %v4480
    %v5400 = vmul.f32 %v5392, %v4483
    %v5401 = vmul.f32 %v5392, %v4488
    %v5402 = vmul.f32 %v5392, %v4491
    %v5403 = vmul.f32 %v5392, %v4496
    %v5404 = vmul.f32 %v5392, %v4499
    %v5405 = vmul.f32 %v5392, %v4504
    %v5406 = vmul.f32 %v5392, %v4507
    %v5407 = vmul.f32 %v5392, %v4512
    %v5408 = vmul.f32 %v5392, %v4515
    %v5409 = vmul.f32 %v5392, %v4520
    %v5410 = vmul.f32 %v5392, %v4523
    %v5411 = vmul.f32 %v5392, %v4528
    %v5412 = vmul.f32 %v5392, %v4531
    %v5413 = vmul.f32 %v5392, %v4536
    %v5414 = vmul.f32 %v5392, %v4539
    %v5415 = vmul.f32 %v5392, %v4544
    %v5416 = vmul.f32 %v5392, %v4547
    %v5417 = vmul.f32 %v5392, %v4552
    %v5418 = vmul.f32 %v5392, %v4555
    %v5419 = vmul.f32 %v5392, %v4560
    %v5420 = vmul.f32 %v5392, %v4563
    %v5421 = vmul.f32 %v5392, %v4568
    %v5422 = vmul.f32 %v5392, %v4571
    %v5423 = vmul.f32 %v5392, %v4576
    %v5424 = vmul.f32 %v5392, %v4579
    %v5425 = vmul.f32 %v5392, %v4584
    %v5426 = vmul.f32 %v5392, %v4587
    %v5427 = vmul.f32 %v5392, %v4592
    %v5428 = vmul.f32 %v5392, %v4595
    %v5429 = vmul.f32 %v5392, %v4600
    %v5430 = vmul.f32 %v5392, %v4603
    %v5431 = vmul.f32 %v5392, %v4608
    %v5432 = vmul.f32 %v5392, %v4611
    %v5433 = vmul.f32 %v5392, %v4616
    %v5434 = vmul.f32 %v5392, %v4619
    %v5435 = vmul.f32 %v5392, %v4624
    %v5436 = vmul.f32 %v5392, %v4627
    %v5437 = vmul.f32 %v5392, %v4632
    %v5438 = vmul.f32 %v5392, %v4635
    %v5439 = vmul.f32 %v5392, %v4640
    %v5440 = vmul.f32 %v5392, %v4643
    %v5441 = vmul.f32 %v5392, %v4648
    %v5442 = vmul.f32 %v5392, %v4651
    %v5443 = vmul.f32 %v5392, %v4656
    %v5444 = vmul.f32 %v5392, %v4659
    %v5445 = vmul.f32 %v5392, %v4664
    %v5446 = vmul.f32 %v5392, %v4667
    %v5447 = vmul.f32 %v5392, %v4672
    %v5448 = vmul.f32 %v5392, %v4675
    %v5449 = vmul.f32 %v5392, %v4680
    %v5450 = vmul.f32 %v5392, %v4683
    %v5451 = vmul.f32 %v5392, %v4688
    %v5452 = vmul.f32 %v5392, %v4691
    %v5453 = vmul.f32 %v5392, %v4696
    %v5454 = vmul.f32 %v5392, %v4699
    %v5455 = vmul.f32 %v5392, %v4704
    %v5456 = vmul.f32 %v5392, %v4707
    %v5457 = vmul.f32 %v5392, %v4712
    %v5458 = vmul.f32 %v5392, %v4715
    %v5459 = vmul.f32 %v5392, %v4720
    %v5460 = vmul.f32 %v5392, %v4723
    %v5461 = vmul.f32 %v5392, %v4728
    %v5462 = vmul.f32 %v5392, %v4731
    %v5463 = vmul.f32 %v5392, %v4736
    %v5464 = vmul.f32 %v5392, %v4739
    %v5465 = vmul.f32 %v5392, %v4744
    %v5466 = vmul.f32 %v5392, %v4747
    %v5467 = vmul.f32 %v5392, %v4752
    %v5468 = vmul.f32 %v5392, %v4755
    %v5469 = vmul.f32 %v5392, %v4760
    %v5470 = vmul.f32 %v5392, %v4763
    %v5471 = vmul.f32 %v5392, %v4768
    %v5472 = vmul.f32 %v5392, %v4771
    %v5473 = vmul.f32 %v5392, %v4776
    %v5474 = vmul.f32 %v5392, %v4779
    %v5475 = vmul.f32 %v5392, %v4784
    %v5476 = vmul.f32 %v5392, %v4787
    %v5477 = vmul.f32 %v5392, %v4792
    %v5478 = vmul.f32 %v5392, %v4795
    %v5479 = vmul.f32 %v5392, %v4800
    %v5480 = vmul.f32 %v5392, %v4803
    %v5481 = vmul.f32 %v5392, %v4808
    %v5482 = vmul.f32 %v5392, %v4811
    %v5483 = vmul.f32 %v5392, %v4816
    %v5484 = vmul.f32 %v5392, %v4819
    %v5485 = vmul.f32 %v5392, %v4824
    %v5486 = vmul.f32 %v5392, %v4827
    %v5487 = vmul.f32 %v5392, %v4832
    %v5488 = vmul.f32 %v5392, %v4835
    %v5489 = vmul.f32 %v5392, %v4840
    %v5490 = vmul.f32 %v5392, %v4843
    %v5491 = vmul.f32 %v5392, %v4848
    %v5492 = vmul.f32 %v5392, %v4851
    %v5493 = vmul.f32 %v5392, %v4856
    %v5494 = vmul.f32 %v5392, %v4859
    %v5495 = vmul.f32 %v5392, %v4864
    %v5496 = vmul.f32 %v5392, %v4867
    %v5497 = vmul.f32 %v5392, %v4872
    %v5498 = vmul.f32 %v5392, %v4875
    %v5499 = vmul.f32 %v5392, %v4880
    %v5500 = vmul.f32 %v5392, %v4883
    %v5501 = vmul.f32 %v5392, %v4888
    %v5502 = vmul.f32 %v5392, %v4891
    %v5503 = vmul.f32 %v5392, %v4896
    %v5504 = vmul.f32 %v5392, %v4899
    %v5505 = vmul.f32 %v5392, %v4904
    %v5506 = vmul.f32 %v5392, %v4907
    %v5507 = vmul.f32 %v5392, %v4912
    %v5508 = vmul.f32 %v5392, %v4915
    %v5509 = vmul.f32 %v5392, %v4920
    %v5510 = vmul.f32 %v5392, %v4923
    %v5511 = vmul.f32 %v5392, %v4928
    %v5512 = vmul.f32 %v5392, %v4931
    %v5513 = vmul.f32 %v5392, %v4936
    %v5514 = vmul.f32 %v5392, %v4939
    %v5515 = vmul.f32 %v5392, %v4944
    %v5516 = vmul.f32 %v5392, %v4947
    %v5517 = vmul.f32 %v5392, %v4952
    %v5518 = vmul.f32 %v5392, %v4955
    %v5519 = vmul.f32 %v5392, %v4960
    %v5520 = vmul.f32 %v5392, %v4963
    %v5521 = vsub.f32 %v3215, %v5393
    %v5522 = vsub.f32 %v3216, %v5394
    %v5523 = vsub.f32 %v3217, %v5395
    %v5524 = vsub.f32 %v3218, %v5396
    %v5525 = vsub.f32 %v3219, %v5397
    %v5526 = vsub.f32 %v3220, %v5398
    %v5527 = vsub.f32 %v3221, %v5399
    %v5528 = vsub.f32 %v3222, %v5400
    %v5529 = vsub.f32 %v3223, %v5401
    %v5530 = vsub.f32 %v3224, %v5402
    %v5531 = vsub.f32 %v3225, %v5403
    %v5532 = vsub.f32 %v3226, %v5404
    %v5533 = vsub.f32 %v3227, %v5405
    %v5534 = vsub.f32 %v3228, %v5406
    %v5535 = vsub.f32 %v3229, %v5407
    %v5536 = vsub.f32 %v3230, %v5408
    %v5537 = vsub.f32 %v3231, %v5409
    %v5538 = vsub.f32 %v3232, %v5410
    %v5539 = vsub.f32 %v3233, %v5411
    %v5540 = vsub.f32 %v3234, %v5412
    %v5541 = vsub.f32 %v3235, %v5413
    %v5542 = vsub.f32 %v3236, %v5414
    %v5543 = vsub.f32 %v3237, %v5415
    %v5544 = vsub.f32 %v3238, %v5416
    %v5545 = vsub.f32 %v3239, %v5417
    %v5546 = vsub.f32 %v3240, %v5418
    %v5547 = vsub.f32 %v3241, %v5419
    %v5548 = vsub.f32 %v3242, %v5420
    %v5549 = vsub.f32 %v3243, %v5421
    %v5550 = vsub.f32 %v3244, %v5422
    %v5551 = vsub.f32 %v3245, %v5423
    %v5552 = vsub.f32 %v3246, %v5424
    %v5553 = vsub.f32 %v3247, %v5425
    %v5554 = vsub.f32 %v3248, %v5426
    %v5555 = vsub.f32 %v3249, %v5427
    %v5556 = vsub.f32 %v3250, %v5428
    %v5557 = vsub.f32 %v3251, %v5429
    %v5558 = vsub.f32 %v3252, %v5430
    %v5559 = vsub.f32 %v3253, %v5431
    %v5560 = vsub.f32 %v3254, %v5432
    %v5561 = vsub.f32 %v3255, %v5433
    %v5562 = vsub.f32 %v3256, %v5434
    %v5563 = vsub.f32 %v3257, %v5435
    %v5564 = vsub.f32 %v3258, %v5436
    %v5565 = vsub.f32 %v3259, %v5437
    %v5566 = vsub.f32 %v3260, %v5438
    %v5567 = vsub.f32 %v3261, %v5439
    %v5568 = vsub.f32 %v3262, %v5440
    %v5569 = vsub.f32 %v3263, %v5441
    %v5570 = vsub.f32 %v3264, %v5442
    %v5571 = vsub.f32 %v3265, %v5443
    %v5572 = vsub.f32 %v3266, %v5444
    %v5573 = vsub.f32 %v3267, %v5445
    %v5574 = vsub.f32 %v3268, %v5446
    %v5575 = vsub.f32 %v3269, %v5447
    %v5576 = vsub.f32 %v3270, %v5448
    %v5577 = vsub.f32 %v3271, %v5449
    %v5578 = vsub.f32 %v3272, %v5450
    %v5579 = vsub.f32 %v3273, %v5451
    %v5580 = vsub.f32 %v3274, %v5452
    %v5581 = vsub.f32 %v3275, %v5453
    %v5582 = vsub.f32 %v3276, %v5454
    %v5583 = vsub.f32 %v3277, %v5455
    %v5584 = vsub.f32 %v3278, %v5456
    %v5585 = vsub.f32 %v3279, %v5457
    %v5586 = vsub.f32 %v3280, %v5458
    %v5587 = vsub.f32 %v3281, %v5459
    %v5588 = vsub.f32 %v3282, %v5460
    %v5589 = vsub.f32 %v3283, %v5461
    %v5590 = vsub.f32 %v3284, %v5462
    %v5591 = vsub.f32 %v3285, %v5463
    %v5592 = vsub.f32 %v3286, %v5464
    %v5593 = vsub.f32 %v3287, %v5465
    %v5594 = vsub.f32 %v3288, %v5466
    %v5595 = vsub.f32 %v3289, %v5467
    %v5596 = vsub.f32 %v3290, %v5468
    %v5597 = vsub.f32 %v3291, %v5469
    %v5598 = vsub.f32 %v3292, %v5470
    %v5599 = vsub.f32 %v3293, %v5471
    %v5600 = vsub.f32 %v3294, %v5472
    %v5601 = vsub.f32 %v3295, %v5473
    %v5602 = vsub.f32 %v3296, %v5474
    %v5603 = vsub.f32 %v3297, %v5475
    %v5604 = vsub.f32 %v3298, %v5476
    %v5605 = vsub.f32 %v3299, %v5477
    %v5606 = vsub.f32 %v3300, %v5478
    %v5607 = vsub.f32 %v3301, %v5479
    %v5608 = vsub.f32 %v3302, %v5480
    %v5609 = vsub.f32 %v3303, %v5481
    %v5610 = vsub.f32 %v3304, %v5482
    %v5611 = vsub.f32 %v3305, %v5483
    %v5612 = vsub.f32 %v3306, %v5484
    %v5613 = vsub.f32 %v3307, %v5485
    %v5614 = vsub.f32 %v3308, %v5486
    %v5615 = vsub.f32 %v3309, %v5487
    %v5616 = vsub.f32 %v3310, %v5488
    %v5617 = vsub.f32 %v3311, %v5489
    %v5618 = vsub.f32 %v3312, %v5490
    %v5619 = vsub.f32 %v3313, %v5491
    %v5620 = vsub.f32 %v3314, %v5492
    %v5621 = vsub.f32 %v3315, %v5493
    %v5622 = vsub.f32 %v3316, %v5494
    %v5623 = vsub.f32 %v3317, %v5495
    %v5624 = vsub.f32 %v3318, %v5496
    %v5625 = vsub.f32 %v3319, %v5497
    %v5626 = vsub.f32 %v3320, %v5498
    %v5627 = vsub.f32 %v3321, %v5499
    %v5628 = vsub.f32 %v3322, %v5500
    %v5629 = vsub.f32 %v3323, %v5501
    %v5630 = vsub.f32 %v3324, %v5502
    %v5631 = vsub.f32 %v3325, %v5503
    %v5632 = vsub.f32 %v3326, %v5504
    %v5633 = vsub.f32 %v3327, %v5505
    %v5634 = vsub.f32 %v3328, %v5506
    %v5635 = vsub.f32 %v3329, %v5507
    %v5636 = vsub.f32 %v3330, %v5508
    %v5637 = vsub.f32 %v3331, %v5509
    %v5638 = vsub.f32 %v3332, %v5510
    %v5639 = vsub.f32 %v3333, %v5511
    %v5640 = vsub.f32 %v3334, %v5512
    %v5641 = vsub.f32 %v3335, %v5513
    %v5642 = vsub.f32 %v3336, %v5514
    %v5643 = vsub.f32 %v3337, %v5515
    %v5644 = vsub.f32 %v3338, %v5516
    %v5645 = vsub.f32 %v3339, %v5517
    %v5646 = vsub.f32 %v3340, %v5518
    %v5647 = vsub.f32 %v3341, %v5519
    %v5648 = vsub.f32 %v3342, %v5520
    %5649 = vst.msk [vmem:[%s8] sm:$0xff] %vm182, %v5521
    %5650 = vst.msk [vmem:[%s8 + $0x8] sm:$0xff] %vm182, %v5522
    %5651 = vst.msk [vmem:[%s8 + $0x10] sm:$0xff] %vm182, %v5523
    %5652 = vst.msk [vmem:[%s8 + $0x18] sm:$0xff] %vm182, %v5524
    %5653 = vst.msk [vmem:[%s8 + $0x20] sm:$0xff] %vm182, %v5525
    %5654 = vst.msk [vmem:[%s8 + $0x28] sm:$0xff] %vm182, %v5526
    %5655 = vst.msk [vmem:[%s8 + $0x30] sm:$0xff] %vm182, %v5527
    %5656 = vst.msk [vmem:[%s8 + $0x38] sm:$0xff] %vm182, %v5528
    %5657 = vst.msk [vmem:[%s8 + $0x40] sm:$0xff] %vm182, %v5529
    %5658 = vst.msk [vmem:[%s8 + $0x48] sm:$0xff] %vm182, %v5530
    %5659 = vst.msk [vmem:[%s8 + $0x50] sm:$0xff] %vm182, %v5531
    %5660 = vst.msk [vmem:[%s8 + $0x58] sm:$0xff] %vm182, %v5532
    %5661 = vst.msk [vmem:[%s8 + $0x60] sm:$0xff] %vm182, %v5533
    %5662 = vst.msk [vmem:[%s8 + $0x68] sm:$0xff] %vm182, %v5534
    %5663 = vst.msk [vmem:[%s8 + $0x70] sm:$0xff] %vm182, %v5535
    %5664 = vst.msk [vmem:[%s8 + $0x78] sm:$0xff] %vm182, %v5536
    %5665 = vst.msk [vmem:[%s8 + $0x80] sm:$0xff] %vm182, %v5537
    %5666 = vst.msk [vmem:[%s8 + $0x88] sm:$0xff] %vm182, %v5538
    %5667 = vst.msk [vmem:[%s8 + $0x90] sm:$0xff] %vm182, %v5539
    %5668 = vst.msk [vmem:[%s8 + $0x98] sm:$0xff] %vm182, %v5540
    %5669 = vst.msk [vmem:[%s8 + $0xa0] sm:$0xff] %vm182, %v5541
    %5670 = vst.msk [vmem:[%s8 + $0xa8] sm:$0xff] %vm182, %v5542
    %5671 = vst.msk [vmem:[%s8 + $0xb0] sm:$0xff] %vm182, %v5543
    %5672 = vst.msk [vmem:[%s8 + $0xb8] sm:$0xff] %vm182, %v5544
    %5673 = vst.msk [vmem:[%s8 + $0xc0] sm:$0xff] %vm182, %v5545
    %5674 = vst.msk [vmem:[%s8 + $0xc8] sm:$0xff] %vm182, %v5546
    %5675 = vst.msk [vmem:[%s8 + $0xd0] sm:$0xff] %vm182, %v5547
    %5676 = vst.msk [vmem:[%s8 + $0xd8] sm:$0xff] %vm182, %v5548
    %5677 = vst.msk [vmem:[%s8 + $0xe0] sm:$0xff] %vm182, %v5549
    %5678 = vst.msk [vmem:[%s8 + $0xe8] sm:$0xff] %vm182, %v5550
    %5679 = vst.msk [vmem:[%s8 + $0xf0] sm:$0xff] %vm182, %v5551
    %5680 = vst.msk [vmem:[%s8 + $0xf8] sm:$0xff] %vm182, %v5552
    %5681 = vst.msk [vmem:[%s8 + $0x100] sm:$0xff] %vm182, %v5553
    %5682 = vst.msk [vmem:[%s8 + $0x108] sm:$0xff] %vm182, %v5554
    %5683 = vst.msk [vmem:[%s8 + $0x110] sm:$0xff] %vm182, %v5555
    %5684 = vst.msk [vmem:[%s8 + $0x118] sm:$0xff] %vm182, %v5556
    %5685 = vst.msk [vmem:[%s8 + $0x120] sm:$0xff] %vm182, %v5557
    %5686 = vst.msk [vmem:[%s8 + $0x128] sm:$0xff] %vm182, %v5558
    %5687 = vst.msk [vmem:[%s8 + $0x130] sm:$0xff] %vm182, %v5559
    %5688 = vst.msk [vmem:[%s8 + $0x138] sm:$0xff] %vm182, %v5560
    %5689 = vst.msk [vmem:[%s8 + $0x140] sm:$0xff] %vm182, %v5561
    %5690 = vst.msk [vmem:[%s8 + $0x148] sm:$0xff] %vm182, %v5562
    %5691 = vst.msk [vmem:[%s8 + $0x150] sm:$0xff] %vm182, %v5563
    %5692 = vst.msk [vmem:[%s8 + $0x158] sm:$0xff] %vm182, %v5564
    %5693 = vst.msk [vmem:[%s8 + $0x160] sm:$0xff] %vm182, %v5565
    %5694 = vst.msk [vmem:[%s8 + $0x168] sm:$0xff] %vm182, %v5566
    %5695 = vst.msk [vmem:[%s8 + $0x170] sm:$0xff] %vm182, %v5567
    %5696 = vst.msk [vmem:[%s8 + $0x178] sm:$0xff] %vm182, %v5568
    %5697 = vst.msk [vmem:[%s8 + $0x180] sm:$0xff] %vm182, %v5569
    %5698 = vst.msk [vmem:[%s8 + $0x188] sm:$0xff] %vm182, %v5570
    %5699 = vst.msk [vmem:[%s8 + $0x190] sm:$0xff] %vm182, %v5571
    %5700 = vst.msk [vmem:[%s8 + $0x198] sm:$0xff] %vm182, %v5572
    %5701 = vst.msk [vmem:[%s8 + $0x1a0] sm:$0xff] %vm182, %v5573
    %5702 = vst.msk [vmem:[%s8 + $0x1a8] sm:$0xff] %vm182, %v5574
    %5703 = vst.msk [vmem:[%s8 + $0x1b0] sm:$0xff] %vm182, %v5575
    %5704 = vst.msk [vmem:[%s8 + $0x1b8] sm:$0xff] %vm182, %v5576
    %5705 = vst.msk [vmem:[%s8 + $0x1c0] sm:$0xff] %vm182, %v5577
    %5706 = vst.msk [vmem:[%s8 + $0x1c8] sm:$0xff] %vm182, %v5578
    %5707 = vst.msk [vmem:[%s8 + $0x1d0] sm:$0xff] %vm182, %v5579
    %5708 = vst.msk [vmem:[%s8 + $0x1d8] sm:$0xff] %vm182, %v5580
    %5709 = vst.msk [vmem:[%s8 + $0x1e0] sm:$0xff] %vm182, %v5581
    %5710 = vst.msk [vmem:[%s8 + $0x1e8] sm:$0xff] %vm182, %v5582
    %5711 = vst.msk [vmem:[%s8 + $0x1f0] sm:$0xff] %vm182, %v5583
    %5712 = vst.msk [vmem:[%s8 + $0x1f8] sm:$0xff] %vm182, %v5584
    %5713 = vst.msk [vmem:[%s8 + $0x200] sm:$0xff] %vm182, %v5585
    %5714 = vst.msk [vmem:[%s8 + $0x208] sm:$0xff] %vm182, %v5586
    %5715 = vst.msk [vmem:[%s8 + $0x210] sm:$0xff] %vm182, %v5587
    %5716 = vst.msk [vmem:[%s8 + $0x218] sm:$0xff] %vm182, %v5588
    %5717 = vst.msk [vmem:[%s8 + $0x220] sm:$0xff] %vm182, %v5589
    %5718 = vst.msk [vmem:[%s8 + $0x228] sm:$0xff] %vm182, %v5590
    %5719 = vst.msk [vmem:[%s8 + $0x230] sm:$0xff] %vm182, %v5591
    %5720 = vst.msk [vmem:[%s8 + $0x238] sm:$0xff] %vm182, %v5592
    %5721 = vst.msk [vmem:[%s8 + $0x240] sm:$0xff] %vm182, %v5593
    %5722 = vst.msk [vmem:[%s8 + $0x248] sm:$0xff] %vm182, %v5594
    %5723 = vst.msk [vmem:[%s8 + $0x250] sm:$0xff] %vm182, %v5595
    %5724 = vst.msk [vmem:[%s8 + $0x258] sm:$0xff] %vm182, %v5596
    %5725 = vst.msk [vmem:[%s8 + $0x260] sm:$0xff] %vm182, %v5597
    %5726 = vst.msk [vmem:[%s8 + $0x268] sm:$0xff] %vm182, %v5598
    %5727 = vst.msk [vmem:[%s8 + $0x270] sm:$0xff] %vm182, %v5599
    %5728 = vst.msk [vmem:[%s8 + $0x278] sm:$0xff] %vm182, %v5600
    %5729 = vst.msk [vmem:[%s8 + $0x280] sm:$0xff] %vm182, %v5601
    %5730 = vst.msk [vmem:[%s8 + $0x288] sm:$0xff] %vm182, %v5602
    %5731 = vst.msk [vmem:[%s8 + $0x290] sm:$0xff] %vm182, %v5603
    %5732 = vst.msk [vmem:[%s8 + $0x298] sm:$0xff] %vm182, %v5604
    %5733 = vst.msk [vmem:[%s8 + $0x2a0] sm:$0xff] %vm182, %v5605
    %5734 = vst.msk [vmem:[%s8 + $0x2a8] sm:$0xff] %vm182, %v5606
    %5735 = vst.msk [vmem:[%s8 + $0x2b0] sm:$0xff] %vm182, %v5607
    %5736 = vst.msk [vmem:[%s8 + $0x2b8] sm:$0xff] %vm182, %v5608
    %5737 = vst.msk [vmem:[%s8 + $0x2c0] sm:$0xff] %vm182, %v5609
    %5738 = vst.msk [vmem:[%s8 + $0x2c8] sm:$0xff] %vm182, %v5610
    %5739 = vst.msk [vmem:[%s8 + $0x2d0] sm:$0xff] %vm182, %v5611
    %5740 = vst.msk [vmem:[%s8 + $0x2d8] sm:$0xff] %vm182, %v5612
    %5741 = vst.msk [vmem:[%s8 + $0x2e0] sm:$0xff] %vm182, %v5613
    %5742 = vst.msk [vmem:[%s8 + $0x2e8] sm:$0xff] %vm182, %v5614
    %5743 = vst.msk [vmem:[%s8 + $0x2f0] sm:$0xff] %vm182, %v5615
    %5744 = vst.msk [vmem:[%s8 + $0x2f8] sm:$0xff] %vm182, %v5616
    %5745 = vst.msk [vmem:[%s8 + $0x300] sm:$0xff] %vm182, %v5617
    %5746 = vst.msk [vmem:[%s8 + $0x308] sm:$0xff] %vm182, %v5618
    %5747 = vst.msk [vmem:[%s8 + $0x310] sm:$0xff] %vm182, %v5619
    %5748 = vst.msk [vmem:[%s8 + $0x318] sm:$0xff] %vm182, %v5620
    %5749 = vst.msk [vmem:[%s8 + $0x320] sm:$0xff] %vm182, %v5621
    %5750 = vst.msk [vmem:[%s8 + $0x328] sm:$0xff] %vm182, %v5622
    %5751 = vst.msk [vmem:[%s8 + $0x330] sm:$0xff] %vm182, %v5623
    %5752 = vst.msk [vmem:[%s8 + $0x338] sm:$0xff] %vm182, %v5624
    %5753 = vst.msk [vmem:[%s8 + $0x340] sm:$0xff] %vm182, %v5625
    %5754 = vst.msk [vmem:[%s8 + $0x348] sm:$0xff] %vm182, %v5626
    %5755 = vst.msk [vmem:[%s8 + $0x350] sm:$0xff] %vm182, %v5627
    %5756 = vst.msk [vmem:[%s8 + $0x358] sm:$0xff] %vm182, %v5628
    %5757 = vst.msk [vmem:[%s8 + $0x360] sm:$0xff] %vm182, %v5629
    %5758 = vst.msk [vmem:[%s8 + $0x368] sm:$0xff] %vm182, %v5630
    %5759 = vst.msk [vmem:[%s8 + $0x370] sm:$0xff] %vm182, %v5631
    %5760 = vst.msk [vmem:[%s8 + $0x378] sm:$0xff] %vm182, %v5632
    %5761 = vst.msk [vmem:[%s8 + $0x380] sm:$0xff] %vm182, %v5633
    %5762 = vst.msk [vmem:[%s8 + $0x388] sm:$0xff] %vm182, %v5634
    %5763 = vst.msk [vmem:[%s8 + $0x390] sm:$0xff] %vm182, %v5635
    %5764 = vst.msk [vmem:[%s8 + $0x398] sm:$0xff] %vm182, %v5636
    %5765 = vst.msk [vmem:[%s8 + $0x3a0] sm:$0xff] %vm182, %v5637
    %5766 = vst.msk [vmem:[%s8 + $0x3a8] sm:$0xff] %vm182, %v5638
    %5767 = vst.msk [vmem:[%s8 + $0x3b0] sm:$0xff] %vm182, %v5639
    %5768 = vst.msk [vmem:[%s8 + $0x3b8] sm:$0xff] %vm182, %v5640
    %5769 = vst.msk [vmem:[%s8 + $0x3c0] sm:$0xff] %vm182, %v5641
    %5770 = vst.msk [vmem:[%s8 + $0x3c8] sm:$0xff] %vm182, %v5642
    %5771 = vst.msk [vmem:[%s8 + $0x3d0] sm:$0xff] %vm182, %v5643
    %5772 = vst.msk [vmem:[%s8 + $0x3d8] sm:$0xff] %vm182, %v5644
    %5773 = vst.msk [vmem:[%s8 + $0x3e0] sm:$0xff] %vm182, %v5645
    %5774 = vst.msk [vmem:[%s8 + $0x3e8] sm:$0xff] %vm182, %v5646
    %5775 = vst.msk [vmem:[%s8 + $0x3f0] sm:$0xff] %vm182, %v5647
    %5776 = vst.msk [vmem:[%s8 + $0x3f8] sm:$0xff] %vm182, %v5648
    %v5777 = vld [vmem:[%s9] sm:$0x1]
    %v5778 = vmul.f32 %v5392, %v4972
    %v5779 = vsub.f32 %v5777, %v5778
    %5780 = vst.msk [vmem:[%s9] sm:$0x1] %vm312, %v5779
    %5781 = vst.msk [vmem:[#allocation2] sm:$0xff] %vm808, %v3700
    // Predicated region
    $region30: #{adapt_forward.1} parent=1 // pred_check
      _
    $region31: #{adapt_forward.1} parent=1 // pred_check_branch
      %5783 = sbr.rel (0) target = $region33
    $region32: #{adapt_forward.1} parent=1 // pred_region
      %s5785 = ssub.s32 128, 128
      %5786 = vsyncadd [#allocation3], %s5785
      %s5788 = sshll.u32 [#allocation2], 4
      %s5789 = int_to_ptr.vmem [resolvable:$true] %s5788
      %5791 = dma.vmem_to_hbm [thread:$0]  %s5789, 128, %s7, [#allocation3]
    $region33: #{adapt_forward.1} parent=1 // pred_fallthru
      _
    // Predicated region
    $region34: #{adapt_forward.1} parent=1 // pred_check
      _
    $region35: #{adapt_forward.1} parent=1 // pred_check_branch
      %5793 = sbr.rel (0) target = $region37
    $region36: #{adapt_forward.1} parent=1 // pred_region
      _
    $region37: #{adapt_forward.1} parent=1 // pred_fallthru
      _
    // Predicated region
    $region38: #{adapt_forward.1} parent=1 // pred_check
      _
    $region39: #{adapt_forward.1} parent=1 // pred_check_branch
      %5795 = sbr.rel (0) target = $region41
    $region40: #{adapt_forward.1} parent=1 // pred_region
      _
    $region41: #{adapt_forward.1} parent=1 // pred_fallthru
      _
    // Predicated region
    $region42: #{adapt_forward.1} parent=1 // pred_check
      _
    $region43: #{adapt_forward.1} parent=1 // pred_check_branch
      %5797 = sbr.rel (0) target = $region45
    $region44: #{adapt_forward.1} parent=1 // pred_region
      %5798 = dma.done [#allocation3], 128
    $region45: #{adapt_forward.1} parent=1 // pred_fallthru
      _
    // Predicated region
    $region46: #{adapt_forward.1} parent=1 // pred_check
      _
    $region47: #{adapt_forward.1} parent=1 // pred_check_branch
      %5800 = sbr.rel (0) target = $region49
    $region48: #{adapt_forward.1} parent=1 // pred_region
      _
    $region49: #{adapt_forward.1} parent=1 // pred_fallthru
      _
    // Predicated region
    $region50: #{adapt_forward.1} parent=1 // pred_check
      _
    $region51: #{adapt_forward.1} parent=1 // pred_check_branch
      %5802 = sbr.rel (0) target = $region53
    $region52: #{adapt_forward.1} parent=1 // pred_region
      _
    $region53: #{adapt_forward.1} parent=1 // pred_fallthru
      _
    %5803 = vsyncpa [#allocation3], 1

</llo_original>
